<compile_context>
chip_gen: v5e
topology: v5e:2x2
jax: 0.10.0
libtpu: 0.0.40
codegen_flags: <defaults>
</compile_context>

<pallas_src>
import numpy as np

import jax
import jax.numpy as jnp
from jax.experimental import pallas as pl
from jax.experimental.pallas import tpu as pltpu


# --------------------------------------------------------------------------------------
# Offline lowering of conv layers to dense matrices on channel-major flattened vectors
#   flat index of activation element (channel c, position l) = c * L + l
# --------------------------------------------------------------------------------------
def _conv1d_matrix(W, Lin, Lout, stride, pad):
    """W: (Cout, Cin, K) -> M: (Cin*Lin, Cout*Lout) with y_flat = x_flat @ M."""
    Cout, Cin, K = W.shape
    M = np.zeros((Cin * Lin, Cout * Lout), np.float32)
    for co in range(Cout):
        for lo in range(Lout):
            for ci in range(Cin):
                for k in range(K):
                    li = lo * stride - pad + k
                    if 0 <= li < Lin:
                        M[ci * Lin + li, co * Lout + lo] += W[co, ci, k]
    return M


def _convT1d_matrix(W, Lin, Lout, stride, pad):
    """W (torch ConvTranspose1d layout): (Cin, Cout, K) -> M: (Cin*Lin, Cout*Lout)."""
    Cin, Cout, K = W.shape
    M = np.zeros((Cin * Lin, Cout * Lout), np.float32)
    for ci in range(Cin):
        for li in range(Lin):
            for co in range(Cout):
                for k in range(K):
                    lo = li * stride - pad + k
                    if 0 <= lo < Lout:
                        M[ci * Lin + li, co * Lout + lo] += W[ci, co, k]
    return M


def _fold_bn(M, b_flat, Lout, gamma, beta, r_mean, r_var, eps=1e-5):
    """Fold eval-mode BatchNorm1d (per output channel) into matrix columns and bias."""
    scale = gamma / np.sqrt(r_var + eps)
    shift = beta - r_mean * scale
    scale_flat = np.repeat(scale, Lout)
    shift_flat = np.repeat(shift, Lout)
    return M * scale_flat[None, :], b_flat * scale_flat + shift_flat


# --------------------------------------------------------------------------------------
# Static layer plan: per-layer padded dims, packing group and ReLU flag.
#   True (unpadded) dims: 140 ->560 ->560 ->544 ->128 ->64 ->128 ->544 ->560 ->560 ->140
#   Padded (multiple-of-128) dims used by the kernel:
#           256 ->640 ->640 ->640 ->128 ->128->128 ->640 ->640 ->640 ->256
# --------------------------------------------------------------------------------------
_RELU    = (True, True, True, True, False, True, False, True, True, False)
_PAD_IN  = (256, 640, 640, 640, 128, 128, 128, 640, 640, 640)
_PAD_OUT = (640, 640, 640, 128, 128, 128, 640, 640, 640, 256)
_GROUP   = ("A", "A", "A", "B", "B", "B", "A", "A", "A", "C")  # weight slab per layer


def _make_layer_plan():
    row_off = {"A": 0, "B": 0, "C": 0}
    plan, boff = [], 0
    for i in range(10):
        g = _GROUP[i]
        plan.append((g, row_off[g], _PAD_IN[i], boff, _PAD_OUT[i], _RELU[i]))
        row_off[g] += _PAD_IN[i]
        boff += _PAD_OUT[i]
    return tuple(plan)


_LAYER_PLAN = _make_layer_plan()   # (group, row_off, rows, bias_off, bias_width, relu)


# --------------------------------------------------------------------------------------
# Parameter construction (deterministic, PyTorch-default-like uniform init) baked into
# three packed bf16 weight slabs + one packed f32 bias row.  BatchNorm uses fresh-init
# eval statistics (gamma=1, beta=0, mean=0, var=1), matching the untrained torch module.
# --------------------------------------------------------------------------------------
def _uinit(key, shape, fan_in):
    bound = 1.0 / np.sqrt(float(fan_in))
    return np.asarray(jax.random.uniform(key, shape, jnp.float32, -bound, bound))


def build_fused_params(key, embedding_dim=64):
    assert embedding_dim <= 128
    ks = jax.random.split(key, 20)
    eps = 1e-5
    bn = lambda c: (np.ones(c, np.float32), np.zeros(c, np.float32),
                    np.zeros(c, np.float32), np.ones(c, np.float32))  # gamma, beta, mean, var

    layers = []

    # ---- Encoder convs ----
    # Conv1d(1, 8, 3, stride=2, padding=1): L 140 -> 70
    W = _uinit(ks[0], (8, 1, 3), 1 * 3); b = _uinit(ks[1], (8,), 1 * 3)
    layers.append((_conv1d_matrix(W, 140, 70, 2, 1), np.repeat(b, 70)))
    # Conv1d(8, 16, 3, stride=2, padding=1) + BatchNorm1d(16): 70 -> 35
    W = _uinit(ks[2], (16, 8, 3), 8 * 3); b = _uinit(ks[3], (16,), 8 * 3)
    M, bf = _conv1d_matrix(W, 70, 35, 2, 1), np.repeat(b, 35)
    layers.append(_fold_bn(M, bf, 35, *bn(16), eps))
    # Conv1d(16, 32, 3, stride=2, padding=0): 35 -> 17
    W = _uinit(ks[4], (32, 16, 3), 16 * 3); b = _uinit(ks[5], (32,), 16 * 3)
    layers.append((_conv1d_matrix(W, 35, 17, 2, 0), np.repeat(b, 17)))

    # ---- Encoder linears ---- (torch Linear weight is (out, in) -> matmul uses W.T)
    W = _uinit(ks[6], (128, 544), 544); b = _uinit(ks[7], (128,), 544)
    layers.append((W.T.copy(), b))
    W = _uinit(ks[8], (embedding_dim, 128), 128); b = _uinit(ks[9], (embedding_dim,), 128)
    layers.append((W.T.copy(), b))

    # ---- Decoder linears ----
    W = _uinit(ks[10], (128, embedding_dim), embedding_dim); b = _uinit(ks[11], (128,), embedding_dim)
    layers.append((W.T.copy(), b))
    W = _uinit(ks[12], (544, 128), 128); b = _uinit(ks[13], (544,), 128)
    layers.append((W.T.copy(), b))

    # ---- Decoder transposed convs ----
    # ConvTranspose1d(32, 16, 3, stride=2, output_padding=0) + BN(16): 17 -> 35
    W = _uinit(ks[14], (32, 16, 3), 16 * 3); b = _uinit(ks[15], (16,), 16 * 3)
    M, bf = _convT1d_matrix(W, 17, 35, 2, 0), np.repeat(b, 35)
    layers.append(_fold_bn(M, bf, 35, *bn(16), eps))
    # ConvTranspose1d(16, 8, 3, stride=2, padding=1, output_padding=1) + BN(8): 35 -> 70
    W = _uinit(ks[16], (16, 8, 3), 8 * 3); b = _uinit(ks[17], (8,), 8 * 3)
    M, bf = _convT1d_matrix(W, 35, 70, 2, 1), np.repeat(b, 70)
    layers.append(_fold_bn(M, bf, 70, *bn(8), eps))
    # ConvTranspose1d(8, 1, 3, stride=2, padding=1, output_padding=1): 70 -> 140
    W = _uinit(ks[18], (8, 1, 3), 1 * 3); b = _uinit(ks[19], (1,), 1 * 3)
    layers.append((_convT1d_matrix(W, 70, 140, 2, 1), np.repeat(b, 140)))

    # ---- Pad every layer offline to MXU-friendly dims (zeros stay zeros through the net)
    padded_W, padded_b = [], []
    for i, (M, bvec) in enumerate(layers):
        PW = np.zeros((_PAD_IN[i], _PAD_OUT[i]), np.float32)
        PW[: M.shape[0], : M.shape[1]] = M
        PB = np.zeros((_PAD_OUT[i],), np.float32)
        PB[: bvec.shape[0]] = bvec
        padded_W.append(PW)
        padded_b.append(PB)

    # ---- Pack into 3 bf16 weight slabs (row-stacked, tile-aligned offsets) + 1 f32 bias row
    wA = np.concatenate([padded_W[i] for i in range(10) if _GROUP[i] == "A"], axis=0)  # (2944, 640)
    wB = np.concatenate([padded_W[i] for i in range(10) if _GROUP[i] == "B"], axis=0)  # (896, 128)
    wC = np.concatenate([padded_W[i] for i in range(10) if _GROUP[i] == "C"], axis=0)  # (640, 256)
    bias = np.concatenate(padded_b, axis=0).reshape(1, -1)                             # (1, 4480)

    return (jnp.asarray(wA, jnp.bfloat16),
            jnp.asarray(wB, jnp.bfloat16),
            jnp.asarray(wC, jnp.bfloat16),
            jnp.asarray(bias, jnp.float32))


# --------------------------------------------------------------------------------------
# The single fused Pallas kernel: 10 x (MXU matmul -> +bias -> [ReLU]) per batch tile.
# All weights live in VMEM (constant index maps); per-layer views are static ref slices.
# --------------------------------------------------------------------------------------
def _fwd_kernel(x_ref, wA_ref, wB_ref, wC_ref, b_ref, o_ref):
    wrefs = {"A": wA_ref, "B": wB_ref, "C": wC_ref}
    h = x_ref[...]                                         # (TB, 256) bf16, already cast
    last = len(_LAYER_PLAN) - 1
    for i, (g, row_off, rows, b_off, b_width, relu) in enumerate(_LAYER_PLAN):
        w = wrefs[g][row_off:row_off + rows, :]            # static, tile-aligned slice (bf16)
        y = jnp.dot(h, w, preferred_element_type=jnp.float32)
        y = y + b_ref[:, b_off:b_off + b_width]            # f32 epilogue
        if relu:
            y = jnp.maximum(y, 0.0)
        if i < last:
            h = y.astype(jnp.bfloat16)                     # feed next MXU matmul in bf16
        else:
            o_ref[...] = y                                 # (TB, 256) f32, lane-dense store


# --------------------------------------------------------------------------------------
# Wrapper: batch tiling + lane-dense padded I/O slabs.
# --------------------------------------------------------------------------------------
_T = 140
_X_LANES = 256     # lane-dense padded input width  (140 -> 256)
_O_LANES = 256     # lane-dense padded output width (140 -> 256)
_MAX_TILE = 512    # multiple of 256: fills the 256-row MXU on v6e/v7x


def _round_up(a, m):
    return -(-a // m) * m


def autoencoder_cnn_forward(fused_params, x):
    """x: (B, T=140, 1)  ->  (B, 1, 140), matching AutoencoderCNN.forward (eval mode)."""
    B, T, C = x.shape
    assert T == _T and C == 1, (T, C)
    wA, wB, wC, bias = fused_params

    # Batch tiling: rows in multiples of 16 (bf16 sublane packing).  Ensure >= 2 grid
    # steps when the padded batch allows it so v7x's second TensorCore gets work.
    b_pad = max(16, _round_up(B, 16))
    if b_pad >= 32:
        tb = min(_MAX_TILE, _round_up((b_pad + 1) // 2, 16))
    else:
        tb = b_pad
    b_pad = _round_up(b_pad, tb)
    grid = (b_pad // tb,)

    # Channels-first with Cin=1 is just a squeeze: (B, 1, 140) flat == (B, 140).
    # Build the lane-dense bf16 input slab in one pad (zeros beyond col 140 / row B).
    x2 = x.reshape(B, T).astype(jnp.bfloat16)
    x2 = jnp.pad(x2, ((0, b_pad - B), (0, _X_LANES - T)))

    in_specs = [
        pl.BlockSpec((tb, _X_LANES), lambda i: (i, 0)),    # batch tile
        pl.BlockSpec(wA.shape, lambda i: (0, 0)),          # resident weight slabs
        pl.BlockSpec(wB.shape, lambda i: (0, 0)),
        pl.BlockSpec(wC.shape, lambda i: (0, 0)),
        pl.BlockSpec(bias.shape, lambda i: (0, 0)),        # packed bias row
    ]
    # NOTE: weights use constant index maps, so Pallas fetches them once and they stay
    # resident across grid steps (single-buffering them via pl.Buffered(1) would save
    # ~4 MB VMEM but is unnecessary within the explicit 48 MiB limit below).

    out = pl.pallas_call(
        _fwd_kernel,
        out_shape=jax.ShapeDtypeStruct((b_pad, _O_LANES), jnp.float32),
        grid=grid,
        in_specs=in_specs,
        out_specs=pl.BlockSpec((tb, _O_LANES), lambda i: (i, 0)),
        compiler_params=pltpu.CompilerParams(
            dimension_semantics=("parallel",),             # shard batch tiles across TCs (v7x)
            vmem_limit_bytes=48 * 1024 * 1024,             # safe headroom on v5e/v6e/v7x
        ),
    )(x2, wA, wB, wC, bias)

    return out[:B, :T].reshape(B, 1, T)


# TODO(synk): training utilities (fit/train_epoch/test_epoch/save) and BatchNorm
# running-stat updates are out of scope; BN is folded in eval mode with fresh stats.

if __name__ == "__main__":
    key = jax.random.PRNGKey(0)
    k_params, k_x = jax.random.split(key)

    fused_params = build_fused_params(k_params, embedding_dim=64)

    # T must be 140 so the encoder flatten yields 544 features (32 * 17).
    B = 2
    x = jax.random.normal(k_x, (B, _T, 1), dtype=jnp.float32)

    out = autoencoder_cnn_forward(fused_params, x)
    out = jax.block_until_ready(out)

    assert out.shape == (B, 1, _T), out.shape
    assert bool(jnp.all(jnp.isfinite(out)))
    print("KERNEL_OK")
</pallas_src>

<mosaic_0001>
module attributes {stable_mosaic.version = 11 : i64} {
  func.func @_fwd_kernel(%arg0: i32, %arg1: memref<16x256xbf16, #tpu.memory_space<vmem>>, %arg2: memref<2944x640xbf16, #tpu.memory_space<vmem>>, %arg3: memref<896x128xbf16, #tpu.memory_space<vmem>>, %arg4: memref<640x256xbf16, #tpu.memory_space<vmem>>, %arg5: memref<1x4480xf32, #tpu.memory_space<vmem>>, %arg6: memref<16x256xf32, #tpu.memory_space<vmem>>) attributes {dimension_semantics = [#tpu.dimension_semantics<parallel>], iteration_bounds = array<i64: 1>, scalar_prefetch = 0 : i64, scratch_operands = 0 : i64, tpu.core_type = #tpu.core_type<tc>, window_params = [{transform_indices = @transform_0, window_bounds = array<i64: 16, 256>}, {pipeline_mode = #tpu.pipeline_mode<synchronous>, transform_indices = @transform_1, window_bounds = array<i64: 2944, 640>}, {pipeline_mode = #tpu.pipeline_mode<synchronous>, transform_indices = @transform_2, window_bounds = array<i64: 896, 128>}, {pipeline_mode = #tpu.pipeline_mode<synchronous>, transform_indices = @transform_3, window_bounds = array<i64: 640, 256>}, {pipeline_mode = #tpu.pipeline_mode<synchronous>, transform_indices = @transform_4, window_bounds = array<i64: 1, 4480>}, {transform_indices = @transform_5, window_bounds = array<i64: 16, 256>}]} {
    %c0 = arith.constant 0 : index
    %c0_0 = arith.constant 0 : index
    %0 = vector.load %arg1[%c0, %c0_0] : memref<16x256xbf16, #tpu.memory_space<vmem>>, vector<16x256xbf16>
    %c0_1 = arith.constant 0 : index
    %c0_2 = arith.constant 0 : index
    %1 = vector.load %arg2[%c0_1, %c0_2] : memref<2944x640xbf16, #tpu.memory_space<vmem>>, vector<256x640xbf16>
    %cst = arith.constant dense<0.000000e+00> : vector<16x640xf32>
    %2 = tpu.matmul %0, %1, %cst {dimension_numbers = #tpu.dot_dimension_numbers<[1], [0], [0], [1], [0, 0, 1, 1], [], []>} : vector<16x256xbf16>, vector<256x640xbf16>, vector<16x640xf32> -> vector<16x640xf32>
    %c0_3 = arith.constant 0 : index
    %c0_4 = arith.constant 0 : index
    %3 = vector.load %arg5[%c0_3, %c0_4] : memref<1x4480xf32, #tpu.memory_space<vmem>>, vector<1x640xf32>
    %4 = vector.broadcast %3 : vector<1x640xf32> to vector<16x640xf32>
    %5 = arith.addf %2, %4 : vector<16x640xf32>
    %cst_5 = arith.constant 0.000000e+00 : f32
    %6 = vector.broadcast %cst_5 : f32 to vector<16x640xf32>
    %7 = arith.maximumf %5, %6 : vector<16x640xf32>
    %8 = arith.truncf %7 : vector<16x640xf32> to vector<16x640xbf16>
    %c256 = arith.constant 256 : index
    %c0_6 = arith.constant 0 : index
    %9 = vector.load %arg2[%c256, %c0_6] : memref<2944x640xbf16, #tpu.memory_space<vmem>>, vector<640x640xbf16>
    %cst_7 = arith.constant dense<0.000000e+00> : vector<16x640xf32>
    %10 = tpu.matmul %8, %9, %cst_7 {dimension_numbers = #tpu.dot_dimension_numbers<[1], [0], [0], [1], [0, 0, 1, 1], [], []>} : vector<16x640xbf16>, vector<640x640xbf16>, vector<16x640xf32> -> vector<16x640xf32>
    %c0_8 = arith.constant 0 : index
    %c640 = arith.constant 640 : index
    %11 = vector.load %arg5[%c0_8, %c640] : memref<1x4480xf32, #tpu.memory_space<vmem>>, vector<1x640xf32>
    %12 = vector.broadcast %11 : vector<1x640xf32> to vector<16x640xf32>
    %13 = arith.addf %10, %12 : vector<16x640xf32>
    %cst_9 = arith.constant 0.000000e+00 : f32
    %14 = vector.broadcast %cst_9 : f32 to vector<16x640xf32>
    %15 = arith.maximumf %13, %14 : vector<16x640xf32>
    %16 = arith.truncf %15 : vector<16x640xf32> to vector<16x640xbf16>
    %c896 = arith.constant 896 : index
    %c0_10 = arith.constant 0 : index
    %17 = vector.load %arg2[%c896, %c0_10] : memref<2944x640xbf16, #tpu.memory_space<vmem>>, vector<640x640xbf16>
    %cst_11 = arith.constant dense<0.000000e+00> : vector<16x640xf32>
    %18 = tpu.matmul %16, %17, %cst_11 {dimension_numbers = #tpu.dot_dimension_numbers<[1], [0], [0], [1], [0, 0, 1, 1], [], []>} : vector<16x640xbf16>, vector<640x640xbf16>, vector<16x640xf32> -> vector<16x640xf32>
    %c0_12 = arith.constant 0 : index
    %c1280 = arith.constant 1280 : index
    %19 = vector.load %arg5[%c0_12, %c1280] : memref<1x4480xf32, #tpu.memory_space<vmem>>, vector<1x640xf32>
    %20 = vector.broadcast %19 : vector<1x640xf32> to vector<16x640xf32>
    %21 = arith.addf %18, %20 : vector<16x640xf32>
    %cst_13 = arith.constant 0.000000e+00 : f32
    %22 = vector.broadcast %cst_13 : f32 to vector<16x640xf32>
    %23 = arith.maximumf %21, %22 : vector<16x640xf32>
    %24 = arith.truncf %23 : vector<16x640xf32> to vector<16x640xbf16>
    %c0_14 = arith.constant 0 : index
    %c0_15 = arith.constant 0 : index
    %25 = vector.load %arg3[%c0_14, %c0_15] : memref<896x128xbf16, #tpu.memory_space<vmem>>, vector<640x128xbf16>
    %cst_16 = arith.constant dense<0.000000e+00> : vector<16x128xf32>
    %26 = tpu.matmul %24, %25, %cst_16 {dimension_numbers = #tpu.dot_dimension_numbers<[1], [0], [0], [1], [0, 0, 1, 1], [], []>} : vector<16x640xbf16>, vector<640x128xbf16>, vector<16x128xf32> -> vector<16x128xf32>
    %c0_17 = arith.constant 0 : index
    %c1920 = arith.constant 1920 : index
    %27 = vector.load %arg5[%c0_17, %c1920] : memref<1x4480xf32, #tpu.memory_space<vmem>>, vector<1x128xf32>
    %28 = vector.broadcast %27 : vector<1x128xf32> to vector<16x128xf32>
    %29 = arith.addf %26, %28 : vector<16x128xf32>
    %cst_18 = arith.constant 0.000000e+00 : f32
    %30 = vector.broadcast %cst_18 : f32 to vector<16x128xf32>
    %31 = arith.maximumf %29, %30 : vector<16x128xf32>
    %32 = arith.truncf %31 : vector<16x128xf32> to vector<16x128xbf16>
    %c640_19 = arith.constant 640 : index
    %c0_20 = arith.constant 0 : index
    %33 = vector.load %arg3[%c640_19, %c0_20] : memref<896x128xbf16, #tpu.memory_space<vmem>>, vector<128x128xbf16>
    %cst_21 = arith.constant dense<0.000000e+00> : vector<16x128xf32>
    %34 = tpu.matmul %32, %33, %cst_21 {dimension_numbers = #tpu.dot_dimension_numbers<[1], [0], [0], [1], [0, 0, 1, 1], [], []>} : vector<16x128xbf16>, vector<128x128xbf16>, vector<16x128xf32> -> vector<16x128xf32>
    %c0_22 = arith.constant 0 : index
    %c2048 = arith.constant 2048 : index
    %35 = vector.load %arg5[%c0_22, %c2048] : memref<1x4480xf32, #tpu.memory_space<vmem>>, vector<1x128xf32>
    %36 = vector.broadcast %35 : vector<1x128xf32> to vector<16x128xf32>
    %37 = arith.addf %34, %36 : vector<16x128xf32>
    %38 = arith.truncf %37 : vector<16x128xf32> to vector<16x128xbf16>
    %c768 = arith.constant 768 : index
    %c0_23 = arith.constant 0 : index
    %39 = vector.load %arg3[%c768, %c0_23] : memref<896x128xbf16, #tpu.memory_space<vmem>>, vector<128x128xbf16>
    %cst_24 = arith.constant dense<0.000000e+00> : vector<16x128xf32>
    %40 = tpu.matmul %38, %39, %cst_24 {dimension_numbers = #tpu.dot_dimension_numbers<[1], [0], [0], [1], [0, 0, 1, 1], [], []>} : vector<16x128xbf16>, vector<128x128xbf16>, vector<16x128xf32> -> vector<16x128xf32>
    %c0_25 = arith.constant 0 : index
    %c2176 = arith.constant 2176 : index
    %41 = vector.load %arg5[%c0_25, %c2176] : memref<1x4480xf32, #tpu.memory_space<vmem>>, vector<1x128xf32>
    %42 = vector.broadcast %41 : vector<1x128xf32> to vector<16x128xf32>
    %43 = arith.addf %40, %42 : vector<16x128xf32>
    %cst_26 = arith.constant 0.000000e+00 : f32
    %44 = vector.broadcast %cst_26 : f32 to vector<16x128xf32>
    %45 = arith.maximumf %43, %44 : vector<16x128xf32>
    %46 = arith.truncf %45 : vector<16x128xf32> to vector<16x128xbf16>
    %c1536 = arith.constant 1536 : index
    %c0_27 = arith.constant 0 : index
    %47 = vector.load %arg2[%c1536, %c0_27] : memref<2944x640xbf16, #tpu.memory_space<vmem>>, vector<128x640xbf16>
    %cst_28 = arith.constant dense<0.000000e+00> : vector<16x640xf32>
    %48 = tpu.matmul %46, %47, %cst_28 {dimension_numbers = #tpu.dot_dimension_numbers<[1], [0], [0], [1], [0, 0, 1, 1], [], []>} : vector<16x128xbf16>, vector<128x640xbf16>, vector<16x640xf32> -> vector<16x640xf32>
    %c0_29 = arith.constant 0 : index
    %c2304 = arith.constant 2304 : index
    %49 = vector.load %arg5[%c0_29, %c2304] : memref<1x4480xf32, #tpu.memory_space<vmem>>, vector<1x640xf32>
    %50 = vector.broadcast %49 : vector<1x640xf32> to vector<16x640xf32>
    %51 = arith.addf %48, %50 : vector<16x640xf32>
    %52 = arith.truncf %51 : vector<16x640xf32> to vector<16x640xbf16>
    %c1664 = arith.constant 1664 : index
    %c0_30 = arith.constant 0 : index
    %53 = vector.load %arg2[%c1664, %c0_30] : memref<2944x640xbf16, #tpu.memory_space<vmem>>, vector<640x640xbf16>
    %cst_31 = arith.constant dense<0.000000e+00> : vector<16x640xf32>
    %54 = tpu.matmul %52, %53, %cst_31 {dimension_numbers = #tpu.dot_dimension_numbers<[1], [0], [0], [1], [0, 0, 1, 1], [], []>} : vector<16x640xbf16>, vector<640x640xbf16>, vector<16x640xf32> -> vector<16x640xf32>
    %c0_32 = arith.constant 0 : index
    %c2944 = arith.constant 2944 : index
    %55 = vector.load %arg5[%c0_32, %c2944] : memref<1x4480xf32, #tpu.memory_space<vmem>>, vector<1x640xf32>
    %56 = vector.broadcast %55 : vector<1x640xf32> to vector<16x640xf32>
    %57 = arith.addf %54, %56 : vector<16x640xf32>
    %cst_33 = arith.constant 0.000000e+00 : f32
    %58 = vector.broadcast %cst_33 : f32 to vector<16x640xf32>
    %59 = arith.maximumf %57, %58 : vector<16x640xf32>
    %60 = arith.truncf %59 : vector<16x640xf32> to vector<16x640xbf16>
    %c2304_34 = arith.constant 2304 : index
    %c0_35 = arith.constant 0 : index
    %61 = vector.load %arg2[%c2304_34, %c0_35] : memref<2944x640xbf16, #tpu.memory_space<vmem>>, vector<640x640xbf16>
    %cst_36 = arith.constant dense<0.000000e+00> : vector<16x640xf32>
    %62 = tpu.matmul %60, %61, %cst_36 {dimension_numbers = #tpu.dot_dimension_numbers<[1], [0], [0], [1], [0, 0, 1, 1], [], []>} : vector<16x640xbf16>, vector<640x640xbf16>, vector<16x640xf32> -> vector<16x640xf32>
    %c0_37 = arith.constant 0 : index
    %c3584 = arith.constant 3584 : index
    %63 = vector.load %arg5[%c0_37, %c3584] : memref<1x4480xf32, #tpu.memory_space<vmem>>, vector<1x640xf32>
    %64 = vector.broadcast %63 : vector<1x640xf32> to vector<16x640xf32>
    %65 = arith.addf %62, %64 : vector<16x640xf32>
    %cst_38 = arith.constant 0.000000e+00 : f32
    %66 = vector.broadcast %cst_38 : f32 to vector<16x640xf32>
    %67 = arith.maximumf %65, %66 : vector<16x640xf32>
    %68 = arith.truncf %67 : vector<16x640xf32> to vector<16x640xbf16>
    %c0_39 = arith.constant 0 : index
    %c0_40 = arith.constant 0 : index
    %69 = vector.load %arg4[%c0_39, %c0_40] : memref<640x256xbf16, #tpu.memory_space<vmem>>, vector<640x256xbf16>
    %cst_41 = arith.constant dense<0.000000e+00> : vector<16x256xf32>
    %70 = tpu.matmul %68, %69, %cst_41 {dimension_numbers = #tpu.dot_dimension_numbers<[1], [0], [0], [1], [0, 0, 1, 1], [], []>} : vector<16x640xbf16>, vector<640x256xbf16>, vector<16x256xf32> -> vector<16x256xf32>
    %c0_42 = arith.constant 0 : index
    %c4224 = arith.constant 4224 : index
    %71 = vector.load %arg5[%c0_42, %c4224] : memref<1x4480xf32, #tpu.memory_space<vmem>>, vector<1x256xf32>
    %72 = vector.broadcast %71 : vector<1x256xf32> to vector<16x256xf32>
    %73 = arith.addf %70, %72 : vector<16x256xf32>
    %c0_43 = arith.constant 0 : index
    %c0_44 = arith.constant 0 : index
    %74 = vector.load %arg6[%c0_43, %c0_44] : memref<16x256xf32, #tpu.memory_space<vmem>>, vector<16x256xf32>
    tpu.vector_store %arg6[%c0_43, %c0_44], %73 {strides = array<i32>} : memref<16x256xf32, #tpu.memory_space<vmem>>, vector<16x256xf32>,
    return
  }
  func.func @transform_0(%arg0: i32) -> (i32, i32) {
    %c0_i32 = arith.constant 0 : i32
    %c0_i32_0 = arith.constant 0 : i32
    return %arg0, %c0_i32 : i32, i32
  }
  func.func @transform_1(%arg0: i32) -> (i32, i32) {
    %c0_i32 = arith.constant 0 : i32
    %c0_i32_0 = arith.constant 0 : i32
    %c0_i32_1 = arith.constant 0 : i32
    return %c0_i32, %c0_i32_0 : i32, i32
  }
  func.func @transform_2(%arg0: i32) -> (i32, i32) {
    %c0_i32 = arith.constant 0 : i32
    %c0_i32_0 = arith.constant 0 : i32
    %c0_i32_1 = arith.constant 0 : i32
    return %c0_i32, %c0_i32_0 : i32, i32
  }
  func.func @transform_3(%arg0: i32) -> (i32, i32) {
    %c0_i32 = arith.constant 0 : i32
    %c0_i32_0 = arith.constant 0 : i32
    %c0_i32_1 = arith.constant 0 : i32
    return %c0_i32, %c0_i32_0 : i32, i32
  }
  func.func @transform_4(%arg0: i32) -> (i32, i32) {
    %c0_i32 = arith.constant 0 : i32
    %c0_i32_0 = arith.constant 0 : i32
    %c0_i32_1 = arith.constant 0 : i32
    return %c0_i32, %c0_i32_0 : i32, i32
  }
  func.func @transform_5(%arg0: i32) -> (i32, i32) {
    %c0_i32 = arith.constant 0 : i32
    %c0_i32_0 = arith.constant 0 : i32
    return %arg0, %c0_i32 : i32, i32
  }
}

</mosaic_0001>

<llo_original>
// kernel: tpu_custom_call.1
$region0: #{tpu_custom_call.1}
  #allocation0 [shape = 'u32[]', space=smem, size = 0x4, offset = 0x4, fixed_abs, tag = 'smem constant byte address 0x4 - core index']
  #allocation1 [shape = 'u32[72,128]{1,0:T(1,128)}', space=vmem, size = 0x9000, scoped, tag = 'internal scratch']
  %s0 = inlined_call_operand.hbm [shape: bf16[16,256], index: 0, kind: input, shape index: {}]
  %s1 = inlined_call_operand.hbm [shape: bf16[2944,640], index: 1, kind: input, shape index: {}]
  %s2 = inlined_call_operand.hbm [shape: bf16[896,128], index: 2, kind: input, shape index: {}]
  %s3 = inlined_call_operand.hbm [shape: bf16[640,256], index: 3, kind: input, shape index: {}]
  %s4 = inlined_call_operand.hbm [shape: f32[1,4480], index: 4, kind: input, shape index: {}]
  %s5 = inlined_call_operand.hbm [shape: f32[16,256], index: 5, kind: output, shape index: {}]
  %s6 = sld [smem:[#allocation0]]
  $region50: #{tpu_custom_call.1} parent=0
    _
  %s8 = ssub.s32 1, %s6
  %s9 = scalar_select 0, %s8, %s6
  $region1: #{tpu_custom_call.1} parent=0
    #allocation2 [shape = 'u8[8192]{0}', space=vmem, size = 0x2000, scoped, tag = 'input window, operand 0, single buffered']
    #allocation3 [shape = 's32[1]{0}', space=sflag, size = 0x4, scoped, tag = 'scoped memory for tpu_custom_call.1']
    #allocation4 [shape = 's32[1]{0}', space=sflag, size = 0x4, scoped, tag = 'scoped memory for tpu_custom_call.1']
    #allocation5 [shape = 'u8[3768320]{0}', space=vmem, size = 0x398000, scoped, tag = 'input window, operand 1, single buffered']
    #allocation6 [shape = 's32[1]{0}', space=sflag, size = 0x4, scoped, tag = 'scoped memory for tpu_custom_call.1']
    #allocation7 [shape = 'u8[229376]{0}', space=vmem, size = 0x38000, scoped, tag = 'input window, operand 2, single buffered']
    #allocation8 [shape = 'u8[327680]{0}', space=vmem, size = 0x50000, scoped, tag = 'input window, operand 3, single buffered']
    #allocation9 [shape = 's32[1]{0}', space=sflag, size = 0x4, scoped, tag = 'scoped memory for tpu_custom_call.1']
    #allocation10 [shape = 'u8[17920]{0}', space=vmem, size = 0x4800, scoped, tag = 'input window, operand 4, single buffered']
    #allocation11 [shape = 'u8[16384]{0}', space=vmem, size = 0x4000, scoped, tag = 'output window, operand 0, single buffered']
    %10 = vsyncpa [#allocation3], 0
    %11 = vsyncpa [#allocation6], 0
    %12 = vsyncpa [#allocation9], 0
    %13 = vsyncpa [#allocation4], 0
    // Predicated region
    $region2: #{tpu_custom_call.1} parent=1 // pred_check
      _
    $region3: #{tpu_custom_call.1} parent=1 // pred_check_branch
      %15 = sbr.rel (0) target = $region5
    $region4: #{tpu_custom_call.1} parent=1 // pred_region
      %17 = vsyncadd [#allocation3], 0
      %s18 = sshll.u32 %s0, 4
      %s19 = int_to_ptr.hbm [resolvable:$true] %s18
      %s20 = sshll.u32 [#allocation2], 4
      %s21 = int_to_ptr.vmem [resolvable:$true] %s20
      %26 = dma.hbm_to_vmem [thread:$0]  %s19, 256, %s21, [#allocation3], 128, 128, 8
    $region5: #{tpu_custom_call.1} parent=1 // pred_fallthru
      _
    // Predicated region
    $region6: #{tpu_custom_call.1} parent=1 // pred_check
      _
    $region7: #{tpu_custom_call.1} parent=1 // pred_check_branch
      %28 = sbr.rel (0) target = $region9
    $region8: #{tpu_custom_call.1} parent=1 // pred_region
      %30 = vsyncadd [#allocation6], 0
      %s31 = sshll.u32 %s1, 4
      %s32 = int_to_ptr.hbm [resolvable:$true] %s31
      %s33 = sshll.u32 [#allocation5], 4
      %s34 = int_to_ptr.vmem [resolvable:$true] %s33
      %39 = dma.hbm_to_vmem [thread:$0]  %s32, 117760, %s34, [#allocation6], 320, 320, 20
    $region9: #{tpu_custom_call.1} parent=1 // pred_fallthru
      _
    // Predicated region
    $region10: #{tpu_custom_call.1} parent=1 // pred_check
      _
    $region11: #{tpu_custom_call.1} parent=1 // pred_check_branch
      %41 = sbr.rel (0) target = $region13
    $region12: #{tpu_custom_call.1} parent=1 // pred_region
      %43 = vsyncadd [#allocation6], 0
      %s44 = sshll.u32 %s2, 4
      %s45 = int_to_ptr.hbm [resolvable:$true] %s44
      %s46 = sshll.u32 [#allocation7], 4
      %s47 = int_to_ptr.vmem [resolvable:$true] %s46
      %52 = dma.hbm_to_vmem [thread:$0]  %s45, 7168, %s47, [#allocation6], 64, 64, 4
    $region13: #{tpu_custom_call.1} parent=1 // pred_fallthru
      _
    // Predicated region
    $region14: #{tpu_custom_call.1} parent=1 // pred_check
      _
    $region15: #{tpu_custom_call.1} parent=1 // pred_check_branch
      %54 = sbr.rel (0) target = $region17
    $region16: #{tpu_custom_call.1} parent=1 // pred_region
      %56 = vsyncadd [#allocation9], 0
      %s57 = sshll.u32 %s3, 4
      %s58 = int_to_ptr.hbm [resolvable:$true] %s57
      %s59 = sshll.u32 [#allocation8], 4
      %s60 = int_to_ptr.vmem [resolvable:$true] %s59
      %65 = dma.hbm_to_vmem [thread:$0]  %s58, 10240, %s60, [#allocation9], 128, 128, 8
    $region17: #{tpu_custom_call.1} parent=1 // pred_fallthru
      _
    // Predicated region
    $region18: #{tpu_custom_call.1} parent=1 // pred_check
      _
    $region19: #{tpu_custom_call.1} parent=1 // pred_check_branch
      %67 = sbr.rel (0) target = $region21
    $region20: #{tpu_custom_call.1} parent=1 // pred_region
      %69 = vsyncadd [#allocation9], 0
      %s71 = sshll.u32 %s4, 4
      %s72 = int_to_ptr.hbm [resolvable:$true] %s71
      %s73 = sshll.u32 [#allocation10], 4
      %s74 = int_to_ptr.vmem [resolvable:$true] %s73
      %76 = dma.hbm_to_vmem [thread:$0]  %s72, 560, %s74, [#allocation9]
    $region21: #{tpu_custom_call.1} parent=1 // pred_fallthru
      _
    // Predicated region
    $region22: #{tpu_custom_call.1} parent=1 // pred_check
      _
    $region23: #{tpu_custom_call.1} parent=1 // pred_check_branch
      %78 = sbr.rel (0) target = $region25
    $region24: #{tpu_custom_call.1} parent=1 // pred_region
      %80 = dma.done [#allocation3], 256
    $region25: #{tpu_custom_call.1} parent=1 // pred_fallthru
      _
    // Predicated region
    $region26: #{tpu_custom_call.1} parent=1 // pred_check
      _
    $region27: #{tpu_custom_call.1} parent=1 // pred_check_branch
      %82 = sbr.rel (0) target = $region29
    $region28: #{tpu_custom_call.1} parent=1 // pred_region
      %84 = dma.done [#allocation6], 117760
    $region29: #{tpu_custom_call.1} parent=1 // pred_fallthru
      _
    // Predicated region
    $region30: #{tpu_custom_call.1} parent=1 // pred_check
      _
    $region31: #{tpu_custom_call.1} parent=1 // pred_check_branch
      %86 = sbr.rel (0) target = $region33
    $region32: #{tpu_custom_call.1} parent=1 // pred_region
      %88 = dma.done [#allocation6], 7168
    $region33: #{tpu_custom_call.1} parent=1 // pred_fallthru
      _
    // Predicated region
    $region34: #{tpu_custom_call.1} parent=1 // pred_check
      _
    $region35: #{tpu_custom_call.1} parent=1 // pred_check_branch
      %90 = sbr.rel (0) target = $region37
    $region36: #{tpu_custom_call.1} parent=1 // pred_region
      %92 = dma.done [#allocation9], 10240
    $region37: #{tpu_custom_call.1} parent=1 // pred_fallthru
      _
    // Predicated region
    $region38: #{tpu_custom_call.1} parent=1 // pred_check
      _
    $region39: #{tpu_custom_call.1} parent=1 // pred_check_branch
      %94 = sbr.rel (0) target = $region41
    $region40: #{tpu_custom_call.1} parent=1 // pred_region
      %96 = dma.done [#allocation9], 560
    $region41: #{tpu_custom_call.1} parent=1 // pred_fallthru
      _
    %v97 = vld [vmem:[#allocation2] sm:$0xff]
    %v98 = vld [vmem:[#allocation2 + $0x8] sm:$0xff]
    %v99 = vld [vmem:[#allocation5] sm:$0xff]
    %v100 = vld [vmem:[#allocation5 + $0x8] sm:$0xff]
    %v101 = vld [vmem:[#allocation5 + $0x10] sm:$0xf]
    %v102 = vld [vmem:[#allocation5 + $0x14] sm:$0xff]
    %v103 = vld [vmem:[#allocation5 + $0x1c] sm:$0xff]
    %v104 = vld [vmem:[#allocation5 + $0x24] sm:$0xf]
    %v105 = vld [vmem:[#allocation5 + $0x28] sm:$0xff]
    %v106 = vld [vmem:[#allocation5 + $0x30] sm:$0xff]
    %v107 = vld [vmem:[#allocation5 + $0x38] sm:$0xf]
    %v108 = vld [vmem:[#allocation5 + $0x3c] sm:$0xff]
    %v109 = vld [vmem:[#allocation5 + $0x44] sm:$0xff]
    %v110 = vld [vmem:[#allocation5 + $0x4c] sm:$0xf]
    %v111 = vld [vmem:[#allocation5 + $0x50] sm:$0xff]
    %v112 = vld [vmem:[#allocation5 + $0x58] sm:$0xff]
    %v113 = vld [vmem:[#allocation5 + $0x60] sm:$0xf]
    %v114 = vld [vmem:[#allocation5 + $0x64] sm:$0xff]
    %v115 = vld [vmem:[#allocation5 + $0x6c] sm:$0xff]
    %v116 = vld [vmem:[#allocation5 + $0x74] sm:$0xf]
    %v117 = vld [vmem:[#allocation5 + $0x78] sm:$0xff]
    %v118 = vld [vmem:[#allocation5 + $0x80] sm:$0xff]
    %v119 = vld [vmem:[#allocation5 + $0x88] sm:$0xf]
    %v120 = vld [vmem:[#allocation5 + $0x8c] sm:$0xff]
    %v121 = vld [vmem:[#allocation5 + $0x94] sm:$0xff]
    %v122 = vld [vmem:[#allocation5 + $0x9c] sm:$0xf]
    %v123 = vld [vmem:[#allocation5 + $0xa0] sm:$0xff]
    %v124 = vld [vmem:[#allocation5 + $0xa8] sm:$0xff]
    %v125 = vld [vmem:[#allocation5 + $0xb0] sm:$0xf]
    %v126 = vld [vmem:[#allocation5 + $0xb4] sm:$0xff]
    %v127 = vld [vmem:[#allocation5 + $0xbc] sm:$0xff]
    %v128 = vld [vmem:[#allocation5 + $0xc4] sm:$0xf]
    %v129 = vld [vmem:[#allocation5 + $0xc8] sm:$0xff]
    %v130 = vld [vmem:[#allocation5 + $0xd0] sm:$0xff]
    %v131 = vld [vmem:[#allocation5 + $0xd8] sm:$0xf]
    %v132 = vld [vmem:[#allocation5 + $0xdc] sm:$0xff]
    %v133 = vld [vmem:[#allocation5 + $0xe4] sm:$0xff]
    %v134 = vld [vmem:[#allocation5 + $0xec] sm:$0xf]
    %v135 = vld [vmem:[#allocation5 + $0xf0] sm:$0xff]
    %v136 = vld [vmem:[#allocation5 + $0xf8] sm:$0xff]
    %v137 = vld [vmem:[#allocation5 + $0x100] sm:$0xf]
    %v138 = vld [vmem:[#allocation5 + $0x104] sm:$0xff]
    %v139 = vld [vmem:[#allocation5 + $0x10c] sm:$0xff]
    %v140 = vld [vmem:[#allocation5 + $0x114] sm:$0xf]
    %v141 = vld [vmem:[#allocation5 + $0x118] sm:$0xff]
    %v142 = vld [vmem:[#allocation5 + $0x120] sm:$0xff]
    %v143 = vld [vmem:[#allocation5 + $0x128] sm:$0xf]
    %v144 = vld [vmem:[#allocation5 + $0x12c] sm:$0xff]
    %v145 = vld [vmem:[#allocation5 + $0x134] sm:$0xff]
    %v146 = vld [vmem:[#allocation5 + $0x13c] sm:$0xf]
    %v147 = vld [vmem:[#allocation5 + $0x140] sm:$0xff]
    %v148 = vld [vmem:[#allocation5 + $0x148] sm:$0xff]
    %v149 = vld [vmem:[#allocation5 + $0x150] sm:$0xf]
    %v150 = vld [vmem:[#allocation5 + $0x154] sm:$0xff]
    %v151 = vld [vmem:[#allocation5 + $0x15c] sm:$0xff]
    %v152 = vld [vmem:[#allocation5 + $0x164] sm:$0xf]
    %v153 = vld [vmem:[#allocation5 + $0x168] sm:$0xff]
    %v154 = vld [vmem:[#allocation5 + $0x170] sm:$0xff]
    %v155 = vld [vmem:[#allocation5 + $0x178] sm:$0xf]
    %v156 = vld [vmem:[#allocation5 + $0x17c] sm:$0xff]
    %v157 = vld [vmem:[#allocation5 + $0x184] sm:$0xff]
    %v158 = vld [vmem:[#allocation5 + $0x18c] sm:$0xf]
    %v159 = vld [vmem:[#allocation5 + $0x190] sm:$0xff]
    %v160 = vld [vmem:[#allocation5 + $0x198] sm:$0xff]
    %v161 = vld [vmem:[#allocation5 + $0x1a0] sm:$0xf]
    %v162 = vld [vmem:[#allocation5 + $0x1a4] sm:$0xff]
    %v163 = vld [vmem:[#allocation5 + $0x1ac] sm:$0xff]
    %v164 = vld [vmem:[#allocation5 + $0x1b4] sm:$0xf]
    %v165 = vld [vmem:[#allocation5 + $0x1b8] sm:$0xff]
    %v166 = vld [vmem:[#allocation5 + $0x1c0] sm:$0xff]
    %v167 = vld [vmem:[#allocation5 + $0x1c8] sm:$0xf]
    %v168 = vld [vmem:[#allocation5 + $0x1cc] sm:$0xff]
    %v169 = vld [vmem:[#allocation5 + $0x1d4] sm:$0xff]
    %v170 = vld [vmem:[#allocation5 + $0x1dc] sm:$0xf]
    %v171 = vld [vmem:[#allocation5 + $0x1e0] sm:$0xff]
    %v172 = vld [vmem:[#allocation5 + $0x1e8] sm:$0xff]
    %v173 = vld [vmem:[#allocation5 + $0x1f0] sm:$0xf]
    %v174 = vld [vmem:[#allocation5 + $0x1f4] sm:$0xff]
    %v175 = vld [vmem:[#allocation5 + $0x1fc] sm:$0xff]
    %v176 = vld [vmem:[#allocation5 + $0x204] sm:$0xf]
    %v177 = vld [vmem:[#allocation5 + $0x208] sm:$0xff]
    %v178 = vld [vmem:[#allocation5 + $0x210] sm:$0xff]
    %v179 = vld [vmem:[#allocation5 + $0x218] sm:$0xf]
    %v180 = vld [vmem:[#allocation5 + $0x21c] sm:$0xff]
    %v181 = vld [vmem:[#allocation5 + $0x224] sm:$0xff]
    %v182 = vld [vmem:[#allocation5 + $0x22c] sm:$0xf]
    %v183 = vld [vmem:[#allocation5 + $0x230] sm:$0xff]
    %v184 = vld [vmem:[#allocation5 + $0x238] sm:$0xff]
    %v185 = vld [vmem:[#allocation5 + $0x240] sm:$0xf]
    %v186 = vld [vmem:[#allocation5 + $0x244] sm:$0xff]
    %v187 = vld [vmem:[#allocation5 + $0x24c] sm:$0xff]
    %v188 = vld [vmem:[#allocation5 + $0x254] sm:$0xf]
    %v189 = vld [vmem:[#allocation5 + $0x258] sm:$0xff]
    %v190 = vld [vmem:[#allocation5 + $0x260] sm:$0xff]
    %v191 = vld [vmem:[#allocation5 + $0x268] sm:$0xf]
    %v192 = vld [vmem:[#allocation5 + $0x26c] sm:$0xff]
    %v193 = vld [vmem:[#allocation5 + $0x274] sm:$0xff]
    %v194 = vld [vmem:[#allocation5 + $0x27c] sm:$0xf]
    %v195 = vld [vmem:[#allocation10] sm:$0x1f]
    %v197 = vperm.slane %v195, 0
    %v198 = vperm.slane %v195, 1
    %v199 = vperm.slane %v195, 2
    %v200 = vperm.slane %v195, 3
    %v201 = vperm.slane %v195, 4
    %v209 = vunpack.c.l.b16 %v97
    %v210 = vunpack.c.h.b16 %v97
    %v211 = vunpack.c.l.b16 %v98
    %v212 = vunpack.c.h.b16 %v98
    %v213 = vpack.c.b16 %v211, %v209
    %v214 = vpack.c.b16 %v212, %v210
    %v313 = vunpack.c.l.b16 %v99
    %v314 = vunpack.c.h.b16 %v99
    %v315 = vunpack.c.l.b16 %v100
    %v316 = vunpack.c.h.b16 %v100
    %v317 = vunpack.c.l.b16 %v101
    %v318 = vunpack.c.l.b16 %v102
    %v319 = vunpack.c.h.b16 %v102
    %v320 = vunpack.c.l.b16 %v103
    %v321 = vunpack.c.h.b16 %v103
    %v322 = vunpack.c.l.b16 %v104
    %v323 = vunpack.c.l.b16 %v105
    %v324 = vunpack.c.h.b16 %v105
    %v325 = vunpack.c.l.b16 %v106
    %v326 = vunpack.c.h.b16 %v106
    %v327 = vunpack.c.l.b16 %v107
    %v328 = vunpack.c.l.b16 %v108
    %v329 = vunpack.c.h.b16 %v108
    %v330 = vunpack.c.l.b16 %v109
    %v331 = vunpack.c.h.b16 %v109
    %v332 = vunpack.c.l.b16 %v110
    %v333 = vunpack.c.l.b16 %v111
    %v334 = vunpack.c.h.b16 %v111
    %v335 = vunpack.c.l.b16 %v112
    %v336 = vunpack.c.h.b16 %v112
    %v337 = vunpack.c.l.b16 %v113
    %v338 = vunpack.c.l.b16 %v114
    %v339 = vunpack.c.h.b16 %v114
    %v340 = vunpack.c.l.b16 %v115
    %v341 = vunpack.c.h.b16 %v115
    %v342 = vunpack.c.l.b16 %v116
    %v343 = vunpack.c.l.b16 %v117
    %v344 = vunpack.c.h.b16 %v117
    %v345 = vunpack.c.l.b16 %v118
    %v346 = vunpack.c.h.b16 %v118
    %v347 = vunpack.c.l.b16 %v119
    %v348 = vunpack.c.l.b16 %v120
    %v349 = vunpack.c.h.b16 %v120
    %v350 = vunpack.c.l.b16 %v121
    %v351 = vunpack.c.h.b16 %v121
    %v352 = vunpack.c.l.b16 %v122
    %v353 = vunpack.c.l.b16 %v123
    %v354 = vunpack.c.h.b16 %v123
    %v355 = vunpack.c.l.b16 %v124
    %v356 = vunpack.c.h.b16 %v124
    %v357 = vunpack.c.l.b16 %v125
    %v358 = vunpack.c.l.b16 %v126
    %v359 = vunpack.c.h.b16 %v126
    %v360 = vunpack.c.l.b16 %v127
    %v361 = vunpack.c.h.b16 %v127
    %v362 = vunpack.c.l.b16 %v128
    %v363 = vunpack.c.l.b16 %v129
    %v364 = vunpack.c.h.b16 %v129
    %v365 = vunpack.c.l.b16 %v130
    %v366 = vunpack.c.h.b16 %v130
    %v367 = vunpack.c.l.b16 %v131
    %v368 = vunpack.c.l.b16 %v132
    %v369 = vunpack.c.h.b16 %v132
    %v370 = vunpack.c.l.b16 %v133
    %v371 = vunpack.c.h.b16 %v133
    %v372 = vunpack.c.l.b16 %v134
    %v373 = vunpack.c.l.b16 %v135
    %v374 = vunpack.c.h.b16 %v135
    %v375 = vunpack.c.l.b16 %v136
    %v376 = vunpack.c.h.b16 %v136
    %v377 = vunpack.c.l.b16 %v137
    %v378 = vunpack.c.l.b16 %v138
    %v379 = vunpack.c.h.b16 %v138
    %v380 = vunpack.c.l.b16 %v139
    %v381 = vunpack.c.h.b16 %v139
    %v382 = vunpack.c.l.b16 %v140
    %v383 = vunpack.c.l.b16 %v141
    %v384 = vunpack.c.h.b16 %v141
    %v385 = vunpack.c.l.b16 %v142
    %v386 = vunpack.c.h.b16 %v142
    %v387 = vunpack.c.l.b16 %v143
    %v388 = vunpack.c.l.b16 %v144
    %v389 = vunpack.c.h.b16 %v144
    %v390 = vunpack.c.l.b16 %v145
    %v391 = vunpack.c.h.b16 %v145
    %v392 = vunpack.c.l.b16 %v146
    %v393 = vunpack.c.l.b16 %v147
    %v394 = vunpack.c.h.b16 %v147
    %v395 = vunpack.c.l.b16 %v148
    %v396 = vunpack.c.h.b16 %v148
    %v397 = vunpack.c.l.b16 %v149
    %v398 = vunpack.c.l.b16 %v150
    %v399 = vunpack.c.h.b16 %v150
    %v400 = vunpack.c.l.b16 %v151
    %v401 = vunpack.c.h.b16 %v151
    %v402 = vunpack.c.l.b16 %v152
    %v403 = vunpack.c.l.b16 %v153
    %v404 = vunpack.c.h.b16 %v153
    %v405 = vunpack.c.l.b16 %v154
    %v406 = vunpack.c.h.b16 %v154
    %v407 = vunpack.c.l.b16 %v155
    %v408 = vunpack.c.l.b16 %v156
    %v409 = vunpack.c.h.b16 %v156
    %v410 = vunpack.c.l.b16 %v157
    %v411 = vunpack.c.h.b16 %v157
    %v412 = vunpack.c.l.b16 %v158
    %v413 = vunpack.c.l.b16 %v159
    %v414 = vunpack.c.h.b16 %v159
    %v415 = vunpack.c.l.b16 %v160
    %v416 = vunpack.c.h.b16 %v160
    %v417 = vunpack.c.l.b16 %v161
    %v418 = vunpack.c.l.b16 %v162
    %v419 = vunpack.c.h.b16 %v162
    %v420 = vunpack.c.l.b16 %v163
    %v421 = vunpack.c.h.b16 %v163
    %v422 = vunpack.c.l.b16 %v164
    %v423 = vunpack.c.l.b16 %v165
    %v424 = vunpack.c.h.b16 %v165
    %v425 = vunpack.c.l.b16 %v166
    %v426 = vunpack.c.h.b16 %v166
    %v427 = vunpack.c.l.b16 %v167
    %v428 = vunpack.c.l.b16 %v168
    %v429 = vunpack.c.h.b16 %v168
    %v430 = vunpack.c.l.b16 %v169
    %v431 = vunpack.c.h.b16 %v169
    %v432 = vunpack.c.l.b16 %v170
    %v433 = vunpack.c.l.b16 %v171
    %v434 = vunpack.c.h.b16 %v171
    %v435 = vunpack.c.l.b16 %v172
    %v436 = vunpack.c.h.b16 %v172
    %v437 = vunpack.c.l.b16 %v173
    %v438 = vunpack.c.l.b16 %v174
    %v439 = vunpack.c.h.b16 %v174
    %v440 = vunpack.c.l.b16 %v175
    %v441 = vunpack.c.h.b16 %v175
    %v442 = vunpack.c.l.b16 %v176
    %v443 = vunpack.c.l.b16 %v177
    %v444 = vunpack.c.h.b16 %v177
    %v445 = vunpack.c.l.b16 %v178
    %v446 = vunpack.c.h.b16 %v178
    %v447 = vunpack.c.l.b16 %v179
    %v448 = vunpack.c.l.b16 %v180
    %v449 = vunpack.c.h.b16 %v180
    %v450 = vunpack.c.l.b16 %v181
    %v451 = vunpack.c.h.b16 %v181
    %v452 = vunpack.c.l.b16 %v182
    %v453 = vunpack.c.l.b16 %v183
    %v454 = vunpack.c.h.b16 %v183
    %v455 = vunpack.c.l.b16 %v184
    %v456 = vunpack.c.h.b16 %v184
    %v457 = vunpack.c.l.b16 %v185
    %v458 = vunpack.c.l.b16 %v186
    %v459 = vunpack.c.h.b16 %v186
    %v460 = vunpack.c.l.b16 %v187
    %v461 = vunpack.c.h.b16 %v187
    %v462 = vunpack.c.l.b16 %v188
    %v463 = vunpack.c.l.b16 %v189
    %v464 = vunpack.c.h.b16 %v189
    %v465 = vunpack.c.l.b16 %v190
    %v466 = vunpack.c.h.b16 %v190
    %v467 = vunpack.c.l.b16 %v191
    %v468 = vunpack.c.l.b16 %v192
    %v469 = vunpack.c.h.b16 %v192
    %v470 = vunpack.c.l.b16 %v193
    %v471 = vunpack.c.h.b16 %v193
    %v472 = vunpack.c.l.b16 %v194
    %v473 = vpack.c.b16 %v318, %v313
    %v474 = vpack.c.b16 %v319, %v314
    %v475 = vpack.c.b16 %v320, %v315
    %v476 = vpack.c.b16 %v321, %v316
    %v477 = vpack.c.b16 %v322, %v317
    %v478 = vpack.c.b16 %v328, %v323
    %v479 = vpack.c.b16 %v329, %v324
    %v480 = vpack.c.b16 %v330, %v325
    %v481 = vpack.c.b16 %v331, %v326
    %v482 = vpack.c.b16 %v332, %v327
    %v483 = vpack.c.b16 %v338, %v333
    %v484 = vpack.c.b16 %v339, %v334
    %v485 = vpack.c.b16 %v340, %v335
    %v486 = vpack.c.b16 %v341, %v336
    %v487 = vpack.c.b16 %v342, %v337
    %v488 = vpack.c.b16 %v348, %v343
    %v489 = vpack.c.b16 %v349, %v344
    %v490 = vpack.c.b16 %v350, %v345
    %v491 = vpack.c.b16 %v351, %v346
    %v492 = vpack.c.b16 %v352, %v347
    %v493 = vpack.c.b16 %v358, %v353
    %v494 = vpack.c.b16 %v359, %v354
    %v495 = vpack.c.b16 %v360, %v355
    %v496 = vpack.c.b16 %v361, %v356
    %v497 = vpack.c.b16 %v362, %v357
    %v498 = vpack.c.b16 %v368, %v363
    %v499 = vpack.c.b16 %v369, %v364
    %v500 = vpack.c.b16 %v370, %v365
    %v501 = vpack.c.b16 %v371, %v366
    %v502 = vpack.c.b16 %v372, %v367
    %v503 = vpack.c.b16 %v378, %v373
    %v504 = vpack.c.b16 %v379, %v374
    %v505 = vpack.c.b16 %v380, %v375
    %v506 = vpack.c.b16 %v381, %v376
    %v507 = vpack.c.b16 %v382, %v377
    %v508 = vpack.c.b16 %v388, %v383
    %v509 = vpack.c.b16 %v389, %v384
    %v510 = vpack.c.b16 %v390, %v385
    %v511 = vpack.c.b16 %v391, %v386
    %v512 = vpack.c.b16 %v392, %v387
    %v513 = vpack.c.b16 %v398, %v393
    %v514 = vpack.c.b16 %v399, %v394
    %v515 = vpack.c.b16 %v400, %v395
    %v516 = vpack.c.b16 %v401, %v396
    %v517 = vpack.c.b16 %v402, %v397
    %v518 = vpack.c.b16 %v408, %v403
    %v519 = vpack.c.b16 %v409, %v404
    %v520 = vpack.c.b16 %v410, %v405
    %v521 = vpack.c.b16 %v411, %v406
    %v522 = vpack.c.b16 %v412, %v407
    %v523 = vpack.c.b16 %v418, %v413
    %v524 = vpack.c.b16 %v419, %v414
    %v525 = vpack.c.b16 %v420, %v415
    %v526 = vpack.c.b16 %v421, %v416
    %v527 = vpack.c.b16 %v422, %v417
    %v528 = vpack.c.b16 %v428, %v423
    %v529 = vpack.c.b16 %v429, %v424
    %v530 = vpack.c.b16 %v430, %v425
    %v531 = vpack.c.b16 %v431, %v426
    %v532 = vpack.c.b16 %v432, %v427
    %v533 = vpack.c.b16 %v438, %v433
    %v534 = vpack.c.b16 %v439, %v434
    %v535 = vpack.c.b16 %v440, %v435
    %v536 = vpack.c.b16 %v441, %v436
    %v537 = vpack.c.b16 %v442, %v437
    %v538 = vpack.c.b16 %v448, %v443
    %v539 = vpack.c.b16 %v449, %v444
    %v540 = vpack.c.b16 %v450, %v445
    %v541 = vpack.c.b16 %v451, %v446
    %v542 = vpack.c.b16 %v452, %v447
    %v543 = vpack.c.b16 %v458, %v453
    %v544 = vpack.c.b16 %v459, %v454
    %v545 = vpack.c.b16 %v460, %v455
    %v546 = vpack.c.b16 %v461, %v456
    %v547 = vpack.c.b16 %v462, %v457
    %v548 = vpack.c.b16 %v468, %v463
    %v549 = vpack.c.b16 %v469, %v464
    %v550 = vpack.c.b16 %v470, %v465
    %v551 = vpack.c.b16 %v471, %v466
    %v552 = vpack.c.b16 %v472, %v467
    %633 = vmatpush.bf16.msra.mxu0 %v508
    %634 = vmatpush.bf16.msra.mxu0 %v503
    %635 = vmatpush.bf16.msra.mxu0 %v498
    %636 = vmatpush.bf16.msra.mxu0 %v493
    %637 = vmatpush.bf16.msra.mxu0 %v488
    %638 = vmatpush.bf16.msra.mxu0 %v483
    %639 = vmatpush.bf16.msra.mxu0 %v478
    %640 = vmatpush.bf16.msra.mxu0 %v473
    %641 = vmatmul.bf16.gmra.mxu0 %v213
    %v642 = vpop.f32.mrf.mxu0
    %v643 = vadd.f32 %v197, %v642
    %v644 = vpop.f32.mrf.mxu0
    %v645 = vadd.f32 %v197, %v644
    %646 = vdwg.mxu0
    %647 = vmatpush.bf16.msra.mxu0 %v548
    %648 = vmatpush.bf16.msra.mxu0 %v543
    %649 = vmatpush.bf16.msra.mxu0 %v538
    %650 = vmatpush.bf16.msra.mxu0 %v533
    %651 = vmatpush.bf16.msra.mxu0 %v528
    %652 = vmatpush.bf16.msra.mxu0 %v523
    %653 = vmatpush.bf16.msra.mxu0 %v518
    %654 = vmatpush.bf16.msra.mxu0 %v513
    %655 = vmatmul.bf16.gmra.mxu0 %v214
    %v656 = vpop.f32.mrf.mxu0
    %v657 = vadd.f32 %v643, %v656
    %v658 = vpop.f32.mrf.mxu0
    %v659 = vadd.f32 %v645, %v658
    %660 = vdwg.mxu0
    %661 = vmatpush.bf16.msra.mxu0 %v509
    %662 = vmatpush.bf16.msra.mxu0 %v504
    %663 = vmatpush.bf16.msra.mxu0 %v499
    %664 = vmatpush.bf16.msra.mxu0 %v494
    %665 = vmatpush.bf16.msra.mxu0 %v489
    %666 = vmatpush.bf16.msra.mxu0 %v484
    %667 = vmatpush.bf16.msra.mxu0 %v479
    %668 = vmatpush.bf16.msra.mxu0 %v474
    %669 = vmatmul.bf16.gmra.mxu0 %v213
    %v670 = vpop.f32.mrf.mxu0
    %v671 = vadd.f32 %v198, %v670
    %v672 = vpop.f32.mrf.mxu0
    %v673 = vadd.f32 %v198, %v672
    %674 = vdwg.mxu0
    %675 = vmatpush.bf16.msra.mxu0 %v549
    %676 = vmatpush.bf16.msra.mxu0 %v544
    %677 = vmatpush.bf16.msra.mxu0 %v539
    %678 = vmatpush.bf16.msra.mxu0 %v534
    %679 = vmatpush.bf16.msra.mxu0 %v529
    %680 = vmatpush.bf16.msra.mxu0 %v524
    %681 = vmatpush.bf16.msra.mxu0 %v519
    %682 = vmatpush.bf16.msra.mxu0 %v514
    %683 = vmatmul.bf16.gmra.mxu0 %v214
    %v684 = vpop.f32.mrf.mxu0
    %v685 = vadd.f32 %v671, %v684
    %v686 = vpop.f32.mrf.mxu0
    %v687 = vadd.f32 %v673, %v686
    %688 = vdwg.mxu0
    %689 = vmatpush.bf16.msra.mxu0 %v510
    %690 = vmatpush.bf16.msra.mxu0 %v505
    %691 = vmatpush.bf16.msra.mxu0 %v500
    %692 = vmatpush.bf16.msra.mxu0 %v495
    %693 = vmatpush.bf16.msra.mxu0 %v490
    %694 = vmatpush.bf16.msra.mxu0 %v485
    %695 = vmatpush.bf16.msra.mxu0 %v480
    %696 = vmatpush.bf16.msra.mxu0 %v475
    %697 = vmatmul.bf16.gmra.mxu0 %v213
    %v698 = vpop.f32.mrf.mxu0
    %v699 = vadd.f32 %v199, %v698
    %v700 = vpop.f32.mrf.mxu0
    %v701 = vadd.f32 %v199, %v700
    %702 = vdwg.mxu0
    %703 = vmatpush.bf16.msra.mxu0 %v550
    %704 = vmatpush.bf16.msra.mxu0 %v545
    %705 = vmatpush.bf16.msra.mxu0 %v540
    %706 = vmatpush.bf16.msra.mxu0 %v535
    %707 = vmatpush.bf16.msra.mxu0 %v530
    %708 = vmatpush.bf16.msra.mxu0 %v525
    %709 = vmatpush.bf16.msra.mxu0 %v520
    %710 = vmatpush.bf16.msra.mxu0 %v515
    %711 = vmatmul.bf16.gmra.mxu0 %v214
    %v712 = vpop.f32.mrf.mxu0
    %v713 = vadd.f32 %v699, %v712
    %v714 = vpop.f32.mrf.mxu0
    %v715 = vadd.f32 %v701, %v714
    %716 = vdwg.mxu0
    %717 = vmatpush.bf16.msra.mxu0 %v511
    %718 = vmatpush.bf16.msra.mxu0 %v506
    %719 = vmatpush.bf16.msra.mxu0 %v501
    %720 = vmatpush.bf16.msra.mxu0 %v496
    %721 = vmatpush.bf16.msra.mxu0 %v491
    %722 = vmatpush.bf16.msra.mxu0 %v486
    %723 = vmatpush.bf16.msra.mxu0 %v481
    %724 = vmatpush.bf16.msra.mxu0 %v476
    %725 = vmatmul.bf16.gmra.mxu0 %v213
    %v726 = vpop.f32.mrf.mxu0
    %v727 = vadd.f32 %v200, %v726
    %v728 = vpop.f32.mrf.mxu0
    %v729 = vadd.f32 %v200, %v728
    %730 = vdwg.mxu0
    %731 = vmatpush.bf16.msra.mxu0 %v551
    %732 = vmatpush.bf16.msra.mxu0 %v546
    %733 = vmatpush.bf16.msra.mxu0 %v541
    %734 = vmatpush.bf16.msra.mxu0 %v536
    %735 = vmatpush.bf16.msra.mxu0 %v531
    %736 = vmatpush.bf16.msra.mxu0 %v526
    %737 = vmatpush.bf16.msra.mxu0 %v521
    %738 = vmatpush.bf16.msra.mxu0 %v516
    %739 = vmatmul.bf16.gmra.mxu0 %v214
    %v740 = vpop.f32.mrf.mxu0
    %v741 = vadd.f32 %v727, %v740
    %v742 = vpop.f32.mrf.mxu0
    %v743 = vadd.f32 %v729, %v742
    %744 = vdwg.mxu0
    %745 = vmatpush.bf16.msra.mxu0 %v512
    %746 = vmatpush.bf16.msra.mxu0 %v507
    %747 = vmatpush.bf16.msra.mxu0 %v502
    %748 = vmatpush.bf16.msra.mxu0 %v497
    %749 = vmatpush.bf16.msra.mxu0 %v492
    %750 = vmatpush.bf16.msra.mxu0 %v487
    %751 = vmatpush.bf16.msra.mxu0 %v482
    %752 = vmatpush.bf16.msra.mxu0 %v477
    %753 = vmatmul.bf16.gmra.mxu0 %v213
    %v754 = vpop.f32.mrf.mxu0
    %v755 = vadd.f32 %v201, %v754
    %v756 = vpop.f32.mrf.mxu0
    %v757 = vadd.f32 %v201, %v756
    %758 = vdwg.mxu0
    %759 = vmatpush.bf16.msra.mxu0 %v552
    %760 = vmatpush.bf16.msra.mxu0 %v547
    %761 = vmatpush.bf16.msra.mxu0 %v542
    %762 = vmatpush.bf16.msra.mxu0 %v537
    %763 = vmatpush.bf16.msra.mxu0 %v532
    %764 = vmatpush.bf16.msra.mxu0 %v527
    %765 = vmatpush.bf16.msra.mxu0 %v522
    %766 = vmatpush.bf16.msra.mxu0 %v517
    %767 = vmatmul.bf16.gmra.mxu0 %v214
    %v768 = vpop.f32.mrf.mxu0
    %v769 = vadd.f32 %v755, %v768
    %v770 = vpop.f32.mrf.mxu0
    %v771 = vadd.f32 %v757, %v770
    %772 = vdwg.mxu0
    %v773 = vmax.f32 %v657, 0.0
    %v774 = vmax.f32 %v685, 0.0
    %v775 = vmax.f32 %v713, 0.0
    %v776 = vmax.f32 %v741, 0.0
    %v777 = vmax.f32 %v769, 0.0
    %v778 = vmax.f32 %v659, 0.0
    %v779 = vmax.f32 %v687, 0.0
    %v780 = vmax.f32 %v715, 0.0
    %v781 = vmax.f32 %v743, 0.0
    %v782 = vmax.f32 %v771, 0.0
    %v783 = vpack.c.bf16 %v778, %v773
    %v784 = vpack.c.bf16 %v779, %v774
    %v785 = vpack.c.bf16 %v780, %v775
    %v786 = vpack.c.bf16 %v781, %v776
    %v787 = vpack.c.bf16 %v782, %v777
    %v788 = vld [vmem:[#allocation5 + $0x280] sm:$0xff]
    %v789 = vld [vmem:[#allocation5 + $0x288] sm:$0xff]
    %v790 = vld [vmem:[#allocation5 + $0x290] sm:$0xf]
    %v791 = vld [vmem:[#allocation5 + $0x294] sm:$0xff]
    %v792 = vld [vmem:[#allocation5 + $0x29c] sm:$0xff]
    %v793 = vld [vmem:[#allocation5 + $0x2a4] sm:$0xf]
    %v794 = vld [vmem:[#allocation5 + $0x2a8] sm:$0xff]
    %v795 = vld [vmem:[#allocation5 + $0x2b0] sm:$0xff]
    %v796 = vld [vmem:[#allocation5 + $0x2b8] sm:$0xf]
    %v797 = vld [vmem:[#allocation5 + $0x2bc] sm:$0xff]
    %v798 = vld [vmem:[#allocation5 + $0x2c4] sm:$0xff]
    %v799 = vld [vmem:[#allocation5 + $0x2cc] sm:$0xf]
    %v800 = vld [vmem:[#allocation5 + $0x2d0] sm:$0xff]
    %v801 = vld [vmem:[#allocation5 + $0x2d8] sm:$0xff]
    %v802 = vld [vmem:[#allocation5 + $0x2e0] sm:$0xf]
    %v803 = vld [vmem:[#allocation5 + $0x2e4] sm:$0xff]
    %v804 = vld [vmem:[#allocation5 + $0x2ec] sm:$0xff]
    %v805 = vld [vmem:[#allocation5 + $0x2f4] sm:$0xf]
    %v806 = vld [vmem:[#allocation5 + $0x2f8] sm:$0xff]
    %v807 = vld [vmem:[#allocation5 + $0x300] sm:$0xff]
    %v808 = vld [vmem:[#allocation5 + $0x308] sm:$0xf]
    %v809 = vld [vmem:[#allocation5 + $0x30c] sm:$0xff]
    %v810 = vld [vmem:[#allocation5 + $0x314] sm:$0xff]
    %v811 = vld [vmem:[#allocation5 + $0x31c] sm:$0xf]
    %v812 = vld [vmem:[#allocation5 + $0x320] sm:$0xff]
    %v813 = vld [vmem:[#allocation5 + $0x328] sm:$0xff]
    %v814 = vld [vmem:[#allocation5 + $0x330] sm:$0xf]
    %v815 = vld [vmem:[#allocation5 + $0x334] sm:$0xff]
    %v816 = vld [vmem:[#allocation5 + $0x33c] sm:$0xff]
    %v817 = vld [vmem:[#allocation5 + $0x344] sm:$0xf]
    %v818 = vld [vmem:[#allocation5 + $0x348] sm:$0xff]
    %v819 = vld [vmem:[#allocation5 + $0x350] sm:$0xff]
    %v820 = vld [vmem:[#allocation5 + $0x358] sm:$0xf]
    %v821 = vld [vmem:[#allocation5 + $0x35c] sm:$0xff]
    %v822 = vld [vmem:[#allocation5 + $0x364] sm:$0xff]
    %v823 = vld [vmem:[#allocation5 + $0x36c] sm:$0xf]
    %v824 = vld [vmem:[#allocation5 + $0x370] sm:$0xff]
    %v825 = vld [vmem:[#allocation5 + $0x378] sm:$0xff]
    %v826 = vld [vmem:[#allocation5 + $0x380] sm:$0xf]
    %v827 = vld [vmem:[#allocation5 + $0x384] sm:$0xff]
    %v828 = vld [vmem:[#allocation5 + $0x38c] sm:$0xff]
    %v829 = vld [vmem:[#allocation5 + $0x394] sm:$0xf]
    %v830 = vld [vmem:[#allocation5 + $0x398] sm:$0xff]
    %v831 = vld [vmem:[#allocation5 + $0x3a0] sm:$0xff]
    %v832 = vld [vmem:[#allocation5 + $0x3a8] sm:$0xf]
    %v833 = vld [vmem:[#allocation5 + $0x3ac] sm:$0xff]
    %v834 = vld [vmem:[#allocation5 + $0x3b4] sm:$0xff]
    %v835 = vld [vmem:[#allocation5 + $0x3bc] sm:$0xf]
    %v836 = vld [vmem:[#allocation5 + $0x3c0] sm:$0xff]
    %v837 = vld [vmem:[#allocation5 + $0x3c8] sm:$0xff]
    %v838 = vld [vmem:[#allocation5 + $0x3d0] sm:$0xf]
    %v839 = vld [vmem:[#allocation5 + $0x3d4] sm:$0xff]
    %v840 = vld [vmem:[#allocation5 + $0x3dc] sm:$0xff]
    %v841 = vld [vmem:[#allocation5 + $0x3e4] sm:$0xf]
    %v842 = vld [vmem:[#allocation5 + $0x3e8] sm:$0xff]
    %v843 = vld [vmem:[#allocation5 + $0x3f0] sm:$0xff]
    %v844 = vld [vmem:[#allocation5 + $0x3f8] sm:$0xf]
    %v845 = vld [vmem:[#allocation5 + $0x3fc] sm:$0xff]
    %v846 = vld [vmem:[#allocation5 + $0x404] sm:$0xff]
    %v847 = vld [vmem:[#allocation5 + $0x40c] sm:$0xf]
    %v848 = vld [vmem:[#allocation5 + $0x410] sm:$0xff]
    %v849 = vld [vmem:[#allocation5 + $0x418] sm:$0xff]
    %v850 = vld [vmem:[#allocation5 + $0x420] sm:$0xf]
    %v851 = vld [vmem:[#allocation5 + $0x424] sm:$0xff]
    %v852 = vld [vmem:[#allocation5 + $0x42c] sm:$0xff]
    %v853 = vld [vmem:[#allocation5 + $0x434] sm:$0xf]
    %v854 = vld [vmem:[#allocation5 + $0x438] sm:$0xff]
    %v855 = vld [vmem:[#allocation5 + $0x440] sm:$0xff]
    %v856 = vld [vmem:[#allocation5 + $0x448] sm:$0xf]
    %v857 = vld [vmem:[#allocation5 + $0x44c] sm:$0xff]
    %v858 = vld [vmem:[#allocation5 + $0x454] sm:$0xff]
    %v859 = vld [vmem:[#allocation5 + $0x45c] sm:$0xf]
    %v860 = vld [vmem:[#allocation5 + $0x460] sm:$0xff]
    %v861 = vld [vmem:[#allocation5 + $0x468] sm:$0xff]
    %v862 = vld [vmem:[#allocation5 + $0x470] sm:$0xf]
    %v863 = vld [vmem:[#allocation5 + $0x474] sm:$0xff]
    %v864 = vld [vmem:[#allocation5 + $0x47c] sm:$0xff]
    %v865 = vld [vmem:[#allocation5 + $0x484] sm:$0xf]
    %v866 = vld [vmem:[#allocation5 + $0x488] sm:$0xff]
    %v867 = vld [vmem:[#allocation5 + $0x490] sm:$0xff]
    %v868 = vld [vmem:[#allocation5 + $0x498] sm:$0xf]
    %v869 = vld [vmem:[#allocation5 + $0x49c] sm:$0xff]
    %v870 = vld [vmem:[#allocation5 + $0x4a4] sm:$0xff]
    %v871 = vld [vmem:[#allocation5 + $0x4ac] sm:$0xf]
    %v872 = vld [vmem:[#allocation5 + $0x4b0] sm:$0xff]
    %v873 = vld [vmem:[#allocation5 + $0x4b8] sm:$0xff]
    %v874 = vld [vmem:[#allocation5 + $0x4c0] sm:$0xf]
    %v875 = vld [vmem:[#allocation5 + $0x4c4] sm:$0xff]
    %v876 = vld [vmem:[#allocation5 + $0x4cc] sm:$0xff]
    %v877 = vld [vmem:[#allocation5 + $0x4d4] sm:$0xf]
    %v878 = vld [vmem:[#allocation5 + $0x4d8] sm:$0xff]
    %v879 = vld [vmem:[#allocation5 + $0x4e0] sm:$0xff]
    %v880 = vld [vmem:[#allocation5 + $0x4e8] sm:$0xf]
    %v881 = vld [vmem:[#allocation5 + $0x4ec] sm:$0xff]
    %v882 = vld [vmem:[#allocation5 + $0x4f4] sm:$0xff]
    %v883 = vld [vmem:[#allocation5 + $0x4fc] sm:$0xf]
    %v884 = vld [vmem:[#allocation5 + $0x500] sm:$0xff]
    %v885 = vld [vmem:[#allocation5 + $0x508] sm:$0xff]
    %v886 = vld [vmem:[#allocation5 + $0x510] sm:$0xf]
    %v887 = vld [vmem:[#allocation5 + $0x514] sm:$0xff]
    %v888 = vld [vmem:[#allocation5 + $0x51c] sm:$0xff]
    %v889 = vld [vmem:[#allocation5 + $0x524] sm:$0xf]
    %v890 = vld [vmem:[#allocation5 + $0x528] sm:$0xff]
    %v891 = vld [vmem:[#allocation5 + $0x530] sm:$0xff]
    %v892 = vld [vmem:[#allocation5 + $0x538] sm:$0xf]
    %v893 = vld [vmem:[#allocation5 + $0x53c] sm:$0xff]
    %v894 = vld [vmem:[#allocation5 + $0x544] sm:$0xff]
    %v895 = vld [vmem:[#allocation5 + $0x54c] sm:$0xf]
    %v896 = vld [vmem:[#allocation5 + $0x550] sm:$0xff]
    %v897 = vld [vmem:[#allocation5 + $0x558] sm:$0xff]
    %v898 = vld [vmem:[#allocation5 + $0x560] sm:$0xf]
    %v899 = vld [vmem:[#allocation5 + $0x564] sm:$0xff]
    %v900 = vld [vmem:[#allocation5 + $0x56c] sm:$0xff]
    %v901 = vld [vmem:[#allocation5 + $0x574] sm:$0xf]
    %v902 = vld [vmem:[#allocation5 + $0x578] sm:$0xff]
    %v903 = vld [vmem:[#allocation5 + $0x580] sm:$0xff]
    %v904 = vld [vmem:[#allocation5 + $0x588] sm:$0xf]
    %v905 = vld [vmem:[#allocation5 + $0x58c] sm:$0xff]
    %v906 = vld [vmem:[#allocation5 + $0x594] sm:$0xff]
    %v907 = vld [vmem:[#allocation5 + $0x59c] sm:$0xf]
    %v908 = vld [vmem:[#allocation5 + $0x5a0] sm:$0xff]
    %v909 = vld [vmem:[#allocation5 + $0x5a8] sm:$0xff]
    %v910 = vld [vmem:[#allocation5 + $0x5b0] sm:$0xf]
    %v911 = vld [vmem:[#allocation5 + $0x5b4] sm:$0xff]
    %v912 = vld [vmem:[#allocation5 + $0x5bc] sm:$0xff]
    %v913 = vld [vmem:[#allocation5 + $0x5c4] sm:$0xf]
    %v914 = vld [vmem:[#allocation5 + $0x5c8] sm:$0xff]
    %v915 = vld [vmem:[#allocation5 + $0x5d0] sm:$0xff]
    %v916 = vld [vmem:[#allocation5 + $0x5d8] sm:$0xf]
    %v917 = vld [vmem:[#allocation5 + $0x5dc] sm:$0xff]
    %v918 = vld [vmem:[#allocation5 + $0x5e4] sm:$0xff]
    %v919 = vld [vmem:[#allocation5 + $0x5ec] sm:$0xf]
    %v920 = vld [vmem:[#allocation5 + $0x5f0] sm:$0xff]
    %v921 = vld [vmem:[#allocation5 + $0x5f8] sm:$0xff]
    %v922 = vld [vmem:[#allocation5 + $0x600] sm:$0xf]
    %v923 = vld [vmem:[#allocation5 + $0x604] sm:$0xff]
    %v924 = vld [vmem:[#allocation5 + $0x60c] sm:$0xff]
    %v925 = vld [vmem:[#allocation5 + $0x614] sm:$0xf]
    %v926 = vld [vmem:[#allocation5 + $0x618] sm:$0xff]
    %v927 = vld [vmem:[#allocation5 + $0x620] sm:$0xff]
    %v928 = vld [vmem:[#allocation5 + $0x628] sm:$0xf]
    %v929 = vld [vmem:[#allocation5 + $0x62c] sm:$0xff]
    %v930 = vld [vmem:[#allocation5 + $0x634] sm:$0xff]
    %v931 = vld [vmem:[#allocation5 + $0x63c] sm:$0xf]
    %v932 = vld [vmem:[#allocation5 + $0x640] sm:$0xff]
    %v933 = vld [vmem:[#allocation5 + $0x648] sm:$0xff]
    %v934 = vld [vmem:[#allocation5 + $0x650] sm:$0xf]
    %v935 = vld [vmem:[#allocation5 + $0x654] sm:$0xff]
    %v936 = vld [vmem:[#allocation5 + $0x65c] sm:$0xff]
    %v937 = vld [vmem:[#allocation5 + $0x664] sm:$0xf]
    %v938 = vld [vmem:[#allocation5 + $0x668] sm:$0xff]
    %v939 = vld [vmem:[#allocation5 + $0x670] sm:$0xff]
    %v940 = vld [vmem:[#allocation5 + $0x678] sm:$0xf]
    %v941 = vld [vmem:[#allocation5 + $0x67c] sm:$0xff]
    %v942 = vld [vmem:[#allocation5 + $0x684] sm:$0xff]
    %v943 = vld [vmem:[#allocation5 + $0x68c] sm:$0xf]
    %v944 = vld [vmem:[#allocation5 + $0x690] sm:$0xff]
    %v945 = vld [vmem:[#allocation5 + $0x698] sm:$0xff]
    %v946 = vld [vmem:[#allocation5 + $0x6a0] sm:$0xf]
    %v947 = vld [vmem:[#allocation5 + $0x6a4] sm:$0xff]
    %v948 = vld [vmem:[#allocation5 + $0x6ac] sm:$0xff]
    %v949 = vld [vmem:[#allocation5 + $0x6b4] sm:$0xf]
    %v950 = vld [vmem:[#allocation5 + $0x6b8] sm:$0xff]
    %v951 = vld [vmem:[#allocation5 + $0x6c0] sm:$0xff]
    %v952 = vld [vmem:[#allocation5 + $0x6c8] sm:$0xf]
    %v953 = vld [vmem:[#allocation5 + $0x6cc] sm:$0xff]
    %v954 = vld [vmem:[#allocation5 + $0x6d4] sm:$0xff]
    %v955 = vld [vmem:[#allocation5 + $0x6dc] sm:$0xf]
    %v956 = vld [vmem:[#allocation5 + $0x6e0] sm:$0xff]
    %v957 = vld [vmem:[#allocation5 + $0x6e8] sm:$0xff]
    %v958 = vld [vmem:[#allocation5 + $0x6f0] sm:$0xf]
    %v959 = vld [vmem:[#allocation5 + $0x6f4] sm:$0xff]
    %v960 = vld [vmem:[#allocation5 + $0x6fc] sm:$0xff]
    %v961 = vld [vmem:[#allocation5 + $0x704] sm:$0xf]
    %v962 = vld [vmem:[#allocation5 + $0x708] sm:$0xff]
    %v963 = vld [vmem:[#allocation5 + $0x710] sm:$0xff]
    %v964 = vld [vmem:[#allocation5 + $0x718] sm:$0xf]
    %v965 = vld [vmem:[#allocation5 + $0x71c] sm:$0xff]
    %v966 = vld [vmem:[#allocation5 + $0x724] sm:$0xff]
    %v967 = vld [vmem:[#allocation5 + $0x72c] sm:$0xf]
    %v968 = vld [vmem:[#allocation5 + $0x730] sm:$0xff]
    %v969 = vld [vmem:[#allocation5 + $0x738] sm:$0xff]
    %v970 = vld [vmem:[#allocation5 + $0x740] sm:$0xf]
    %v971 = vld [vmem:[#allocation5 + $0x744] sm:$0xff]
    %v972 = vld [vmem:[#allocation5 + $0x74c] sm:$0xff]
    %v973 = vld [vmem:[#allocation5 + $0x754] sm:$0xf]
    %v974 = vld [vmem:[#allocation5 + $0x758] sm:$0xff]
    %v975 = vld [vmem:[#allocation5 + $0x760] sm:$0xff]
    %v976 = vld [vmem:[#allocation5 + $0x768] sm:$0xf]
    %v977 = vld [vmem:[#allocation5 + $0x76c] sm:$0xff]
    %v978 = vld [vmem:[#allocation5 + $0x774] sm:$0xff]
    %v979 = vld [vmem:[#allocation5 + $0x77c] sm:$0xf]
    %v980 = vld [vmem:[#allocation5 + $0x780] sm:$0xff]
    %v981 = vld [vmem:[#allocation5 + $0x788] sm:$0xff]
    %v982 = vld [vmem:[#allocation5 + $0x790] sm:$0xf]
    %v983 = vld [vmem:[#allocation5 + $0x794] sm:$0xff]
    %v984 = vld [vmem:[#allocation5 + $0x79c] sm:$0xff]
    %v985 = vld [vmem:[#allocation5 + $0x7a4] sm:$0xf]
    %v986 = vld [vmem:[#allocation5 + $0x7a8] sm:$0xff]
    %v987 = vld [vmem:[#allocation5 + $0x7b0] sm:$0xff]
    %v988 = vld [vmem:[#allocation5 + $0x7b8] sm:$0xf]
    %v989 = vld [vmem:[#allocation5 + $0x7bc] sm:$0xff]
    %v990 = vld [vmem:[#allocation5 + $0x7c4] sm:$0xff]
    %v991 = vld [vmem:[#allocation5 + $0x7cc] sm:$0xf]
    %v992 = vld [vmem:[#allocation5 + $0x7d0] sm:$0xff]
    %v993 = vld [vmem:[#allocation5 + $0x7d8] sm:$0xff]
    %v994 = vld [vmem:[#allocation5 + $0x7e0] sm:$0xf]
    %v995 = vld [vmem:[#allocation5 + $0x7e4] sm:$0xff]
    %v996 = vld [vmem:[#allocation5 + $0x7ec] sm:$0xff]
    %v997 = vld [vmem:[#allocation5 + $0x7f4] sm:$0xf]
    %v998 = vld [vmem:[#allocation5 + $0x7f8] sm:$0xff]
    %v999 = vld [vmem:[#allocation5 + $0x800] sm:$0xff]
    %v1000 = vld [vmem:[#allocation5 + $0x808] sm:$0xf]
    %v1001 = vld [vmem:[#allocation5 + $0x80c] sm:$0xff]
    %v1002 = vld [vmem:[#allocation5 + $0x814] sm:$0xff]
    %v1003 = vld [vmem:[#allocation5 + $0x81c] sm:$0xf]
    %v1004 = vld [vmem:[#allocation5 + $0x820] sm:$0xff]
    %v1005 = vld [vmem:[#allocation5 + $0x828] sm:$0xff]
    %v1006 = vld [vmem:[#allocation5 + $0x830] sm:$0xf]
    %v1007 = vld [vmem:[#allocation5 + $0x834] sm:$0xff]
    %v1008 = vld [vmem:[#allocation5 + $0x83c] sm:$0xff]
    %v1009 = vld [vmem:[#allocation5 + $0x844] sm:$0xf]
    %v1010 = vld [vmem:[#allocation5 + $0x848] sm:$0xff]
    %v1011 = vld [vmem:[#allocation5 + $0x850] sm:$0xff]
    %v1012 = vld [vmem:[#allocation5 + $0x858] sm:$0xf]
    %v1013 = vld [vmem:[#allocation5 + $0x85c] sm:$0xff]
    %v1014 = vld [vmem:[#allocation5 + $0x864] sm:$0xff]
    %v1015 = vld [vmem:[#allocation5 + $0x86c] sm:$0xf]
    %v1016 = vld [vmem:[#allocation5 + $0x870] sm:$0xff]
    %v1017 = vld [vmem:[#allocation5 + $0x878] sm:$0xff]
    %v1018 = vld [vmem:[#allocation5 + $0x880] sm:$0xf]
    %v1019 = vld [vmem:[#allocation5 + $0x884] sm:$0xff]
    %v1020 = vld [vmem:[#allocation5 + $0x88c] sm:$0xff]
    %v1021 = vld [vmem:[#allocation5 + $0x894] sm:$0xf]
    %v1022 = vld [vmem:[#allocation5 + $0x898] sm:$0xff]
    %v1023 = vld [vmem:[#allocation5 + $0x8a0] sm:$0xff]
    %v1024 = vld [vmem:[#allocation5 + $0x8a8] sm:$0xf]
    %v1025 = vld [vmem:[#allocation5 + $0x8ac] sm:$0xff]
    %v1026 = vld [vmem:[#allocation5 + $0x8b4] sm:$0xff]
    %v1027 = vld [vmem:[#allocation5 + $0x8bc] sm:$0xf]
    %v1028 = vld [vmem:[#allocation10 + $0x5] sm:$0x1f]
    %v1030 = vperm.slane %v1028, 0
    %v1031 = vperm.slane %v1028, 1
    %v1032 = vperm.slane %v1028, 2
    %v1033 = vperm.slane %v1028, 3
    %v1034 = vperm.slane %v1028, 4
    %v1280 = vunpack.c.l.b16 %v788
    %v1281 = vunpack.c.h.b16 %v788
    %v1282 = vunpack.c.l.b16 %v789
    %v1283 = vunpack.c.h.b16 %v789
    %v1284 = vunpack.c.l.b16 %v790
    %v1285 = vunpack.c.l.b16 %v791
    %v1286 = vunpack.c.h.b16 %v791
    %v1287 = vunpack.c.l.b16 %v792
    %v1288 = vunpack.c.h.b16 %v792
    %v1289 = vunpack.c.l.b16 %v793
    %v1290 = vunpack.c.l.b16 %v794
    %v1291 = vunpack.c.h.b16 %v794
    %v1292 = vunpack.c.l.b16 %v795
    %v1293 = vunpack.c.h.b16 %v795
    %v1294 = vunpack.c.l.b16 %v796
    %v1295 = vunpack.c.l.b16 %v797
    %v1296 = vunpack.c.h.b16 %v797
    %v1297 = vunpack.c.l.b16 %v798
    %v1298 = vunpack.c.h.b16 %v798
    %v1299 = vunpack.c.l.b16 %v799
    %v1300 = vunpack.c.l.b16 %v800
    %v1301 = vunpack.c.h.b16 %v800
    %v1302 = vunpack.c.l.b16 %v801
    %v1303 = vunpack.c.h.b16 %v801
    %v1304 = vunpack.c.l.b16 %v802
    %v1305 = vunpack.c.l.b16 %v803
    %v1306 = vunpack.c.h.b16 %v803
    %v1307 = vunpack.c.l.b16 %v804
    %v1308 = vunpack.c.h.b16 %v804
    %v1309 = vunpack.c.l.b16 %v805
    %v1310 = vunpack.c.l.b16 %v806
    %v1311 = vunpack.c.h.b16 %v806
    %v1312 = vunpack.c.l.b16 %v807
    %v1313 = vunpack.c.h.b16 %v807
    %v1314 = vunpack.c.l.b16 %v808
    %v1315 = vunpack.c.l.b16 %v809
    %v1316 = vunpack.c.h.b16 %v809
    %v1317 = vunpack.c.l.b16 %v810
    %v1318 = vunpack.c.h.b16 %v810
    %v1319 = vunpack.c.l.b16 %v811
    %v1320 = vunpack.c.l.b16 %v812
    %v1321 = vunpack.c.h.b16 %v812
    %v1322 = vunpack.c.l.b16 %v813
    %v1323 = vunpack.c.h.b16 %v813
    %v1324 = vunpack.c.l.b16 %v814
    %v1325 = vunpack.c.l.b16 %v815
    %v1326 = vunpack.c.h.b16 %v815
    %v1327 = vunpack.c.l.b16 %v816
    %v1328 = vunpack.c.h.b16 %v816
    %v1329 = vunpack.c.l.b16 %v817
    %v1330 = vunpack.c.l.b16 %v818
    %v1331 = vunpack.c.h.b16 %v818
    %v1332 = vunpack.c.l.b16 %v819
    %v1333 = vunpack.c.h.b16 %v819
    %v1334 = vunpack.c.l.b16 %v820
    %v1335 = vunpack.c.l.b16 %v821
    %v1336 = vunpack.c.h.b16 %v821
    %v1337 = vunpack.c.l.b16 %v822
    %v1338 = vunpack.c.h.b16 %v822
    %v1339 = vunpack.c.l.b16 %v823
    %v1340 = vunpack.c.l.b16 %v824
    %v1341 = vunpack.c.h.b16 %v824
    %v1342 = vunpack.c.l.b16 %v825
    %v1343 = vunpack.c.h.b16 %v825
    %v1344 = vunpack.c.l.b16 %v826
    %v1345 = vunpack.c.l.b16 %v827
    %v1346 = vunpack.c.h.b16 %v827
    %v1347 = vunpack.c.l.b16 %v828
    %v1348 = vunpack.c.h.b16 %v828
    %v1349 = vunpack.c.l.b16 %v829
    %v1350 = vunpack.c.l.b16 %v830
    %v1351 = vunpack.c.h.b16 %v830
    %v1352 = vunpack.c.l.b16 %v831
    %v1353 = vunpack.c.h.b16 %v831
    %v1354 = vunpack.c.l.b16 %v832
    %v1355 = vunpack.c.l.b16 %v833
    %v1356 = vunpack.c.h.b16 %v833
    %v1357 = vunpack.c.l.b16 %v834
    %v1358 = vunpack.c.h.b16 %v834
    %v1359 = vunpack.c.l.b16 %v835
    %v1360 = vunpack.c.l.b16 %v836
    %v1361 = vunpack.c.h.b16 %v836
    %v1362 = vunpack.c.l.b16 %v837
    %v1363 = vunpack.c.h.b16 %v837
    %v1364 = vunpack.c.l.b16 %v838
    %v1365 = vunpack.c.l.b16 %v839
    %v1366 = vunpack.c.h.b16 %v839
    %v1367 = vunpack.c.l.b16 %v840
    %v1368 = vunpack.c.h.b16 %v840
    %v1369 = vunpack.c.l.b16 %v841
    %v1370 = vunpack.c.l.b16 %v842
    %v1371 = vunpack.c.h.b16 %v842
    %v1372 = vunpack.c.l.b16 %v843
    %v1373 = vunpack.c.h.b16 %v843
    %v1374 = vunpack.c.l.b16 %v844
    %v1375 = vunpack.c.l.b16 %v845
    %v1376 = vunpack.c.h.b16 %v845
    %v1377 = vunpack.c.l.b16 %v846
    %v1378 = vunpack.c.h.b16 %v846
    %v1379 = vunpack.c.l.b16 %v847
    %v1380 = vunpack.c.l.b16 %v848
    %v1381 = vunpack.c.h.b16 %v848
    %v1382 = vunpack.c.l.b16 %v849
    %v1383 = vunpack.c.h.b16 %v849
    %v1384 = vunpack.c.l.b16 %v850
    %v1385 = vunpack.c.l.b16 %v851
    %v1386 = vunpack.c.h.b16 %v851
    %v1387 = vunpack.c.l.b16 %v852
    %v1388 = vunpack.c.h.b16 %v852
    %v1389 = vunpack.c.l.b16 %v853
    %v1390 = vunpack.c.l.b16 %v854
    %v1391 = vunpack.c.h.b16 %v854
    %v1392 = vunpack.c.l.b16 %v855
    %v1393 = vunpack.c.h.b16 %v855
    %v1394 = vunpack.c.l.b16 %v856
    %v1395 = vunpack.c.l.b16 %v857
    %v1396 = vunpack.c.h.b16 %v857
    %v1397 = vunpack.c.l.b16 %v858
    %v1398 = vunpack.c.h.b16 %v858
    %v1399 = vunpack.c.l.b16 %v859
    %v1400 = vunpack.c.l.b16 %v860
    %v1401 = vunpack.c.h.b16 %v860
    %v1402 = vunpack.c.l.b16 %v861
    %v1403 = vunpack.c.h.b16 %v861
    %v1404 = vunpack.c.l.b16 %v862
    %v1405 = vunpack.c.l.b16 %v863
    %v1406 = vunpack.c.h.b16 %v863
    %v1407 = vunpack.c.l.b16 %v864
    %v1408 = vunpack.c.h.b16 %v864
    %v1409 = vunpack.c.l.b16 %v865
    %v1410 = vunpack.c.l.b16 %v866
    %v1411 = vunpack.c.h.b16 %v866
    %v1412 = vunpack.c.l.b16 %v867
    %v1413 = vunpack.c.h.b16 %v867
    %v1414 = vunpack.c.l.b16 %v868
    %v1415 = vunpack.c.l.b16 %v869
    %v1416 = vunpack.c.h.b16 %v869
    %v1417 = vunpack.c.l.b16 %v870
    %v1418 = vunpack.c.h.b16 %v870
    %v1419 = vunpack.c.l.b16 %v871
    %v1420 = vunpack.c.l.b16 %v872
    %v1421 = vunpack.c.h.b16 %v872
    %v1422 = vunpack.c.l.b16 %v873
    %v1423 = vunpack.c.h.b16 %v873
    %v1424 = vunpack.c.l.b16 %v874
    %v1425 = vunpack.c.l.b16 %v875
    %v1426 = vunpack.c.h.b16 %v875
    %v1427 = vunpack.c.l.b16 %v876
    %v1428 = vunpack.c.h.b16 %v876
    %v1429 = vunpack.c.l.b16 %v877
    %v1430 = vunpack.c.l.b16 %v878
    %v1431 = vunpack.c.h.b16 %v878
    %v1432 = vunpack.c.l.b16 %v879
    %v1433 = vunpack.c.h.b16 %v879
    %v1434 = vunpack.c.l.b16 %v880
    %v1435 = vunpack.c.l.b16 %v881
    %v1436 = vunpack.c.h.b16 %v881
    %v1437 = vunpack.c.l.b16 %v882
    %v1438 = vunpack.c.h.b16 %v882
    %v1439 = vunpack.c.l.b16 %v883
    %v1440 = vunpack.c.l.b16 %v884
    %v1441 = vunpack.c.h.b16 %v884
    %v1442 = vunpack.c.l.b16 %v885
    %v1443 = vunpack.c.h.b16 %v885
    %v1444 = vunpack.c.l.b16 %v886
    %v1445 = vunpack.c.l.b16 %v887
    %v1446 = vunpack.c.h.b16 %v887
    %v1447 = vunpack.c.l.b16 %v888
    %v1448 = vunpack.c.h.b16 %v888
    %v1449 = vunpack.c.l.b16 %v889
    %v1450 = vunpack.c.l.b16 %v890
    %v1451 = vunpack.c.h.b16 %v890
    %v1452 = vunpack.c.l.b16 %v891
    %v1453 = vunpack.c.h.b16 %v891
    %v1454 = vunpack.c.l.b16 %v892
    %v1455 = vunpack.c.l.b16 %v893
    %v1456 = vunpack.c.h.b16 %v893
    %v1457 = vunpack.c.l.b16 %v894
    %v1458 = vunpack.c.h.b16 %v894
    %v1459 = vunpack.c.l.b16 %v895
    %v1460 = vunpack.c.l.b16 %v896
    %v1461 = vunpack.c.h.b16 %v896
    %v1462 = vunpack.c.l.b16 %v897
    %v1463 = vunpack.c.h.b16 %v897
    %v1464 = vunpack.c.l.b16 %v898
    %v1465 = vunpack.c.l.b16 %v899
    %v1466 = vunpack.c.h.b16 %v899
    %v1467 = vunpack.c.l.b16 %v900
    %v1468 = vunpack.c.h.b16 %v900
    %v1469 = vunpack.c.l.b16 %v901
    %v1470 = vunpack.c.l.b16 %v902
    %v1471 = vunpack.c.h.b16 %v902
    %v1472 = vunpack.c.l.b16 %v903
    %v1473 = vunpack.c.h.b16 %v903
    %v1474 = vunpack.c.l.b16 %v904
    %v1475 = vunpack.c.l.b16 %v905
    %v1476 = vunpack.c.h.b16 %v905
    %v1477 = vunpack.c.l.b16 %v906
    %v1478 = vunpack.c.h.b16 %v906
    %v1479 = vunpack.c.l.b16 %v907
    %v1480 = vunpack.c.l.b16 %v908
    %v1481 = vunpack.c.h.b16 %v908
    %v1482 = vunpack.c.l.b16 %v909
    %v1483 = vunpack.c.h.b16 %v909
    %v1484 = vunpack.c.l.b16 %v910
    %v1485 = vunpack.c.l.b16 %v911
    %v1486 = vunpack.c.h.b16 %v911
    %v1487 = vunpack.c.l.b16 %v912
    %v1488 = vunpack.c.h.b16 %v912
    %v1489 = vunpack.c.l.b16 %v913
    %v1490 = vunpack.c.l.b16 %v914
    %v1491 = vunpack.c.h.b16 %v914
    %v1492 = vunpack.c.l.b16 %v915
    %v1493 = vunpack.c.h.b16 %v915
    %v1494 = vunpack.c.l.b16 %v916
    %v1495 = vunpack.c.l.b16 %v917
    %v1496 = vunpack.c.h.b16 %v917
    %v1497 = vunpack.c.l.b16 %v918
    %v1498 = vunpack.c.h.b16 %v918
    %v1499 = vunpack.c.l.b16 %v919
    %v1500 = vunpack.c.l.b16 %v920
    %v1501 = vunpack.c.h.b16 %v920
    %v1502 = vunpack.c.l.b16 %v921
    %v1503 = vunpack.c.h.b16 %v921
    %v1504 = vunpack.c.l.b16 %v922
    %v1505 = vunpack.c.l.b16 %v923
    %v1506 = vunpack.c.h.b16 %v923
    %v1507 = vunpack.c.l.b16 %v924
    %v1508 = vunpack.c.h.b16 %v924
    %v1509 = vunpack.c.l.b16 %v925
    %v1510 = vunpack.c.l.b16 %v926
    %v1511 = vunpack.c.h.b16 %v926
    %v1512 = vunpack.c.l.b16 %v927
    %v1513 = vunpack.c.h.b16 %v927
    %v1514 = vunpack.c.l.b16 %v928
    %v1515 = vunpack.c.l.b16 %v929
    %v1516 = vunpack.c.h.b16 %v929
    %v1517 = vunpack.c.l.b16 %v930
    %v1518 = vunpack.c.h.b16 %v930
    %v1519 = vunpack.c.l.b16 %v931
    %v1520 = vunpack.c.l.b16 %v932
    %v1521 = vunpack.c.h.b16 %v932
    %v1522 = vunpack.c.l.b16 %v933
    %v1523 = vunpack.c.h.b16 %v933
    %v1524 = vunpack.c.l.b16 %v934
    %v1525 = vunpack.c.l.b16 %v935
    %v1526 = vunpack.c.h.b16 %v935
    %v1527 = vunpack.c.l.b16 %v936
    %v1528 = vunpack.c.h.b16 %v936
    %v1529 = vunpack.c.l.b16 %v937
    %v1530 = vunpack.c.l.b16 %v938
    %v1531 = vunpack.c.h.b16 %v938
    %v1532 = vunpack.c.l.b16 %v939
    %v1533 = vunpack.c.h.b16 %v939
    %v1534 = vunpack.c.l.b16 %v940
    %v1535 = vunpack.c.l.b16 %v941
    %v1536 = vunpack.c.h.b16 %v941
    %v1537 = vunpack.c.l.b16 %v942
    %v1538 = vunpack.c.h.b16 %v942
    %v1539 = vunpack.c.l.b16 %v943
    %v1540 = vunpack.c.l.b16 %v944
    %v1541 = vunpack.c.h.b16 %v944
    %v1542 = vunpack.c.l.b16 %v945
    %v1543 = vunpack.c.h.b16 %v945
    %v1544 = vunpack.c.l.b16 %v946
    %v1545 = vunpack.c.l.b16 %v947
    %v1546 = vunpack.c.h.b16 %v947
    %v1547 = vunpack.c.l.b16 %v948
    %v1548 = vunpack.c.h.b16 %v948
    %v1549 = vunpack.c.l.b16 %v949
    %v1550 = vunpack.c.l.b16 %v950
    %v1551 = vunpack.c.h.b16 %v950
    %v1552 = vunpack.c.l.b16 %v951
    %v1553 = vunpack.c.h.b16 %v951
    %v1554 = vunpack.c.l.b16 %v952
    %v1555 = vunpack.c.l.b16 %v953
    %v1556 = vunpack.c.h.b16 %v953
    %v1557 = vunpack.c.l.b16 %v954
    %v1558 = vunpack.c.h.b16 %v954
    %v1559 = vunpack.c.l.b16 %v955
    %v1560 = vunpack.c.l.b16 %v956
    %v1561 = vunpack.c.h.b16 %v956
    %v1562 = vunpack.c.l.b16 %v957
    %v1563 = vunpack.c.h.b16 %v957
    %v1564 = vunpack.c.l.b16 %v958
    %v1565 = vunpack.c.l.b16 %v959
    %v1566 = vunpack.c.h.b16 %v959
    %v1567 = vunpack.c.l.b16 %v960
    %v1568 = vunpack.c.h.b16 %v960
    %v1569 = vunpack.c.l.b16 %v961
    %v1570 = vunpack.c.l.b16 %v962
    %v1571 = vunpack.c.h.b16 %v962
    %v1572 = vunpack.c.l.b16 %v963
    %v1573 = vunpack.c.h.b16 %v963
    %v1574 = vunpack.c.l.b16 %v964
    %v1575 = vunpack.c.l.b16 %v965
    %v1576 = vunpack.c.h.b16 %v965
    %v1577 = vunpack.c.l.b16 %v966
    %v1578 = vunpack.c.h.b16 %v966
    %v1579 = vunpack.c.l.b16 %v967
    %v1580 = vunpack.c.l.b16 %v968
    %v1581 = vunpack.c.h.b16 %v968
    %v1582 = vunpack.c.l.b16 %v969
    %v1583 = vunpack.c.h.b16 %v969
    %v1584 = vunpack.c.l.b16 %v970
    %v1585 = vunpack.c.l.b16 %v971
    %v1586 = vunpack.c.h.b16 %v971
    %v1587 = vunpack.c.l.b16 %v972
    %v1588 = vunpack.c.h.b16 %v972
    %v1589 = vunpack.c.l.b16 %v973
    %v1590 = vunpack.c.l.b16 %v974
    %v1591 = vunpack.c.h.b16 %v974
    %v1592 = vunpack.c.l.b16 %v975
    %v1593 = vunpack.c.h.b16 %v975
    %v1594 = vunpack.c.l.b16 %v976
    %v1595 = vunpack.c.l.b16 %v977
    %v1596 = vunpack.c.h.b16 %v977
    %v1597 = vunpack.c.l.b16 %v978
    %v1598 = vunpack.c.h.b16 %v978
    %v1599 = vunpack.c.l.b16 %v979
    %v1600 = vunpack.c.l.b16 %v980
    %v1601 = vunpack.c.h.b16 %v980
    %v1602 = vunpack.c.l.b16 %v981
    %v1603 = vunpack.c.h.b16 %v981
    %v1604 = vunpack.c.l.b16 %v982
    %v1605 = vunpack.c.l.b16 %v983
    %v1606 = vunpack.c.h.b16 %v983
    %v1607 = vunpack.c.l.b16 %v984
    %v1608 = vunpack.c.h.b16 %v984
    %v1609 = vunpack.c.l.b16 %v985
    %v1610 = vunpack.c.l.b16 %v986
    %v1611 = vunpack.c.h.b16 %v986
    %v1612 = vunpack.c.l.b16 %v987
    %v1613 = vunpack.c.h.b16 %v987
    %v1614 = vunpack.c.l.b16 %v988
    %v1615 = vunpack.c.l.b16 %v989
    %v1616 = vunpack.c.h.b16 %v989
    %v1617 = vunpack.c.l.b16 %v990
    %v1618 = vunpack.c.h.b16 %v990
    %v1619 = vunpack.c.l.b16 %v991
    %v1620 = vunpack.c.l.b16 %v992
    %v1621 = vunpack.c.h.b16 %v992
    %v1622 = vunpack.c.l.b16 %v993
    %v1623 = vunpack.c.h.b16 %v993
    %v1624 = vunpack.c.l.b16 %v994
    %v1625 = vunpack.c.l.b16 %v995
    %v1626 = vunpack.c.h.b16 %v995
    %v1627 = vunpack.c.l.b16 %v996
    %v1628 = vunpack.c.h.b16 %v996
    %v1629 = vunpack.c.l.b16 %v997
    %v1630 = vunpack.c.l.b16 %v998
    %v1631 = vunpack.c.h.b16 %v998
    %v1632 = vunpack.c.l.b16 %v999
    %v1633 = vunpack.c.h.b16 %v999
    %v1634 = vunpack.c.l.b16 %v1000
    %v1635 = vunpack.c.l.b16 %v1001
    %v1636 = vunpack.c.h.b16 %v1001
    %v1637 = vunpack.c.l.b16 %v1002
    %v1638 = vunpack.c.h.b16 %v1002
    %v1639 = vunpack.c.l.b16 %v1003
    %v1640 = vunpack.c.l.b16 %v1004
    %v1641 = vunpack.c.h.b16 %v1004
    %v1642 = vunpack.c.l.b16 %v1005
    %v1643 = vunpack.c.h.b16 %v1005
    %v1644 = vunpack.c.l.b16 %v1006
    %v1645 = vunpack.c.l.b16 %v1007
    %v1646 = vunpack.c.h.b16 %v1007
    %v1647 = vunpack.c.l.b16 %v1008
    %v1648 = vunpack.c.h.b16 %v1008
    %v1649 = vunpack.c.l.b16 %v1009
    %v1650 = vunpack.c.l.b16 %v1010
    %v1651 = vunpack.c.h.b16 %v1010
    %v1652 = vunpack.c.l.b16 %v1011
    %v1653 = vunpack.c.h.b16 %v1011
    %v1654 = vunpack.c.l.b16 %v1012
    %v1655 = vunpack.c.l.b16 %v1013
    %v1656 = vunpack.c.h.b16 %v1013
    %v1657 = vunpack.c.l.b16 %v1014
    %v1658 = vunpack.c.h.b16 %v1014
    %v1659 = vunpack.c.l.b16 %v1015
    %v1660 = vunpack.c.l.b16 %v1016
    %v1661 = vunpack.c.h.b16 %v1016
    %v1662 = vunpack.c.l.b16 %v1017
    %v1663 = vunpack.c.h.b16 %v1017
    %v1664 = vunpack.c.l.b16 %v1018
    %v1665 = vunpack.c.l.b16 %v1019
    %v1666 = vunpack.c.h.b16 %v1019
    %v1667 = vunpack.c.l.b16 %v1020
    %v1668 = vunpack.c.h.b16 %v1020
    %v1669 = vunpack.c.l.b16 %v1021
    %v1670 = vunpack.c.l.b16 %v1022
    %v1671 = vunpack.c.h.b16 %v1022
    %v1672 = vunpack.c.l.b16 %v1023
    %v1673 = vunpack.c.h.b16 %v1023
    %v1674 = vunpack.c.l.b16 %v1024
    %v1675 = vunpack.c.l.b16 %v1025
    %v1676 = vunpack.c.h.b16 %v1025
    %v1677 = vunpack.c.l.b16 %v1026
    %v1678 = vunpack.c.h.b16 %v1026
    %v1679 = vunpack.c.l.b16 %v1027
    %v1680 = vpack.c.b16 %v1285, %v1280
    %v1681 = vpack.c.b16 %v1286, %v1281
    %v1682 = vpack.c.b16 %v1287, %v1282
    %v1683 = vpack.c.b16 %v1288, %v1283
    %v1684 = vpack.c.b16 %v1289, %v1284
    %v1685 = vpack.c.b16 %v1295, %v1290
    %v1686 = vpack.c.b16 %v1296, %v1291
    %v1687 = vpack.c.b16 %v1297, %v1292
    %v1688 = vpack.c.b16 %v1298, %v1293
    %v1689 = vpack.c.b16 %v1299, %v1294
    %v1690 = vpack.c.b16 %v1305, %v1300
    %v1691 = vpack.c.b16 %v1306, %v1301
    %v1692 = vpack.c.b16 %v1307, %v1302
    %v1693 = vpack.c.b16 %v1308, %v1303
    %v1694 = vpack.c.b16 %v1309, %v1304
    %v1695 = vpack.c.b16 %v1315, %v1310
    %v1696 = vpack.c.b16 %v1316, %v1311
    %v1697 = vpack.c.b16 %v1317, %v1312
    %v1698 = vpack.c.b16 %v1318, %v1313
    %v1699 = vpack.c.b16 %v1319, %v1314
    %v1700 = vpack.c.b16 %v1325, %v1320
    %v1701 = vpack.c.b16 %v1326, %v1321
    %v1702 = vpack.c.b16 %v1327, %v1322
    %v1703 = vpack.c.b16 %v1328, %v1323
    %v1704 = vpack.c.b16 %v1329, %v1324
    %v1705 = vpack.c.b16 %v1335, %v1330
    %v1706 = vpack.c.b16 %v1336, %v1331
    %v1707 = vpack.c.b16 %v1337, %v1332
    %v1708 = vpack.c.b16 %v1338, %v1333
    %v1709 = vpack.c.b16 %v1339, %v1334
    %v1710 = vpack.c.b16 %v1345, %v1340
    %v1711 = vpack.c.b16 %v1346, %v1341
    %v1712 = vpack.c.b16 %v1347, %v1342
    %v1713 = vpack.c.b16 %v1348, %v1343
    %v1714 = vpack.c.b16 %v1349, %v1344
    %v1715 = vpack.c.b16 %v1355, %v1350
    %v1716 = vpack.c.b16 %v1356, %v1351
    %v1717 = vpack.c.b16 %v1357, %v1352
    %v1718 = vpack.c.b16 %v1358, %v1353
    %v1719 = vpack.c.b16 %v1359, %v1354
    %v1720 = vpack.c.b16 %v1365, %v1360
    %v1721 = vpack.c.b16 %v1366, %v1361
    %v1722 = vpack.c.b16 %v1367, %v1362
    %v1723 = vpack.c.b16 %v1368, %v1363
    %v1724 = vpack.c.b16 %v1369, %v1364
    %v1725 = vpack.c.b16 %v1375, %v1370
    %v1726 = vpack.c.b16 %v1376, %v1371
    %v1727 = vpack.c.b16 %v1377, %v1372
    %v1728 = vpack.c.b16 %v1378, %v1373
    %v1729 = vpack.c.b16 %v1379, %v1374
    %v1730 = vpack.c.b16 %v1385, %v1380
    %v1731 = vpack.c.b16 %v1386, %v1381
    %v1732 = vpack.c.b16 %v1387, %v1382
    %v1733 = vpack.c.b16 %v1388, %v1383
    %v1734 = vpack.c.b16 %v1389, %v1384
    %v1735 = vpack.c.b16 %v1395, %v1390
    %v1736 = vpack.c.b16 %v1396, %v1391
    %v1737 = vpack.c.b16 %v1397, %v1392
    %v1738 = vpack.c.b16 %v1398, %v1393
    %v1739 = vpack.c.b16 %v1399, %v1394
    %v1740 = vpack.c.b16 %v1405, %v1400
    %v1741 = vpack.c.b16 %v1406, %v1401
    %v1742 = vpack.c.b16 %v1407, %v1402
    %v1743 = vpack.c.b16 %v1408, %v1403
    %v1744 = vpack.c.b16 %v1409, %v1404
    %v1745 = vpack.c.b16 %v1415, %v1410
    %v1746 = vpack.c.b16 %v1416, %v1411
    %v1747 = vpack.c.b16 %v1417, %v1412
    %v1748 = vpack.c.b16 %v1418, %v1413
    %v1749 = vpack.c.b16 %v1419, %v1414
    %v1750 = vpack.c.b16 %v1425, %v1420
    %v1751 = vpack.c.b16 %v1426, %v1421
    %v1752 = vpack.c.b16 %v1427, %v1422
    %v1753 = vpack.c.b16 %v1428, %v1423
    %v1754 = vpack.c.b16 %v1429, %v1424
    %v1755 = vpack.c.b16 %v1435, %v1430
    %v1756 = vpack.c.b16 %v1436, %v1431
    %v1757 = vpack.c.b16 %v1437, %v1432
    %v1758 = vpack.c.b16 %v1438, %v1433
    %v1759 = vpack.c.b16 %v1439, %v1434
    %v1760 = vpack.c.b16 %v1445, %v1440
    %v1761 = vpack.c.b16 %v1446, %v1441
    %v1762 = vpack.c.b16 %v1447, %v1442
    %v1763 = vpack.c.b16 %v1448, %v1443
    %v1764 = vpack.c.b16 %v1449, %v1444
    %v1765 = vpack.c.b16 %v1455, %v1450
    %v1766 = vpack.c.b16 %v1456, %v1451
    %v1767 = vpack.c.b16 %v1457, %v1452
    %v1768 = vpack.c.b16 %v1458, %v1453
    %v1769 = vpack.c.b16 %v1459, %v1454
    %v1770 = vpack.c.b16 %v1465, %v1460
    %v1771 = vpack.c.b16 %v1466, %v1461
    %v1772 = vpack.c.b16 %v1467, %v1462
    %v1773 = vpack.c.b16 %v1468, %v1463
    %v1774 = vpack.c.b16 %v1469, %v1464
    %v1775 = vpack.c.b16 %v1475, %v1470
    %v1776 = vpack.c.b16 %v1476, %v1471
    %v1777 = vpack.c.b16 %v1477, %v1472
    %v1778 = vpack.c.b16 %v1478, %v1473
    %v1779 = vpack.c.b16 %v1479, %v1474
    %v1780 = vpack.c.b16 %v1485, %v1480
    %v1781 = vpack.c.b16 %v1486, %v1481
    %v1782 = vpack.c.b16 %v1487, %v1482
    %v1783 = vpack.c.b16 %v1488, %v1483
    %v1784 = vpack.c.b16 %v1489, %v1484
    %v1785 = vpack.c.b16 %v1495, %v1490
    %v1786 = vpack.c.b16 %v1496, %v1491
    %v1787 = vpack.c.b16 %v1497, %v1492
    %v1788 = vpack.c.b16 %v1498, %v1493
    %v1789 = vpack.c.b16 %v1499, %v1494
    %v1790 = vpack.c.b16 %v1505, %v1500
    %v1791 = vpack.c.b16 %v1506, %v1501
    %v1792 = vpack.c.b16 %v1507, %v1502
    %v1793 = vpack.c.b16 %v1508, %v1503
    %v1794 = vpack.c.b16 %v1509, %v1504
    %v1795 = vpack.c.b16 %v1515, %v1510
    %v1796 = vpack.c.b16 %v1516, %v1511
    %v1797 = vpack.c.b16 %v1517, %v1512
    %v1798 = vpack.c.b16 %v1518, %v1513
    %v1799 = vpack.c.b16 %v1519, %v1514
    %v1800 = vpack.c.b16 %v1525, %v1520
    %v1801 = vpack.c.b16 %v1526, %v1521
    %v1802 = vpack.c.b16 %v1527, %v1522
    %v1803 = vpack.c.b16 %v1528, %v1523
    %v1804 = vpack.c.b16 %v1529, %v1524
    %v1805 = vpack.c.b16 %v1535, %v1530
    %v1806 = vpack.c.b16 %v1536, %v1531
    %v1807 = vpack.c.b16 %v1537, %v1532
    %v1808 = vpack.c.b16 %v1538, %v1533
    %v1809 = vpack.c.b16 %v1539, %v1534
    %v1810 = vpack.c.b16 %v1545, %v1540
    %v1811 = vpack.c.b16 %v1546, %v1541
    %v1812 = vpack.c.b16 %v1547, %v1542
    %v1813 = vpack.c.b16 %v1548, %v1543
    %v1814 = vpack.c.b16 %v1549, %v1544
    %v1815 = vpack.c.b16 %v1555, %v1550
    %v1816 = vpack.c.b16 %v1556, %v1551
    %v1817 = vpack.c.b16 %v1557, %v1552
    %v1818 = vpack.c.b16 %v1558, %v1553
    %v1819 = vpack.c.b16 %v1559, %v1554
    %v1820 = vpack.c.b16 %v1565, %v1560
    %v1821 = vpack.c.b16 %v1566, %v1561
    %v1822 = vpack.c.b16 %v1567, %v1562
    %v1823 = vpack.c.b16 %v1568, %v1563
    %v1824 = vpack.c.b16 %v1569, %v1564
    %v1825 = vpack.c.b16 %v1575, %v1570
    %v1826 = vpack.c.b16 %v1576, %v1571
    %v1827 = vpack.c.b16 %v1577, %v1572
    %v1828 = vpack.c.b16 %v1578, %v1573
    %v1829 = vpack.c.b16 %v1579, %v1574
    %v1830 = vpack.c.b16 %v1585, %v1580
    %v1831 = vpack.c.b16 %v1586, %v1581
    %v1832 = vpack.c.b16 %v1587, %v1582
    %v1833 = vpack.c.b16 %v1588, %v1583
    %v1834 = vpack.c.b16 %v1589, %v1584
    %v1835 = vpack.c.b16 %v1595, %v1590
    %v1836 = vpack.c.b16 %v1596, %v1591
    %v1837 = vpack.c.b16 %v1597, %v1592
    %v1838 = vpack.c.b16 %v1598, %v1593
    %v1839 = vpack.c.b16 %v1599, %v1594
    %v1840 = vpack.c.b16 %v1605, %v1600
    %v1841 = vpack.c.b16 %v1606, %v1601
    %v1842 = vpack.c.b16 %v1607, %v1602
    %v1843 = vpack.c.b16 %v1608, %v1603
    %v1844 = vpack.c.b16 %v1609, %v1604
    %v1845 = vpack.c.b16 %v1615, %v1610
    %v1846 = vpack.c.b16 %v1616, %v1611
    %v1847 = vpack.c.b16 %v1617, %v1612
    %v1848 = vpack.c.b16 %v1618, %v1613
    %v1849 = vpack.c.b16 %v1619, %v1614
    %v1850 = vpack.c.b16 %v1625, %v1620
    %v1851 = vpack.c.b16 %v1626, %v1621
    %v1852 = vpack.c.b16 %v1627, %v1622
    %v1853 = vpack.c.b16 %v1628, %v1623
    %v1854 = vpack.c.b16 %v1629, %v1624
    %v1855 = vpack.c.b16 %v1635, %v1630
    %v1856 = vpack.c.b16 %v1636, %v1631
    %v1857 = vpack.c.b16 %v1637, %v1632
    %v1858 = vpack.c.b16 %v1638, %v1633
    %v1859 = vpack.c.b16 %v1639, %v1634
    %v1860 = vpack.c.b16 %v1645, %v1640
    %v1861 = vpack.c.b16 %v1646, %v1641
    %v1862 = vpack.c.b16 %v1647, %v1642
    %v1863 = vpack.c.b16 %v1648, %v1643
    %v1864 = vpack.c.b16 %v1649, %v1644
    %v1865 = vpack.c.b16 %v1655, %v1650
    %v1866 = vpack.c.b16 %v1656, %v1651
    %v1867 = vpack.c.b16 %v1657, %v1652
    %v1868 = vpack.c.b16 %v1658, %v1653
    %v1869 = vpack.c.b16 %v1659, %v1654
    %v1870 = vpack.c.b16 %v1665, %v1660
    %v1871 = vpack.c.b16 %v1666, %v1661
    %v1872 = vpack.c.b16 %v1667, %v1662
    %v1873 = vpack.c.b16 %v1668, %v1663
    %v1874 = vpack.c.b16 %v1669, %v1664
    %v1875 = vpack.c.b16 %v1675, %v1670
    %v1876 = vpack.c.b16 %v1676, %v1671
    %v1877 = vpack.c.b16 %v1677, %v1672
    %v1878 = vpack.c.b16 %v1678, %v1673
    %v1879 = vpack.c.b16 %v1679, %v1674
    %2080 = vmatpush.bf16.msra.mxu0 %v1715
    %2081 = vmatpush.bf16.msra.mxu0 %v1710
    %2082 = vmatpush.bf16.msra.mxu0 %v1705
    %2083 = vmatpush.bf16.msra.mxu0 %v1700
    %2084 = vmatpush.bf16.msra.mxu0 %v1695
    %2085 = vmatpush.bf16.msra.mxu0 %v1690
    %2086 = vmatpush.bf16.msra.mxu0 %v1685
    %2087 = vmatpush.bf16.msra.mxu0 %v1680
    %2088 = vmatmul.bf16.gmra.mxu0 %v783
    %v2089 = vpop.f32.mrf.mxu0
    %v2090 = vadd.f32 %v1030, %v2089
    %v2091 = vpop.f32.mrf.mxu0
    %v2092 = vadd.f32 %v1030, %v2091
    %2093 = vdwg.mxu0
    %2094 = vmatpush.bf16.msra.mxu0 %v1755
    %2095 = vmatpush.bf16.msra.mxu0 %v1750
    %2096 = vmatpush.bf16.msra.mxu0 %v1745
    %2097 = vmatpush.bf16.msra.mxu0 %v1740
    %2098 = vmatpush.bf16.msra.mxu0 %v1735
    %2099 = vmatpush.bf16.msra.mxu0 %v1730
    %2100 = vmatpush.bf16.msra.mxu0 %v1725
    %2101 = vmatpush.bf16.msra.mxu0 %v1720
    %2102 = vmatmul.bf16.gmra.mxu0 %v784
    %v2103 = vpop.f32.mrf.mxu0
    %v2104 = vadd.f32 %v2090, %v2103
    %v2105 = vpop.f32.mrf.mxu0
    %v2106 = vadd.f32 %v2092, %v2105
    %2107 = vdwg.mxu0
    %2108 = vmatpush.bf16.msra.mxu0 %v1795
    %2109 = vmatpush.bf16.msra.mxu0 %v1790
    %2110 = vmatpush.bf16.msra.mxu0 %v1785
    %2111 = vmatpush.bf16.msra.mxu0 %v1780
    %2112 = vmatpush.bf16.msra.mxu0 %v1775
    %2113 = vmatpush.bf16.msra.mxu0 %v1770
    %2114 = vmatpush.bf16.msra.mxu0 %v1765
    %2115 = vmatpush.bf16.msra.mxu0 %v1760
    %2116 = vmatmul.bf16.gmra.mxu0 %v785
    %v2117 = vpop.f32.mrf.mxu0
    %v2118 = vadd.f32 %v2104, %v2117
    %v2119 = vpop.f32.mrf.mxu0
    %v2120 = vadd.f32 %v2106, %v2119
    %2121 = vdwg.mxu0
    %2122 = vmatpush.bf16.msra.mxu0 %v1835
    %2123 = vmatpush.bf16.msra.mxu0 %v1830
    %2124 = vmatpush.bf16.msra.mxu0 %v1825
    %2125 = vmatpush.bf16.msra.mxu0 %v1820
    %2126 = vmatpush.bf16.msra.mxu0 %v1815
    %2127 = vmatpush.bf16.msra.mxu0 %v1810
    %2128 = vmatpush.bf16.msra.mxu0 %v1805
    %2129 = vmatpush.bf16.msra.mxu0 %v1800
    %2130 = vmatmul.bf16.gmra.mxu0 %v786
    %v2131 = vpop.f32.mrf.mxu0
    %v2132 = vadd.f32 %v2118, %v2131
    %v2133 = vpop.f32.mrf.mxu0
    %v2134 = vadd.f32 %v2120, %v2133
    %2135 = vdwg.mxu0
    %2136 = vmatpush.bf16.msra.mxu0 %v1875
    %2137 = vmatpush.bf16.msra.mxu0 %v1870
    %2138 = vmatpush.bf16.msra.mxu0 %v1865
    %2139 = vmatpush.bf16.msra.mxu0 %v1860
    %2140 = vmatpush.bf16.msra.mxu0 %v1855
    %2141 = vmatpush.bf16.msra.mxu0 %v1850
    %2142 = vmatpush.bf16.msra.mxu0 %v1845
    %2143 = vmatpush.bf16.msra.mxu0 %v1840
    %2144 = vmatmul.bf16.gmra.mxu0 %v787
    %v2145 = vpop.f32.mrf.mxu0
    %v2146 = vadd.f32 %v2132, %v2145
    %v2147 = vpop.f32.mrf.mxu0
    %v2148 = vadd.f32 %v2134, %v2147
    %2149 = vdwg.mxu0
    %2150 = vmatpush.bf16.msra.mxu0 %v1716
    %2151 = vmatpush.bf16.msra.mxu0 %v1711
    %2152 = vmatpush.bf16.msra.mxu0 %v1706
    %2153 = vmatpush.bf16.msra.mxu0 %v1701
    %2154 = vmatpush.bf16.msra.mxu0 %v1696
    %2155 = vmatpush.bf16.msra.mxu0 %v1691
    %2156 = vmatpush.bf16.msra.mxu0 %v1686
    %2157 = vmatpush.bf16.msra.mxu0 %v1681
    %2158 = vmatmul.bf16.gmra.mxu0 %v783
    %v2159 = vpop.f32.mrf.mxu0
    %v2160 = vadd.f32 %v1031, %v2159
    %v2161 = vpop.f32.mrf.mxu0
    %v2162 = vadd.f32 %v1031, %v2161
    %2163 = vdwg.mxu0
    %2164 = vmatpush.bf16.msra.mxu0 %v1756
    %2165 = vmatpush.bf16.msra.mxu0 %v1751
    %2166 = vmatpush.bf16.msra.mxu0 %v1746
    %2167 = vmatpush.bf16.msra.mxu0 %v1741
    %2168 = vmatpush.bf16.msra.mxu0 %v1736
    %2169 = vmatpush.bf16.msra.mxu0 %v1731
    %2170 = vmatpush.bf16.msra.mxu0 %v1726
    %2171 = vmatpush.bf16.msra.mxu0 %v1721
    %2172 = vmatmul.bf16.gmra.mxu0 %v784
    %v2173 = vpop.f32.mrf.mxu0
    %v2174 = vadd.f32 %v2160, %v2173
    %v2175 = vpop.f32.mrf.mxu0
    %v2176 = vadd.f32 %v2162, %v2175
    %2177 = vdwg.mxu0
    %2178 = vmatpush.bf16.msra.mxu0 %v1796
    %2179 = vmatpush.bf16.msra.mxu0 %v1791
    %2180 = vmatpush.bf16.msra.mxu0 %v1786
    %2181 = vmatpush.bf16.msra.mxu0 %v1781
    %2182 = vmatpush.bf16.msra.mxu0 %v1776
    %2183 = vmatpush.bf16.msra.mxu0 %v1771
    %2184 = vmatpush.bf16.msra.mxu0 %v1766
    %2185 = vmatpush.bf16.msra.mxu0 %v1761
    %2186 = vmatmul.bf16.gmra.mxu0 %v785
    %v2187 = vpop.f32.mrf.mxu0
    %v2188 = vadd.f32 %v2174, %v2187
    %v2189 = vpop.f32.mrf.mxu0
    %v2190 = vadd.f32 %v2176, %v2189
    %2191 = vdwg.mxu0
    %2192 = vmatpush.bf16.msra.mxu0 %v1836
    %2193 = vmatpush.bf16.msra.mxu0 %v1831
    %2194 = vmatpush.bf16.msra.mxu0 %v1826
    %2195 = vmatpush.bf16.msra.mxu0 %v1821
    %2196 = vmatpush.bf16.msra.mxu0 %v1816
    %2197 = vmatpush.bf16.msra.mxu0 %v1811
    %2198 = vmatpush.bf16.msra.mxu0 %v1806
    %2199 = vmatpush.bf16.msra.mxu0 %v1801
    %2200 = vmatmul.bf16.gmra.mxu0 %v786
    %v2201 = vpop.f32.mrf.mxu0
    %v2202 = vadd.f32 %v2188, %v2201
    %v2203 = vpop.f32.mrf.mxu0
    %v2204 = vadd.f32 %v2190, %v2203
    %2205 = vdwg.mxu0
    %2206 = vmatpush.bf16.msra.mxu0 %v1876
    %2207 = vmatpush.bf16.msra.mxu0 %v1871
    %2208 = vmatpush.bf16.msra.mxu0 %v1866
    %2209 = vmatpush.bf16.msra.mxu0 %v1861
    %2210 = vmatpush.bf16.msra.mxu0 %v1856
    %2211 = vmatpush.bf16.msra.mxu0 %v1851
    %2212 = vmatpush.bf16.msra.mxu0 %v1846
    %2213 = vmatpush.bf16.msra.mxu0 %v1841
    %2214 = vmatmul.bf16.gmra.mxu0 %v787
    %v2215 = vpop.f32.mrf.mxu0
    %v2216 = vadd.f32 %v2202, %v2215
    %v2217 = vpop.f32.mrf.mxu0
    %v2218 = vadd.f32 %v2204, %v2217
    %2219 = vdwg.mxu0
    %2220 = vmatpush.bf16.msra.mxu0 %v1717
    %2221 = vmatpush.bf16.msra.mxu0 %v1712
    %2222 = vmatpush.bf16.msra.mxu0 %v1707
    %2223 = vmatpush.bf16.msra.mxu0 %v1702
    %2224 = vmatpush.bf16.msra.mxu0 %v1697
    %2225 = vmatpush.bf16.msra.mxu0 %v1692
    %2226 = vmatpush.bf16.msra.mxu0 %v1687
    %2227 = vmatpush.bf16.msra.mxu0 %v1682
    %2228 = vmatmul.bf16.gmra.mxu0 %v783
    %v2229 = vpop.f32.mrf.mxu0
    %v2230 = vadd.f32 %v1032, %v2229
    %v2231 = vpop.f32.mrf.mxu0
    %v2232 = vadd.f32 %v1032, %v2231
    %2233 = vdwg.mxu0
    %2234 = vmatpush.bf16.msra.mxu0 %v1757
    %2235 = vmatpush.bf16.msra.mxu0 %v1752
    %2236 = vmatpush.bf16.msra.mxu0 %v1747
    %2237 = vmatpush.bf16.msra.mxu0 %v1742
    %2238 = vmatpush.bf16.msra.mxu0 %v1737
    %2239 = vmatpush.bf16.msra.mxu0 %v1732
    %2240 = vmatpush.bf16.msra.mxu0 %v1727
    %2241 = vmatpush.bf16.msra.mxu0 %v1722
    %2242 = vmatmul.bf16.gmra.mxu0 %v784
    %v2243 = vpop.f32.mrf.mxu0
    %v2244 = vadd.f32 %v2230, %v2243
    %v2245 = vpop.f32.mrf.mxu0
    %v2246 = vadd.f32 %v2232, %v2245
    %2247 = vdwg.mxu0
    %2248 = vmatpush.bf16.msra.mxu0 %v1797
    %2249 = vmatpush.bf16.msra.mxu0 %v1792
    %2250 = vmatpush.bf16.msra.mxu0 %v1787
    %2251 = vmatpush.bf16.msra.mxu0 %v1782
    %2252 = vmatpush.bf16.msra.mxu0 %v1777
    %2253 = vmatpush.bf16.msra.mxu0 %v1772
    %2254 = vmatpush.bf16.msra.mxu0 %v1767
    %2255 = vmatpush.bf16.msra.mxu0 %v1762
    %2256 = vmatmul.bf16.gmra.mxu0 %v785
    %v2257 = vpop.f32.mrf.mxu0
    %v2258 = vadd.f32 %v2244, %v2257
    %v2259 = vpop.f32.mrf.mxu0
    %v2260 = vadd.f32 %v2246, %v2259
    %2261 = vdwg.mxu0
    %2262 = vmatpush.bf16.msra.mxu0 %v1837
    %2263 = vmatpush.bf16.msra.mxu0 %v1832
    %2264 = vmatpush.bf16.msra.mxu0 %v1827
    %2265 = vmatpush.bf16.msra.mxu0 %v1822
    %2266 = vmatpush.bf16.msra.mxu0 %v1817
    %2267 = vmatpush.bf16.msra.mxu0 %v1812
    %2268 = vmatpush.bf16.msra.mxu0 %v1807
    %2269 = vmatpush.bf16.msra.mxu0 %v1802
    %2270 = vmatmul.bf16.gmra.mxu0 %v786
    %v2271 = vpop.f32.mrf.mxu0
    %v2272 = vadd.f32 %v2258, %v2271
    %v2273 = vpop.f32.mrf.mxu0
    %v2274 = vadd.f32 %v2260, %v2273
    %2275 = vdwg.mxu0
    %2276 = vmatpush.bf16.msra.mxu0 %v1877
    %2277 = vmatpush.bf16.msra.mxu0 %v1872
    %2278 = vmatpush.bf16.msra.mxu0 %v1867
    %2279 = vmatpush.bf16.msra.mxu0 %v1862
    %2280 = vmatpush.bf16.msra.mxu0 %v1857
    %2281 = vmatpush.bf16.msra.mxu0 %v1852
    %2282 = vmatpush.bf16.msra.mxu0 %v1847
    %2283 = vmatpush.bf16.msra.mxu0 %v1842
    %2284 = vmatmul.bf16.gmra.mxu0 %v787
    %v2285 = vpop.f32.mrf.mxu0
    %v2286 = vadd.f32 %v2272, %v2285
    %v2287 = vpop.f32.mrf.mxu0
    %v2288 = vadd.f32 %v2274, %v2287
    %2289 = vdwg.mxu0
    %2290 = vmatpush.bf16.msra.mxu0 %v1718
    %2291 = vmatpush.bf16.msra.mxu0 %v1713
    %2292 = vmatpush.bf16.msra.mxu0 %v1708
    %2293 = vmatpush.bf16.msra.mxu0 %v1703
    %2294 = vmatpush.bf16.msra.mxu0 %v1698
    %2295 = vmatpush.bf16.msra.mxu0 %v1693
    %2296 = vmatpush.bf16.msra.mxu0 %v1688
    %2297 = vmatpush.bf16.msra.mxu0 %v1683
    %2298 = vmatmul.bf16.gmra.mxu0 %v783
    %v2299 = vpop.f32.mrf.mxu0
    %v2300 = vadd.f32 %v1033, %v2299
    %v2301 = vpop.f32.mrf.mxu0
    %v2302 = vadd.f32 %v1033, %v2301
    %2303 = vdwg.mxu0
    %2304 = vmatpush.bf16.msra.mxu0 %v1758
    %2305 = vmatpush.bf16.msra.mxu0 %v1753
    %2306 = vmatpush.bf16.msra.mxu0 %v1748
    %2307 = vmatpush.bf16.msra.mxu0 %v1743
    %2308 = vmatpush.bf16.msra.mxu0 %v1738
    %2309 = vmatpush.bf16.msra.mxu0 %v1733
    %2310 = vmatpush.bf16.msra.mxu0 %v1728
    %2311 = vmatpush.bf16.msra.mxu0 %v1723
    %2312 = vmatmul.bf16.gmra.mxu0 %v784
    %v2313 = vpop.f32.mrf.mxu0
    %v2314 = vadd.f32 %v2300, %v2313
    %v2315 = vpop.f32.mrf.mxu0
    %v2316 = vadd.f32 %v2302, %v2315
    %2317 = vdwg.mxu0
    %2318 = vmatpush.bf16.msra.mxu0 %v1798
    %2319 = vmatpush.bf16.msra.mxu0 %v1793
    %2320 = vmatpush.bf16.msra.mxu0 %v1788
    %2321 = vmatpush.bf16.msra.mxu0 %v1783
    %2322 = vmatpush.bf16.msra.mxu0 %v1778
    %2323 = vmatpush.bf16.msra.mxu0 %v1773
    %2324 = vmatpush.bf16.msra.mxu0 %v1768
    %2325 = vmatpush.bf16.msra.mxu0 %v1763
    %2326 = vmatmul.bf16.gmra.mxu0 %v785
    %v2327 = vpop.f32.mrf.mxu0
    %v2328 = vadd.f32 %v2314, %v2327
    %v2329 = vpop.f32.mrf.mxu0
    %v2330 = vadd.f32 %v2316, %v2329
    %2331 = vdwg.mxu0
    %2332 = vmatpush.bf16.msra.mxu0 %v1838
    %2333 = vmatpush.bf16.msra.mxu0 %v1833
    %2334 = vmatpush.bf16.msra.mxu0 %v1828
    %2335 = vmatpush.bf16.msra.mxu0 %v1823
    %2336 = vmatpush.bf16.msra.mxu0 %v1818
    %2337 = vmatpush.bf16.msra.mxu0 %v1813
    %2338 = vmatpush.bf16.msra.mxu0 %v1808
    %2339 = vmatpush.bf16.msra.mxu0 %v1803
    %2340 = vmatmul.bf16.gmra.mxu0 %v786
    %v2341 = vpop.f32.mrf.mxu0
    %v2342 = vadd.f32 %v2328, %v2341
    %v2343 = vpop.f32.mrf.mxu0
    %v2344 = vadd.f32 %v2330, %v2343
    %2345 = vdwg.mxu0
    %2346 = vmatpush.bf16.msra.mxu0 %v1878
    %2347 = vmatpush.bf16.msra.mxu0 %v1873
    %2348 = vmatpush.bf16.msra.mxu0 %v1868
    %2349 = vmatpush.bf16.msra.mxu0 %v1863
    %2350 = vmatpush.bf16.msra.mxu0 %v1858
    %2351 = vmatpush.bf16.msra.mxu0 %v1853
    %2352 = vmatpush.bf16.msra.mxu0 %v1848
    %2353 = vmatpush.bf16.msra.mxu0 %v1843
    %2354 = vmatmul.bf16.gmra.mxu0 %v787
    %v2355 = vpop.f32.mrf.mxu0
    %v2356 = vadd.f32 %v2342, %v2355
    %v2357 = vpop.f32.mrf.mxu0
    %v2358 = vadd.f32 %v2344, %v2357
    %2359 = vdwg.mxu0
    %2360 = vmatpush.bf16.msra.mxu0 %v1719
    %2361 = vmatpush.bf16.msra.mxu0 %v1714
    %2362 = vmatpush.bf16.msra.mxu0 %v1709
    %2363 = vmatpush.bf16.msra.mxu0 %v1704
    %2364 = vmatpush.bf16.msra.mxu0 %v1699
    %2365 = vmatpush.bf16.msra.mxu0 %v1694
    %2366 = vmatpush.bf16.msra.mxu0 %v1689
    %2367 = vmatpush.bf16.msra.mxu0 %v1684
    %2368 = vmatmul.bf16.gmra.mxu0 %v783
    %v2369 = vpop.f32.mrf.mxu0
    %v2370 = vadd.f32 %v1034, %v2369
    %v2371 = vpop.f32.mrf.mxu0
    %v2372 = vadd.f32 %v1034, %v2371
    %2373 = vdwg.mxu0
    %2374 = vmatpush.bf16.msra.mxu0 %v1759
    %2375 = vmatpush.bf16.msra.mxu0 %v1754
    %2376 = vmatpush.bf16.msra.mxu0 %v1749
    %2377 = vmatpush.bf16.msra.mxu0 %v1744
    %2378 = vmatpush.bf16.msra.mxu0 %v1739
    %2379 = vmatpush.bf16.msra.mxu0 %v1734
    %2380 = vmatpush.bf16.msra.mxu0 %v1729
    %2381 = vmatpush.bf16.msra.mxu0 %v1724
    %2382 = vmatmul.bf16.gmra.mxu0 %v784
    %v2383 = vpop.f32.mrf.mxu0
    %v2384 = vadd.f32 %v2370, %v2383
    %v2385 = vpop.f32.mrf.mxu0
    %v2386 = vadd.f32 %v2372, %v2385
    %2387 = vdwg.mxu0
    %2388 = vmatpush.bf16.msra.mxu0 %v1799
    %2389 = vmatpush.bf16.msra.mxu0 %v1794
    %2390 = vmatpush.bf16.msra.mxu0 %v1789
    %2391 = vmatpush.bf16.msra.mxu0 %v1784
    %2392 = vmatpush.bf16.msra.mxu0 %v1779
    %2393 = vmatpush.bf16.msra.mxu0 %v1774
    %2394 = vmatpush.bf16.msra.mxu0 %v1769
    %2395 = vmatpush.bf16.msra.mxu0 %v1764
    %2396 = vmatmul.bf16.gmra.mxu0 %v785
    %v2397 = vpop.f32.mrf.mxu0
    %v2398 = vadd.f32 %v2384, %v2397
    %v2399 = vpop.f32.mrf.mxu0
    %v2400 = vadd.f32 %v2386, %v2399
    %2401 = vdwg.mxu0
    %2402 = vmatpush.bf16.msra.mxu0 %v1839
    %2403 = vmatpush.bf16.msra.mxu0 %v1834
    %2404 = vmatpush.bf16.msra.mxu0 %v1829
    %2405 = vmatpush.bf16.msra.mxu0 %v1824
    %2406 = vmatpush.bf16.msra.mxu0 %v1819
    %2407 = vmatpush.bf16.msra.mxu0 %v1814
    %2408 = vmatpush.bf16.msra.mxu0 %v1809
    %2409 = vmatpush.bf16.msra.mxu0 %v1804
    %2410 = vmatmul.bf16.gmra.mxu0 %v786
    %v2411 = vpop.f32.mrf.mxu0
    %v2412 = vadd.f32 %v2398, %v2411
    %v2413 = vpop.f32.mrf.mxu0
    %v2414 = vadd.f32 %v2400, %v2413
    %2415 = vdwg.mxu0
    %2416 = vmatpush.bf16.msra.mxu0 %v1879
    %2417 = vmatpush.bf16.msra.mxu0 %v1874
    %2418 = vmatpush.bf16.msra.mxu0 %v1869
    %2419 = vmatpush.bf16.msra.mxu0 %v1864
    %2420 = vmatpush.bf16.msra.mxu0 %v1859
    %2421 = vmatpush.bf16.msra.mxu0 %v1854
    %2422 = vmatpush.bf16.msra.mxu0 %v1849
    %2423 = vmatpush.bf16.msra.mxu0 %v1844
    %2424 = vmatmul.bf16.gmra.mxu0 %v787
    %v2425 = vpop.f32.mrf.mxu0
    %v2426 = vadd.f32 %v2412, %v2425
    %v2427 = vpop.f32.mrf.mxu0
    %v2428 = vadd.f32 %v2414, %v2427
    %2429 = vdwg.mxu0
    %v2430 = vmax.f32 %v2146, 0.0
    %v2431 = vmax.f32 %v2216, 0.0
    %v2432 = vmax.f32 %v2286, 0.0
    %v2433 = vmax.f32 %v2356, 0.0
    %v2434 = vmax.f32 %v2426, 0.0
    %v2435 = vmax.f32 %v2148, 0.0
    %v2436 = vmax.f32 %v2218, 0.0
    %v2437 = vmax.f32 %v2288, 0.0
    %v2438 = vmax.f32 %v2358, 0.0
    %v2439 = vmax.f32 %v2428, 0.0
    %v2440 = vpack.c.bf16 %v2435, %v2430
    %v2441 = vpack.c.bf16 %v2436, %v2431
    %v2442 = vpack.c.bf16 %v2437, %v2432
    %v2443 = vpack.c.bf16 %v2438, %v2433
    %v2444 = vpack.c.bf16 %v2439, %v2434
    %v2445 = vld [vmem:[#allocation5 + $0x8c0] sm:$0xff]
    %v2446 = vld [vmem:[#allocation5 + $0x8c8] sm:$0xff]
    %v2447 = vld [vmem:[#allocation5 + $0x8d0] sm:$0xf]
    %v2448 = vld [vmem:[#allocation5 + $0x8d4] sm:$0xff]
    %v2449 = vld [vmem:[#allocation5 + $0x8dc] sm:$0xff]
    %v2450 = vld [vmem:[#allocation5 + $0x8e4] sm:$0xf]
    %v2451 = vld [vmem:[#allocation5 + $0x8e8] sm:$0xff]
    %v2452 = vld [vmem:[#allocation5 + $0x8f0] sm:$0xff]
    %v2453 = vld [vmem:[#allocation5 + $0x8f8] sm:$0xf]
    %v2454 = vld [vmem:[#allocation5 + $0x8fc] sm:$0xff]
    %v2455 = vld [vmem:[#allocation5 + $0x904] sm:$0xff]
    %v2456 = vld [vmem:[#allocation5 + $0x90c] sm:$0xf]
    %v2457 = vld [vmem:[#allocation5 + $0x910] sm:$0xff]
    %v2458 = vld [vmem:[#allocation5 + $0x918] sm:$0xff]
    %v2459 = vld [vmem:[#allocation5 + $0x920] sm:$0xf]
    %v2460 = vld [vmem:[#allocation5 + $0x924] sm:$0xff]
    %v2461 = vld [vmem:[#allocation5 + $0x92c] sm:$0xff]
    %v2462 = vld [vmem:[#allocation5 + $0x934] sm:$0xf]
    %v2463 = vld [vmem:[#allocation5 + $0x938] sm:$0xff]
    %v2464 = vld [vmem:[#allocation5 + $0x940] sm:$0xff]
    %v2465 = vld [vmem:[#allocation5 + $0x948] sm:$0xf]
    %v2466 = vld [vmem:[#allocation5 + $0x94c] sm:$0xff]
    %v2467 = vld [vmem:[#allocation5 + $0x954] sm:$0xff]
    %v2468 = vld [vmem:[#allocation5 + $0x95c] sm:$0xf]
    %v2469 = vld [vmem:[#allocation5 + $0x960] sm:$0xff]
    %v2470 = vld [vmem:[#allocation5 + $0x968] sm:$0xff]
    %v2471 = vld [vmem:[#allocation5 + $0x970] sm:$0xf]
    %v2472 = vld [vmem:[#allocation5 + $0x974] sm:$0xff]
    %v2473 = vld [vmem:[#allocation5 + $0x97c] sm:$0xff]
    %v2474 = vld [vmem:[#allocation5 + $0x984] sm:$0xf]
    %v2475 = vld [vmem:[#allocation5 + $0x988] sm:$0xff]
    %v2476 = vld [vmem:[#allocation5 + $0x990] sm:$0xff]
    %v2477 = vld [vmem:[#allocation5 + $0x998] sm:$0xf]
    %v2478 = vld [vmem:[#allocation5 + $0x99c] sm:$0xff]
    %v2479 = vld [vmem:[#allocation5 + $0x9a4] sm:$0xff]
    %v2480 = vld [vmem:[#allocation5 + $0x9ac] sm:$0xf]
    %v2481 = vld [vmem:[#allocation5 + $0x9b0] sm:$0xff]
    %v2482 = vld [vmem:[#allocation5 + $0x9b8] sm:$0xff]
    %v2483 = vld [vmem:[#allocation5 + $0x9c0] sm:$0xf]
    %v2484 = vld [vmem:[#allocation5 + $0x9c4] sm:$0xff]
    %v2485 = vld [vmem:[#allocation5 + $0x9cc] sm:$0xff]
    %v2486 = vld [vmem:[#allocation5 + $0x9d4] sm:$0xf]
    %v2487 = vld [vmem:[#allocation5 + $0x9d8] sm:$0xff]
    %v2488 = vld [vmem:[#allocation5 + $0x9e0] sm:$0xff]
    %v2489 = vld [vmem:[#allocation5 + $0x9e8] sm:$0xf]
    %v2490 = vld [vmem:[#allocation5 + $0x9ec] sm:$0xff]
    %v2491 = vld [vmem:[#allocation5 + $0x9f4] sm:$0xff]
    %v2492 = vld [vmem:[#allocation5 + $0x9fc] sm:$0xf]
    %v2493 = vld [vmem:[#allocation5 + $0xa00] sm:$0xff]
    %v2494 = vld [vmem:[#allocation5 + $0xa08] sm:$0xff]
    %v2495 = vld [vmem:[#allocation5 + $0xa10] sm:$0xf]
    %v2496 = vld [vmem:[#allocation5 + $0xa14] sm:$0xff]
    %v2497 = vld [vmem:[#allocation5 + $0xa1c] sm:$0xff]
    %v2498 = vld [vmem:[#allocation5 + $0xa24] sm:$0xf]
    %v2499 = vld [vmem:[#allocation5 + $0xa28] sm:$0xff]
    %v2500 = vld [vmem:[#allocation5 + $0xa30] sm:$0xff]
    %v2501 = vld [vmem:[#allocation5 + $0xa38] sm:$0xf]
    %v2502 = vld [vmem:[#allocation5 + $0xa3c] sm:$0xff]
    %v2503 = vld [vmem:[#allocation5 + $0xa44] sm:$0xff]
    %v2504 = vld [vmem:[#allocation5 + $0xa4c] sm:$0xf]
    %v2505 = vld [vmem:[#allocation5 + $0xa50] sm:$0xff]
    %v2506 = vld [vmem:[#allocation5 + $0xa58] sm:$0xff]
    %v2507 = vld [vmem:[#allocation5 + $0xa60] sm:$0xf]
    %v2508 = vld [vmem:[#allocation5 + $0xa64] sm:$0xff]
    %v2509 = vld [vmem:[#allocation5 + $0xa6c] sm:$0xff]
    %v2510 = vld [vmem:[#allocation5 + $0xa74] sm:$0xf]
    %v2511 = vld [vmem:[#allocation5 + $0xa78] sm:$0xff]
    %v2512 = vld [vmem:[#allocation5 + $0xa80] sm:$0xff]
    %v2513 = vld [vmem:[#allocation5 + $0xa88] sm:$0xf]
    %v2514 = vld [vmem:[#allocation5 + $0xa8c] sm:$0xff]
    %v2515 = vld [vmem:[#allocation5 + $0xa94] sm:$0xff]
    %v2516 = vld [vmem:[#allocation5 + $0xa9c] sm:$0xf]
    %v2517 = vld [vmem:[#allocation5 + $0xaa0] sm:$0xff]
    %v2518 = vld [vmem:[#allocation5 + $0xaa8] sm:$0xff]
    %v2519 = vld [vmem:[#allocation5 + $0xab0] sm:$0xf]
    %v2520 = vld [vmem:[#allocation5 + $0xab4] sm:$0xff]
    %v2521 = vld [vmem:[#allocation5 + $0xabc] sm:$0xff]
    %v2522 = vld [vmem:[#allocation5 + $0xac4] sm:$0xf]
    %v2523 = vld [vmem:[#allocation5 + $0xac8] sm:$0xff]
    %v2524 = vld [vmem:[#allocation5 + $0xad0] sm:$0xff]
    %v2525 = vld [vmem:[#allocation5 + $0xad8] sm:$0xf]
    %v2526 = vld [vmem:[#allocation5 + $0xadc] sm:$0xff]
    %v2527 = vld [vmem:[#allocation5 + $0xae4] sm:$0xff]
    %v2528 = vld [vmem:[#allocation5 + $0xaec] sm:$0xf]
    %v2529 = vld [vmem:[#allocation5 + $0xaf0] sm:$0xff]
    %v2530 = vld [vmem:[#allocation5 + $0xaf8] sm:$0xff]
    %v2531 = vld [vmem:[#allocation5 + $0xb00] sm:$0xf]
    %v2532 = vld [vmem:[#allocation5 + $0xb04] sm:$0xff]
    %v2533 = vld [vmem:[#allocation5 + $0xb0c] sm:$0xff]
    %v2534 = vld [vmem:[#allocation5 + $0xb14] sm:$0xf]
    %v2535 = vld [vmem:[#allocation5 + $0xb18] sm:$0xff]
    %v2536 = vld [vmem:[#allocation5 + $0xb20] sm:$0xff]
    %v2537 = vld [vmem:[#allocation5 + $0xb28] sm:$0xf]
    %v2538 = vld [vmem:[#allocation5 + $0xb2c] sm:$0xff]
    %v2539 = vld [vmem:[#allocation5 + $0xb34] sm:$0xff]
    %v2540 = vld [vmem:[#allocation5 + $0xb3c] sm:$0xf]
    %v2541 = vld [vmem:[#allocation5 + $0xb40] sm:$0xff]
    %v2542 = vld [vmem:[#allocation5 + $0xb48] sm:$0xff]
    %v2543 = vld [vmem:[#allocation5 + $0xb50] sm:$0xf]
    %v2544 = vld [vmem:[#allocation5 + $0xb54] sm:$0xff]
    %v2545 = vld [vmem:[#allocation5 + $0xb5c] sm:$0xff]
    %v2546 = vld [vmem:[#allocation5 + $0xb64] sm:$0xf]
    %v2547 = vld [vmem:[#allocation5 + $0xb68] sm:$0xff]
    %v2548 = vld [vmem:[#allocation5 + $0xb70] sm:$0xff]
    %v2549 = vld [vmem:[#allocation5 + $0xb78] sm:$0xf]
    %v2550 = vld [vmem:[#allocation5 + $0xb7c] sm:$0xff]
    %v2551 = vld [vmem:[#allocation5 + $0xb84] sm:$0xff]
    %v2552 = vld [vmem:[#allocation5 + $0xb8c] sm:$0xf]
    %v2553 = vld [vmem:[#allocation5 + $0xb90] sm:$0xff]
    %v2554 = vld [vmem:[#allocation5 + $0xb98] sm:$0xff]
    %v2555 = vld [vmem:[#allocation5 + $0xba0] sm:$0xf]
    %v2556 = vld [vmem:[#allocation5 + $0xba4] sm:$0xff]
    %v2557 = vld [vmem:[#allocation5 + $0xbac] sm:$0xff]
    %v2558 = vld [vmem:[#allocation5 + $0xbb4] sm:$0xf]
    %v2559 = vld [vmem:[#allocation5 + $0xbb8] sm:$0xff]
    %v2560 = vld [vmem:[#allocation5 + $0xbc0] sm:$0xff]
    %v2561 = vld [vmem:[#allocation5 + $0xbc8] sm:$0xf]
    %v2562 = vld [vmem:[#allocation5 + $0xbcc] sm:$0xff]
    %v2563 = vld [vmem:[#allocation5 + $0xbd4] sm:$0xff]
    %v2564 = vld [vmem:[#allocation5 + $0xbdc] sm:$0xf]
    %v2565 = vld [vmem:[#allocation5 + $0xbe0] sm:$0xff]
    %v2566 = vld [vmem:[#allocation5 + $0xbe8] sm:$0xff]
    %v2567 = vld [vmem:[#allocation5 + $0xbf0] sm:$0xf]
    %v2568 = vld [vmem:[#allocation5 + $0xbf4] sm:$0xff]
    %v2569 = vld [vmem:[#allocation5 + $0xbfc] sm:$0xff]
    %v2570 = vld [vmem:[#allocation5 + $0xc04] sm:$0xf]
    %v2571 = vld [vmem:[#allocation5 + $0xc08] sm:$0xff]
    %v2572 = vld [vmem:[#allocation5 + $0xc10] sm:$0xff]
    %v2573 = vld [vmem:[#allocation5 + $0xc18] sm:$0xf]
    %v2574 = vld [vmem:[#allocation5 + $0xc1c] sm:$0xff]
    %v2575 = vld [vmem:[#allocation5 + $0xc24] sm:$0xff]
    %v2576 = vld [vmem:[#allocation5 + $0xc2c] sm:$0xf]
    %v2577 = vld [vmem:[#allocation5 + $0xc30] sm:$0xff]
    %v2578 = vld [vmem:[#allocation5 + $0xc38] sm:$0xff]
    %v2579 = vld [vmem:[#allocation5 + $0xc40] sm:$0xf]
    %v2580 = vld [vmem:[#allocation5 + $0xc44] sm:$0xff]
    %v2581 = vld [vmem:[#allocation5 + $0xc4c] sm:$0xff]
    %v2582 = vld [vmem:[#allocation5 + $0xc54] sm:$0xf]
    %v2583 = vld [vmem:[#allocation5 + $0xc58] sm:$0xff]
    %v2584 = vld [vmem:[#allocation5 + $0xc60] sm:$0xff]
    %v2585 = vld [vmem:[#allocation5 + $0xc68] sm:$0xf]
    %v2586 = vld [vmem:[#allocation5 + $0xc6c] sm:$0xff]
    %v2587 = vld [vmem:[#allocation5 + $0xc74] sm:$0xff]
    %v2588 = vld [vmem:[#allocation5 + $0xc7c] sm:$0xf]
    %v2589 = vld [vmem:[#allocation5 + $0xc80] sm:$0xff]
    %v2590 = vld [vmem:[#allocation5 + $0xc88] sm:$0xff]
    %v2591 = vld [vmem:[#allocation5 + $0xc90] sm:$0xf]
    %v2592 = vld [vmem:[#allocation5 + $0xc94] sm:$0xff]
    %v2593 = vld [vmem:[#allocation5 + $0xc9c] sm:$0xff]
    %v2594 = vld [vmem:[#allocation5 + $0xca4] sm:$0xf]
    %v2595 = vld [vmem:[#allocation5 + $0xca8] sm:$0xff]
    %v2596 = vld [vmem:[#allocation5 + $0xcb0] sm:$0xff]
    %v2597 = vld [vmem:[#allocation5 + $0xcb8] sm:$0xf]
    %v2598 = vld [vmem:[#allocation5 + $0xcbc] sm:$0xff]
    %v2599 = vld [vmem:[#allocation5 + $0xcc4] sm:$0xff]
    %v2600 = vld [vmem:[#allocation5 + $0xccc] sm:$0xf]
    %v2601 = vld [vmem:[#allocation5 + $0xcd0] sm:$0xff]
    %v2602 = vld [vmem:[#allocation5 + $0xcd8] sm:$0xff]
    %v2603 = vld [vmem:[#allocation5 + $0xce0] sm:$0xf]
    %v2604 = vld [vmem:[#allocation5 + $0xce4] sm:$0xff]
    %v2605 = vld [vmem:[#allocation5 + $0xcec] sm:$0xff]
    %v2606 = vld [vmem:[#allocation5 + $0xcf4] sm:$0xf]
    %v2607 = vld [vmem:[#allocation5 + $0xcf8] sm:$0xff]
    %v2608 = vld [vmem:[#allocation5 + $0xd00] sm:$0xff]
    %v2609 = vld [vmem:[#allocation5 + $0xd08] sm:$0xf]
    %v2610 = vld [vmem:[#allocation5 + $0xd0c] sm:$0xff]
    %v2611 = vld [vmem:[#allocation5 + $0xd14] sm:$0xff]
    %v2612 = vld [vmem:[#allocation5 + $0xd1c] sm:$0xf]
    %v2613 = vld [vmem:[#allocation5 + $0xd20] sm:$0xff]
    %v2614 = vld [vmem:[#allocation5 + $0xd28] sm:$0xff]
    %v2615 = vld [vmem:[#allocation5 + $0xd30] sm:$0xf]
    %v2616 = vld [vmem:[#allocation5 + $0xd34] sm:$0xff]
    %v2617 = vld [vmem:[#allocation5 + $0xd3c] sm:$0xff]
    %v2618 = vld [vmem:[#allocation5 + $0xd44] sm:$0xf]
    %v2619 = vld [vmem:[#allocation5 + $0xd48] sm:$0xff]
    %v2620 = vld [vmem:[#allocation5 + $0xd50] sm:$0xff]
    %v2621 = vld [vmem:[#allocation5 + $0xd58] sm:$0xf]
    %v2622 = vld [vmem:[#allocation5 + $0xd5c] sm:$0xff]
    %v2623 = vld [vmem:[#allocation5 + $0xd64] sm:$0xff]
    %v2624 = vld [vmem:[#allocation5 + $0xd6c] sm:$0xf]
    %v2625 = vld [vmem:[#allocation5 + $0xd70] sm:$0xff]
    %v2626 = vld [vmem:[#allocation5 + $0xd78] sm:$0xff]
    %v2627 = vld [vmem:[#allocation5 + $0xd80] sm:$0xf]
    %v2628 = vld [vmem:[#allocation5 + $0xd84] sm:$0xff]
    %v2629 = vld [vmem:[#allocation5 + $0xd8c] sm:$0xff]
    %v2630 = vld [vmem:[#allocation5 + $0xd94] sm:$0xf]
    %v2631 = vld [vmem:[#allocation5 + $0xd98] sm:$0xff]
    %v2632 = vld [vmem:[#allocation5 + $0xda0] sm:$0xff]
    %v2633 = vld [vmem:[#allocation5 + $0xda8] sm:$0xf]
    %v2634 = vld [vmem:[#allocation5 + $0xdac] sm:$0xff]
    %v2635 = vld [vmem:[#allocation5 + $0xdb4] sm:$0xff]
    %v2636 = vld [vmem:[#allocation5 + $0xdbc] sm:$0xf]
    %v2637 = vld [vmem:[#allocation5 + $0xdc0] sm:$0xff]
    %v2638 = vld [vmem:[#allocation5 + $0xdc8] sm:$0xff]
    %v2639 = vld [vmem:[#allocation5 + $0xdd0] sm:$0xf]
    %v2640 = vld [vmem:[#allocation5 + $0xdd4] sm:$0xff]
    %v2641 = vld [vmem:[#allocation5 + $0xddc] sm:$0xff]
    %v2642 = vld [vmem:[#allocation5 + $0xde4] sm:$0xf]
    %v2643 = vld [vmem:[#allocation5 + $0xde8] sm:$0xff]
    %v2644 = vld [vmem:[#allocation5 + $0xdf0] sm:$0xff]
    %v2645 = vld [vmem:[#allocation5 + $0xdf8] sm:$0xf]
    %v2646 = vld [vmem:[#allocation5 + $0xdfc] sm:$0xff]
    %v2647 = vld [vmem:[#allocation5 + $0xe04] sm:$0xff]
    %v2648 = vld [vmem:[#allocation5 + $0xe0c] sm:$0xf]
    %v2649 = vld [vmem:[#allocation5 + $0xe10] sm:$0xff]
    %v2650 = vld [vmem:[#allocation5 + $0xe18] sm:$0xff]
    %v2651 = vld [vmem:[#allocation5 + $0xe20] sm:$0xf]
    %v2652 = vld [vmem:[#allocation5 + $0xe24] sm:$0xff]
    %v2653 = vld [vmem:[#allocation5 + $0xe2c] sm:$0xff]
    %v2654 = vld [vmem:[#allocation5 + $0xe34] sm:$0xf]
    %v2655 = vld [vmem:[#allocation5 + $0xe38] sm:$0xff]
    %v2656 = vld [vmem:[#allocation5 + $0xe40] sm:$0xff]
    %v2657 = vld [vmem:[#allocation5 + $0xe48] sm:$0xf]
    %v2658 = vld [vmem:[#allocation5 + $0xe4c] sm:$0xff]
    %v2659 = vld [vmem:[#allocation5 + $0xe54] sm:$0xff]
    %v2660 = vld [vmem:[#allocation5 + $0xe5c] sm:$0xf]
    %v2661 = vld [vmem:[#allocation5 + $0xe60] sm:$0xff]
    %v2662 = vld [vmem:[#allocation5 + $0xe68] sm:$0xff]
    %v2663 = vld [vmem:[#allocation5 + $0xe70] sm:$0xf]
    %v2664 = vld [vmem:[#allocation5 + $0xe74] sm:$0xff]
    %v2665 = vld [vmem:[#allocation5 + $0xe7c] sm:$0xff]
    %v2666 = vld [vmem:[#allocation5 + $0xe84] sm:$0xf]
    %v2667 = vld [vmem:[#allocation5 + $0xe88] sm:$0xff]
    %v2668 = vld [vmem:[#allocation5 + $0xe90] sm:$0xff]
    %v2669 = vld [vmem:[#allocation5 + $0xe98] sm:$0xf]
    %v2670 = vld [vmem:[#allocation5 + $0xe9c] sm:$0xff]
    %v2671 = vld [vmem:[#allocation5 + $0xea4] sm:$0xff]
    %v2672 = vld [vmem:[#allocation5 + $0xeac] sm:$0xf]
    %v2673 = vld [vmem:[#allocation5 + $0xeb0] sm:$0xff]
    %v2674 = vld [vmem:[#allocation5 + $0xeb8] sm:$0xff]
    %v2675 = vld [vmem:[#allocation5 + $0xec0] sm:$0xf]
    %v2676 = vld [vmem:[#allocation5 + $0xec4] sm:$0xff]
    %v2677 = vld [vmem:[#allocation5 + $0xecc] sm:$0xff]
    %v2678 = vld [vmem:[#allocation5 + $0xed4] sm:$0xf]
    %v2679 = vld [vmem:[#allocation5 + $0xed8] sm:$0xff]
    %v2680 = vld [vmem:[#allocation5 + $0xee0] sm:$0xff]
    %v2681 = vld [vmem:[#allocation5 + $0xee8] sm:$0xf]
    %v2682 = vld [vmem:[#allocation5 + $0xeec] sm:$0xff]
    %v2683 = vld [vmem:[#allocation5 + $0xef4] sm:$0xff]
    %v2684 = vld [vmem:[#allocation5 + $0xefc] sm:$0xf]
    %v2685 = vld [vmem:[#allocation10 + $0xa] sm:$0x1f]
    %v2687 = vperm.slane %v2685, 0
    %v2688 = vperm.slane %v2685, 1
    %v2689 = vperm.slane %v2685, 2
    %v2690 = vperm.slane %v2685, 3
    %v2691 = vperm.slane %v2685, 4
    %v2937 = vunpack.c.l.b16 %v2445
    %v2938 = vunpack.c.h.b16 %v2445
    %v2939 = vunpack.c.l.b16 %v2446
    %v2940 = vunpack.c.h.b16 %v2446
    %v2941 = vunpack.c.l.b16 %v2447
    %v2942 = vunpack.c.l.b16 %v2448
    %v2943 = vunpack.c.h.b16 %v2448
    %v2944 = vunpack.c.l.b16 %v2449
    %v2945 = vunpack.c.h.b16 %v2449
    %v2946 = vunpack.c.l.b16 %v2450
    %v2947 = vunpack.c.l.b16 %v2451
    %v2948 = vunpack.c.h.b16 %v2451
    %v2949 = vunpack.c.l.b16 %v2452
    %v2950 = vunpack.c.h.b16 %v2452
    %v2951 = vunpack.c.l.b16 %v2453
    %v2952 = vunpack.c.l.b16 %v2454
    %v2953 = vunpack.c.h.b16 %v2454
    %v2954 = vunpack.c.l.b16 %v2455
    %v2955 = vunpack.c.h.b16 %v2455
    %v2956 = vunpack.c.l.b16 %v2456
    %v2957 = vunpack.c.l.b16 %v2457
    %v2958 = vunpack.c.h.b16 %v2457
    %v2959 = vunpack.c.l.b16 %v2458
    %v2960 = vunpack.c.h.b16 %v2458
    %v2961 = vunpack.c.l.b16 %v2459
    %v2962 = vunpack.c.l.b16 %v2460
    %v2963 = vunpack.c.h.b16 %v2460
    %v2964 = vunpack.c.l.b16 %v2461
    %v2965 = vunpack.c.h.b16 %v2461
    %v2966 = vunpack.c.l.b16 %v2462
    %v2967 = vunpack.c.l.b16 %v2463
    %v2968 = vunpack.c.h.b16 %v2463
    %v2969 = vunpack.c.l.b16 %v2464
    %v2970 = vunpack.c.h.b16 %v2464
    %v2971 = vunpack.c.l.b16 %v2465
    %v2972 = vunpack.c.l.b16 %v2466
    %v2973 = vunpack.c.h.b16 %v2466
    %v2974 = vunpack.c.l.b16 %v2467
    %v2975 = vunpack.c.h.b16 %v2467
    %v2976 = vunpack.c.l.b16 %v2468
    %v2977 = vunpack.c.l.b16 %v2469
    %v2978 = vunpack.c.h.b16 %v2469
    %v2979 = vunpack.c.l.b16 %v2470
    %v2980 = vunpack.c.h.b16 %v2470
    %v2981 = vunpack.c.l.b16 %v2471
    %v2982 = vunpack.c.l.b16 %v2472
    %v2983 = vunpack.c.h.b16 %v2472
    %v2984 = vunpack.c.l.b16 %v2473
    %v2985 = vunpack.c.h.b16 %v2473
    %v2986 = vunpack.c.l.b16 %v2474
    %v2987 = vunpack.c.l.b16 %v2475
    %v2988 = vunpack.c.h.b16 %v2475
    %v2989 = vunpack.c.l.b16 %v2476
    %v2990 = vunpack.c.h.b16 %v2476
    %v2991 = vunpack.c.l.b16 %v2477
    %v2992 = vunpack.c.l.b16 %v2478
    %v2993 = vunpack.c.h.b16 %v2478
    %v2994 = vunpack.c.l.b16 %v2479
    %v2995 = vunpack.c.h.b16 %v2479
    %v2996 = vunpack.c.l.b16 %v2480
    %v2997 = vunpack.c.l.b16 %v2481
    %v2998 = vunpack.c.h.b16 %v2481
    %v2999 = vunpack.c.l.b16 %v2482
    %v3000 = vunpack.c.h.b16 %v2482
    %v3001 = vunpack.c.l.b16 %v2483
    %v3002 = vunpack.c.l.b16 %v2484
    %v3003 = vunpack.c.h.b16 %v2484
    %v3004 = vunpack.c.l.b16 %v2485
    %v3005 = vunpack.c.h.b16 %v2485
    %v3006 = vunpack.c.l.b16 %v2486
    %v3007 = vunpack.c.l.b16 %v2487
    %v3008 = vunpack.c.h.b16 %v2487
    %v3009 = vunpack.c.l.b16 %v2488
    %v3010 = vunpack.c.h.b16 %v2488
    %v3011 = vunpack.c.l.b16 %v2489
    %v3012 = vunpack.c.l.b16 %v2490
    %v3013 = vunpack.c.h.b16 %v2490
    %v3014 = vunpack.c.l.b16 %v2491
    %v3015 = vunpack.c.h.b16 %v2491
    %v3016 = vunpack.c.l.b16 %v2492
    %v3017 = vunpack.c.l.b16 %v2493
    %v3018 = vunpack.c.h.b16 %v2493
    %v3019 = vunpack.c.l.b16 %v2494
    %v3020 = vunpack.c.h.b16 %v2494
    %v3021 = vunpack.c.l.b16 %v2495
    %v3022 = vunpack.c.l.b16 %v2496
    %v3023 = vunpack.c.h.b16 %v2496
    %v3024 = vunpack.c.l.b16 %v2497
    %v3025 = vunpack.c.h.b16 %v2497
    %v3026 = vunpack.c.l.b16 %v2498
    %v3027 = vunpack.c.l.b16 %v2499
    %v3028 = vunpack.c.h.b16 %v2499
    %v3029 = vunpack.c.l.b16 %v2500
    %v3030 = vunpack.c.h.b16 %v2500
    %v3031 = vunpack.c.l.b16 %v2501
    %v3032 = vunpack.c.l.b16 %v2502
    %v3033 = vunpack.c.h.b16 %v2502
    %v3034 = vunpack.c.l.b16 %v2503
    %v3035 = vunpack.c.h.b16 %v2503
    %v3036 = vunpack.c.l.b16 %v2504
    %v3037 = vunpack.c.l.b16 %v2505
    %v3038 = vunpack.c.h.b16 %v2505
    %v3039 = vunpack.c.l.b16 %v2506
    %v3040 = vunpack.c.h.b16 %v2506
    %v3041 = vunpack.c.l.b16 %v2507
    %v3042 = vunpack.c.l.b16 %v2508
    %v3043 = vunpack.c.h.b16 %v2508
    %v3044 = vunpack.c.l.b16 %v2509
    %v3045 = vunpack.c.h.b16 %v2509
    %v3046 = vunpack.c.l.b16 %v2510
    %v3047 = vunpack.c.l.b16 %v2511
    %v3048 = vunpack.c.h.b16 %v2511
    %v3049 = vunpack.c.l.b16 %v2512
    %v3050 = vunpack.c.h.b16 %v2512
    %v3051 = vunpack.c.l.b16 %v2513
    %v3052 = vunpack.c.l.b16 %v2514
    %v3053 = vunpack.c.h.b16 %v2514
    %v3054 = vunpack.c.l.b16 %v2515
    %v3055 = vunpack.c.h.b16 %v2515
    %v3056 = vunpack.c.l.b16 %v2516
    %v3057 = vunpack.c.l.b16 %v2517
    %v3058 = vunpack.c.h.b16 %v2517
    %v3059 = vunpack.c.l.b16 %v2518
    %v3060 = vunpack.c.h.b16 %v2518
    %v3061 = vunpack.c.l.b16 %v2519
    %v3062 = vunpack.c.l.b16 %v2520
    %v3063 = vunpack.c.h.b16 %v2520
    %v3064 = vunpack.c.l.b16 %v2521
    %v3065 = vunpack.c.h.b16 %v2521
    %v3066 = vunpack.c.l.b16 %v2522
    %v3067 = vunpack.c.l.b16 %v2523
    %v3068 = vunpack.c.h.b16 %v2523
    %v3069 = vunpack.c.l.b16 %v2524
    %v3070 = vunpack.c.h.b16 %v2524
    %v3071 = vunpack.c.l.b16 %v2525
    %v3072 = vunpack.c.l.b16 %v2526
    %v3073 = vunpack.c.h.b16 %v2526
    %v3074 = vunpack.c.l.b16 %v2527
    %v3075 = vunpack.c.h.b16 %v2527
    %v3076 = vunpack.c.l.b16 %v2528
    %v3077 = vunpack.c.l.b16 %v2529
    %v3078 = vunpack.c.h.b16 %v2529
    %v3079 = vunpack.c.l.b16 %v2530
    %v3080 = vunpack.c.h.b16 %v2530
    %v3081 = vunpack.c.l.b16 %v2531
    %v3082 = vunpack.c.l.b16 %v2532
    %v3083 = vunpack.c.h.b16 %v2532
    %v3084 = vunpack.c.l.b16 %v2533
    %v3085 = vunpack.c.h.b16 %v2533
    %v3086 = vunpack.c.l.b16 %v2534
    %v3087 = vunpack.c.l.b16 %v2535
    %v3088 = vunpack.c.h.b16 %v2535
    %v3089 = vunpack.c.l.b16 %v2536
    %v3090 = vunpack.c.h.b16 %v2536
    %v3091 = vunpack.c.l.b16 %v2537
    %v3092 = vunpack.c.l.b16 %v2538
    %v3093 = vunpack.c.h.b16 %v2538
    %v3094 = vunpack.c.l.b16 %v2539
    %v3095 = vunpack.c.h.b16 %v2539
    %v3096 = vunpack.c.l.b16 %v2540
    %v3097 = vunpack.c.l.b16 %v2541
    %v3098 = vunpack.c.h.b16 %v2541
    %v3099 = vunpack.c.l.b16 %v2542
    %v3100 = vunpack.c.h.b16 %v2542
    %v3101 = vunpack.c.l.b16 %v2543
    %v3102 = vunpack.c.l.b16 %v2544
    %v3103 = vunpack.c.h.b16 %v2544
    %v3104 = vunpack.c.l.b16 %v2545
    %v3105 = vunpack.c.h.b16 %v2545
    %v3106 = vunpack.c.l.b16 %v2546
    %v3107 = vunpack.c.l.b16 %v2547
    %v3108 = vunpack.c.h.b16 %v2547
    %v3109 = vunpack.c.l.b16 %v2548
    %v3110 = vunpack.c.h.b16 %v2548
    %v3111 = vunpack.c.l.b16 %v2549
    %v3112 = vunpack.c.l.b16 %v2550
    %v3113 = vunpack.c.h.b16 %v2550
    %v3114 = vunpack.c.l.b16 %v2551
    %v3115 = vunpack.c.h.b16 %v2551
    %v3116 = vunpack.c.l.b16 %v2552
    %v3117 = vunpack.c.l.b16 %v2553
    %v3118 = vunpack.c.h.b16 %v2553
    %v3119 = vunpack.c.l.b16 %v2554
    %v3120 = vunpack.c.h.b16 %v2554
    %v3121 = vunpack.c.l.b16 %v2555
    %v3122 = vunpack.c.l.b16 %v2556
    %v3123 = vunpack.c.h.b16 %v2556
    %v3124 = vunpack.c.l.b16 %v2557
    %v3125 = vunpack.c.h.b16 %v2557
    %v3126 = vunpack.c.l.b16 %v2558
    %v3127 = vunpack.c.l.b16 %v2559
    %v3128 = vunpack.c.h.b16 %v2559
    %v3129 = vunpack.c.l.b16 %v2560
    %v3130 = vunpack.c.h.b16 %v2560
    %v3131 = vunpack.c.l.b16 %v2561
    %v3132 = vunpack.c.l.b16 %v2562
    %v3133 = vunpack.c.h.b16 %v2562
    %v3134 = vunpack.c.l.b16 %v2563
    %v3135 = vunpack.c.h.b16 %v2563
    %v3136 = vunpack.c.l.b16 %v2564
    %v3137 = vunpack.c.l.b16 %v2565
    %v3138 = vunpack.c.h.b16 %v2565
    %v3139 = vunpack.c.l.b16 %v2566
    %v3140 = vunpack.c.h.b16 %v2566
    %v3141 = vunpack.c.l.b16 %v2567
    %v3142 = vunpack.c.l.b16 %v2568
    %v3143 = vunpack.c.h.b16 %v2568
    %v3144 = vunpack.c.l.b16 %v2569
    %v3145 = vunpack.c.h.b16 %v2569
    %v3146 = vunpack.c.l.b16 %v2570
    %v3147 = vunpack.c.l.b16 %v2571
    %v3148 = vunpack.c.h.b16 %v2571
    %v3149 = vunpack.c.l.b16 %v2572
    %v3150 = vunpack.c.h.b16 %v2572
    %v3151 = vunpack.c.l.b16 %v2573
    %v3152 = vunpack.c.l.b16 %v2574
    %v3153 = vunpack.c.h.b16 %v2574
    %v3154 = vunpack.c.l.b16 %v2575
    %v3155 = vunpack.c.h.b16 %v2575
    %v3156 = vunpack.c.l.b16 %v2576
    %v3157 = vunpack.c.l.b16 %v2577
    %v3158 = vunpack.c.h.b16 %v2577
    %v3159 = vunpack.c.l.b16 %v2578
    %v3160 = vunpack.c.h.b16 %v2578
    %v3161 = vunpack.c.l.b16 %v2579
    %v3162 = vunpack.c.l.b16 %v2580
    %v3163 = vunpack.c.h.b16 %v2580
    %v3164 = vunpack.c.l.b16 %v2581
    %v3165 = vunpack.c.h.b16 %v2581
    %v3166 = vunpack.c.l.b16 %v2582
    %v3167 = vunpack.c.l.b16 %v2583
    %v3168 = vunpack.c.h.b16 %v2583
    %v3169 = vunpack.c.l.b16 %v2584
    %v3170 = vunpack.c.h.b16 %v2584
    %v3171 = vunpack.c.l.b16 %v2585
    %v3172 = vunpack.c.l.b16 %v2586
    %v3173 = vunpack.c.h.b16 %v2586
    %v3174 = vunpack.c.l.b16 %v2587
    %v3175 = vunpack.c.h.b16 %v2587
    %v3176 = vunpack.c.l.b16 %v2588
    %v3177 = vunpack.c.l.b16 %v2589
    %v3178 = vunpack.c.h.b16 %v2589
    %v3179 = vunpack.c.l.b16 %v2590
    %v3180 = vunpack.c.h.b16 %v2590
    %v3181 = vunpack.c.l.b16 %v2591
    %v3182 = vunpack.c.l.b16 %v2592
    %v3183 = vunpack.c.h.b16 %v2592
    %v3184 = vunpack.c.l.b16 %v2593
    %v3185 = vunpack.c.h.b16 %v2593
    %v3186 = vunpack.c.l.b16 %v2594
    %v3187 = vunpack.c.l.b16 %v2595
    %v3188 = vunpack.c.h.b16 %v2595
    %v3189 = vunpack.c.l.b16 %v2596
    %v3190 = vunpack.c.h.b16 %v2596
    %v3191 = vunpack.c.l.b16 %v2597
    %v3192 = vunpack.c.l.b16 %v2598
    %v3193 = vunpack.c.h.b16 %v2598
    %v3194 = vunpack.c.l.b16 %v2599
    %v3195 = vunpack.c.h.b16 %v2599
    %v3196 = vunpack.c.l.b16 %v2600
    %v3197 = vunpack.c.l.b16 %v2601
    %v3198 = vunpack.c.h.b16 %v2601
    %v3199 = vunpack.c.l.b16 %v2602
    %v3200 = vunpack.c.h.b16 %v2602
    %v3201 = vunpack.c.l.b16 %v2603
    %v3202 = vunpack.c.l.b16 %v2604
    %v3203 = vunpack.c.h.b16 %v2604
    %v3204 = vunpack.c.l.b16 %v2605
    %v3205 = vunpack.c.h.b16 %v2605
    %v3206 = vunpack.c.l.b16 %v2606
    %v3207 = vunpack.c.l.b16 %v2607
    %v3208 = vunpack.c.h.b16 %v2607
    %v3209 = vunpack.c.l.b16 %v2608
    %v3210 = vunpack.c.h.b16 %v2608
    %v3211 = vunpack.c.l.b16 %v2609
    %v3212 = vunpack.c.l.b16 %v2610
    %v3213 = vunpack.c.h.b16 %v2610
    %v3214 = vunpack.c.l.b16 %v2611
    %v3215 = vunpack.c.h.b16 %v2611
    %v3216 = vunpack.c.l.b16 %v2612
    %v3217 = vunpack.c.l.b16 %v2613
    %v3218 = vunpack.c.h.b16 %v2613
    %v3219 = vunpack.c.l.b16 %v2614
    %v3220 = vunpack.c.h.b16 %v2614
    %v3221 = vunpack.c.l.b16 %v2615
    %v3222 = vunpack.c.l.b16 %v2616
    %v3223 = vunpack.c.h.b16 %v2616
    %v3224 = vunpack.c.l.b16 %v2617
    %v3225 = vunpack.c.h.b16 %v2617
    %v3226 = vunpack.c.l.b16 %v2618
    %v3227 = vunpack.c.l.b16 %v2619
    %v3228 = vunpack.c.h.b16 %v2619
    %v3229 = vunpack.c.l.b16 %v2620
    %v3230 = vunpack.c.h.b16 %v2620
    %v3231 = vunpack.c.l.b16 %v2621
    %v3232 = vunpack.c.l.b16 %v2622
    %v3233 = vunpack.c.h.b16 %v2622
    %v3234 = vunpack.c.l.b16 %v2623
    %v3235 = vunpack.c.h.b16 %v2623
    %v3236 = vunpack.c.l.b16 %v2624
    %v3237 = vunpack.c.l.b16 %v2625
    %v3238 = vunpack.c.h.b16 %v2625
    %v3239 = vunpack.c.l.b16 %v2626
    %v3240 = vunpack.c.h.b16 %v2626
    %v3241 = vunpack.c.l.b16 %v2627
    %v3242 = vunpack.c.l.b16 %v2628
    %v3243 = vunpack.c.h.b16 %v2628
    %v3244 = vunpack.c.l.b16 %v2629
    %v3245 = vunpack.c.h.b16 %v2629
    %v3246 = vunpack.c.l.b16 %v2630
    %v3247 = vunpack.c.l.b16 %v2631
    %v3248 = vunpack.c.h.b16 %v2631
    %v3249 = vunpack.c.l.b16 %v2632
    %v3250 = vunpack.c.h.b16 %v2632
    %v3251 = vunpack.c.l.b16 %v2633
    %v3252 = vunpack.c.l.b16 %v2634
    %v3253 = vunpack.c.h.b16 %v2634
    %v3254 = vunpack.c.l.b16 %v2635
    %v3255 = vunpack.c.h.b16 %v2635
    %v3256 = vunpack.c.l.b16 %v2636
    %v3257 = vunpack.c.l.b16 %v2637
    %v3258 = vunpack.c.h.b16 %v2637
    %v3259 = vunpack.c.l.b16 %v2638
    %v3260 = vunpack.c.h.b16 %v2638
    %v3261 = vunpack.c.l.b16 %v2639
    %v3262 = vunpack.c.l.b16 %v2640
    %v3263 = vunpack.c.h.b16 %v2640
    %v3264 = vunpack.c.l.b16 %v2641
    %v3265 = vunpack.c.h.b16 %v2641
    %v3266 = vunpack.c.l.b16 %v2642
    %v3267 = vunpack.c.l.b16 %v2643
    %v3268 = vunpack.c.h.b16 %v2643
    %v3269 = vunpack.c.l.b16 %v2644
    %v3270 = vunpack.c.h.b16 %v2644
    %v3271 = vunpack.c.l.b16 %v2645
    %v3272 = vunpack.c.l.b16 %v2646
    %v3273 = vunpack.c.h.b16 %v2646
    %v3274 = vunpack.c.l.b16 %v2647
    %v3275 = vunpack.c.h.b16 %v2647
    %v3276 = vunpack.c.l.b16 %v2648
    %v3277 = vunpack.c.l.b16 %v2649
    %v3278 = vunpack.c.h.b16 %v2649
    %v3279 = vunpack.c.l.b16 %v2650
    %v3280 = vunpack.c.h.b16 %v2650
    %v3281 = vunpack.c.l.b16 %v2651
    %v3282 = vunpack.c.l.b16 %v2652
    %v3283 = vunpack.c.h.b16 %v2652
    %v3284 = vunpack.c.l.b16 %v2653
    %v3285 = vunpack.c.h.b16 %v2653
    %v3286 = vunpack.c.l.b16 %v2654
    %v3287 = vunpack.c.l.b16 %v2655
    %v3288 = vunpack.c.h.b16 %v2655
    %v3289 = vunpack.c.l.b16 %v2656
    %v3290 = vunpack.c.h.b16 %v2656
    %v3291 = vunpack.c.l.b16 %v2657
    %v3292 = vunpack.c.l.b16 %v2658
    %v3293 = vunpack.c.h.b16 %v2658
    %v3294 = vunpack.c.l.b16 %v2659
    %v3295 = vunpack.c.h.b16 %v2659
    %v3296 = vunpack.c.l.b16 %v2660
    %v3297 = vunpack.c.l.b16 %v2661
    %v3298 = vunpack.c.h.b16 %v2661
    %v3299 = vunpack.c.l.b16 %v2662
    %v3300 = vunpack.c.h.b16 %v2662
    %v3301 = vunpack.c.l.b16 %v2663
    %v3302 = vunpack.c.l.b16 %v2664
    %v3303 = vunpack.c.h.b16 %v2664
    %v3304 = vunpack.c.l.b16 %v2665
    %v3305 = vunpack.c.h.b16 %v2665
    %v3306 = vunpack.c.l.b16 %v2666
    %v3307 = vunpack.c.l.b16 %v2667
    %v3308 = vunpack.c.h.b16 %v2667
    %v3309 = vunpack.c.l.b16 %v2668
    %v3310 = vunpack.c.h.b16 %v2668
    %v3311 = vunpack.c.l.b16 %v2669
    %v3312 = vunpack.c.l.b16 %v2670
    %v3313 = vunpack.c.h.b16 %v2670
    %v3314 = vunpack.c.l.b16 %v2671
    %v3315 = vunpack.c.h.b16 %v2671
    %v3316 = vunpack.c.l.b16 %v2672
    %v3317 = vunpack.c.l.b16 %v2673
    %v3318 = vunpack.c.h.b16 %v2673
    %v3319 = vunpack.c.l.b16 %v2674
    %v3320 = vunpack.c.h.b16 %v2674
    %v3321 = vunpack.c.l.b16 %v2675
    %v3322 = vunpack.c.l.b16 %v2676
    %v3323 = vunpack.c.h.b16 %v2676
    %v3324 = vunpack.c.l.b16 %v2677
    %v3325 = vunpack.c.h.b16 %v2677
    %v3326 = vunpack.c.l.b16 %v2678
    %v3327 = vunpack.c.l.b16 %v2679
    %v3328 = vunpack.c.h.b16 %v2679
    %v3329 = vunpack.c.l.b16 %v2680
    %v3330 = vunpack.c.h.b16 %v2680
    %v3331 = vunpack.c.l.b16 %v2681
    %v3332 = vunpack.c.l.b16 %v2682
    %v3333 = vunpack.c.h.b16 %v2682
    %v3334 = vunpack.c.l.b16 %v2683
    %v3335 = vunpack.c.h.b16 %v2683
    %v3336 = vunpack.c.l.b16 %v2684
    %v3337 = vpack.c.b16 %v2942, %v2937
    %v3338 = vpack.c.b16 %v2943, %v2938
    %v3339 = vpack.c.b16 %v2944, %v2939
    %v3340 = vpack.c.b16 %v2945, %v2940
    %v3341 = vpack.c.b16 %v2946, %v2941
    %v3342 = vpack.c.b16 %v2952, %v2947
    %v3343 = vpack.c.b16 %v2953, %v2948
    %v3344 = vpack.c.b16 %v2954, %v2949
    %v3345 = vpack.c.b16 %v2955, %v2950
    %v3346 = vpack.c.b16 %v2956, %v2951
    %v3347 = vpack.c.b16 %v2962, %v2957
    %v3348 = vpack.c.b16 %v2963, %v2958
    %v3349 = vpack.c.b16 %v2964, %v2959
    %v3350 = vpack.c.b16 %v2965, %v2960
    %v3351 = vpack.c.b16 %v2966, %v2961
    %v3352 = vpack.c.b16 %v2972, %v2967
    %v3353 = vpack.c.b16 %v2973, %v2968
    %v3354 = vpack.c.b16 %v2974, %v2969
    %v3355 = vpack.c.b16 %v2975, %v2970
    %v3356 = vpack.c.b16 %v2976, %v2971
    %v3357 = vpack.c.b16 %v2982, %v2977
    %v3358 = vpack.c.b16 %v2983, %v2978
    %v3359 = vpack.c.b16 %v2984, %v2979
    %v3360 = vpack.c.b16 %v2985, %v2980
    %v3361 = vpack.c.b16 %v2986, %v2981
    %v3362 = vpack.c.b16 %v2992, %v2987
    %v3363 = vpack.c.b16 %v2993, %v2988
    %v3364 = vpack.c.b16 %v2994, %v2989
    %v3365 = vpack.c.b16 %v2995, %v2990
    %v3366 = vpack.c.b16 %v2996, %v2991
    %v3367 = vpack.c.b16 %v3002, %v2997
    %v3368 = vpack.c.b16 %v3003, %v2998
    %v3369 = vpack.c.b16 %v3004, %v2999
    %v3370 = vpack.c.b16 %v3005, %v3000
    %v3371 = vpack.c.b16 %v3006, %v3001
    %v3372 = vpack.c.b16 %v3012, %v3007
    %v3373 = vpack.c.b16 %v3013, %v3008
    %v3374 = vpack.c.b16 %v3014, %v3009
    %v3375 = vpack.c.b16 %v3015, %v3010
    %v3376 = vpack.c.b16 %v3016, %v3011
    %v3377 = vpack.c.b16 %v3022, %v3017
    %v3378 = vpack.c.b16 %v3023, %v3018
    %v3379 = vpack.c.b16 %v3024, %v3019
    %v3380 = vpack.c.b16 %v3025, %v3020
    %v3381 = vpack.c.b16 %v3026, %v3021
    %v3382 = vpack.c.b16 %v3032, %v3027
    %v3383 = vpack.c.b16 %v3033, %v3028
    %v3384 = vpack.c.b16 %v3034, %v3029
    %v3385 = vpack.c.b16 %v3035, %v3030
    %v3386 = vpack.c.b16 %v3036, %v3031
    %v3387 = vpack.c.b16 %v3042, %v3037
    %v3388 = vpack.c.b16 %v3043, %v3038
    %v3389 = vpack.c.b16 %v3044, %v3039
    %v3390 = vpack.c.b16 %v3045, %v3040
    %v3391 = vpack.c.b16 %v3046, %v3041
    %v3392 = vpack.c.b16 %v3052, %v3047
    %v3393 = vpack.c.b16 %v3053, %v3048
    %v3394 = vpack.c.b16 %v3054, %v3049
    %v3395 = vpack.c.b16 %v3055, %v3050
    %v3396 = vpack.c.b16 %v3056, %v3051
    %v3397 = vpack.c.b16 %v3062, %v3057
    %v3398 = vpack.c.b16 %v3063, %v3058
    %v3399 = vpack.c.b16 %v3064, %v3059
    %v3400 = vpack.c.b16 %v3065, %v3060
    %v3401 = vpack.c.b16 %v3066, %v3061
    %v3402 = vpack.c.b16 %v3072, %v3067
    %v3403 = vpack.c.b16 %v3073, %v3068
    %v3404 = vpack.c.b16 %v3074, %v3069
    %v3405 = vpack.c.b16 %v3075, %v3070
    %v3406 = vpack.c.b16 %v3076, %v3071
    %v3407 = vpack.c.b16 %v3082, %v3077
    %v3408 = vpack.c.b16 %v3083, %v3078
    %v3409 = vpack.c.b16 %v3084, %v3079
    %v3410 = vpack.c.b16 %v3085, %v3080
    %v3411 = vpack.c.b16 %v3086, %v3081
    %v3412 = vpack.c.b16 %v3092, %v3087
    %v3413 = vpack.c.b16 %v3093, %v3088
    %v3414 = vpack.c.b16 %v3094, %v3089
    %v3415 = vpack.c.b16 %v3095, %v3090
    %v3416 = vpack.c.b16 %v3096, %v3091
    %v3417 = vpack.c.b16 %v3102, %v3097
    %v3418 = vpack.c.b16 %v3103, %v3098
    %v3419 = vpack.c.b16 %v3104, %v3099
    %v3420 = vpack.c.b16 %v3105, %v3100
    %v3421 = vpack.c.b16 %v3106, %v3101
    %v3422 = vpack.c.b16 %v3112, %v3107
    %v3423 = vpack.c.b16 %v3113, %v3108
    %v3424 = vpack.c.b16 %v3114, %v3109
    %v3425 = vpack.c.b16 %v3115, %v3110
    %v3426 = vpack.c.b16 %v3116, %v3111
    %v3427 = vpack.c.b16 %v3122, %v3117
    %v3428 = vpack.c.b16 %v3123, %v3118
    %v3429 = vpack.c.b16 %v3124, %v3119
    %v3430 = vpack.c.b16 %v3125, %v3120
    %v3431 = vpack.c.b16 %v3126, %v3121
    %v3432 = vpack.c.b16 %v3132, %v3127
    %v3433 = vpack.c.b16 %v3133, %v3128
    %v3434 = vpack.c.b16 %v3134, %v3129
    %v3435 = vpack.c.b16 %v3135, %v3130
    %v3436 = vpack.c.b16 %v3136, %v3131
    %v3437 = vpack.c.b16 %v3142, %v3137
    %v3438 = vpack.c.b16 %v3143, %v3138
    %v3439 = vpack.c.b16 %v3144, %v3139
    %v3440 = vpack.c.b16 %v3145, %v3140
    %v3441 = vpack.c.b16 %v3146, %v3141
    %v3442 = vpack.c.b16 %v3152, %v3147
    %v3443 = vpack.c.b16 %v3153, %v3148
    %v3444 = vpack.c.b16 %v3154, %v3149
    %v3445 = vpack.c.b16 %v3155, %v3150
    %v3446 = vpack.c.b16 %v3156, %v3151
    %v3447 = vpack.c.b16 %v3162, %v3157
    %v3448 = vpack.c.b16 %v3163, %v3158
    %v3449 = vpack.c.b16 %v3164, %v3159
    %v3450 = vpack.c.b16 %v3165, %v3160
    %v3451 = vpack.c.b16 %v3166, %v3161
    %v3452 = vpack.c.b16 %v3172, %v3167
    %v3453 = vpack.c.b16 %v3173, %v3168
    %v3454 = vpack.c.b16 %v3174, %v3169
    %v3455 = vpack.c.b16 %v3175, %v3170
    %v3456 = vpack.c.b16 %v3176, %v3171
    %v3457 = vpack.c.b16 %v3182, %v3177
    %v3458 = vpack.c.b16 %v3183, %v3178
    %v3459 = vpack.c.b16 %v3184, %v3179
    %v3460 = vpack.c.b16 %v3185, %v3180
    %v3461 = vpack.c.b16 %v3186, %v3181
    %v3462 = vpack.c.b16 %v3192, %v3187
    %v3463 = vpack.c.b16 %v3193, %v3188
    %v3464 = vpack.c.b16 %v3194, %v3189
    %v3465 = vpack.c.b16 %v3195, %v3190
    %v3466 = vpack.c.b16 %v3196, %v3191
    %v3467 = vpack.c.b16 %v3202, %v3197
    %v3468 = vpack.c.b16 %v3203, %v3198
    %v3469 = vpack.c.b16 %v3204, %v3199
    %v3470 = vpack.c.b16 %v3205, %v3200
    %v3471 = vpack.c.b16 %v3206, %v3201
    %v3472 = vpack.c.b16 %v3212, %v3207
    %v3473 = vpack.c.b16 %v3213, %v3208
    %v3474 = vpack.c.b16 %v3214, %v3209
    %v3475 = vpack.c.b16 %v3215, %v3210
    %v3476 = vpack.c.b16 %v3216, %v3211
    %v3477 = vpack.c.b16 %v3222, %v3217
    %v3478 = vpack.c.b16 %v3223, %v3218
    %v3479 = vpack.c.b16 %v3224, %v3219
    %v3480 = vpack.c.b16 %v3225, %v3220
    %v3481 = vpack.c.b16 %v3226, %v3221
    %v3482 = vpack.c.b16 %v3232, %v3227
    %v3483 = vpack.c.b16 %v3233, %v3228
    %v3484 = vpack.c.b16 %v3234, %v3229
    %v3485 = vpack.c.b16 %v3235, %v3230
    %v3486 = vpack.c.b16 %v3236, %v3231
    %v3487 = vpack.c.b16 %v3242, %v3237
    %v3488 = vpack.c.b16 %v3243, %v3238
    %v3489 = vpack.c.b16 %v3244, %v3239
    %v3490 = vpack.c.b16 %v3245, %v3240
    %v3491 = vpack.c.b16 %v3246, %v3241
    %v3492 = vpack.c.b16 %v3252, %v3247
    %v3493 = vpack.c.b16 %v3253, %v3248
    %v3494 = vpack.c.b16 %v3254, %v3249
    %v3495 = vpack.c.b16 %v3255, %v3250
    %v3496 = vpack.c.b16 %v3256, %v3251
    %v3497 = vpack.c.b16 %v3262, %v3257
    %v3498 = vpack.c.b16 %v3263, %v3258
    %v3499 = vpack.c.b16 %v3264, %v3259
    %v3500 = vpack.c.b16 %v3265, %v3260
    %v3501 = vpack.c.b16 %v3266, %v3261
    %v3502 = vpack.c.b16 %v3272, %v3267
    %v3503 = vpack.c.b16 %v3273, %v3268
    %v3504 = vpack.c.b16 %v3274, %v3269
    %v3505 = vpack.c.b16 %v3275, %v3270
    %v3506 = vpack.c.b16 %v3276, %v3271
    %v3507 = vpack.c.b16 %v3282, %v3277
    %v3508 = vpack.c.b16 %v3283, %v3278
    %v3509 = vpack.c.b16 %v3284, %v3279
    %v3510 = vpack.c.b16 %v3285, %v3280
    %v3511 = vpack.c.b16 %v3286, %v3281
    %v3512 = vpack.c.b16 %v3292, %v3287
    %v3513 = vpack.c.b16 %v3293, %v3288
    %v3514 = vpack.c.b16 %v3294, %v3289
    %v3515 = vpack.c.b16 %v3295, %v3290
    %v3516 = vpack.c.b16 %v3296, %v3291
    %v3517 = vpack.c.b16 %v3302, %v3297
    %v3518 = vpack.c.b16 %v3303, %v3298
    %v3519 = vpack.c.b16 %v3304, %v3299
    %v3520 = vpack.c.b16 %v3305, %v3300
    %v3521 = vpack.c.b16 %v3306, %v3301
    %v3522 = vpack.c.b16 %v3312, %v3307
    %v3523 = vpack.c.b16 %v3313, %v3308
    %v3524 = vpack.c.b16 %v3314, %v3309
    %v3525 = vpack.c.b16 %v3315, %v3310
    %v3526 = vpack.c.b16 %v3316, %v3311
    %v3527 = vpack.c.b16 %v3322, %v3317
    %v3528 = vpack.c.b16 %v3323, %v3318
    %v3529 = vpack.c.b16 %v3324, %v3319
    %v3530 = vpack.c.b16 %v3325, %v3320
    %v3531 = vpack.c.b16 %v3326, %v3321
    %v3532 = vpack.c.b16 %v3332, %v3327
    %v3533 = vpack.c.b16 %v3333, %v3328
    %v3534 = vpack.c.b16 %v3334, %v3329
    %v3535 = vpack.c.b16 %v3335, %v3330
    %v3536 = vpack.c.b16 %v3336, %v3331
    %3737 = vmatpush.bf16.msra.mxu0 %v3372
    %3738 = vmatpush.bf16.msra.mxu0 %v3367
    %3739 = vmatpush.bf16.msra.mxu0 %v3362
    %3740 = vmatpush.bf16.msra.mxu0 %v3357
    %3741 = vmatpush.bf16.msra.mxu0 %v3352
    %3742 = vmatpush.bf16.msra.mxu0 %v3347
    %3743 = vmatpush.bf16.msra.mxu0 %v3342
    %3744 = vmatpush.bf16.msra.mxu0 %v3337
    %3745 = vmatmul.bf16.gmra.mxu0 %v2440
    %v3746 = vpop.f32.mrf.mxu0
    %v3747 = vadd.f32 %v2687, %v3746
    %v3748 = vpop.f32.mrf.mxu0
    %v3749 = vadd.f32 %v2687, %v3748
    %3750 = vdwg.mxu0
    %3751 = vmatpush.bf16.msra.mxu0 %v3412
    %3752 = vmatpush.bf16.msra.mxu0 %v3407
    %3753 = vmatpush.bf16.msra.mxu0 %v3402
    %3754 = vmatpush.bf16.msra.mxu0 %v3397
    %3755 = vmatpush.bf16.msra.mxu0 %v3392
    %3756 = vmatpush.bf16.msra.mxu0 %v3387
    %3757 = vmatpush.bf16.msra.mxu0 %v3382
    %3758 = vmatpush.bf16.msra.mxu0 %v3377
    %3759 = vmatmul.bf16.gmra.mxu0 %v2441
    %v3760 = vpop.f32.mrf.mxu0
    %v3761 = vadd.f32 %v3747, %v3760
    %v3762 = vpop.f32.mrf.mxu0
    %v3763 = vadd.f32 %v3749, %v3762
    %3764 = vdwg.mxu0
    %3765 = vmatpush.bf16.msra.mxu0 %v3452
    %3766 = vmatpush.bf16.msra.mxu0 %v3447
    %3767 = vmatpush.bf16.msra.mxu0 %v3442
    %3768 = vmatpush.bf16.msra.mxu0 %v3437
    %3769 = vmatpush.bf16.msra.mxu0 %v3432
    %3770 = vmatpush.bf16.msra.mxu0 %v3427
    %3771 = vmatpush.bf16.msra.mxu0 %v3422
    %3772 = vmatpush.bf16.msra.mxu0 %v3417
    %3773 = vmatmul.bf16.gmra.mxu0 %v2442
    %v3774 = vpop.f32.mrf.mxu0
    %v3775 = vadd.f32 %v3761, %v3774
    %v3776 = vpop.f32.mrf.mxu0
    %v3777 = vadd.f32 %v3763, %v3776
    %3778 = vdwg.mxu0
    %3779 = vmatpush.bf16.msra.mxu0 %v3492
    %3780 = vmatpush.bf16.msra.mxu0 %v3487
    %3781 = vmatpush.bf16.msra.mxu0 %v3482
    %3782 = vmatpush.bf16.msra.mxu0 %v3477
    %3783 = vmatpush.bf16.msra.mxu0 %v3472
    %3784 = vmatpush.bf16.msra.mxu0 %v3467
    %3785 = vmatpush.bf16.msra.mxu0 %v3462
    %3786 = vmatpush.bf16.msra.mxu0 %v3457
    %3787 = vmatmul.bf16.gmra.mxu0 %v2443
    %v3788 = vpop.f32.mrf.mxu0
    %v3789 = vadd.f32 %v3775, %v3788
    %v3790 = vpop.f32.mrf.mxu0
    %v3791 = vadd.f32 %v3777, %v3790
    %3792 = vdwg.mxu0
    %3793 = vmatpush.bf16.msra.mxu0 %v3532
    %3794 = vmatpush.bf16.msra.mxu0 %v3527
    %3795 = vmatpush.bf16.msra.mxu0 %v3522
    %3796 = vmatpush.bf16.msra.mxu0 %v3517
    %3797 = vmatpush.bf16.msra.mxu0 %v3512
    %3798 = vmatpush.bf16.msra.mxu0 %v3507
    %3799 = vmatpush.bf16.msra.mxu0 %v3502
    %3800 = vmatpush.bf16.msra.mxu0 %v3497
    %3801 = vmatmul.bf16.gmra.mxu0 %v2444
    %v3802 = vpop.f32.mrf.mxu0
    %v3803 = vadd.f32 %v3789, %v3802
    %v3804 = vpop.f32.mrf.mxu0
    %v3805 = vadd.f32 %v3791, %v3804
    %3806 = vdwg.mxu0
    %3807 = vmatpush.bf16.msra.mxu0 %v3373
    %3808 = vmatpush.bf16.msra.mxu0 %v3368
    %3809 = vmatpush.bf16.msra.mxu0 %v3363
    %3810 = vmatpush.bf16.msra.mxu0 %v3358
    %3811 = vmatpush.bf16.msra.mxu0 %v3353
    %3812 = vmatpush.bf16.msra.mxu0 %v3348
    %3813 = vmatpush.bf16.msra.mxu0 %v3343
    %3814 = vmatpush.bf16.msra.mxu0 %v3338
    %3815 = vmatmul.bf16.gmra.mxu0 %v2440
    %v3816 = vpop.f32.mrf.mxu0
    %v3817 = vadd.f32 %v2688, %v3816
    %v3818 = vpop.f32.mrf.mxu0
    %v3819 = vadd.f32 %v2688, %v3818
    %3820 = vdwg.mxu0
    %3821 = vmatpush.bf16.msra.mxu0 %v3413
    %3822 = vmatpush.bf16.msra.mxu0 %v3408
    %3823 = vmatpush.bf16.msra.mxu0 %v3403
    %3824 = vmatpush.bf16.msra.mxu0 %v3398
    %3825 = vmatpush.bf16.msra.mxu0 %v3393
    %3826 = vmatpush.bf16.msra.mxu0 %v3388
    %3827 = vmatpush.bf16.msra.mxu0 %v3383
    %3828 = vmatpush.bf16.msra.mxu0 %v3378
    %3829 = vmatmul.bf16.gmra.mxu0 %v2441
    %v3830 = vpop.f32.mrf.mxu0
    %v3831 = vadd.f32 %v3817, %v3830
    %v3832 = vpop.f32.mrf.mxu0
    %v3833 = vadd.f32 %v3819, %v3832
    %3834 = vdwg.mxu0
    %3835 = vmatpush.bf16.msra.mxu0 %v3453
    %3836 = vmatpush.bf16.msra.mxu0 %v3448
    %3837 = vmatpush.bf16.msra.mxu0 %v3443
    %3838 = vmatpush.bf16.msra.mxu0 %v3438
    %3839 = vmatpush.bf16.msra.mxu0 %v3433
    %3840 = vmatpush.bf16.msra.mxu0 %v3428
    %3841 = vmatpush.bf16.msra.mxu0 %v3423
    %3842 = vmatpush.bf16.msra.mxu0 %v3418
    %3843 = vmatmul.bf16.gmra.mxu0 %v2442
    %v3844 = vpop.f32.mrf.mxu0
    %v3845 = vadd.f32 %v3831, %v3844
    %v3846 = vpop.f32.mrf.mxu0
    %v3847 = vadd.f32 %v3833, %v3846
    %3848 = vdwg.mxu0
    %3849 = vmatpush.bf16.msra.mxu0 %v3493
    %3850 = vmatpush.bf16.msra.mxu0 %v3488
    %3851 = vmatpush.bf16.msra.mxu0 %v3483
    %3852 = vmatpush.bf16.msra.mxu0 %v3478
    %3853 = vmatpush.bf16.msra.mxu0 %v3473
    %3854 = vmatpush.bf16.msra.mxu0 %v3468
    %3855 = vmatpush.bf16.msra.mxu0 %v3463
    %3856 = vmatpush.bf16.msra.mxu0 %v3458
    %3857 = vmatmul.bf16.gmra.mxu0 %v2443
    %v3858 = vpop.f32.mrf.mxu0
    %v3859 = vadd.f32 %v3845, %v3858
    %v3860 = vpop.f32.mrf.mxu0
    %v3861 = vadd.f32 %v3847, %v3860
    %3862 = vdwg.mxu0
    %3863 = vmatpush.bf16.msra.mxu0 %v3533
    %3864 = vmatpush.bf16.msra.mxu0 %v3528
    %3865 = vmatpush.bf16.msra.mxu0 %v3523
    %3866 = vmatpush.bf16.msra.mxu0 %v3518
    %3867 = vmatpush.bf16.msra.mxu0 %v3513
    %3868 = vmatpush.bf16.msra.mxu0 %v3508
    %3869 = vmatpush.bf16.msra.mxu0 %v3503
    %3870 = vmatpush.bf16.msra.mxu0 %v3498
    %3871 = vmatmul.bf16.gmra.mxu0 %v2444
    %v3872 = vpop.f32.mrf.mxu0
    %v3873 = vadd.f32 %v3859, %v3872
    %v3874 = vpop.f32.mrf.mxu0
    %v3875 = vadd.f32 %v3861, %v3874
    %3876 = vdwg.mxu0
    %3877 = vmatpush.bf16.msra.mxu0 %v3374
    %3878 = vmatpush.bf16.msra.mxu0 %v3369
    %3879 = vmatpush.bf16.msra.mxu0 %v3364
    %3880 = vmatpush.bf16.msra.mxu0 %v3359
    %3881 = vmatpush.bf16.msra.mxu0 %v3354
    %3882 = vmatpush.bf16.msra.mxu0 %v3349
    %3883 = vmatpush.bf16.msra.mxu0 %v3344
    %3884 = vmatpush.bf16.msra.mxu0 %v3339
    %3885 = vmatmul.bf16.gmra.mxu0 %v2440
    %v3886 = vpop.f32.mrf.mxu0
    %v3887 = vadd.f32 %v2689, %v3886
    %v3888 = vpop.f32.mrf.mxu0
    %v3889 = vadd.f32 %v2689, %v3888
    %3890 = vdwg.mxu0
    %3891 = vmatpush.bf16.msra.mxu0 %v3414
    %3892 = vmatpush.bf16.msra.mxu0 %v3409
    %3893 = vmatpush.bf16.msra.mxu0 %v3404
    %3894 = vmatpush.bf16.msra.mxu0 %v3399
    %3895 = vmatpush.bf16.msra.mxu0 %v3394
    %3896 = vmatpush.bf16.msra.mxu0 %v3389
    %3897 = vmatpush.bf16.msra.mxu0 %v3384
    %3898 = vmatpush.bf16.msra.mxu0 %v3379
    %3899 = vmatmul.bf16.gmra.mxu0 %v2441
    %v3900 = vpop.f32.mrf.mxu0
    %v3901 = vadd.f32 %v3887, %v3900
    %v3902 = vpop.f32.mrf.mxu0
    %v3903 = vadd.f32 %v3889, %v3902
    %3904 = vdwg.mxu0
    %3905 = vmatpush.bf16.msra.mxu0 %v3454
    %3906 = vmatpush.bf16.msra.mxu0 %v3449
    %3907 = vmatpush.bf16.msra.mxu0 %v3444
    %3908 = vmatpush.bf16.msra.mxu0 %v3439
    %3909 = vmatpush.bf16.msra.mxu0 %v3434
    %3910 = vmatpush.bf16.msra.mxu0 %v3429
    %3911 = vmatpush.bf16.msra.mxu0 %v3424
    %3912 = vmatpush.bf16.msra.mxu0 %v3419
    %3913 = vmatmul.bf16.gmra.mxu0 %v2442
    %v3914 = vpop.f32.mrf.mxu0
    %v3915 = vadd.f32 %v3901, %v3914
    %v3916 = vpop.f32.mrf.mxu0
    %v3917 = vadd.f32 %v3903, %v3916
    %3918 = vdwg.mxu0
    %3919 = vmatpush.bf16.msra.mxu0 %v3494
    %3920 = vmatpush.bf16.msra.mxu0 %v3489
    %3921 = vmatpush.bf16.msra.mxu0 %v3484
    %3922 = vmatpush.bf16.msra.mxu0 %v3479
    %3923 = vmatpush.bf16.msra.mxu0 %v3474
    %3924 = vmatpush.bf16.msra.mxu0 %v3469
    %3925 = vmatpush.bf16.msra.mxu0 %v3464
    %3926 = vmatpush.bf16.msra.mxu0 %v3459
    %3927 = vmatmul.bf16.gmra.mxu0 %v2443
    %v3928 = vpop.f32.mrf.mxu0
    %v3929 = vadd.f32 %v3915, %v3928
    %v3930 = vpop.f32.mrf.mxu0
    %v3931 = vadd.f32 %v3917, %v3930
    %3932 = vdwg.mxu0
    %3933 = vmatpush.bf16.msra.mxu0 %v3534
    %3934 = vmatpush.bf16.msra.mxu0 %v3529
    %3935 = vmatpush.bf16.msra.mxu0 %v3524
    %3936 = vmatpush.bf16.msra.mxu0 %v3519
    %3937 = vmatpush.bf16.msra.mxu0 %v3514
    %3938 = vmatpush.bf16.msra.mxu0 %v3509
    %3939 = vmatpush.bf16.msra.mxu0 %v3504
    %3940 = vmatpush.bf16.msra.mxu0 %v3499
    %3941 = vmatmul.bf16.gmra.mxu0 %v2444
    %v3942 = vpop.f32.mrf.mxu0
    %v3943 = vadd.f32 %v3929, %v3942
    %v3944 = vpop.f32.mrf.mxu0
    %v3945 = vadd.f32 %v3931, %v3944
    %3946 = vdwg.mxu0
    %3947 = vmatpush.bf16.msra.mxu0 %v3375
    %3948 = vmatpush.bf16.msra.mxu0 %v3370
    %3949 = vmatpush.bf16.msra.mxu0 %v3365
    %3950 = vmatpush.bf16.msra.mxu0 %v3360
    %3951 = vmatpush.bf16.msra.mxu0 %v3355
    %3952 = vmatpush.bf16.msra.mxu0 %v3350
    %3953 = vmatpush.bf16.msra.mxu0 %v3345
    %3954 = vmatpush.bf16.msra.mxu0 %v3340
    %3955 = vmatmul.bf16.gmra.mxu0 %v2440
    %v3956 = vpop.f32.mrf.mxu0
    %v3957 = vadd.f32 %v2690, %v3956
    %v3958 = vpop.f32.mrf.mxu0
    %v3959 = vadd.f32 %v2690, %v3958
    %3960 = vdwg.mxu0
    %3961 = vmatpush.bf16.msra.mxu0 %v3415
    %3962 = vmatpush.bf16.msra.mxu0 %v3410
    %3963 = vmatpush.bf16.msra.mxu0 %v3405
    %3964 = vmatpush.bf16.msra.mxu0 %v3400
    %3965 = vmatpush.bf16.msra.mxu0 %v3395
    %3966 = vmatpush.bf16.msra.mxu0 %v3390
    %3967 = vmatpush.bf16.msra.mxu0 %v3385
    %3968 = vmatpush.bf16.msra.mxu0 %v3380
    %3969 = vmatmul.bf16.gmra.mxu0 %v2441
    %v3970 = vpop.f32.mrf.mxu0
    %v3971 = vadd.f32 %v3957, %v3970
    %v3972 = vpop.f32.mrf.mxu0
    %v3973 = vadd.f32 %v3959, %v3972
    %3974 = vdwg.mxu0
    %3975 = vmatpush.bf16.msra.mxu0 %v3455
    %3976 = vmatpush.bf16.msra.mxu0 %v3450
    %3977 = vmatpush.bf16.msra.mxu0 %v3445
    %3978 = vmatpush.bf16.msra.mxu0 %v3440
    %3979 = vmatpush.bf16.msra.mxu0 %v3435
    %3980 = vmatpush.bf16.msra.mxu0 %v3430
    %3981 = vmatpush.bf16.msra.mxu0 %v3425
    %3982 = vmatpush.bf16.msra.mxu0 %v3420
    %3983 = vmatmul.bf16.gmra.mxu0 %v2442
    %v3984 = vpop.f32.mrf.mxu0
    %v3985 = vadd.f32 %v3971, %v3984
    %v3986 = vpop.f32.mrf.mxu0
    %v3987 = vadd.f32 %v3973, %v3986
    %3988 = vdwg.mxu0
    %3989 = vmatpush.bf16.msra.mxu0 %v3495
    %3990 = vmatpush.bf16.msra.mxu0 %v3490
    %3991 = vmatpush.bf16.msra.mxu0 %v3485
    %3992 = vmatpush.bf16.msra.mxu0 %v3480
    %3993 = vmatpush.bf16.msra.mxu0 %v3475
    %3994 = vmatpush.bf16.msra.mxu0 %v3470
    %3995 = vmatpush.bf16.msra.mxu0 %v3465
    %3996 = vmatpush.bf16.msra.mxu0 %v3460
    %3997 = vmatmul.bf16.gmra.mxu0 %v2443
    %v3998 = vpop.f32.mrf.mxu0
    %v3999 = vadd.f32 %v3985, %v3998
    %v4000 = vpop.f32.mrf.mxu0
    %v4001 = vadd.f32 %v3987, %v4000
    %4002 = vdwg.mxu0
    %4003 = vmatpush.bf16.msra.mxu0 %v3535
    %4004 = vmatpush.bf16.msra.mxu0 %v3530
    %4005 = vmatpush.bf16.msra.mxu0 %v3525
    %4006 = vmatpush.bf16.msra.mxu0 %v3520
    %4007 = vmatpush.bf16.msra.mxu0 %v3515
    %4008 = vmatpush.bf16.msra.mxu0 %v3510
    %4009 = vmatpush.bf16.msra.mxu0 %v3505
    %4010 = vmatpush.bf16.msra.mxu0 %v3500
    %4011 = vmatmul.bf16.gmra.mxu0 %v2444
    %v4012 = vpop.f32.mrf.mxu0
    %v4013 = vadd.f32 %v3999, %v4012
    %v4014 = vpop.f32.mrf.mxu0
    %v4015 = vadd.f32 %v4001, %v4014
    %4016 = vdwg.mxu0
    %4017 = vmatpush.bf16.msra.mxu0 %v3376
    %4018 = vmatpush.bf16.msra.mxu0 %v3371
    %4019 = vmatpush.bf16.msra.mxu0 %v3366
    %4020 = vmatpush.bf16.msra.mxu0 %v3361
    %4021 = vmatpush.bf16.msra.mxu0 %v3356
    %4022 = vmatpush.bf16.msra.mxu0 %v3351
    %4023 = vmatpush.bf16.msra.mxu0 %v3346
    %4024 = vmatpush.bf16.msra.mxu0 %v3341
    %4025 = vmatmul.bf16.gmra.mxu0 %v2440
    %v4026 = vpop.f32.mrf.mxu0
    %v4027 = vadd.f32 %v2691, %v4026
    %v4028 = vpop.f32.mrf.mxu0
    %v4029 = vadd.f32 %v2691, %v4028
    %4030 = vdwg.mxu0
    %4031 = vmatpush.bf16.msra.mxu0 %v3416
    %4032 = vmatpush.bf16.msra.mxu0 %v3411
    %4033 = vmatpush.bf16.msra.mxu0 %v3406
    %4034 = vmatpush.bf16.msra.mxu0 %v3401
    %4035 = vmatpush.bf16.msra.mxu0 %v3396
    %4036 = vmatpush.bf16.msra.mxu0 %v3391
    %4037 = vmatpush.bf16.msra.mxu0 %v3386
    %4038 = vmatpush.bf16.msra.mxu0 %v3381
    %4039 = vmatmul.bf16.gmra.mxu0 %v2441
    %v4040 = vpop.f32.mrf.mxu0
    %v4041 = vadd.f32 %v4027, %v4040
    %v4042 = vpop.f32.mrf.mxu0
    %v4043 = vadd.f32 %v4029, %v4042
    %4044 = vdwg.mxu0
    %4045 = vmatpush.bf16.msra.mxu0 %v3456
    %4046 = vmatpush.bf16.msra.mxu0 %v3451
    %4047 = vmatpush.bf16.msra.mxu0 %v3446
    %4048 = vmatpush.bf16.msra.mxu0 %v3441
    %4049 = vmatpush.bf16.msra.mxu0 %v3436
    %4050 = vmatpush.bf16.msra.mxu0 %v3431
    %4051 = vmatpush.bf16.msra.mxu0 %v3426
    %4052 = vmatpush.bf16.msra.mxu0 %v3421
    %4053 = vmatmul.bf16.gmra.mxu0 %v2442
    %v4054 = vpop.f32.mrf.mxu0
    %v4055 = vadd.f32 %v4041, %v4054
    %v4056 = vpop.f32.mrf.mxu0
    %v4057 = vadd.f32 %v4043, %v4056
    %4058 = vdwg.mxu0
    %4059 = vmatpush.bf16.msra.mxu0 %v3496
    %4060 = vmatpush.bf16.msra.mxu0 %v3491
    %4061 = vmatpush.bf16.msra.mxu0 %v3486
    %4062 = vmatpush.bf16.msra.mxu0 %v3481
    %4063 = vmatpush.bf16.msra.mxu0 %v3476
    %4064 = vmatpush.bf16.msra.mxu0 %v3471
    %4065 = vmatpush.bf16.msra.mxu0 %v3466
    %4066 = vmatpush.bf16.msra.mxu0 %v3461
    %4067 = vmatmul.bf16.gmra.mxu0 %v2443
    %v4068 = vpop.f32.mrf.mxu0
    %v4069 = vadd.f32 %v4055, %v4068
    %v4070 = vpop.f32.mrf.mxu0
    %v4071 = vadd.f32 %v4057, %v4070
    %4072 = vdwg.mxu0
    %4073 = vmatpush.bf16.msra.mxu0 %v3536
    %4074 = vmatpush.bf16.msra.mxu0 %v3531
    %4075 = vmatpush.bf16.msra.mxu0 %v3526
    %4076 = vmatpush.bf16.msra.mxu0 %v3521
    %4077 = vmatpush.bf16.msra.mxu0 %v3516
    %4078 = vmatpush.bf16.msra.mxu0 %v3511
    %4079 = vmatpush.bf16.msra.mxu0 %v3506
    %4080 = vmatpush.bf16.msra.mxu0 %v3501
    %4081 = vmatmul.bf16.gmra.mxu0 %v2444
    %v4082 = vpop.f32.mrf.mxu0
    %v4083 = vadd.f32 %v4069, %v4082
    %v4084 = vpop.f32.mrf.mxu0
    %v4085 = vadd.f32 %v4071, %v4084
    %4086 = vdwg.mxu0
    %v4087 = vmax.f32 %v3803, 0.0
    %v4088 = vmax.f32 %v3873, 0.0
    %v4089 = vmax.f32 %v3943, 0.0
    %v4090 = vmax.f32 %v4013, 0.0
    %v4091 = vmax.f32 %v4083, 0.0
    %v4092 = vmax.f32 %v3805, 0.0
    %v4093 = vmax.f32 %v3875, 0.0
    %v4094 = vmax.f32 %v3945, 0.0
    %v4095 = vmax.f32 %v4015, 0.0
    %v4096 = vmax.f32 %v4085, 0.0
    %v4097 = vpack.c.bf16 %v4092, %v4087
    %v4098 = vpack.c.bf16 %v4093, %v4088
    %v4099 = vpack.c.bf16 %v4094, %v4089
    %v4100 = vpack.c.bf16 %v4095, %v4090
    %v4101 = vpack.c.bf16 %v4096, %v4091
    %v4102 = vld [vmem:[#allocation7] sm:$0xf]
    %v4103 = vld [vmem:[#allocation7 + $0x4] sm:$0xf]
    %v4104 = vld [vmem:[#allocation7 + $0x8] sm:$0xf]
    %v4105 = vld [vmem:[#allocation7 + $0xc] sm:$0xf]
    %v4106 = vld [vmem:[#allocation7 + $0x10] sm:$0xf]
    %v4107 = vld [vmem:[#allocation7 + $0x14] sm:$0xf]
    %v4108 = vld [vmem:[#allocation7 + $0x18] sm:$0xf]
    %v4109 = vld [vmem:[#allocation7 + $0x1c] sm:$0xf]
    %v4110 = vld [vmem:[#allocation7 + $0x20] sm:$0xf]
    %v4111 = vld [vmem:[#allocation7 + $0x24] sm:$0xf]
    %v4112 = vld [vmem:[#allocation7 + $0x28] sm:$0xf]
    %v4113 = vld [vmem:[#allocation7 + $0x2c] sm:$0xf]
    %v4114 = vld [vmem:[#allocation7 + $0x30] sm:$0xf]
    %v4115 = vld [vmem:[#allocation7 + $0x34] sm:$0xf]
    %v4116 = vld [vmem:[#allocation7 + $0x38] sm:$0xf]
    %v4117 = vld [vmem:[#allocation7 + $0x3c] sm:$0xf]
    %v4118 = vld [vmem:[#allocation7 + $0x40] sm:$0xf]
    %v4119 = vld [vmem:[#allocation7 + $0x44] sm:$0xf]
    %v4120 = vld [vmem:[#allocation7 + $0x48] sm:$0xf]
    %v4121 = vld [vmem:[#allocation7 + $0x4c] sm:$0xf]
    %v4122 = vld [vmem:[#allocation7 + $0x50] sm:$0xf]
    %v4123 = vld [vmem:[#allocation7 + $0x54] sm:$0xf]
    %v4124 = vld [vmem:[#allocation7 + $0x58] sm:$0xf]
    %v4125 = vld [vmem:[#allocation7 + $0x5c] sm:$0xf]
    %v4126 = vld [vmem:[#allocation7 + $0x60] sm:$0xf]
    %v4127 = vld [vmem:[#allocation7 + $0x64] sm:$0xf]
    %v4128 = vld [vmem:[#allocation7 + $0x68] sm:$0xf]
    %v4129 = vld [vmem:[#allocation7 + $0x6c] sm:$0xf]
    %v4130 = vld [vmem:[#allocation7 + $0x70] sm:$0xf]
    %v4131 = vld [vmem:[#allocation7 + $0x74] sm:$0xf]
    %v4132 = vld [vmem:[#allocation7 + $0x78] sm:$0xf]
    %v4133 = vld [vmem:[#allocation7 + $0x7c] sm:$0xf]
    %v4134 = vld [vmem:[#allocation7 + $0x80] sm:$0xf]
    %v4135 = vld [vmem:[#allocation7 + $0x84] sm:$0xf]
    %v4136 = vld [vmem:[#allocation7 + $0x88] sm:$0xf]
    %v4137 = vld [vmem:[#allocation7 + $0x8c] sm:$0xf]
    %v4138 = vld [vmem:[#allocation7 + $0x90] sm:$0xf]
    %v4139 = vld [vmem:[#allocation7 + $0x94] sm:$0xf]
    %v4140 = vld [vmem:[#allocation7 + $0x98] sm:$0xf]
    %v4141 = vld [vmem:[#allocation7 + $0x9c] sm:$0xf]
    %v4142 = vld [vmem:[#allocation7 + $0xa0] sm:$0xf]
    %v4143 = vld [vmem:[#allocation7 + $0xa4] sm:$0xf]
    %v4144 = vld [vmem:[#allocation7 + $0xa8] sm:$0xf]
    %v4145 = vld [vmem:[#allocation7 + $0xac] sm:$0xf]
    %v4146 = vld [vmem:[#allocation7 + $0xb0] sm:$0xf]
    %v4147 = vld [vmem:[#allocation7 + $0xb4] sm:$0xf]
    %v4148 = vld [vmem:[#allocation7 + $0xb8] sm:$0xf]
    %v4149 = vld [vmem:[#allocation7 + $0xbc] sm:$0xf]
    %v4150 = vld [vmem:[#allocation7 + $0xc0] sm:$0xf]
    %v4151 = vld [vmem:[#allocation7 + $0xc4] sm:$0xf]
    %v4152 = vld [vmem:[#allocation7 + $0xc8] sm:$0xf]
    %v4153 = vld [vmem:[#allocation7 + $0xcc] sm:$0xf]
    %v4154 = vld [vmem:[#allocation7 + $0xd0] sm:$0xf]
    %v4155 = vld [vmem:[#allocation7 + $0xd4] sm:$0xf]
    %v4156 = vld [vmem:[#allocation7 + $0xd8] sm:$0xf]
    %v4157 = vld [vmem:[#allocation7 + $0xdc] sm:$0xf]
    %v4158 = vld [vmem:[#allocation7 + $0xe0] sm:$0xf]
    %v4159 = vld [vmem:[#allocation7 + $0xe4] sm:$0xf]
    %v4160 = vld [vmem:[#allocation7 + $0xe8] sm:$0xf]
    %v4161 = vld [vmem:[#allocation7 + $0xec] sm:$0xf]
    %v4162 = vld [vmem:[#allocation7 + $0xf0] sm:$0xf]
    %v4163 = vld [vmem:[#allocation7 + $0xf4] sm:$0xf]
    %v4164 = vld [vmem:[#allocation7 + $0xf8] sm:$0xf]
    %v4165 = vld [vmem:[#allocation7 + $0xfc] sm:$0xf]
    %v4166 = vld [vmem:[#allocation7 + $0x100] sm:$0xf]
    %v4167 = vld [vmem:[#allocation7 + $0x104] sm:$0xf]
    %v4168 = vld [vmem:[#allocation7 + $0x108] sm:$0xf]
    %v4169 = vld [vmem:[#allocation7 + $0x10c] sm:$0xf]
    %v4170 = vld [vmem:[#allocation7 + $0x110] sm:$0xf]
    %v4171 = vld [vmem:[#allocation7 + $0x114] sm:$0xf]
    %v4172 = vld [vmem:[#allocation7 + $0x118] sm:$0xf]
    %v4173 = vld [vmem:[#allocation7 + $0x11c] sm:$0xf]
    %v4174 = vld [vmem:[#allocation7 + $0x120] sm:$0xf]
    %v4175 = vld [vmem:[#allocation7 + $0x124] sm:$0xf]
    %v4176 = vld [vmem:[#allocation7 + $0x128] sm:$0xf]
    %v4177 = vld [vmem:[#allocation7 + $0x12c] sm:$0xf]
    %v4178 = vld [vmem:[#allocation7 + $0x130] sm:$0xf]
    %v4179 = vld [vmem:[#allocation7 + $0x134] sm:$0xf]
    %v4180 = vld [vmem:[#allocation7 + $0x138] sm:$0xf]
    %v4181 = vld [vmem:[#allocation7 + $0x13c] sm:$0xf]
    %v4182 = vld [vmem:[#allocation10 + $0xf] sm:$0x1]
    %v4184 = vperm.slane %v4182, 0
    %v4266 = vunpack.c.l.b16 %v4102
    %v4267 = vunpack.c.l.b16 %v4103
    %v4268 = vunpack.c.l.b16 %v4104
    %v4269 = vunpack.c.l.b16 %v4105
    %v4270 = vunpack.c.l.b16 %v4106
    %v4271 = vunpack.c.l.b16 %v4107
    %v4272 = vunpack.c.l.b16 %v4108
    %v4273 = vunpack.c.l.b16 %v4109
    %v4274 = vunpack.c.l.b16 %v4110
    %v4275 = vunpack.c.l.b16 %v4111
    %v4276 = vunpack.c.l.b16 %v4112
    %v4277 = vunpack.c.l.b16 %v4113
    %v4278 = vunpack.c.l.b16 %v4114
    %v4279 = vunpack.c.l.b16 %v4115
    %v4280 = vunpack.c.l.b16 %v4116
    %v4281 = vunpack.c.l.b16 %v4117
    %v4282 = vunpack.c.l.b16 %v4118
    %v4283 = vunpack.c.l.b16 %v4119
    %v4284 = vunpack.c.l.b16 %v4120
    %v4285 = vunpack.c.l.b16 %v4121
    %v4286 = vunpack.c.l.b16 %v4122
    %v4287 = vunpack.c.l.b16 %v4123
    %v4288 = vunpack.c.l.b16 %v4124
    %v4289 = vunpack.c.l.b16 %v4125
    %v4290 = vunpack.c.l.b16 %v4126
    %v4291 = vunpack.c.l.b16 %v4127
    %v4292 = vunpack.c.l.b16 %v4128
    %v4293 = vunpack.c.l.b16 %v4129
    %v4294 = vunpack.c.l.b16 %v4130
    %v4295 = vunpack.c.l.b16 %v4131
    %v4296 = vunpack.c.l.b16 %v4132
    %v4297 = vunpack.c.l.b16 %v4133
    %v4298 = vunpack.c.l.b16 %v4134
    %v4299 = vunpack.c.l.b16 %v4135
    %v4300 = vunpack.c.l.b16 %v4136
    %v4301 = vunpack.c.l.b16 %v4137
    %v4302 = vunpack.c.l.b16 %v4138
    %v4303 = vunpack.c.l.b16 %v4139
    %v4304 = vunpack.c.l.b16 %v4140
    %v4305 = vunpack.c.l.b16 %v4141
    %v4306 = vunpack.c.l.b16 %v4142
    %v4307 = vunpack.c.l.b16 %v4143
    %v4308 = vunpack.c.l.b16 %v4144
    %v4309 = vunpack.c.l.b16 %v4145
    %v4310 = vunpack.c.l.b16 %v4146
    %v4311 = vunpack.c.l.b16 %v4147
    %v4312 = vunpack.c.l.b16 %v4148
    %v4313 = vunpack.c.l.b16 %v4149
    %v4314 = vunpack.c.l.b16 %v4150
    %v4315 = vunpack.c.l.b16 %v4151
    %v4316 = vunpack.c.l.b16 %v4152
    %v4317 = vunpack.c.l.b16 %v4153
    %v4318 = vunpack.c.l.b16 %v4154
    %v4319 = vunpack.c.l.b16 %v4155
    %v4320 = vunpack.c.l.b16 %v4156
    %v4321 = vunpack.c.l.b16 %v4157
    %v4322 = vunpack.c.l.b16 %v4158
    %v4323 = vunpack.c.l.b16 %v4159
    %v4324 = vunpack.c.l.b16 %v4160
    %v4325 = vunpack.c.l.b16 %v4161
    %v4326 = vunpack.c.l.b16 %v4162
    %v4327 = vunpack.c.l.b16 %v4163
    %v4328 = vunpack.c.l.b16 %v4164
    %v4329 = vunpack.c.l.b16 %v4165
    %v4330 = vunpack.c.l.b16 %v4166
    %v4331 = vunpack.c.l.b16 %v4167
    %v4332 = vunpack.c.l.b16 %v4168
    %v4333 = vunpack.c.l.b16 %v4169
    %v4334 = vunpack.c.l.b16 %v4170
    %v4335 = vunpack.c.l.b16 %v4171
    %v4336 = vunpack.c.l.b16 %v4172
    %v4337 = vunpack.c.l.b16 %v4173
    %v4338 = vunpack.c.l.b16 %v4174
    %v4339 = vunpack.c.l.b16 %v4175
    %v4340 = vunpack.c.l.b16 %v4176
    %v4341 = vunpack.c.l.b16 %v4177
    %v4342 = vunpack.c.l.b16 %v4178
    %v4343 = vunpack.c.l.b16 %v4179
    %v4344 = vunpack.c.l.b16 %v4180
    %v4345 = vunpack.c.l.b16 %v4181
    %v4346 = vpack.c.b16 %v4267, %v4266
    %v4347 = vpack.c.b16 %v4269, %v4268
    %v4348 = vpack.c.b16 %v4271, %v4270
    %v4349 = vpack.c.b16 %v4273, %v4272
    %v4350 = vpack.c.b16 %v4275, %v4274
    %v4351 = vpack.c.b16 %v4277, %v4276
    %v4352 = vpack.c.b16 %v4279, %v4278
    %v4353 = vpack.c.b16 %v4281, %v4280
    %v4354 = vpack.c.b16 %v4283, %v4282
    %v4355 = vpack.c.b16 %v4285, %v4284
    %v4356 = vpack.c.b16 %v4287, %v4286
    %v4357 = vpack.c.b16 %v4289, %v4288
    %v4358 = vpack.c.b16 %v4291, %v4290
    %v4359 = vpack.c.b16 %v4293, %v4292
    %v4360 = vpack.c.b16 %v4295, %v4294
    %v4361 = vpack.c.b16 %v4297, %v4296
    %v4362 = vpack.c.b16 %v4299, %v4298
    %v4363 = vpack.c.b16 %v4301, %v4300
    %v4364 = vpack.c.b16 %v4303, %v4302
    %v4365 = vpack.c.b16 %v4305, %v4304
    %v4366 = vpack.c.b16 %v4307, %v4306
    %v4367 = vpack.c.b16 %v4309, %v4308
    %v4368 = vpack.c.b16 %v4311, %v4310
    %v4369 = vpack.c.b16 %v4313, %v4312
    %v4370 = vpack.c.b16 %v4315, %v4314
    %v4371 = vpack.c.b16 %v4317, %v4316
    %v4372 = vpack.c.b16 %v4319, %v4318
    %v4373 = vpack.c.b16 %v4321, %v4320
    %v4374 = vpack.c.b16 %v4323, %v4322
    %v4375 = vpack.c.b16 %v4325, %v4324
    %v4376 = vpack.c.b16 %v4327, %v4326
    %v4377 = vpack.c.b16 %v4329, %v4328
    %v4378 = vpack.c.b16 %v4331, %v4330
    %v4379 = vpack.c.b16 %v4333, %v4332
    %v4380 = vpack.c.b16 %v4335, %v4334
    %v4381 = vpack.c.b16 %v4337, %v4336
    %v4382 = vpack.c.b16 %v4339, %v4338
    %v4383 = vpack.c.b16 %v4341, %v4340
    %v4384 = vpack.c.b16 %v4343, %v4342
    %v4385 = vpack.c.b16 %v4345, %v4344
    %4426 = vmatpush.bf16.msra.mxu0 %v4353
    %4427 = vmatpush.bf16.msra.mxu0 %v4352
    %4428 = vmatpush.bf16.msra.mxu0 %v4351
    %4429 = vmatpush.bf16.msra.mxu0 %v4350
    %4430 = vmatpush.bf16.msra.mxu0 %v4349
    %4431 = vmatpush.bf16.msra.mxu0 %v4348
    %4432 = vmatpush.bf16.msra.mxu0 %v4347
    %4433 = vmatpush.bf16.msra.mxu0 %v4346
    %4434 = vmatmul.bf16.gmra.mxu0 %v4097
    %v4435 = vpop.f32.mrf.mxu0
    %v4436 = vadd.f32 %v4184, %v4435
    %v4437 = vpop.f32.mrf.mxu0
    %v4438 = vadd.f32 %v4184, %v4437
    %4439 = vdwg.mxu0
    %4440 = vmatpush.bf16.msra.mxu0 %v4361
    %4441 = vmatpush.bf16.msra.mxu0 %v4360
    %4442 = vmatpush.bf16.msra.mxu0 %v4359
    %4443 = vmatpush.bf16.msra.mxu0 %v4358
    %4444 = vmatpush.bf16.msra.mxu0 %v4357
    %4445 = vmatpush.bf16.msra.mxu0 %v4356
    %4446 = vmatpush.bf16.msra.mxu0 %v4355
    %4447 = vmatpush.bf16.msra.mxu0 %v4354
    %4448 = vmatmul.bf16.gmra.mxu0 %v4098
    %v4449 = vpop.f32.mrf.mxu0
    %v4450 = vadd.f32 %v4436, %v4449
    %v4451 = vpop.f32.mrf.mxu0
    %v4452 = vadd.f32 %v4438, %v4451
    %4453 = vdwg.mxu0
    %4454 = vmatpush.bf16.msra.mxu0 %v4369
    %4455 = vmatpush.bf16.msra.mxu0 %v4368
    %4456 = vmatpush.bf16.msra.mxu0 %v4367
    %4457 = vmatpush.bf16.msra.mxu0 %v4366
    %4458 = vmatpush.bf16.msra.mxu0 %v4365
    %4459 = vmatpush.bf16.msra.mxu0 %v4364
    %4460 = vmatpush.bf16.msra.mxu0 %v4363
    %4461 = vmatpush.bf16.msra.mxu0 %v4362
    %4462 = vmatmul.bf16.gmra.mxu0 %v4099
    %v4463 = vpop.f32.mrf.mxu0
    %v4464 = vadd.f32 %v4450, %v4463
    %v4465 = vpop.f32.mrf.mxu0
    %v4466 = vadd.f32 %v4452, %v4465
    %4467 = vdwg.mxu0
    %4468 = vmatpush.bf16.msra.mxu0 %v4377
    %4469 = vmatpush.bf16.msra.mxu0 %v4376
    %4470 = vmatpush.bf16.msra.mxu0 %v4375
    %4471 = vmatpush.bf16.msra.mxu0 %v4374
    %4472 = vmatpush.bf16.msra.mxu0 %v4373
    %4473 = vmatpush.bf16.msra.mxu0 %v4372
    %4474 = vmatpush.bf16.msra.mxu0 %v4371
    %4475 = vmatpush.bf16.msra.mxu0 %v4370
    %4476 = vmatmul.bf16.gmra.mxu0 %v4100
    %v4477 = vpop.f32.mrf.mxu0
    %v4478 = vadd.f32 %v4464, %v4477
    %v4479 = vpop.f32.mrf.mxu0
    %v4480 = vadd.f32 %v4466, %v4479
    %4481 = vdwg.mxu0
    %4482 = vmatpush.bf16.msra.mxu0 %v4385
    %4483 = vmatpush.bf16.msra.mxu0 %v4384
    %4484 = vmatpush.bf16.msra.mxu0 %v4383
    %4485 = vmatpush.bf16.msra.mxu0 %v4382
    %4486 = vmatpush.bf16.msra.mxu0 %v4381
    %4487 = vmatpush.bf16.msra.mxu0 %v4380
    %4488 = vmatpush.bf16.msra.mxu0 %v4379
    %4489 = vmatpush.bf16.msra.mxu0 %v4378
    %4490 = vmatmul.bf16.gmra.mxu0 %v4101
    %v4491 = vpop.f32.mrf.mxu0
    %v4492 = vadd.f32 %v4478, %v4491
    %v4493 = vpop.f32.mrf.mxu0
    %v4494 = vadd.f32 %v4480, %v4493
    %4495 = vdwg.mxu0
    %v4496 = vmax.f32 %v4492, 0.0
    %v4497 = vmax.f32 %v4494, 0.0
    %v4498 = vpack.c.bf16 %v4497, %v4496
    %v4499 = vld [vmem:[#allocation7 + $0x140] sm:$0xf]
    %v4500 = vld [vmem:[#allocation7 + $0x144] sm:$0xf]
    %v4501 = vld [vmem:[#allocation7 + $0x148] sm:$0xf]
    %v4502 = vld [vmem:[#allocation7 + $0x14c] sm:$0xf]
    %v4503 = vld [vmem:[#allocation7 + $0x150] sm:$0xf]
    %v4504 = vld [vmem:[#allocation7 + $0x154] sm:$0xf]
    %v4505 = vld [vmem:[#allocation7 + $0x158] sm:$0xf]
    %v4506 = vld [vmem:[#allocation7 + $0x15c] sm:$0xf]
    %v4507 = vld [vmem:[#allocation7 + $0x160] sm:$0xf]
    %v4508 = vld [vmem:[#allocation7 + $0x164] sm:$0xf]
    %v4509 = vld [vmem:[#allocation7 + $0x168] sm:$0xf]
    %v4510 = vld [vmem:[#allocation7 + $0x16c] sm:$0xf]
    %v4511 = vld [vmem:[#allocation7 + $0x170] sm:$0xf]
    %v4512 = vld [vmem:[#allocation7 + $0x174] sm:$0xf]
    %v4513 = vld [vmem:[#allocation7 + $0x178] sm:$0xf]
    %v4514 = vld [vmem:[#allocation7 + $0x17c] sm:$0xf]
    %v4515 = vld [vmem:[#allocation10 + $0x10] sm:$0x1]
    %v4517 = vperm.slane %v4515, 0
    %v4535 = vunpack.c.l.b16 %v4499
    %v4536 = vunpack.c.l.b16 %v4500
    %v4537 = vunpack.c.l.b16 %v4501
    %v4538 = vunpack.c.l.b16 %v4502
    %v4539 = vunpack.c.l.b16 %v4503
    %v4540 = vunpack.c.l.b16 %v4504
    %v4541 = vunpack.c.l.b16 %v4505
    %v4542 = vunpack.c.l.b16 %v4506
    %v4543 = vunpack.c.l.b16 %v4507
    %v4544 = vunpack.c.l.b16 %v4508
    %v4545 = vunpack.c.l.b16 %v4509
    %v4546 = vunpack.c.l.b16 %v4510
    %v4547 = vunpack.c.l.b16 %v4511
    %v4548 = vunpack.c.l.b16 %v4512
    %v4549 = vunpack.c.l.b16 %v4513
    %v4550 = vunpack.c.l.b16 %v4514
    %v4551 = vpack.c.b16 %v4536, %v4535
    %v4552 = vpack.c.b16 %v4538, %v4537
    %v4553 = vpack.c.b16 %v4540, %v4539
    %v4554 = vpack.c.b16 %v4542, %v4541
    %v4555 = vpack.c.b16 %v4544, %v4543
    %v4556 = vpack.c.b16 %v4546, %v4545
    %v4557 = vpack.c.b16 %v4548, %v4547
    %v4558 = vpack.c.b16 %v4550, %v4549
    %4567 = vmatpush.bf16.msra.mxu0 %v4558
    %4568 = vmatpush.bf16.msra.mxu0 %v4557
    %4569 = vmatpush.bf16.msra.mxu0 %v4556
    %4570 = vmatpush.bf16.msra.mxu0 %v4555
    %4571 = vmatpush.bf16.msra.mxu0 %v4554
    %4572 = vmatpush.bf16.msra.mxu0 %v4553
    %4573 = vmatpush.bf16.msra.mxu0 %v4552
    %4574 = vmatpush.bf16.msra.mxu0 %v4551
    %4575 = vmatmul.bf16.gmra.mxu0 %v4498
    %v4576 = vpop.f32.mrf.mxu0
    %v4577 = vadd.f32 %v4517, %v4576
    %v4578 = vpop.f32.mrf.mxu0
    %v4579 = vadd.f32 %v4517, %v4578
    %4580 = vdwg.mxu0
    %v4581 = vpack.c.bf16 %v4579, %v4577
    %v4582 = vld [vmem:[#allocation7 + $0x180] sm:$0xf]
    %v4583 = vld [vmem:[#allocation7 + $0x184] sm:$0xf]
    %v4584 = vld [vmem:[#allocation7 + $0x188] sm:$0xf]
    %v4585 = vld [vmem:[#allocation7 + $0x18c] sm:$0xf]
    %v4586 = vld [vmem:[#allocation7 + $0x190] sm:$0xf]
    %v4587 = vld [vmem:[#allocation7 + $0x194] sm:$0xf]
    %v4588 = vld [vmem:[#allocation7 + $0x198] sm:$0xf]
    %v4589 = vld [vmem:[#allocation7 + $0x19c] sm:$0xf]
    %v4590 = vld [vmem:[#allocation7 + $0x1a0] sm:$0xf]
    %v4591 = vld [vmem:[#allocation7 + $0x1a4] sm:$0xf]
    %v4592 = vld [vmem:[#allocation7 + $0x1a8] sm:$0xf]
    %v4593 = vld [vmem:[#allocation7 + $0x1ac] sm:$0xf]
    %v4594 = vld [vmem:[#allocation7 + $0x1b0] sm:$0xf]
    %v4595 = vld [vmem:[#allocation7 + $0x1b4] sm:$0xf]
    %v4596 = vld [vmem:[#allocation7 + $0x1b8] sm:$0xf]
    %v4597 = vld [vmem:[#allocation7 + $0x1bc] sm:$0xf]
    %v4598 = vld [vmem:[#allocation10 + $0x11] sm:$0x1]
    %v4600 = vperm.slane %v4598, 0
    %v4618 = vunpack.c.l.b16 %v4582
    %v4619 = vunpack.c.l.b16 %v4583
    %v4620 = vunpack.c.l.b16 %v4584
    %v4621 = vunpack.c.l.b16 %v4585
    %v4622 = vunpack.c.l.b16 %v4586
    %v4623 = vunpack.c.l.b16 %v4587
    %v4624 = vunpack.c.l.b16 %v4588
    %v4625 = vunpack.c.l.b16 %v4589
    %v4626 = vunpack.c.l.b16 %v4590
    %v4627 = vunpack.c.l.b16 %v4591
    %v4628 = vunpack.c.l.b16 %v4592
    %v4629 = vunpack.c.l.b16 %v4593
    %v4630 = vunpack.c.l.b16 %v4594
    %v4631 = vunpack.c.l.b16 %v4595
    %v4632 = vunpack.c.l.b16 %v4596
    %v4633 = vunpack.c.l.b16 %v4597
    %v4634 = vpack.c.b16 %v4619, %v4618
    %v4635 = vpack.c.b16 %v4621, %v4620
    %v4636 = vpack.c.b16 %v4623, %v4622
    %v4637 = vpack.c.b16 %v4625, %v4624
    %v4638 = vpack.c.b16 %v4627, %v4626
    %v4639 = vpack.c.b16 %v4629, %v4628
    %v4640 = vpack.c.b16 %v4631, %v4630
    %v4641 = vpack.c.b16 %v4633, %v4632
    %4650 = vmatpush.bf16.msra.mxu0 %v4641
    %4651 = vmatpush.bf16.msra.mxu0 %v4640
    %4652 = vmatpush.bf16.msra.mxu0 %v4639
    %4653 = vmatpush.bf16.msra.mxu0 %v4638
    %4654 = vmatpush.bf16.msra.mxu0 %v4637
    %4655 = vmatpush.bf16.msra.mxu0 %v4636
    %4656 = vmatpush.bf16.msra.mxu0 %v4635
    %4657 = vmatpush.bf16.msra.mxu0 %v4634
    %4658 = vmatmul.bf16.gmra.mxu0 %v4581
    %v4659 = vpop.f32.mrf.mxu0
    %v4660 = vadd.f32 %v4600, %v4659
    %v4661 = vpop.f32.mrf.mxu0
    %v4662 = vadd.f32 %v4600, %v4661
    %4663 = vdwg.mxu0
    %v4664 = vmax.f32 %v4660, 0.0
    %v4665 = vmax.f32 %v4662, 0.0
    %v4666 = vpack.c.bf16 %v4665, %v4664
    %v4667 = vld [vmem:[#allocation5 + $0xf00] sm:$0xff]
    %v4668 = vld [vmem:[#allocation5 + $0xf08] sm:$0xff]
    %v4669 = vld [vmem:[#allocation5 + $0xf10] sm:$0xf]
    %v4670 = vld [vmem:[#allocation5 + $0xf14] sm:$0xff]
    %v4671 = vld [vmem:[#allocation5 + $0xf1c] sm:$0xff]
    %v4672 = vld [vmem:[#allocation5 + $0xf24] sm:$0xf]
    %v4673 = vld [vmem:[#allocation5 + $0xf28] sm:$0xff]
    %v4674 = vld [vmem:[#allocation5 + $0xf30] sm:$0xff]
    %v4675 = vld [vmem:[#allocation5 + $0xf38] sm:$0xf]
    %v4676 = vld [vmem:[#allocation5 + $0xf3c] sm:$0xff]
    %v4677 = vld [vmem:[#allocation5 + $0xf44] sm:$0xff]
    %v4678 = vld [vmem:[#allocation5 + $0xf4c] sm:$0xf]
    %v4679 = vld [vmem:[#allocation5 + $0xf50] sm:$0xff]
    %v4680 = vld [vmem:[#allocation5 + $0xf58] sm:$0xff]
    %v4681 = vld [vmem:[#allocation5 + $0xf60] sm:$0xf]
    %v4682 = vld [vmem:[#allocation5 + $0xf64] sm:$0xff]
    %v4683 = vld [vmem:[#allocation5 + $0xf6c] sm:$0xff]
    %v4684 = vld [vmem:[#allocation5 + $0xf74] sm:$0xf]
    %v4685 = vld [vmem:[#allocation5 + $0xf78] sm:$0xff]
    %v4686 = vld [vmem:[#allocation5 + $0xf80] sm:$0xff]
    %v4687 = vld [vmem:[#allocation5 + $0xf88] sm:$0xf]
    %v4688 = vld [vmem:[#allocation5 + $0xf8c] sm:$0xff]
    %v4689 = vld [vmem:[#allocation5 + $0xf94] sm:$0xff]
    %v4690 = vld [vmem:[#allocation5 + $0xf9c] sm:$0xf]
    %v4691 = vld [vmem:[#allocation5 + $0xfa0] sm:$0xff]
    %v4692 = vld [vmem:[#allocation5 + $0xfa8] sm:$0xff]
    %v4693 = vld [vmem:[#allocation5 + $0xfb0] sm:$0xf]
    %v4694 = vld [vmem:[#allocation5 + $0xfb4] sm:$0xff]
    %v4695 = vld [vmem:[#allocation5 + $0xfbc] sm:$0xff]
    %v4696 = vld [vmem:[#allocation5 + $0xfc4] sm:$0xf]
    %v4697 = vld [vmem:[#allocation5 + $0xfc8] sm:$0xff]
    %v4698 = vld [vmem:[#allocation5 + $0xfd0] sm:$0xff]
    %v4699 = vld [vmem:[#allocation5 + $0xfd8] sm:$0xf]
    %v4700 = vld [vmem:[#allocation5 + $0xfdc] sm:$0xff]
    %v4701 = vld [vmem:[#allocation5 + $0xfe4] sm:$0xff]
    %v4702 = vld [vmem:[#allocation5 + $0xfec] sm:$0xf]
    %v4703 = vld [vmem:[#allocation5 + $0xff0] sm:$0xff]
    %v4704 = vld [vmem:[#allocation5 + $0xff8] sm:$0xff]
    %v4705 = vld [vmem:[#allocation5 + $0x1000] sm:$0xf]
    %v4706 = vld [vmem:[#allocation5 + $0x1004] sm:$0xff]
    %v4707 = vld [vmem:[#allocation5 + $0x100c] sm:$0xff]
    %v4708 = vld [vmem:[#allocation5 + $0x1014] sm:$0xf]
    %v4709 = vld [vmem:[#allocation5 + $0x1018] sm:$0xff]
    %v4710 = vld [vmem:[#allocation5 + $0x1020] sm:$0xff]
    %v4711 = vld [vmem:[#allocation5 + $0x1028] sm:$0xf]
    %v4712 = vld [vmem:[#allocation5 + $0x102c] sm:$0xff]
    %v4713 = vld [vmem:[#allocation5 + $0x1034] sm:$0xff]
    %v4714 = vld [vmem:[#allocation5 + $0x103c] sm:$0xf]
    %v4715 = vld [vmem:[#allocation10 + $0x12] sm:$0x1f]
    %v4717 = vperm.slane %v4715, 0
    %v4718 = vperm.slane %v4715, 1
    %v4719 = vperm.slane %v4715, 2
    %v4720 = vperm.slane %v4715, 3
    %v4721 = vperm.slane %v4715, 4
    %v4775 = vunpack.c.l.b16 %v4667
    %v4776 = vunpack.c.h.b16 %v4667
    %v4777 = vunpack.c.l.b16 %v4668
    %v4778 = vunpack.c.h.b16 %v4668
    %v4779 = vunpack.c.l.b16 %v4669
    %v4780 = vunpack.c.l.b16 %v4670
    %v4781 = vunpack.c.h.b16 %v4670
    %v4782 = vunpack.c.l.b16 %v4671
    %v4783 = vunpack.c.h.b16 %v4671
    %v4784 = vunpack.c.l.b16 %v4672
    %v4785 = vunpack.c.l.b16 %v4673
    %v4786 = vunpack.c.h.b16 %v4673
    %v4787 = vunpack.c.l.b16 %v4674
    %v4788 = vunpack.c.h.b16 %v4674
    %v4789 = vunpack.c.l.b16 %v4675
    %v4790 = vunpack.c.l.b16 %v4676
    %v4791 = vunpack.c.h.b16 %v4676
    %v4792 = vunpack.c.l.b16 %v4677
    %v4793 = vunpack.c.h.b16 %v4677
    %v4794 = vunpack.c.l.b16 %v4678
    %v4795 = vunpack.c.l.b16 %v4679
    %v4796 = vunpack.c.h.b16 %v4679
    %v4797 = vunpack.c.l.b16 %v4680
    %v4798 = vunpack.c.h.b16 %v4680
    %v4799 = vunpack.c.l.b16 %v4681
    %v4800 = vunpack.c.l.b16 %v4682
    %v4801 = vunpack.c.h.b16 %v4682
    %v4802 = vunpack.c.l.b16 %v4683
    %v4803 = vunpack.c.h.b16 %v4683
    %v4804 = vunpack.c.l.b16 %v4684
    %v4805 = vunpack.c.l.b16 %v4685
    %v4806 = vunpack.c.h.b16 %v4685
    %v4807 = vunpack.c.l.b16 %v4686
    %v4808 = vunpack.c.h.b16 %v4686
    %v4809 = vunpack.c.l.b16 %v4687
    %v4810 = vunpack.c.l.b16 %v4688
    %v4811 = vunpack.c.h.b16 %v4688
    %v4812 = vunpack.c.l.b16 %v4689
    %v4813 = vunpack.c.h.b16 %v4689
    %v4814 = vunpack.c.l.b16 %v4690
    %v4815 = vunpack.c.l.b16 %v4691
    %v4816 = vunpack.c.h.b16 %v4691
    %v4817 = vunpack.c.l.b16 %v4692
    %v4818 = vunpack.c.h.b16 %v4692
    %v4819 = vunpack.c.l.b16 %v4693
    %v4820 = vunpack.c.l.b16 %v4694
    %v4821 = vunpack.c.h.b16 %v4694
    %v4822 = vunpack.c.l.b16 %v4695
    %v4823 = vunpack.c.h.b16 %v4695
    %v4824 = vunpack.c.l.b16 %v4696
    %v4825 = vunpack.c.l.b16 %v4697
    %v4826 = vunpack.c.h.b16 %v4697
    %v4827 = vunpack.c.l.b16 %v4698
    %v4828 = vunpack.c.h.b16 %v4698
    %v4829 = vunpack.c.l.b16 %v4699
    %v4830 = vunpack.c.l.b16 %v4700
    %v4831 = vunpack.c.h.b16 %v4700
    %v4832 = vunpack.c.l.b16 %v4701
    %v4833 = vunpack.c.h.b16 %v4701
    %v4834 = vunpack.c.l.b16 %v4702
    %v4835 = vunpack.c.l.b16 %v4703
    %v4836 = vunpack.c.h.b16 %v4703
    %v4837 = vunpack.c.l.b16 %v4704
    %v4838 = vunpack.c.h.b16 %v4704
    %v4839 = vunpack.c.l.b16 %v4705
    %v4840 = vunpack.c.l.b16 %v4706
    %v4841 = vunpack.c.h.b16 %v4706
    %v4842 = vunpack.c.l.b16 %v4707
    %v4843 = vunpack.c.h.b16 %v4707
    %v4844 = vunpack.c.l.b16 %v4708
    %v4845 = vunpack.c.l.b16 %v4709
    %v4846 = vunpack.c.h.b16 %v4709
    %v4847 = vunpack.c.l.b16 %v4710
    %v4848 = vunpack.c.h.b16 %v4710
    %v4849 = vunpack.c.l.b16 %v4711
    %v4850 = vunpack.c.l.b16 %v4712
    %v4851 = vunpack.c.h.b16 %v4712
    %v4852 = vunpack.c.l.b16 %v4713
    %v4853 = vunpack.c.h.b16 %v4713
    %v4854 = vunpack.c.l.b16 %v4714
    %v4855 = vpack.c.b16 %v4780, %v4775
    %v4856 = vpack.c.b16 %v4781, %v4776
    %v4857 = vpack.c.b16 %v4782, %v4777
    %v4858 = vpack.c.b16 %v4783, %v4778
    %v4859 = vpack.c.b16 %v4784, %v4779
    %v4860 = vpack.c.b16 %v4790, %v4785
    %v4861 = vpack.c.b16 %v4791, %v4786
    %v4862 = vpack.c.b16 %v4792, %v4787
    %v4863 = vpack.c.b16 %v4793, %v4788
    %v4864 = vpack.c.b16 %v4794, %v4789
    %v4865 = vpack.c.b16 %v4800, %v4795
    %v4866 = vpack.c.b16 %v4801, %v4796
    %v4867 = vpack.c.b16 %v4802, %v4797
    %v4868 = vpack.c.b16 %v4803, %v4798
    %v4869 = vpack.c.b16 %v4804, %v4799
    %v4870 = vpack.c.b16 %v4810, %v4805
    %v4871 = vpack.c.b16 %v4811, %v4806
    %v4872 = vpack.c.b16 %v4812, %v4807
    %v4873 = vpack.c.b16 %v4813, %v4808
    %v4874 = vpack.c.b16 %v4814, %v4809
    %v4875 = vpack.c.b16 %v4820, %v4815
    %v4876 = vpack.c.b16 %v4821, %v4816
    %v4877 = vpack.c.b16 %v4822, %v4817
    %v4878 = vpack.c.b16 %v4823, %v4818
    %v4879 = vpack.c.b16 %v4824, %v4819
    %v4880 = vpack.c.b16 %v4830, %v4825
    %v4881 = vpack.c.b16 %v4831, %v4826
    %v4882 = vpack.c.b16 %v4832, %v4827
    %v4883 = vpack.c.b16 %v4833, %v4828
    %v4884 = vpack.c.b16 %v4834, %v4829
    %v4885 = vpack.c.b16 %v4840, %v4835
    %v4886 = vpack.c.b16 %v4841, %v4836
    %v4887 = vpack.c.b16 %v4842, %v4837
    %v4888 = vpack.c.b16 %v4843, %v4838
    %v4889 = vpack.c.b16 %v4844, %v4839
    %v4890 = vpack.c.b16 %v4850, %v4845
    %v4891 = vpack.c.b16 %v4851, %v4846
    %v4892 = vpack.c.b16 %v4852, %v4847
    %v4893 = vpack.c.b16 %v4853, %v4848
    %v4894 = vpack.c.b16 %v4854, %v4849
    %4935 = vmatpush.bf16.msra.mxu0 %v4890
    %4936 = vmatpush.bf16.msra.mxu0 %v4885
    %4937 = vmatpush.bf16.msra.mxu0 %v4880
    %4938 = vmatpush.bf16.msra.mxu0 %v4875
    %4939 = vmatpush.bf16.msra.mxu0 %v4870
    %4940 = vmatpush.bf16.msra.mxu0 %v4865
    %4941 = vmatpush.bf16.msra.mxu0 %v4860
    %4942 = vmatpush.bf16.msra.mxu0 %v4855
    %4943 = vmatmul.bf16.gmra.mxu0 %v4666
    %v4944 = vpop.f32.mrf.mxu0
    %v4945 = vadd.f32 %v4717, %v4944
    %v4946 = vpop.f32.mrf.mxu0
    %v4947 = vadd.f32 %v4717, %v4946
    %4948 = vdwg.mxu0
    %4949 = vmatpush.bf16.msra.mxu0 %v4891
    %4950 = vmatpush.bf16.msra.mxu0 %v4886
    %4951 = vmatpush.bf16.msra.mxu0 %v4881
    %4952 = vmatpush.bf16.msra.mxu0 %v4876
    %4953 = vmatpush.bf16.msra.mxu0 %v4871
    %4954 = vmatpush.bf16.msra.mxu0 %v4866
    %4955 = vmatpush.bf16.msra.mxu0 %v4861
    %4956 = vmatpush.bf16.msra.mxu0 %v4856
    %4957 = vmatmul.bf16.gmra.mxu0 %v4666
    %v4958 = vpop.f32.mrf.mxu0
    %v4959 = vadd.f32 %v4718, %v4958
    %v4960 = vpop.f32.mrf.mxu0
    %v4961 = vadd.f32 %v4718, %v4960
    %4962 = vdwg.mxu0
    %4963 = vmatpush.bf16.msra.mxu0 %v4892
    %4964 = vmatpush.bf16.msra.mxu0 %v4887
    %4965 = vmatpush.bf16.msra.mxu0 %v4882
    %4966 = vmatpush.bf16.msra.mxu0 %v4877
    %4967 = vmatpush.bf16.msra.mxu0 %v4872
    %4968 = vmatpush.bf16.msra.mxu0 %v4867
    %4969 = vmatpush.bf16.msra.mxu0 %v4862
    %4970 = vmatpush.bf16.msra.mxu0 %v4857
    %4971 = vmatmul.bf16.gmra.mxu0 %v4666
    %v4972 = vpop.f32.mrf.mxu0
    %v4973 = vadd.f32 %v4719, %v4972
    %v4974 = vpop.f32.mrf.mxu0
    %v4975 = vadd.f32 %v4719, %v4974
    %4976 = vdwg.mxu0
    %4977 = vmatpush.bf16.msra.mxu0 %v4893
    %4978 = vmatpush.bf16.msra.mxu0 %v4888
    %4979 = vmatpush.bf16.msra.mxu0 %v4883
    %4980 = vmatpush.bf16.msra.mxu0 %v4878
    %4981 = vmatpush.bf16.msra.mxu0 %v4873
    %4982 = vmatpush.bf16.msra.mxu0 %v4868
    %4983 = vmatpush.bf16.msra.mxu0 %v4863
    %4984 = vmatpush.bf16.msra.mxu0 %v4858
    %4985 = vmatmul.bf16.gmra.mxu0 %v4666
    %v4986 = vpop.f32.mrf.mxu0
    %v4987 = vadd.f32 %v4720, %v4986
    %v4988 = vpop.f32.mrf.mxu0
    %v4989 = vadd.f32 %v4720, %v4988
    %4990 = vdwg.mxu0
    %4991 = vmatpush.bf16.msra.mxu0 %v4894
    %4992 = vmatpush.bf16.msra.mxu0 %v4889
    %4993 = vmatpush.bf16.msra.mxu0 %v4884
    %4994 = vmatpush.bf16.msra.mxu0 %v4879
    %4995 = vmatpush.bf16.msra.mxu0 %v4874
    %4996 = vmatpush.bf16.msra.mxu0 %v4869
    %4997 = vmatpush.bf16.msra.mxu0 %v4864
    %4998 = vmatpush.bf16.msra.mxu0 %v4859
    %4999 = vmatmul.bf16.gmra.mxu0 %v4666
    %v5000 = vpop.f32.mrf.mxu0
    %v5001 = vadd.f32 %v4721, %v5000
    %v5002 = vpop.f32.mrf.mxu0
    %v5003 = vadd.f32 %v4721, %v5002
    %5004 = vdwg.mxu0
    %v5005 = vpack.c.bf16 %v4947, %v4945
    %v5006 = vpack.c.bf16 %v4961, %v4959
    %v5007 = vpack.c.bf16 %v4975, %v4973
    %v5008 = vpack.c.bf16 %v4989, %v4987
    %v5009 = vpack.c.bf16 %v5003, %v5001
    %v5010 = vld [vmem:[#allocation5 + $0x1040] sm:$0xff]
    %v5011 = vld [vmem:[#allocation5 + $0x1048] sm:$0xff]
    %v5012 = vld [vmem:[#allocation5 + $0x1050] sm:$0xf]
    %v5013 = vld [vmem:[#allocation5 + $0x1054] sm:$0xff]
    %v5014 = vld [vmem:[#allocation5 + $0x105c] sm:$0xff]
    %v5015 = vld [vmem:[#allocation5 + $0x1064] sm:$0xf]
    %v5016 = vld [vmem:[#allocation5 + $0x1068] sm:$0xff]
    %v5017 = vld [vmem:[#allocation5 + $0x1070] sm:$0xff]
    %v5018 = vld [vmem:[#allocation5 + $0x1078] sm:$0xf]
    %v5019 = vld [vmem:[#allocation5 + $0x107c] sm:$0xff]
    %v5020 = vld [vmem:[#allocation5 + $0x1084] sm:$0xff]
    %v5021 = vld [vmem:[#allocation5 + $0x108c] sm:$0xf]
    %v5022 = vld [vmem:[#allocation5 + $0x1090] sm:$0xff]
    %v5023 = vld [vmem:[#allocation5 + $0x1098] sm:$0xff]
    %v5024 = vld [vmem:[#allocation5 + $0x10a0] sm:$0xf]
    %v5025 = vld [vmem:[#allocation5 + $0x10a4] sm:$0xff]
    %v5026 = vld [vmem:[#allocation5 + $0x10ac] sm:$0xff]
    %v5027 = vld [vmem:[#allocation5 + $0x10b4] sm:$0xf]
    %v5028 = vld [vmem:[#allocation5 + $0x10b8] sm:$0xff]
    %v5029 = vld [vmem:[#allocation5 + $0x10c0] sm:$0xff]
    %v5030 = vld [vmem:[#allocation5 + $0x10c8] sm:$0xf]
    %v5031 = vld [vmem:[#allocation5 + $0x10cc] sm:$0xff]
    %v5032 = vld [vmem:[#allocation5 + $0x10d4] sm:$0xff]
    %v5033 = vld [vmem:[#allocation5 + $0x10dc] sm:$0xf]
    %v5034 = vld [vmem:[#allocation5 + $0x10e0] sm:$0xff]
    %v5035 = vld [vmem:[#allocation5 + $0x10e8] sm:$0xff]
    %v5036 = vld [vmem:[#allocation5 + $0x10f0] sm:$0xf]
    %v5037 = vld [vmem:[#allocation5 + $0x10f4] sm:$0xff]
    %v5038 = vld [vmem:[#allocation5 + $0x10fc] sm:$0xff]
    %v5039 = vld [vmem:[#allocation5 + $0x1104] sm:$0xf]
    %v5040 = vld [vmem:[#allocation5 + $0x1108] sm:$0xff]
    %v5041 = vld [vmem:[#allocation5 + $0x1110] sm:$0xff]
    %v5042 = vld [vmem:[#allocation5 + $0x1118] sm:$0xf]
    %v5043 = vld [vmem:[#allocation5 + $0x111c] sm:$0xff]
    %v5044 = vld [vmem:[#allocation5 + $0x1124] sm:$0xff]
    %v5045 = vld [vmem:[#allocation5 + $0x112c] sm:$0xf]
    %v5046 = vld [vmem:[#allocation5 + $0x1130] sm:$0xff]
    %v5047 = vld [vmem:[#allocation5 + $0x1138] sm:$0xff]
    %v5048 = vld [vmem:[#allocation5 + $0x1140] sm:$0xf]
    %v5049 = vld [vmem:[#allocation5 + $0x1144] sm:$0xff]
    %v5050 = vld [vmem:[#allocation5 + $0x114c] sm:$0xff]
    %v5051 = vld [vmem:[#allocation5 + $0x1154] sm:$0xf]
    %v5052 = vld [vmem:[#allocation5 + $0x1158] sm:$0xff]
    %v5053 = vld [vmem:[#allocation5 + $0x1160] sm:$0xff]
    %v5054 = vld [vmem:[#allocation5 + $0x1168] sm:$0xf]
    %v5055 = vld [vmem:[#allocation5 + $0x116c] sm:$0xff]
    %v5056 = vld [vmem:[#allocation5 + $0x1174] sm:$0xff]
    %v5057 = vld [vmem:[#allocation5 + $0x117c] sm:$0xf]
    %v5058 = vld [vmem:[#allocation5 + $0x1180] sm:$0xff]
    %v5059 = vld [vmem:[#allocation5 + $0x1188] sm:$0xff]
    %v5060 = vld [vmem:[#allocation5 + $0x1190] sm:$0xf]
    %v5061 = vld [vmem:[#allocation5 + $0x1194] sm:$0xff]
    %v5062 = vld [vmem:[#allocation5 + $0x119c] sm:$0xff]
    %v5063 = vld [vmem:[#allocation5 + $0x11a4] sm:$0xf]
    %v5064 = vld [vmem:[#allocation5 + $0x11a8] sm:$0xff]
    %v5065 = vld [vmem:[#allocation5 + $0x11b0] sm:$0xff]
    %v5066 = vld [vmem:[#allocation5 + $0x11b8] sm:$0xf]
    %v5067 = vld [vmem:[#allocation5 + $0x11bc] sm:$0xff]
    %v5068 = vld [vmem:[#allocation5 + $0x11c4] sm:$0xff]
    %v5069 = vld [vmem:[#allocation5 + $0x11cc] sm:$0xf]
    %v5070 = vld [vmem:[#allocation5 + $0x11d0] sm:$0xff]
    %v5071 = vld [vmem:[#allocation5 + $0x11d8] sm:$0xff]
    %v5072 = vld [vmem:[#allocation5 + $0x11e0] sm:$0xf]
    %v5073 = vld [vmem:[#allocation5 + $0x11e4] sm:$0xff]
    %v5074 = vld [vmem:[#allocation5 + $0x11ec] sm:$0xff]
    %v5075 = vld [vmem:[#allocation5 + $0x11f4] sm:$0xf]
    %v5076 = vld [vmem:[#allocation5 + $0x11f8] sm:$0xff]
    %v5077 = vld [vmem:[#allocation5 + $0x1200] sm:$0xff]
    %v5078 = vld [vmem:[#allocation5 + $0x1208] sm:$0xf]
    %v5079 = vld [vmem:[#allocation5 + $0x120c] sm:$0xff]
    %v5080 = vld [vmem:[#allocation5 + $0x1214] sm:$0xff]
    %v5081 = vld [vmem:[#allocation5 + $0x121c] sm:$0xf]
    %v5082 = vld [vmem:[#allocation5 + $0x1220] sm:$0xff]
    %v5083 = vld [vmem:[#allocation5 + $0x1228] sm:$0xff]
    %v5084 = vld [vmem:[#allocation5 + $0x1230] sm:$0xf]
    %v5085 = vld [vmem:[#allocation5 + $0x1234] sm:$0xff]
    %v5086 = vld [vmem:[#allocation5 + $0x123c] sm:$0xff]
    %v5087 = vld [vmem:[#allocation5 + $0x1244] sm:$0xf]
    %v5088 = vld [vmem:[#allocation5 + $0x1248] sm:$0xff]
    %v5089 = vld [vmem:[#allocation5 + $0x1250] sm:$0xff]
    %v5090 = vld [vmem:[#allocation5 + $0x1258] sm:$0xf]
    %v5091 = vld [vmem:[#allocation5 + $0x125c] sm:$0xff]
    %v5092 = vld [vmem:[#allocation5 + $0x1264] sm:$0xff]
    %v5093 = vld [vmem:[#allocation5 + $0x126c] sm:$0xf]
    %v5094 = vld [vmem:[#allocation5 + $0x1270] sm:$0xff]
    %v5095 = vld [vmem:[#allocation5 + $0x1278] sm:$0xff]
    %v5096 = vld [vmem:[#allocation5 + $0x1280] sm:$0xf]
    %v5097 = vld [vmem:[#allocation5 + $0x1284] sm:$0xff]
    %v5098 = vld [vmem:[#allocation5 + $0x128c] sm:$0xff]
    %v5099 = vld [vmem:[#allocation5 + $0x1294] sm:$0xf]
    %v5100 = vld [vmem:[#allocation5 + $0x1298] sm:$0xff]
    %v5101 = vld [vmem:[#allocation5 + $0x12a0] sm:$0xff]
    %v5102 = vld [vmem:[#allocation5 + $0x12a8] sm:$0xf]
    %v5103 = vld [vmem:[#allocation5 + $0x12ac] sm:$0xff]
    %v5104 = vld [vmem:[#allocation5 + $0x12b4] sm:$0xff]
    %v5105 = vld [vmem:[#allocation5 + $0x12bc] sm:$0xf]
    %v5106 = vld [vmem:[#allocation5 + $0x12c0] sm:$0xff]
    %v5107 = vld [vmem:[#allocation5 + $0x12c8] sm:$0xff]
    %v5108 = vld [vmem:[#allocation5 + $0x12d0] sm:$0xf]
    %v5109 = vld [vmem:[#allocation5 + $0x12d4] sm:$0xff]
    %v5110 = vld [vmem:[#allocation5 + $0x12dc] sm:$0xff]
    %v5111 = vld [vmem:[#allocation5 + $0x12e4] sm:$0xf]
    %v5112 = vld [vmem:[#allocation5 + $0x12e8] sm:$0xff]
    %v5113 = vld [vmem:[#allocation5 + $0x12f0] sm:$0xff]
    %v5114 = vld [vmem:[#allocation5 + $0x12f8] sm:$0xf]
    %v5115 = vld [vmem:[#allocation5 + $0x12fc] sm:$0xff]
    %v5116 = vld [vmem:[#allocation5 + $0x1304] sm:$0xff]
    %v5117 = vld [vmem:[#allocation5 + $0x130c] sm:$0xf]
    %v5118 = vld [vmem:[#allocation5 + $0x1310] sm:$0xff]
    %v5119 = vld [vmem:[#allocation5 + $0x1318] sm:$0xff]
    %v5120 = vld [vmem:[#allocation5 + $0x1320] sm:$0xf]
    %v5121 = vld [vmem:[#allocation5 + $0x1324] sm:$0xff]
    %v5122 = vld [vmem:[#allocation5 + $0x132c] sm:$0xff]
    %v5123 = vld [vmem:[#allocation5 + $0x1334] sm:$0xf]
    %v5124 = vld [vmem:[#allocation5 + $0x1338] sm:$0xff]
    %v5125 = vld [vmem:[#allocation5 + $0x1340] sm:$0xff]
    %v5126 = vld [vmem:[#allocation5 + $0x1348] sm:$0xf]
    %v5127 = vld [vmem:[#allocation5 + $0x134c] sm:$0xff]
    %v5128 = vld [vmem:[#allocation5 + $0x1354] sm:$0xff]
    %v5129 = vld [vmem:[#allocation5 + $0x135c] sm:$0xf]
    %v5130 = vld [vmem:[#allocation5 + $0x1360] sm:$0xff]
    %v5131 = vld [vmem:[#allocation5 + $0x1368] sm:$0xff]
    %v5132 = vld [vmem:[#allocation5 + $0x1370] sm:$0xf]
    %v5133 = vld [vmem:[#allocation5 + $0x1374] sm:$0xff]
    %v5134 = vld [vmem:[#allocation5 + $0x137c] sm:$0xff]
    %v5135 = vld [vmem:[#allocation5 + $0x1384] sm:$0xf]
    %v5136 = vld [vmem:[#allocation5 + $0x1388] sm:$0xff]
    %v5137 = vld [vmem:[#allocation5 + $0x1390] sm:$0xff]
    %v5138 = vld [vmem:[#allocation5 + $0x1398] sm:$0xf]
    %v5139 = vld [vmem:[#allocation5 + $0x139c] sm:$0xff]
    %v5140 = vld [vmem:[#allocation5 + $0x13a4] sm:$0xff]
    %v5141 = vld [vmem:[#allocation5 + $0x13ac] sm:$0xf]
    %v5142 = vld [vmem:[#allocation5 + $0x13b0] sm:$0xff]
    %v5143 = vld [vmem:[#allocation5 + $0x13b8] sm:$0xff]
    %v5144 = vld [vmem:[#allocation5 + $0x13c0] sm:$0xf]
    %v5145 = vld [vmem:[#allocation5 + $0x13c4] sm:$0xff]
    %v5146 = vld [vmem:[#allocation5 + $0x13cc] sm:$0xff]
    %v5147 = vld [vmem:[#allocation5 + $0x13d4] sm:$0xf]
    %v5148 = vld [vmem:[#allocation5 + $0x13d8] sm:$0xff]
    %v5149 = vld [vmem:[#allocation5 + $0x13e0] sm:$0xff]
    %v5150 = vld [vmem:[#allocation5 + $0x13e8] sm:$0xf]
    %v5151 = vld [vmem:[#allocation5 + $0x13ec] sm:$0xff]
    %v5152 = vld [vmem:[#allocation5 + $0x13f4] sm:$0xff]
    %v5153 = vld [vmem:[#allocation5 + $0x13fc] sm:$0xf]
    %v5154 = vld [vmem:[#allocation5 + $0x1400] sm:$0xff]
    %v5155 = vld [vmem:[#allocation5 + $0x1408] sm:$0xff]
    %v5156 = vld [vmem:[#allocation5 + $0x1410] sm:$0xf]
    %v5157 = vld [vmem:[#allocation5 + $0x1414] sm:$0xff]
    %v5158 = vld [vmem:[#allocation5 + $0x141c] sm:$0xff]
    %v5159 = vld [vmem:[#allocation5 + $0x1424] sm:$0xf]
    %v5160 = vld [vmem:[#allocation5 + $0x1428] sm:$0xff]
    %v5161 = vld [vmem:[#allocation5 + $0x1430] sm:$0xff]
    %v5162 = vld [vmem:[#allocation5 + $0x1438] sm:$0xf]
    %v5163 = vld [vmem:[#allocation5 + $0x143c] sm:$0xff]
    %v5164 = vld [vmem:[#allocation5 + $0x1444] sm:$0xff]
    %v5165 = vld [vmem:[#allocation5 + $0x144c] sm:$0xf]
    %v5166 = vld [vmem:[#allocation5 + $0x1450] sm:$0xff]
    %v5167 = vld [vmem:[#allocation5 + $0x1458] sm:$0xff]
    %v5168 = vld [vmem:[#allocation5 + $0x1460] sm:$0xf]
    %v5169 = vld [vmem:[#allocation5 + $0x1464] sm:$0xff]
    %v5170 = vld [vmem:[#allocation5 + $0x146c] sm:$0xff]
    %v5171 = vld [vmem:[#allocation5 + $0x1474] sm:$0xf]
    %v5172 = vld [vmem:[#allocation5 + $0x1478] sm:$0xff]
    %v5173 = vld [vmem:[#allocation5 + $0x1480] sm:$0xff]
    %v5174 = vld [vmem:[#allocation5 + $0x1488] sm:$0xf]
    %v5175 = vld [vmem:[#allocation5 + $0x148c] sm:$0xff]
    %v5176 = vld [vmem:[#allocation5 + $0x1494] sm:$0xff]
    %v5177 = vld [vmem:[#allocation5 + $0x149c] sm:$0xf]
    %v5178 = vld [vmem:[#allocation5 + $0x14a0] sm:$0xff]
    %v5179 = vld [vmem:[#allocation5 + $0x14a8] sm:$0xff]
    %v5180 = vld [vmem:[#allocation5 + $0x14b0] sm:$0xf]
    %v5181 = vld [vmem:[#allocation5 + $0x14b4] sm:$0xff]
    %v5182 = vld [vmem:[#allocation5 + $0x14bc] sm:$0xff]
    %v5183 = vld [vmem:[#allocation5 + $0x14c4] sm:$0xf]
    %v5184 = vld [vmem:[#allocation5 + $0x14c8] sm:$0xff]
    %v5185 = vld [vmem:[#allocation5 + $0x14d0] sm:$0xff]
    %v5186 = vld [vmem:[#allocation5 + $0x14d8] sm:$0xf]
    %v5187 = vld [vmem:[#allocation5 + $0x14dc] sm:$0xff]
    %v5188 = vld [vmem:[#allocation5 + $0x14e4] sm:$0xff]
    %v5189 = vld [vmem:[#allocation5 + $0x14ec] sm:$0xf]
    %v5190 = vld [vmem:[#allocation5 + $0x14f0] sm:$0xff]
    %v5191 = vld [vmem:[#allocation5 + $0x14f8] sm:$0xff]
    %v5192 = vld [vmem:[#allocation5 + $0x1500] sm:$0xf]
    %v5193 = vld [vmem:[#allocation5 + $0x1504] sm:$0xff]
    %v5194 = vld [vmem:[#allocation5 + $0x150c] sm:$0xff]
    %v5195 = vld [vmem:[#allocation5 + $0x1514] sm:$0xf]
    %v5196 = vld [vmem:[#allocation5 + $0x1518] sm:$0xff]
    %v5197 = vld [vmem:[#allocation5 + $0x1520] sm:$0xff]
    %v5198 = vld [vmem:[#allocation5 + $0x1528] sm:$0xf]
    %v5199 = vld [vmem:[#allocation5 + $0x152c] sm:$0xff]
    %v5200 = vld [vmem:[#allocation5 + $0x1534] sm:$0xff]
    %v5201 = vld [vmem:[#allocation5 + $0x153c] sm:$0xf]
    %v5202 = vld [vmem:[#allocation5 + $0x1540] sm:$0xff]
    %v5203 = vld [vmem:[#allocation5 + $0x1548] sm:$0xff]
    %v5204 = vld [vmem:[#allocation5 + $0x1550] sm:$0xf]
    %v5205 = vld [vmem:[#allocation5 + $0x1554] sm:$0xff]
    %v5206 = vld [vmem:[#allocation5 + $0x155c] sm:$0xff]
    %v5207 = vld [vmem:[#allocation5 + $0x1564] sm:$0xf]
    %v5208 = vld [vmem:[#allocation5 + $0x1568] sm:$0xff]
    %v5209 = vld [vmem:[#allocation5 + $0x1570] sm:$0xff]
    %v5210 = vld [vmem:[#allocation5 + $0x1578] sm:$0xf]
    %v5211 = vld [vmem:[#allocation5 + $0x157c] sm:$0xff]
    %v5212 = vld [vmem:[#allocation5 + $0x1584] sm:$0xff]
    %v5213 = vld [vmem:[#allocation5 + $0x158c] sm:$0xf]
    %v5214 = vld [vmem:[#allocation5 + $0x1590] sm:$0xff]
    %v5215 = vld [vmem:[#allocation5 + $0x1598] sm:$0xff]
    %v5216 = vld [vmem:[#allocation5 + $0x15a0] sm:$0xf]
    %v5217 = vld [vmem:[#allocation5 + $0x15a4] sm:$0xff]
    %v5218 = vld [vmem:[#allocation5 + $0x15ac] sm:$0xff]
    %v5219 = vld [vmem:[#allocation5 + $0x15b4] sm:$0xf]
    %v5220 = vld [vmem:[#allocation5 + $0x15b8] sm:$0xff]
    %v5221 = vld [vmem:[#allocation5 + $0x15c0] sm:$0xff]
    %v5222 = vld [vmem:[#allocation5 + $0x15c8] sm:$0xf]
    %v5223 = vld [vmem:[#allocation5 + $0x15cc] sm:$0xff]
    %v5224 = vld [vmem:[#allocation5 + $0x15d4] sm:$0xff]
    %v5225 = vld [vmem:[#allocation5 + $0x15dc] sm:$0xf]
    %v5226 = vld [vmem:[#allocation5 + $0x15e0] sm:$0xff]
    %v5227 = vld [vmem:[#allocation5 + $0x15e8] sm:$0xff]
    %v5228 = vld [vmem:[#allocation5 + $0x15f0] sm:$0xf]
    %v5229 = vld [vmem:[#allocation5 + $0x15f4] sm:$0xff]
    %v5230 = vld [vmem:[#allocation5 + $0x15fc] sm:$0xff]
    %v5231 = vld [vmem:[#allocation5 + $0x1604] sm:$0xf]
    %v5232 = vld [vmem:[#allocation5 + $0x1608] sm:$0xff]
    %v5233 = vld [vmem:[#allocation5 + $0x1610] sm:$0xff]
    %v5234 = vld [vmem:[#allocation5 + $0x1618] sm:$0xf]
    %v5235 = vld [vmem:[#allocation5 + $0x161c] sm:$0xff]
    %v5236 = vld [vmem:[#allocation5 + $0x1624] sm:$0xff]
    %v5237 = vld [vmem:[#allocation5 + $0x162c] sm:$0xf]
    %v5238 = vld [vmem:[#allocation5 + $0x1630] sm:$0xff]
    %v5239 = vld [vmem:[#allocation5 + $0x1638] sm:$0xff]
    %v5240 = vld [vmem:[#allocation5 + $0x1640] sm:$0xf]
    %v5241 = vld [vmem:[#allocation5 + $0x1644] sm:$0xff]
    %v5242 = vld [vmem:[#allocation5 + $0x164c] sm:$0xff]
    %v5243 = vld [vmem:[#allocation5 + $0x1654] sm:$0xf]
    %v5244 = vld [vmem:[#allocation5 + $0x1658] sm:$0xff]
    %v5245 = vld [vmem:[#allocation5 + $0x1660] sm:$0xff]
    %v5246 = vld [vmem:[#allocation5 + $0x1668] sm:$0xf]
    %v5247 = vld [vmem:[#allocation5 + $0x166c] sm:$0xff]
    %v5248 = vld [vmem:[#allocation5 + $0x1674] sm:$0xff]
    %v5249 = vld [vmem:[#allocation5 + $0x167c] sm:$0xf]
    %v5250 = vld [vmem:[#allocation10 + $0x17] sm:$0x1f]
    %v5252 = vperm.slane %v5250, 0
    %v5253 = vperm.slane %v5250, 1
    %v5254 = vperm.slane %v5250, 2
    %v5255 = vperm.slane %v5250, 3
    %v5256 = vperm.slane %v5250, 4
    %v5502 = vunpack.c.l.b16 %v5010
    %v5503 = vunpack.c.h.b16 %v5010
    %v5504 = vunpack.c.l.b16 %v5011
    %v5505 = vunpack.c.h.b16 %v5011
    %v5506 = vunpack.c.l.b16 %v5012
    %v5507 = vunpack.c.l.b16 %v5013
    %v5508 = vunpack.c.h.b16 %v5013
    %v5509 = vunpack.c.l.b16 %v5014
    %v5510 = vunpack.c.h.b16 %v5014
    %v5511 = vunpack.c.l.b16 %v5015
    %v5512 = vunpack.c.l.b16 %v5016
    %v5513 = vunpack.c.h.b16 %v5016
    %v5514 = vunpack.c.l.b16 %v5017
    %v5515 = vunpack.c.h.b16 %v5017
    %v5516 = vunpack.c.l.b16 %v5018
    %v5517 = vunpack.c.l.b16 %v5019
    %v5518 = vunpack.c.h.b16 %v5019
    %v5519 = vunpack.c.l.b16 %v5020
    %v5520 = vunpack.c.h.b16 %v5020
    %v5521 = vunpack.c.l.b16 %v5021
    %v5522 = vunpack.c.l.b16 %v5022
    %v5523 = vunpack.c.h.b16 %v5022
    %v5524 = vunpack.c.l.b16 %v5023
    %v5525 = vunpack.c.h.b16 %v5023
    %v5526 = vunpack.c.l.b16 %v5024
    %v5527 = vunpack.c.l.b16 %v5025
    %v5528 = vunpack.c.h.b16 %v5025
    %v5529 = vunpack.c.l.b16 %v5026
    %v5530 = vunpack.c.h.b16 %v5026
    %v5531 = vunpack.c.l.b16 %v5027
    %v5532 = vunpack.c.l.b16 %v5028
    %v5533 = vunpack.c.h.b16 %v5028
    %v5534 = vunpack.c.l.b16 %v5029
    %v5535 = vunpack.c.h.b16 %v5029
    %v5536 = vunpack.c.l.b16 %v5030
    %v5537 = vunpack.c.l.b16 %v5031
    %v5538 = vunpack.c.h.b16 %v5031
    %v5539 = vunpack.c.l.b16 %v5032
    %v5540 = vunpack.c.h.b16 %v5032
    %v5541 = vunpack.c.l.b16 %v5033
    %v5542 = vunpack.c.l.b16 %v5034
    %v5543 = vunpack.c.h.b16 %v5034
    %v5544 = vunpack.c.l.b16 %v5035
    %v5545 = vunpack.c.h.b16 %v5035
    %v5546 = vunpack.c.l.b16 %v5036
    %v5547 = vunpack.c.l.b16 %v5037
    %v5548 = vunpack.c.h.b16 %v5037
    %v5549 = vunpack.c.l.b16 %v5038
    %v5550 = vunpack.c.h.b16 %v5038
    %v5551 = vunpack.c.l.b16 %v5039
    %v5552 = vunpack.c.l.b16 %v5040
    %v5553 = vunpack.c.h.b16 %v5040
    %v5554 = vunpack.c.l.b16 %v5041
    %v5555 = vunpack.c.h.b16 %v5041
    %v5556 = vunpack.c.l.b16 %v5042
    %v5557 = vunpack.c.l.b16 %v5043
    %v5558 = vunpack.c.h.b16 %v5043
    %v5559 = vunpack.c.l.b16 %v5044
    %v5560 = vunpack.c.h.b16 %v5044
    %v5561 = vunpack.c.l.b16 %v5045
    %v5562 = vunpack.c.l.b16 %v5046
    %v5563 = vunpack.c.h.b16 %v5046
    %v5564 = vunpack.c.l.b16 %v5047
    %v5565 = vunpack.c.h.b16 %v5047
    %v5566 = vunpack.c.l.b16 %v5048
    %v5567 = vunpack.c.l.b16 %v5049
    %v5568 = vunpack.c.h.b16 %v5049
    %v5569 = vunpack.c.l.b16 %v5050
    %v5570 = vunpack.c.h.b16 %v5050
    %v5571 = vunpack.c.l.b16 %v5051
    %v5572 = vunpack.c.l.b16 %v5052
    %v5573 = vunpack.c.h.b16 %v5052
    %v5574 = vunpack.c.l.b16 %v5053
    %v5575 = vunpack.c.h.b16 %v5053
    %v5576 = vunpack.c.l.b16 %v5054
    %v5577 = vunpack.c.l.b16 %v5055
    %v5578 = vunpack.c.h.b16 %v5055
    %v5579 = vunpack.c.l.b16 %v5056
    %v5580 = vunpack.c.h.b16 %v5056
    %v5581 = vunpack.c.l.b16 %v5057
    %v5582 = vunpack.c.l.b16 %v5058
    %v5583 = vunpack.c.h.b16 %v5058
    %v5584 = vunpack.c.l.b16 %v5059
    %v5585 = vunpack.c.h.b16 %v5059
    %v5586 = vunpack.c.l.b16 %v5060
    %v5587 = vunpack.c.l.b16 %v5061
    %v5588 = vunpack.c.h.b16 %v5061
    %v5589 = vunpack.c.l.b16 %v5062
    %v5590 = vunpack.c.h.b16 %v5062
    %v5591 = vunpack.c.l.b16 %v5063
    %v5592 = vunpack.c.l.b16 %v5064
    %v5593 = vunpack.c.h.b16 %v5064
    %v5594 = vunpack.c.l.b16 %v5065
    %v5595 = vunpack.c.h.b16 %v5065
    %v5596 = vunpack.c.l.b16 %v5066
    %v5597 = vunpack.c.l.b16 %v5067
    %v5598 = vunpack.c.h.b16 %v5067
    %v5599 = vunpack.c.l.b16 %v5068
    %v5600 = vunpack.c.h.b16 %v5068
    %v5601 = vunpack.c.l.b16 %v5069
    %v5602 = vunpack.c.l.b16 %v5070
    %v5603 = vunpack.c.h.b16 %v5070
    %v5604 = vunpack.c.l.b16 %v5071
    %v5605 = vunpack.c.h.b16 %v5071
    %v5606 = vunpack.c.l.b16 %v5072
    %v5607 = vunpack.c.l.b16 %v5073
    %v5608 = vunpack.c.h.b16 %v5073
    %v5609 = vunpack.c.l.b16 %v5074
    %v5610 = vunpack.c.h.b16 %v5074
    %v5611 = vunpack.c.l.b16 %v5075
    %v5612 = vunpack.c.l.b16 %v5076
    %v5613 = vunpack.c.h.b16 %v5076
    %v5614 = vunpack.c.l.b16 %v5077
    %v5615 = vunpack.c.h.b16 %v5077
    %v5616 = vunpack.c.l.b16 %v5078
    %v5617 = vunpack.c.l.b16 %v5079
    %v5618 = vunpack.c.h.b16 %v5079
    %v5619 = vunpack.c.l.b16 %v5080
    %v5620 = vunpack.c.h.b16 %v5080
    %v5621 = vunpack.c.l.b16 %v5081
    %v5622 = vunpack.c.l.b16 %v5082
    %v5623 = vunpack.c.h.b16 %v5082
    %v5624 = vunpack.c.l.b16 %v5083
    %v5625 = vunpack.c.h.b16 %v5083
    %v5626 = vunpack.c.l.b16 %v5084
    %v5627 = vunpack.c.l.b16 %v5085
    %v5628 = vunpack.c.h.b16 %v5085
    %v5629 = vunpack.c.l.b16 %v5086
    %v5630 = vunpack.c.h.b16 %v5086
    %v5631 = vunpack.c.l.b16 %v5087
    %v5632 = vunpack.c.l.b16 %v5088
    %v5633 = vunpack.c.h.b16 %v5088
    %v5634 = vunpack.c.l.b16 %v5089
    %v5635 = vunpack.c.h.b16 %v5089
    %v5636 = vunpack.c.l.b16 %v5090
    %v5637 = vunpack.c.l.b16 %v5091
    %v5638 = vunpack.c.h.b16 %v5091
    %v5639 = vunpack.c.l.b16 %v5092
    %v5640 = vunpack.c.h.b16 %v5092
    %v5641 = vunpack.c.l.b16 %v5093
    %v5642 = vunpack.c.l.b16 %v5094
    %v5643 = vunpack.c.h.b16 %v5094
    %v5644 = vunpack.c.l.b16 %v5095
    %v5645 = vunpack.c.h.b16 %v5095
    %v5646 = vunpack.c.l.b16 %v5096
    %v5647 = vunpack.c.l.b16 %v5097
    %v5648 = vunpack.c.h.b16 %v5097
    %v5649 = vunpack.c.l.b16 %v5098
    %v5650 = vunpack.c.h.b16 %v5098
    %v5651 = vunpack.c.l.b16 %v5099
    %v5652 = vunpack.c.l.b16 %v5100
    %v5653 = vunpack.c.h.b16 %v5100
    %v5654 = vunpack.c.l.b16 %v5101
    %v5655 = vunpack.c.h.b16 %v5101
    %v5656 = vunpack.c.l.b16 %v5102
    %v5657 = vunpack.c.l.b16 %v5103
    %v5658 = vunpack.c.h.b16 %v5103
    %v5659 = vunpack.c.l.b16 %v5104
    %v5660 = vunpack.c.h.b16 %v5104
    %v5661 = vunpack.c.l.b16 %v5105
    %v5662 = vunpack.c.l.b16 %v5106
    %v5663 = vunpack.c.h.b16 %v5106
    %v5664 = vunpack.c.l.b16 %v5107
    %v5665 = vunpack.c.h.b16 %v5107
    %v5666 = vunpack.c.l.b16 %v5108
    %v5667 = vunpack.c.l.b16 %v5109
    %v5668 = vunpack.c.h.b16 %v5109
    %v5669 = vunpack.c.l.b16 %v5110
    %v5670 = vunpack.c.h.b16 %v5110
    %v5671 = vunpack.c.l.b16 %v5111
    %v5672 = vunpack.c.l.b16 %v5112
    %v5673 = vunpack.c.h.b16 %v5112
    %v5674 = vunpack.c.l.b16 %v5113
    %v5675 = vunpack.c.h.b16 %v5113
    %v5676 = vunpack.c.l.b16 %v5114
    %v5677 = vunpack.c.l.b16 %v5115
    %v5678 = vunpack.c.h.b16 %v5115
    %v5679 = vunpack.c.l.b16 %v5116
    %v5680 = vunpack.c.h.b16 %v5116
    %v5681 = vunpack.c.l.b16 %v5117
    %v5682 = vunpack.c.l.b16 %v5118
    %v5683 = vunpack.c.h.b16 %v5118
    %v5684 = vunpack.c.l.b16 %v5119
    %v5685 = vunpack.c.h.b16 %v5119
    %v5686 = vunpack.c.l.b16 %v5120
    %v5687 = vunpack.c.l.b16 %v5121
    %v5688 = vunpack.c.h.b16 %v5121
    %v5689 = vunpack.c.l.b16 %v5122
    %v5690 = vunpack.c.h.b16 %v5122
    %v5691 = vunpack.c.l.b16 %v5123
    %v5692 = vunpack.c.l.b16 %v5124
    %v5693 = vunpack.c.h.b16 %v5124
    %v5694 = vunpack.c.l.b16 %v5125
    %v5695 = vunpack.c.h.b16 %v5125
    %v5696 = vunpack.c.l.b16 %v5126
    %v5697 = vunpack.c.l.b16 %v5127
    %v5698 = vunpack.c.h.b16 %v5127
    %v5699 = vunpack.c.l.b16 %v5128
    %v5700 = vunpack.c.h.b16 %v5128
    %v5701 = vunpack.c.l.b16 %v5129
    %v5702 = vunpack.c.l.b16 %v5130
    %v5703 = vunpack.c.h.b16 %v5130
    %v5704 = vunpack.c.l.b16 %v5131
    %v5705 = vunpack.c.h.b16 %v5131
    %v5706 = vunpack.c.l.b16 %v5132
    %v5707 = vunpack.c.l.b16 %v5133
    %v5708 = vunpack.c.h.b16 %v5133
    %v5709 = vunpack.c.l.b16 %v5134
    %v5710 = vunpack.c.h.b16 %v5134
    %v5711 = vunpack.c.l.b16 %v5135
    %v5712 = vunpack.c.l.b16 %v5136
    %v5713 = vunpack.c.h.b16 %v5136
    %v5714 = vunpack.c.l.b16 %v5137
    %v5715 = vunpack.c.h.b16 %v5137
    %v5716 = vunpack.c.l.b16 %v5138
    %v5717 = vunpack.c.l.b16 %v5139
    %v5718 = vunpack.c.h.b16 %v5139
    %v5719 = vunpack.c.l.b16 %v5140
    %v5720 = vunpack.c.h.b16 %v5140
    %v5721 = vunpack.c.l.b16 %v5141
    %v5722 = vunpack.c.l.b16 %v5142
    %v5723 = vunpack.c.h.b16 %v5142
    %v5724 = vunpack.c.l.b16 %v5143
    %v5725 = vunpack.c.h.b16 %v5143
    %v5726 = vunpack.c.l.b16 %v5144
    %v5727 = vunpack.c.l.b16 %v5145
    %v5728 = vunpack.c.h.b16 %v5145
    %v5729 = vunpack.c.l.b16 %v5146
    %v5730 = vunpack.c.h.b16 %v5146
    %v5731 = vunpack.c.l.b16 %v5147
    %v5732 = vunpack.c.l.b16 %v5148
    %v5733 = vunpack.c.h.b16 %v5148
    %v5734 = vunpack.c.l.b16 %v5149
    %v5735 = vunpack.c.h.b16 %v5149
    %v5736 = vunpack.c.l.b16 %v5150
    %v5737 = vunpack.c.l.b16 %v5151
    %v5738 = vunpack.c.h.b16 %v5151
    %v5739 = vunpack.c.l.b16 %v5152
    %v5740 = vunpack.c.h.b16 %v5152
    %v5741 = vunpack.c.l.b16 %v5153
    %v5742 = vunpack.c.l.b16 %v5154
    %v5743 = vunpack.c.h.b16 %v5154
    %v5744 = vunpack.c.l.b16 %v5155
    %v5745 = vunpack.c.h.b16 %v5155
    %v5746 = vunpack.c.l.b16 %v5156
    %v5747 = vunpack.c.l.b16 %v5157
    %v5748 = vunpack.c.h.b16 %v5157
    %v5749 = vunpack.c.l.b16 %v5158
    %v5750 = vunpack.c.h.b16 %v5158
    %v5751 = vunpack.c.l.b16 %v5159
    %v5752 = vunpack.c.l.b16 %v5160
    %v5753 = vunpack.c.h.b16 %v5160
    %v5754 = vunpack.c.l.b16 %v5161
    %v5755 = vunpack.c.h.b16 %v5161
    %v5756 = vunpack.c.l.b16 %v5162
    %v5757 = vunpack.c.l.b16 %v5163
    %v5758 = vunpack.c.h.b16 %v5163
    %v5759 = vunpack.c.l.b16 %v5164
    %v5760 = vunpack.c.h.b16 %v5164
    %v5761 = vunpack.c.l.b16 %v5165
    %v5762 = vunpack.c.l.b16 %v5166
    %v5763 = vunpack.c.h.b16 %v5166
    %v5764 = vunpack.c.l.b16 %v5167
    %v5765 = vunpack.c.h.b16 %v5167
    %v5766 = vunpack.c.l.b16 %v5168
    %v5767 = vunpack.c.l.b16 %v5169
    %v5768 = vunpack.c.h.b16 %v5169
    %v5769 = vunpack.c.l.b16 %v5170
    %v5770 = vunpack.c.h.b16 %v5170
    %v5771 = vunpack.c.l.b16 %v5171
    %v5772 = vunpack.c.l.b16 %v5172
    %v5773 = vunpack.c.h.b16 %v5172
    %v5774 = vunpack.c.l.b16 %v5173
    %v5775 = vunpack.c.h.b16 %v5173
    %v5776 = vunpack.c.l.b16 %v5174
    %v5777 = vunpack.c.l.b16 %v5175
    %v5778 = vunpack.c.h.b16 %v5175
    %v5779 = vunpack.c.l.b16 %v5176
    %v5780 = vunpack.c.h.b16 %v5176
    %v5781 = vunpack.c.l.b16 %v5177
    %v5782 = vunpack.c.l.b16 %v5178
    %v5783 = vunpack.c.h.b16 %v5178
    %v5784 = vunpack.c.l.b16 %v5179
    %v5785 = vunpack.c.h.b16 %v5179
    %v5786 = vunpack.c.l.b16 %v5180
    %v5787 = vunpack.c.l.b16 %v5181
    %v5788 = vunpack.c.h.b16 %v5181
    %v5789 = vunpack.c.l.b16 %v5182
    %v5790 = vunpack.c.h.b16 %v5182
    %v5791 = vunpack.c.l.b16 %v5183
    %v5792 = vunpack.c.l.b16 %v5184
    %v5793 = vunpack.c.h.b16 %v5184
    %v5794 = vunpack.c.l.b16 %v5185
    %v5795 = vunpack.c.h.b16 %v5185
    %v5796 = vunpack.c.l.b16 %v5186
    %v5797 = vunpack.c.l.b16 %v5187
    %v5798 = vunpack.c.h.b16 %v5187
    %v5799 = vunpack.c.l.b16 %v5188
    %v5800 = vunpack.c.h.b16 %v5188
    %v5801 = vunpack.c.l.b16 %v5189
    %v5802 = vunpack.c.l.b16 %v5190
    %v5803 = vunpack.c.h.b16 %v5190
    %v5804 = vunpack.c.l.b16 %v5191
    %v5805 = vunpack.c.h.b16 %v5191
    %v5806 = vunpack.c.l.b16 %v5192
    %v5807 = vunpack.c.l.b16 %v5193
    %v5808 = vunpack.c.h.b16 %v5193
    %v5809 = vunpack.c.l.b16 %v5194
    %v5810 = vunpack.c.h.b16 %v5194
    %v5811 = vunpack.c.l.b16 %v5195
    %v5812 = vunpack.c.l.b16 %v5196
    %v5813 = vunpack.c.h.b16 %v5196
    %v5814 = vunpack.c.l.b16 %v5197
    %v5815 = vunpack.c.h.b16 %v5197
    %v5816 = vunpack.c.l.b16 %v5198
    %v5817 = vunpack.c.l.b16 %v5199
    %v5818 = vunpack.c.h.b16 %v5199
    %v5819 = vunpack.c.l.b16 %v5200
    %v5820 = vunpack.c.h.b16 %v5200
    %v5821 = vunpack.c.l.b16 %v5201
    %v5822 = vunpack.c.l.b16 %v5202
    %v5823 = vunpack.c.h.b16 %v5202
    %v5824 = vunpack.c.l.b16 %v5203
    %v5825 = vunpack.c.h.b16 %v5203
    %v5826 = vunpack.c.l.b16 %v5204
    %v5827 = vunpack.c.l.b16 %v5205
    %v5828 = vunpack.c.h.b16 %v5205
    %v5829 = vunpack.c.l.b16 %v5206
    %v5830 = vunpack.c.h.b16 %v5206
    %v5831 = vunpack.c.l.b16 %v5207
    %v5832 = vunpack.c.l.b16 %v5208
    %v5833 = vunpack.c.h.b16 %v5208
    %v5834 = vunpack.c.l.b16 %v5209
    %v5835 = vunpack.c.h.b16 %v5209
    %v5836 = vunpack.c.l.b16 %v5210
    %v5837 = vunpack.c.l.b16 %v5211
    %v5838 = vunpack.c.h.b16 %v5211
    %v5839 = vunpack.c.l.b16 %v5212
    %v5840 = vunpack.c.h.b16 %v5212
    %v5841 = vunpack.c.l.b16 %v5213
    %v5842 = vunpack.c.l.b16 %v5214
    %v5843 = vunpack.c.h.b16 %v5214
    %v5844 = vunpack.c.l.b16 %v5215
    %v5845 = vunpack.c.h.b16 %v5215
    %v5846 = vunpack.c.l.b16 %v5216
    %v5847 = vunpack.c.l.b16 %v5217
    %v5848 = vunpack.c.h.b16 %v5217
    %v5849 = vunpack.c.l.b16 %v5218
    %v5850 = vunpack.c.h.b16 %v5218
    %v5851 = vunpack.c.l.b16 %v5219
    %v5852 = vunpack.c.l.b16 %v5220
    %v5853 = vunpack.c.h.b16 %v5220
    %v5854 = vunpack.c.l.b16 %v5221
    %v5855 = vunpack.c.h.b16 %v5221
    %v5856 = vunpack.c.l.b16 %v5222
    %v5857 = vunpack.c.l.b16 %v5223
    %v5858 = vunpack.c.h.b16 %v5223
    %v5859 = vunpack.c.l.b16 %v5224
    %v5860 = vunpack.c.h.b16 %v5224
    %v5861 = vunpack.c.l.b16 %v5225
    %v5862 = vunpack.c.l.b16 %v5226
    %v5863 = vunpack.c.h.b16 %v5226
    %v5864 = vunpack.c.l.b16 %v5227
    %v5865 = vunpack.c.h.b16 %v5227
    %v5866 = vunpack.c.l.b16 %v5228
    %v5867 = vunpack.c.l.b16 %v5229
    %v5868 = vunpack.c.h.b16 %v5229
    %v5869 = vunpack.c.l.b16 %v5230
    %v5870 = vunpack.c.h.b16 %v5230
    %v5871 = vunpack.c.l.b16 %v5231
    %v5872 = vunpack.c.l.b16 %v5232
    %v5873 = vunpack.c.h.b16 %v5232
    %v5874 = vunpack.c.l.b16 %v5233
    %v5875 = vunpack.c.h.b16 %v5233
    %v5876 = vunpack.c.l.b16 %v5234
    %v5877 = vunpack.c.l.b16 %v5235
    %v5878 = vunpack.c.h.b16 %v5235
    %v5879 = vunpack.c.l.b16 %v5236
    %v5880 = vunpack.c.h.b16 %v5236
    %v5881 = vunpack.c.l.b16 %v5237
    %v5882 = vunpack.c.l.b16 %v5238
    %v5883 = vunpack.c.h.b16 %v5238
    %v5884 = vunpack.c.l.b16 %v5239
    %v5885 = vunpack.c.h.b16 %v5239
    %v5886 = vunpack.c.l.b16 %v5240
    %v5887 = vunpack.c.l.b16 %v5241
    %v5888 = vunpack.c.h.b16 %v5241
    %v5889 = vunpack.c.l.b16 %v5242
    %v5890 = vunpack.c.h.b16 %v5242
    %v5891 = vunpack.c.l.b16 %v5243
    %v5892 = vunpack.c.l.b16 %v5244
    %v5893 = vunpack.c.h.b16 %v5244
    %v5894 = vunpack.c.l.b16 %v5245
    %v5895 = vunpack.c.h.b16 %v5245
    %v5896 = vunpack.c.l.b16 %v5246
    %v5897 = vunpack.c.l.b16 %v5247
    %v5898 = vunpack.c.h.b16 %v5247
    %v5899 = vunpack.c.l.b16 %v5248
    %v5900 = vunpack.c.h.b16 %v5248
    %v5901 = vunpack.c.l.b16 %v5249
    %v5902 = vpack.c.b16 %v5507, %v5502
    %v5903 = vpack.c.b16 %v5508, %v5503
    %v5904 = vpack.c.b16 %v5509, %v5504
    %v5905 = vpack.c.b16 %v5510, %v5505
    %v5906 = vpack.c.b16 %v5511, %v5506
    %v5907 = vpack.c.b16 %v5517, %v5512
    %v5908 = vpack.c.b16 %v5518, %v5513
    %v5909 = vpack.c.b16 %v5519, %v5514
    %v5910 = vpack.c.b16 %v5520, %v5515
    %v5911 = vpack.c.b16 %v5521, %v5516
    %v5912 = vpack.c.b16 %v5527, %v5522
    %v5913 = vpack.c.b16 %v5528, %v5523
    %v5914 = vpack.c.b16 %v5529, %v5524
    %v5915 = vpack.c.b16 %v5530, %v5525
    %v5916 = vpack.c.b16 %v5531, %v5526
    %v5917 = vpack.c.b16 %v5537, %v5532
    %v5918 = vpack.c.b16 %v5538, %v5533
    %v5919 = vpack.c.b16 %v5539, %v5534
    %v5920 = vpack.c.b16 %v5540, %v5535
    %v5921 = vpack.c.b16 %v5541, %v5536
    %v5922 = vpack.c.b16 %v5547, %v5542
    %v5923 = vpack.c.b16 %v5548, %v5543
    %v5924 = vpack.c.b16 %v5549, %v5544
    %v5925 = vpack.c.b16 %v5550, %v5545
    %v5926 = vpack.c.b16 %v5551, %v5546
    %v5927 = vpack.c.b16 %v5557, %v5552
    %v5928 = vpack.c.b16 %v5558, %v5553
    %v5929 = vpack.c.b16 %v5559, %v5554
    %v5930 = vpack.c.b16 %v5560, %v5555
    %v5931 = vpack.c.b16 %v5561, %v5556
    %v5932 = vpack.c.b16 %v5567, %v5562
    %v5933 = vpack.c.b16 %v5568, %v5563
    %v5934 = vpack.c.b16 %v5569, %v5564
    %v5935 = vpack.c.b16 %v5570, %v5565
    %v5936 = vpack.c.b16 %v5571, %v5566
    %v5937 = vpack.c.b16 %v5577, %v5572
    %v5938 = vpack.c.b16 %v5578, %v5573
    %v5939 = vpack.c.b16 %v5579, %v5574
    %v5940 = vpack.c.b16 %v5580, %v5575
    %v5941 = vpack.c.b16 %v5581, %v5576
    %v5942 = vpack.c.b16 %v5587, %v5582
    %v5943 = vpack.c.b16 %v5588, %v5583
    %v5944 = vpack.c.b16 %v5589, %v5584
    %v5945 = vpack.c.b16 %v5590, %v5585
    %v5946 = vpack.c.b16 %v5591, %v5586
    %v5947 = vpack.c.b16 %v5597, %v5592
    %v5948 = vpack.c.b16 %v5598, %v5593
    %v5949 = vpack.c.b16 %v5599, %v5594
    %v5950 = vpack.c.b16 %v5600, %v5595
    %v5951 = vpack.c.b16 %v5601, %v5596
    %v5952 = vpack.c.b16 %v5607, %v5602
    %v5953 = vpack.c.b16 %v5608, %v5603
    %v5954 = vpack.c.b16 %v5609, %v5604
    %v5955 = vpack.c.b16 %v5610, %v5605
    %v5956 = vpack.c.b16 %v5611, %v5606
    %v5957 = vpack.c.b16 %v5617, %v5612
    %v5958 = vpack.c.b16 %v5618, %v5613
    %v5959 = vpack.c.b16 %v5619, %v5614
    %v5960 = vpack.c.b16 %v5620, %v5615
    %v5961 = vpack.c.b16 %v5621, %v5616
    %v5962 = vpack.c.b16 %v5627, %v5622
    %v5963 = vpack.c.b16 %v5628, %v5623
    %v5964 = vpack.c.b16 %v5629, %v5624
    %v5965 = vpack.c.b16 %v5630, %v5625
    %v5966 = vpack.c.b16 %v5631, %v5626
    %v5967 = vpack.c.b16 %v5637, %v5632
    %v5968 = vpack.c.b16 %v5638, %v5633
    %v5969 = vpack.c.b16 %v5639, %v5634
    %v5970 = vpack.c.b16 %v5640, %v5635
    %v5971 = vpack.c.b16 %v5641, %v5636
    %v5972 = vpack.c.b16 %v5647, %v5642
    %v5973 = vpack.c.b16 %v5648, %v5643
    %v5974 = vpack.c.b16 %v5649, %v5644
    %v5975 = vpack.c.b16 %v5650, %v5645
    %v5976 = vpack.c.b16 %v5651, %v5646
    %v5977 = vpack.c.b16 %v5657, %v5652
    %v5978 = vpack.c.b16 %v5658, %v5653
    %v5979 = vpack.c.b16 %v5659, %v5654
    %v5980 = vpack.c.b16 %v5660, %v5655
    %v5981 = vpack.c.b16 %v5661, %v5656
    %v5982 = vpack.c.b16 %v5667, %v5662
    %v5983 = vpack.c.b16 %v5668, %v5663
    %v5984 = vpack.c.b16 %v5669, %v5664
    %v5985 = vpack.c.b16 %v5670, %v5665
    %v5986 = vpack.c.b16 %v5671, %v5666
    %v5987 = vpack.c.b16 %v5677, %v5672
    %v5988 = vpack.c.b16 %v5678, %v5673
    %v5989 = vpack.c.b16 %v5679, %v5674
    %v5990 = vpack.c.b16 %v5680, %v5675
    %v5991 = vpack.c.b16 %v5681, %v5676
    %v5992 = vpack.c.b16 %v5687, %v5682
    %v5993 = vpack.c.b16 %v5688, %v5683
    %v5994 = vpack.c.b16 %v5689, %v5684
    %v5995 = vpack.c.b16 %v5690, %v5685
    %v5996 = vpack.c.b16 %v5691, %v5686
    %v5997 = vpack.c.b16 %v5697, %v5692
    %v5998 = vpack.c.b16 %v5698, %v5693
    %v5999 = vpack.c.b16 %v5699, %v5694
    %v6000 = vpack.c.b16 %v5700, %v5695
    %v6001 = vpack.c.b16 %v5701, %v5696
    %v6002 = vpack.c.b16 %v5707, %v5702
    %v6003 = vpack.c.b16 %v5708, %v5703
    %v6004 = vpack.c.b16 %v5709, %v5704
    %v6005 = vpack.c.b16 %v5710, %v5705
    %v6006 = vpack.c.b16 %v5711, %v5706
    %v6007 = vpack.c.b16 %v5717, %v5712
    %v6008 = vpack.c.b16 %v5718, %v5713
    %v6009 = vpack.c.b16 %v5719, %v5714
    %v6010 = vpack.c.b16 %v5720, %v5715
    %v6011 = vpack.c.b16 %v5721, %v5716
    %v6012 = vpack.c.b16 %v5727, %v5722
    %v6013 = vpack.c.b16 %v5728, %v5723
    %v6014 = vpack.c.b16 %v5729, %v5724
    %v6015 = vpack.c.b16 %v5730, %v5725
    %v6016 = vpack.c.b16 %v5731, %v5726
    %v6017 = vpack.c.b16 %v5737, %v5732
    %v6018 = vpack.c.b16 %v5738, %v5733
    %v6019 = vpack.c.b16 %v5739, %v5734
    %v6020 = vpack.c.b16 %v5740, %v5735
    %v6021 = vpack.c.b16 %v5741, %v5736
    %v6022 = vpack.c.b16 %v5747, %v5742
    %v6023 = vpack.c.b16 %v5748, %v5743
    %v6024 = vpack.c.b16 %v5749, %v5744
    %v6025 = vpack.c.b16 %v5750, %v5745
    %v6026 = vpack.c.b16 %v5751, %v5746
    %v6027 = vpack.c.b16 %v5757, %v5752
    %v6028 = vpack.c.b16 %v5758, %v5753
    %v6029 = vpack.c.b16 %v5759, %v5754
    %v6030 = vpack.c.b16 %v5760, %v5755
    %v6031 = vpack.c.b16 %v5761, %v5756
    %v6032 = vpack.c.b16 %v5767, %v5762
    %v6033 = vpack.c.b16 %v5768, %v5763
    %v6034 = vpack.c.b16 %v5769, %v5764
    %v6035 = vpack.c.b16 %v5770, %v5765
    %v6036 = vpack.c.b16 %v5771, %v5766
    %v6037 = vpack.c.b16 %v5777, %v5772
    %v6038 = vpack.c.b16 %v5778, %v5773
    %v6039 = vpack.c.b16 %v5779, %v5774
    %v6040 = vpack.c.b16 %v5780, %v5775
    %v6041 = vpack.c.b16 %v5781, %v5776
    %v6042 = vpack.c.b16 %v5787, %v5782
    %v6043 = vpack.c.b16 %v5788, %v5783
    %v6044 = vpack.c.b16 %v5789, %v5784
    %v6045 = vpack.c.b16 %v5790, %v5785
    %v6046 = vpack.c.b16 %v5791, %v5786
    %v6047 = vpack.c.b16 %v5797, %v5792
    %v6048 = vpack.c.b16 %v5798, %v5793
    %v6049 = vpack.c.b16 %v5799, %v5794
    %v6050 = vpack.c.b16 %v5800, %v5795
    %v6051 = vpack.c.b16 %v5801, %v5796
    %v6052 = vpack.c.b16 %v5807, %v5802
    %v6053 = vpack.c.b16 %v5808, %v5803
    %v6054 = vpack.c.b16 %v5809, %v5804
    %v6055 = vpack.c.b16 %v5810, %v5805
    %v6056 = vpack.c.b16 %v5811, %v5806
    %v6057 = vpack.c.b16 %v5817, %v5812
    %v6058 = vpack.c.b16 %v5818, %v5813
    %v6059 = vpack.c.b16 %v5819, %v5814
    %v6060 = vpack.c.b16 %v5820, %v5815
    %v6061 = vpack.c.b16 %v5821, %v5816
    %v6062 = vpack.c.b16 %v5827, %v5822
    %v6063 = vpack.c.b16 %v5828, %v5823
    %v6064 = vpack.c.b16 %v5829, %v5824
    %v6065 = vpack.c.b16 %v5830, %v5825
    %v6066 = vpack.c.b16 %v5831, %v5826
    %v6067 = vpack.c.b16 %v5837, %v5832
    %v6068 = vpack.c.b16 %v5838, %v5833
    %v6069 = vpack.c.b16 %v5839, %v5834
    %v6070 = vpack.c.b16 %v5840, %v5835
    %v6071 = vpack.c.b16 %v5841, %v5836
    %v6072 = vpack.c.b16 %v5847, %v5842
    %v6073 = vpack.c.b16 %v5848, %v5843
    %v6074 = vpack.c.b16 %v5849, %v5844
    %v6075 = vpack.c.b16 %v5850, %v5845
    %v6076 = vpack.c.b16 %v5851, %v5846
    %v6077 = vpack.c.b16 %v5857, %v5852
    %v6078 = vpack.c.b16 %v5858, %v5853
    %v6079 = vpack.c.b16 %v5859, %v5854
    %v6080 = vpack.c.b16 %v5860, %v5855
    %v6081 = vpack.c.b16 %v5861, %v5856
    %v6082 = vpack.c.b16 %v5867, %v5862
    %v6083 = vpack.c.b16 %v5868, %v5863
    %v6084 = vpack.c.b16 %v5869, %v5864
    %v6085 = vpack.c.b16 %v5870, %v5865
    %v6086 = vpack.c.b16 %v5871, %v5866
    %v6087 = vpack.c.b16 %v5877, %v5872
    %v6088 = vpack.c.b16 %v5878, %v5873
    %v6089 = vpack.c.b16 %v5879, %v5874
    %v6090 = vpack.c.b16 %v5880, %v5875
    %v6091 = vpack.c.b16 %v5881, %v5876
    %v6092 = vpack.c.b16 %v5887, %v5882
    %v6093 = vpack.c.b16 %v5888, %v5883
    %v6094 = vpack.c.b16 %v5889, %v5884
    %v6095 = vpack.c.b16 %v5890, %v5885
    %v6096 = vpack.c.b16 %v5891, %v5886
    %v6097 = vpack.c.b16 %v5897, %v5892
    %v6098 = vpack.c.b16 %v5898, %v5893
    %v6099 = vpack.c.b16 %v5899, %v5894
    %v6100 = vpack.c.b16 %v5900, %v5895
    %v6101 = vpack.c.b16 %v5901, %v5896
    %6302 = vmatpush.bf16.msra.mxu0 %v5937
    %6303 = vmatpush.bf16.msra.mxu0 %v5932
    %6304 = vmatpush.bf16.msra.mxu0 %v5927
    %6305 = vmatpush.bf16.msra.mxu0 %v5922
    %6306 = vmatpush.bf16.msra.mxu0 %v5917
    %6307 = vmatpush.bf16.msra.mxu0 %v5912
    %6308 = vmatpush.bf16.msra.mxu0 %v5907
    %6309 = vmatpush.bf16.msra.mxu0 %v5902
    %6310 = vmatmul.bf16.gmra.mxu0 %v5005
    %v6311 = vpop.f32.mrf.mxu0
    %v6312 = vadd.f32 %v5252, %v6311
    %v6313 = vpop.f32.mrf.mxu0
    %v6314 = vadd.f32 %v5252, %v6313
    %6315 = vdwg.mxu0
    %6316 = vmatpush.bf16.msra.mxu0 %v5977
    %6317 = vmatpush.bf16.msra.mxu0 %v5972
    %6318 = vmatpush.bf16.msra.mxu0 %v5967
    %6319 = vmatpush.bf16.msra.mxu0 %v5962
    %6320 = vmatpush.bf16.msra.mxu0 %v5957
    %6321 = vmatpush.bf16.msra.mxu0 %v5952
    %6322 = vmatpush.bf16.msra.mxu0 %v5947
    %6323 = vmatpush.bf16.msra.mxu0 %v5942
    %6324 = vmatmul.bf16.gmra.mxu0 %v5006
    %v6325 = vpop.f32.mrf.mxu0
    %v6326 = vadd.f32 %v6312, %v6325
    %v6327 = vpop.f32.mrf.mxu0
    %v6328 = vadd.f32 %v6314, %v6327
    %6329 = vdwg.mxu0
    %6330 = vmatpush.bf16.msra.mxu0 %v6017
    %6331 = vmatpush.bf16.msra.mxu0 %v6012
    %6332 = vmatpush.bf16.msra.mxu0 %v6007
    %6333 = vmatpush.bf16.msra.mxu0 %v6002
    %6334 = vmatpush.bf16.msra.mxu0 %v5997
    %6335 = vmatpush.bf16.msra.mxu0 %v5992
    %6336 = vmatpush.bf16.msra.mxu0 %v5987
    %6337 = vmatpush.bf16.msra.mxu0 %v5982
    %6338 = vmatmul.bf16.gmra.mxu0 %v5007
    %v6339 = vpop.f32.mrf.mxu0
    %v6340 = vadd.f32 %v6326, %v6339
    %v6341 = vpop.f32.mrf.mxu0
    %v6342 = vadd.f32 %v6328, %v6341
    %6343 = vdwg.mxu0
    %6344 = vmatpush.bf16.msra.mxu0 %v6057
    %6345 = vmatpush.bf16.msra.mxu0 %v6052
    %6346 = vmatpush.bf16.msra.mxu0 %v6047
    %6347 = vmatpush.bf16.msra.mxu0 %v6042
    %6348 = vmatpush.bf16.msra.mxu0 %v6037
    %6349 = vmatpush.bf16.msra.mxu0 %v6032
    %6350 = vmatpush.bf16.msra.mxu0 %v6027
    %6351 = vmatpush.bf16.msra.mxu0 %v6022
    %6352 = vmatmul.bf16.gmra.mxu0 %v5008
    %v6353 = vpop.f32.mrf.mxu0
    %v6354 = vadd.f32 %v6340, %v6353
    %v6355 = vpop.f32.mrf.mxu0
    %v6356 = vadd.f32 %v6342, %v6355
    %6357 = vdwg.mxu0
    %6358 = vmatpush.bf16.msra.mxu0 %v6097
    %6359 = vmatpush.bf16.msra.mxu0 %v6092
    %6360 = vmatpush.bf16.msra.mxu0 %v6087
    %6361 = vmatpush.bf16.msra.mxu0 %v6082
    %6362 = vmatpush.bf16.msra.mxu0 %v6077
    %6363 = vmatpush.bf16.msra.mxu0 %v6072
    %6364 = vmatpush.bf16.msra.mxu0 %v6067
    %6365 = vmatpush.bf16.msra.mxu0 %v6062
    %6366 = vmatmul.bf16.gmra.mxu0 %v5009
    %v6367 = vpop.f32.mrf.mxu0
    %v6368 = vadd.f32 %v6354, %v6367
    %v6369 = vpop.f32.mrf.mxu0
    %v6370 = vadd.f32 %v6356, %v6369
    %6371 = vdwg.mxu0
    %6372 = vmatpush.bf16.msra.mxu0 %v5938
    %6373 = vmatpush.bf16.msra.mxu0 %v5933
    %6374 = vmatpush.bf16.msra.mxu0 %v5928
    %6375 = vmatpush.bf16.msra.mxu0 %v5923
    %6376 = vmatpush.bf16.msra.mxu0 %v5918
    %6377 = vmatpush.bf16.msra.mxu0 %v5913
    %6378 = vmatpush.bf16.msra.mxu0 %v5908
    %6379 = vmatpush.bf16.msra.mxu0 %v5903
    %6380 = vmatmul.bf16.gmra.mxu0 %v5005
    %v6381 = vpop.f32.mrf.mxu0
    %v6382 = vadd.f32 %v5253, %v6381
    %v6383 = vpop.f32.mrf.mxu0
    %v6384 = vadd.f32 %v5253, %v6383
    %6385 = vdwg.mxu0
    %6386 = vmatpush.bf16.msra.mxu0 %v5978
    %6387 = vmatpush.bf16.msra.mxu0 %v5973
    %6388 = vmatpush.bf16.msra.mxu0 %v5968
    %6389 = vmatpush.bf16.msra.mxu0 %v5963
    %6390 = vmatpush.bf16.msra.mxu0 %v5958
    %6391 = vmatpush.bf16.msra.mxu0 %v5953
    %6392 = vmatpush.bf16.msra.mxu0 %v5948
    %6393 = vmatpush.bf16.msra.mxu0 %v5943
    %6394 = vmatmul.bf16.gmra.mxu0 %v5006
    %v6395 = vpop.f32.mrf.mxu0
    %v6396 = vadd.f32 %v6382, %v6395
    %v6397 = vpop.f32.mrf.mxu0
    %v6398 = vadd.f32 %v6384, %v6397
    %6399 = vdwg.mxu0
    %6400 = vmatpush.bf16.msra.mxu0 %v6018
    %6401 = vmatpush.bf16.msra.mxu0 %v6013
    %6402 = vmatpush.bf16.msra.mxu0 %v6008
    %6403 = vmatpush.bf16.msra.mxu0 %v6003
    %6404 = vmatpush.bf16.msra.mxu0 %v5998
    %6405 = vmatpush.bf16.msra.mxu0 %v5993
    %6406 = vmatpush.bf16.msra.mxu0 %v5988
    %6407 = vmatpush.bf16.msra.mxu0 %v5983
    %6408 = vmatmul.bf16.gmra.mxu0 %v5007
    %v6409 = vpop.f32.mrf.mxu0
    %v6410 = vadd.f32 %v6396, %v6409
    %v6411 = vpop.f32.mrf.mxu0
    %v6412 = vadd.f32 %v6398, %v6411
    %6413 = vdwg.mxu0
    %6414 = vmatpush.bf16.msra.mxu0 %v6058
    %6415 = vmatpush.bf16.msra.mxu0 %v6053
    %6416 = vmatpush.bf16.msra.mxu0 %v6048
    %6417 = vmatpush.bf16.msra.mxu0 %v6043
    %6418 = vmatpush.bf16.msra.mxu0 %v6038
    %6419 = vmatpush.bf16.msra.mxu0 %v6033
    %6420 = vmatpush.bf16.msra.mxu0 %v6028
    %6421 = vmatpush.bf16.msra.mxu0 %v6023
    %6422 = vmatmul.bf16.gmra.mxu0 %v5008
    %v6423 = vpop.f32.mrf.mxu0
    %v6424 = vadd.f32 %v6410, %v6423
    %v6425 = vpop.f32.mrf.mxu0
    %v6426 = vadd.f32 %v6412, %v6425
    %6427 = vdwg.mxu0
    %6428 = vmatpush.bf16.msra.mxu0 %v6098
    %6429 = vmatpush.bf16.msra.mxu0 %v6093
    %6430 = vmatpush.bf16.msra.mxu0 %v6088
    %6431 = vmatpush.bf16.msra.mxu0 %v6083
    %6432 = vmatpush.bf16.msra.mxu0 %v6078
    %6433 = vmatpush.bf16.msra.mxu0 %v6073
    %6434 = vmatpush.bf16.msra.mxu0 %v6068
    %6435 = vmatpush.bf16.msra.mxu0 %v6063
    %6436 = vmatmul.bf16.gmra.mxu0 %v5009
    %v6437 = vpop.f32.mrf.mxu0
    %v6438 = vadd.f32 %v6424, %v6437
    %v6439 = vpop.f32.mrf.mxu0
    %v6440 = vadd.f32 %v6426, %v6439
    %6441 = vdwg.mxu0
    %6442 = vmatpush.bf16.msra.mxu0 %v5939
    %6443 = vmatpush.bf16.msra.mxu0 %v5934
    %6444 = vmatpush.bf16.msra.mxu0 %v5929
    %6445 = vmatpush.bf16.msra.mxu0 %v5924
    %6446 = vmatpush.bf16.msra.mxu0 %v5919
    %6447 = vmatpush.bf16.msra.mxu0 %v5914
    %6448 = vmatpush.bf16.msra.mxu0 %v5909
    %6449 = vmatpush.bf16.msra.mxu0 %v5904
    %6450 = vmatmul.bf16.gmra.mxu0 %v5005
    %v6451 = vpop.f32.mrf.mxu0
    %v6452 = vadd.f32 %v5254, %v6451
    %v6453 = vpop.f32.mrf.mxu0
    %v6454 = vadd.f32 %v5254, %v6453
    %6455 = vdwg.mxu0
    %6456 = vmatpush.bf16.msra.mxu0 %v5979
    %6457 = vmatpush.bf16.msra.mxu0 %v5974
    %6458 = vmatpush.bf16.msra.mxu0 %v5969
    %6459 = vmatpush.bf16.msra.mxu0 %v5964
    %6460 = vmatpush.bf16.msra.mxu0 %v5959
    %6461 = vmatpush.bf16.msra.mxu0 %v5954
    %6462 = vmatpush.bf16.msra.mxu0 %v5949
    %6463 = vmatpush.bf16.msra.mxu0 %v5944
    %6464 = vmatmul.bf16.gmra.mxu0 %v5006
    %v6465 = vpop.f32.mrf.mxu0
    %v6466 = vadd.f32 %v6452, %v6465
    %v6467 = vpop.f32.mrf.mxu0
    %v6468 = vadd.f32 %v6454, %v6467
    %6469 = vdwg.mxu0
    %6470 = vmatpush.bf16.msra.mxu0 %v6019
    %6471 = vmatpush.bf16.msra.mxu0 %v6014
    %6472 = vmatpush.bf16.msra.mxu0 %v6009
    %6473 = vmatpush.bf16.msra.mxu0 %v6004
    %6474 = vmatpush.bf16.msra.mxu0 %v5999
    %6475 = vmatpush.bf16.msra.mxu0 %v5994
    %6476 = vmatpush.bf16.msra.mxu0 %v5989
    %6477 = vmatpush.bf16.msra.mxu0 %v5984
    %6478 = vmatmul.bf16.gmra.mxu0 %v5007
    %v6479 = vpop.f32.mrf.mxu0
    %v6480 = vadd.f32 %v6466, %v6479
    %v6481 = vpop.f32.mrf.mxu0
    %v6482 = vadd.f32 %v6468, %v6481
    %6483 = vdwg.mxu0
    %6484 = vmatpush.bf16.msra.mxu0 %v6059
    %6485 = vmatpush.bf16.msra.mxu0 %v6054
    %6486 = vmatpush.bf16.msra.mxu0 %v6049
    %6487 = vmatpush.bf16.msra.mxu0 %v6044
    %6488 = vmatpush.bf16.msra.mxu0 %v6039
    %6489 = vmatpush.bf16.msra.mxu0 %v6034
    %6490 = vmatpush.bf16.msra.mxu0 %v6029
    %6491 = vmatpush.bf16.msra.mxu0 %v6024
    %6492 = vmatmul.bf16.gmra.mxu0 %v5008
    %v6493 = vpop.f32.mrf.mxu0
    %v6494 = vadd.f32 %v6480, %v6493
    %v6495 = vpop.f32.mrf.mxu0
    %v6496 = vadd.f32 %v6482, %v6495
    %6497 = vdwg.mxu0
    %6498 = vmatpush.bf16.msra.mxu0 %v6099
    %6499 = vmatpush.bf16.msra.mxu0 %v6094
    %6500 = vmatpush.bf16.msra.mxu0 %v6089
    %6501 = vmatpush.bf16.msra.mxu0 %v6084
    %6502 = vmatpush.bf16.msra.mxu0 %v6079
    %6503 = vmatpush.bf16.msra.mxu0 %v6074
    %6504 = vmatpush.bf16.msra.mxu0 %v6069
    %6505 = vmatpush.bf16.msra.mxu0 %v6064
    %6506 = vmatmul.bf16.gmra.mxu0 %v5009
    %v6507 = vpop.f32.mrf.mxu0
    %v6508 = vadd.f32 %v6494, %v6507
    %v6509 = vpop.f32.mrf.mxu0
    %v6510 = vadd.f32 %v6496, %v6509
    %6511 = vdwg.mxu0
    %6512 = vmatpush.bf16.msra.mxu0 %v5940
    %6513 = vmatpush.bf16.msra.mxu0 %v5935
    %6514 = vmatpush.bf16.msra.mxu0 %v5930
    %6515 = vmatpush.bf16.msra.mxu0 %v5925
    %6516 = vmatpush.bf16.msra.mxu0 %v5920
    %6517 = vmatpush.bf16.msra.mxu0 %v5915
    %6518 = vmatpush.bf16.msra.mxu0 %v5910
    %6519 = vmatpush.bf16.msra.mxu0 %v5905
    %6520 = vmatmul.bf16.gmra.mxu0 %v5005
    %v6521 = vpop.f32.mrf.mxu0
    %v6522 = vadd.f32 %v5255, %v6521
    %v6523 = vpop.f32.mrf.mxu0
    %v6524 = vadd.f32 %v5255, %v6523
    %6525 = vdwg.mxu0
    %6526 = vmatpush.bf16.msra.mxu0 %v5980
    %6527 = vmatpush.bf16.msra.mxu0 %v5975
    %6528 = vmatpush.bf16.msra.mxu0 %v5970
    %6529 = vmatpush.bf16.msra.mxu0 %v5965
    %6530 = vmatpush.bf16.msra.mxu0 %v5960
    %6531 = vmatpush.bf16.msra.mxu0 %v5955
    %6532 = vmatpush.bf16.msra.mxu0 %v5950
    %6533 = vmatpush.bf16.msra.mxu0 %v5945
    %6534 = vmatmul.bf16.gmra.mxu0 %v5006
    %v6535 = vpop.f32.mrf.mxu0
    %v6536 = vadd.f32 %v6522, %v6535
    %v6537 = vpop.f32.mrf.mxu0
    %v6538 = vadd.f32 %v6524, %v6537
    %6539 = vdwg.mxu0
    %6540 = vmatpush.bf16.msra.mxu0 %v6020
    %6541 = vmatpush.bf16.msra.mxu0 %v6015
    %6542 = vmatpush.bf16.msra.mxu0 %v6010
    %6543 = vmatpush.bf16.msra.mxu0 %v6005
    %6544 = vmatpush.bf16.msra.mxu0 %v6000
    %6545 = vmatpush.bf16.msra.mxu0 %v5995
    %6546 = vmatpush.bf16.msra.mxu0 %v5990
    %6547 = vmatpush.bf16.msra.mxu0 %v5985
    %6548 = vmatmul.bf16.gmra.mxu0 %v5007
    %v6549 = vpop.f32.mrf.mxu0
    %v6550 = vadd.f32 %v6536, %v6549
    %v6551 = vpop.f32.mrf.mxu0
    %v6552 = vadd.f32 %v6538, %v6551
    %6553 = vdwg.mxu0
    %6554 = vmatpush.bf16.msra.mxu0 %v6060
    %6555 = vmatpush.bf16.msra.mxu0 %v6055
    %6556 = vmatpush.bf16.msra.mxu0 %v6050
    %6557 = vmatpush.bf16.msra.mxu0 %v6045
    %6558 = vmatpush.bf16.msra.mxu0 %v6040
    %6559 = vmatpush.bf16.msra.mxu0 %v6035
    %6560 = vmatpush.bf16.msra.mxu0 %v6030
    %6561 = vmatpush.bf16.msra.mxu0 %v6025
    %6562 = vmatmul.bf16.gmra.mxu0 %v5008
    %v6563 = vpop.f32.mrf.mxu0
    %v6564 = vadd.f32 %v6550, %v6563
    %v6565 = vpop.f32.mrf.mxu0
    %v6566 = vadd.f32 %v6552, %v6565
    %6567 = vdwg.mxu0
    %6568 = vmatpush.bf16.msra.mxu0 %v6100
    %6569 = vmatpush.bf16.msra.mxu0 %v6095
    %6570 = vmatpush.bf16.msra.mxu0 %v6090
    %6571 = vmatpush.bf16.msra.mxu0 %v6085
    %6572 = vmatpush.bf16.msra.mxu0 %v6080
    %6573 = vmatpush.bf16.msra.mxu0 %v6075
    %6574 = vmatpush.bf16.msra.mxu0 %v6070
    %6575 = vmatpush.bf16.msra.mxu0 %v6065
    %6576 = vmatmul.bf16.gmra.mxu0 %v5009
    %v6577 = vpop.f32.mrf.mxu0
    %v6578 = vadd.f32 %v6564, %v6577
    %v6579 = vpop.f32.mrf.mxu0
    %v6580 = vadd.f32 %v6566, %v6579
    %6581 = vdwg.mxu0
    %6582 = vmatpush.bf16.msra.mxu0 %v5941
    %6583 = vmatpush.bf16.msra.mxu0 %v5936
    %6584 = vmatpush.bf16.msra.mxu0 %v5931
    %6585 = vmatpush.bf16.msra.mxu0 %v5926
    %6586 = vmatpush.bf16.msra.mxu0 %v5921
    %6587 = vmatpush.bf16.msra.mxu0 %v5916
    %6588 = vmatpush.bf16.msra.mxu0 %v5911
    %6589 = vmatpush.bf16.msra.mxu0 %v5906
    %6590 = vmatmul.bf16.gmra.mxu0 %v5005
    %v6591 = vpop.f32.mrf.mxu0
    %v6592 = vadd.f32 %v5256, %v6591
    %v6593 = vpop.f32.mrf.mxu0
    %v6594 = vadd.f32 %v5256, %v6593
    %6595 = vdwg.mxu0
    %6596 = vmatpush.bf16.msra.mxu0 %v5981
    %6597 = vmatpush.bf16.msra.mxu0 %v5976
    %6598 = vmatpush.bf16.msra.mxu0 %v5971
    %6599 = vmatpush.bf16.msra.mxu0 %v5966
    %6600 = vmatpush.bf16.msra.mxu0 %v5961
    %6601 = vmatpush.bf16.msra.mxu0 %v5956
    %6602 = vmatpush.bf16.msra.mxu0 %v5951
    %6603 = vmatpush.bf16.msra.mxu0 %v5946
    %6604 = vmatmul.bf16.gmra.mxu0 %v5006
    %v6605 = vpop.f32.mrf.mxu0
    %v6606 = vadd.f32 %v6592, %v6605
    %v6607 = vpop.f32.mrf.mxu0
    %v6608 = vadd.f32 %v6594, %v6607
    %6609 = vdwg.mxu0
    %6610 = vmatpush.bf16.msra.mxu0 %v6021
    %6611 = vmatpush.bf16.msra.mxu0 %v6016
    %6612 = vmatpush.bf16.msra.mxu0 %v6011
    %6613 = vmatpush.bf16.msra.mxu0 %v6006
    %6614 = vmatpush.bf16.msra.mxu0 %v6001
    %6615 = vmatpush.bf16.msra.mxu0 %v5996
    %6616 = vmatpush.bf16.msra.mxu0 %v5991
    %6617 = vmatpush.bf16.msra.mxu0 %v5986
    %6618 = vmatmul.bf16.gmra.mxu0 %v5007
    %v6619 = vpop.f32.mrf.mxu0
    %v6620 = vadd.f32 %v6606, %v6619
    %v6621 = vpop.f32.mrf.mxu0
    %v6622 = vadd.f32 %v6608, %v6621
    %6623 = vdwg.mxu0
    %6624 = vmatpush.bf16.msra.mxu0 %v6061
    %6625 = vmatpush.bf16.msra.mxu0 %v6056
    %6626 = vmatpush.bf16.msra.mxu0 %v6051
    %6627 = vmatpush.bf16.msra.mxu0 %v6046
    %6628 = vmatpush.bf16.msra.mxu0 %v6041
    %6629 = vmatpush.bf16.msra.mxu0 %v6036
    %6630 = vmatpush.bf16.msra.mxu0 %v6031
    %6631 = vmatpush.bf16.msra.mxu0 %v6026
    %6632 = vmatmul.bf16.gmra.mxu0 %v5008
    %v6633 = vpop.f32.mrf.mxu0
    %v6634 = vadd.f32 %v6620, %v6633
    %v6635 = vpop.f32.mrf.mxu0
    %v6636 = vadd.f32 %v6622, %v6635
    %6637 = vdwg.mxu0
    %6638 = vmatpush.bf16.msra.mxu0 %v6101
    %6639 = vmatpush.bf16.msra.mxu0 %v6096
    %6640 = vmatpush.bf16.msra.mxu0 %v6091
    %6641 = vmatpush.bf16.msra.mxu0 %v6086
    %6642 = vmatpush.bf16.msra.mxu0 %v6081
    %6643 = vmatpush.bf16.msra.mxu0 %v6076
    %6644 = vmatpush.bf16.msra.mxu0 %v6071
    %6645 = vmatpush.bf16.msra.mxu0 %v6066
    %6646 = vmatmul.bf16.gmra.mxu0 %v5009
    %v6647 = vpop.f32.mrf.mxu0
    %v6648 = vadd.f32 %v6634, %v6647
    %v6649 = vpop.f32.mrf.mxu0
    %v6650 = vadd.f32 %v6636, %v6649
    %6651 = vdwg.mxu0
    %v6652 = vmax.f32 %v6368, 0.0
    %v6653 = vmax.f32 %v6438, 0.0
    %v6654 = vmax.f32 %v6508, 0.0
    %v6655 = vmax.f32 %v6578, 0.0
    %v6656 = vmax.f32 %v6648, 0.0
    %v6657 = vmax.f32 %v6370, 0.0
    %v6658 = vmax.f32 %v6440, 0.0
    %v6659 = vmax.f32 %v6510, 0.0
    %v6660 = vmax.f32 %v6580, 0.0
    %v6661 = vmax.f32 %v6650, 0.0
    %v6662 = vpack.c.bf16 %v6657, %v6652
    %v6663 = vpack.c.bf16 %v6658, %v6653
    %v6664 = vpack.c.bf16 %v6659, %v6654
    %v6665 = vpack.c.bf16 %v6660, %v6655
    %v6666 = vpack.c.bf16 %v6661, %v6656
    %v6667 = vld [vmem:[#allocation5 + $0x1680] sm:$0xff]
    %v6668 = vld [vmem:[#allocation5 + $0x1688] sm:$0xff]
    %v6669 = vld [vmem:[#allocation5 + $0x1690] sm:$0xf]
    %v6670 = vld [vmem:[#allocation5 + $0x1694] sm:$0xff]
    %v6671 = vld [vmem:[#allocation5 + $0x169c] sm:$0xff]
    %v6672 = vld [vmem:[#allocation5 + $0x16a4] sm:$0xf]
    %v6673 = vld [vmem:[#allocation5 + $0x16a8] sm:$0xff]
    %v6674 = vld [vmem:[#allocation5 + $0x16b0] sm:$0xff]
    %v6675 = vld [vmem:[#allocation5 + $0x16b8] sm:$0xf]
    %v6676 = vld [vmem:[#allocation5 + $0x16bc] sm:$0xff]
    %v6677 = vld [vmem:[#allocation5 + $0x16c4] sm:$0xff]
    %v6678 = vld [vmem:[#allocation5 + $0x16cc] sm:$0xf]
    %v6679 = vld [vmem:[#allocation5 + $0x16d0] sm:$0xff]
    %v6680 = vld [vmem:[#allocation5 + $0x16d8] sm:$0xff]
    %v6681 = vld [vmem:[#allocation5 + $0x16e0] sm:$0xf]
    %v6682 = vld [vmem:[#allocation5 + $0x16e4] sm:$0xff]
    %v6683 = vld [vmem:[#allocation5 + $0x16ec] sm:$0xff]
    %v6684 = vld [vmem:[#allocation5 + $0x16f4] sm:$0xf]
    %v6685 = vld [vmem:[#allocation5 + $0x16f8] sm:$0xff]
    %v6686 = vld [vmem:[#allocation5 + $0x1700] sm:$0xff]
    %v6687 = vld [vmem:[#allocation5 + $0x1708] sm:$0xf]
    %v6688 = vld [vmem:[#allocation5 + $0x170c] sm:$0xff]
    %v6689 = vld [vmem:[#allocation5 + $0x1714] sm:$0xff]
    %v6690 = vld [vmem:[#allocation5 + $0x171c] sm:$0xf]
    %v6691 = vld [vmem:[#allocation5 + $0x1720] sm:$0xff]
    %v6692 = vld [vmem:[#allocation5 + $0x1728] sm:$0xff]
    %v6693 = vld [vmem:[#allocation5 + $0x1730] sm:$0xf]
    %v6694 = vld [vmem:[#allocation5 + $0x1734] sm:$0xff]
    %v6695 = vld [vmem:[#allocation5 + $0x173c] sm:$0xff]
    %v6696 = vld [vmem:[#allocation5 + $0x1744] sm:$0xf]
    %v6697 = vld [vmem:[#allocation5 + $0x1748] sm:$0xff]
    %v6698 = vld [vmem:[#allocation5 + $0x1750] sm:$0xff]
    %v6699 = vld [vmem:[#allocation5 + $0x1758] sm:$0xf]
    %v6700 = vld [vmem:[#allocation5 + $0x175c] sm:$0xff]
    %v6701 = vld [vmem:[#allocation5 + $0x1764] sm:$0xff]
    %v6702 = vld [vmem:[#allocation5 + $0x176c] sm:$0xf]
    %v6703 = vld [vmem:[#allocation5 + $0x1770] sm:$0xff]
    %v6704 = vld [vmem:[#allocation5 + $0x1778] sm:$0xff]
    %v6705 = vld [vmem:[#allocation5 + $0x1780] sm:$0xf]
    %v6706 = vld [vmem:[#allocation5 + $0x1784] sm:$0xff]
    %v6707 = vld [vmem:[#allocation5 + $0x178c] sm:$0xff]
    %v6708 = vld [vmem:[#allocation5 + $0x1794] sm:$0xf]
    %v6709 = vld [vmem:[#allocation5 + $0x1798] sm:$0xff]
    %v6710 = vld [vmem:[#allocation5 + $0x17a0] sm:$0xff]
    %v6711 = vld [vmem:[#allocation5 + $0x17a8] sm:$0xf]
    %v6712 = vld [vmem:[#allocation5 + $0x17ac] sm:$0xff]
    %v6713 = vld [vmem:[#allocation5 + $0x17b4] sm:$0xff]
    %v6714 = vld [vmem:[#allocation5 + $0x17bc] sm:$0xf]
    %v6715 = vld [vmem:[#allocation5 + $0x17c0] sm:$0xff]
    %v6716 = vld [vmem:[#allocation5 + $0x17c8] sm:$0xff]
    %v6717 = vld [vmem:[#allocation5 + $0x17d0] sm:$0xf]
    %v6718 = vld [vmem:[#allocation5 + $0x17d4] sm:$0xff]
    %v6719 = vld [vmem:[#allocation5 + $0x17dc] sm:$0xff]
    %v6720 = vld [vmem:[#allocation5 + $0x17e4] sm:$0xf]
    %v6721 = vld [vmem:[#allocation5 + $0x17e8] sm:$0xff]
    %v6722 = vld [vmem:[#allocation5 + $0x17f0] sm:$0xff]
    %v6723 = vld [vmem:[#allocation5 + $0x17f8] sm:$0xf]
    %v6724 = vld [vmem:[#allocation5 + $0x17fc] sm:$0xff]
    %v6725 = vld [vmem:[#allocation5 + $0x1804] sm:$0xff]
    %v6726 = vld [vmem:[#allocation5 + $0x180c] sm:$0xf]
    %v6727 = vld [vmem:[#allocation5 + $0x1810] sm:$0xff]
    %v6728 = vld [vmem:[#allocation5 + $0x1818] sm:$0xff]
    %v6729 = vld [vmem:[#allocation5 + $0x1820] sm:$0xf]
    %v6730 = vld [vmem:[#allocation5 + $0x1824] sm:$0xff]
    %v6731 = vld [vmem:[#allocation5 + $0x182c] sm:$0xff]
    %v6732 = vld [vmem:[#allocation5 + $0x1834] sm:$0xf]
    %v6733 = vld [vmem:[#allocation5 + $0x1838] sm:$0xff]
    %v6734 = vld [vmem:[#allocation5 + $0x1840] sm:$0xff]
    %v6735 = vld [vmem:[#allocation5 + $0x1848] sm:$0xf]
    %v6736 = vld [vmem:[#allocation5 + $0x184c] sm:$0xff]
    %v6737 = vld [vmem:[#allocation5 + $0x1854] sm:$0xff]
    %v6738 = vld [vmem:[#allocation5 + $0x185c] sm:$0xf]
    %v6739 = vld [vmem:[#allocation5 + $0x1860] sm:$0xff]
    %v6740 = vld [vmem:[#allocation5 + $0x1868] sm:$0xff]
    %v6741 = vld [vmem:[#allocation5 + $0x1870] sm:$0xf]
    %v6742 = vld [vmem:[#allocation5 + $0x1874] sm:$0xff]
    %v6743 = vld [vmem:[#allocation5 + $0x187c] sm:$0xff]
    %v6744 = vld [vmem:[#allocation5 + $0x1884] sm:$0xf]
    %v6745 = vld [vmem:[#allocation5 + $0x1888] sm:$0xff]
    %v6746 = vld [vmem:[#allocation5 + $0x1890] sm:$0xff]
    %v6747 = vld [vmem:[#allocation5 + $0x1898] sm:$0xf]
    %v6748 = vld [vmem:[#allocation5 + $0x189c] sm:$0xff]
    %v6749 = vld [vmem:[#allocation5 + $0x18a4] sm:$0xff]
    %v6750 = vld [vmem:[#allocation5 + $0x18ac] sm:$0xf]
    %v6751 = vld [vmem:[#allocation5 + $0x18b0] sm:$0xff]
    %v6752 = vld [vmem:[#allocation5 + $0x18b8] sm:$0xff]
    %v6753 = vld [vmem:[#allocation5 + $0x18c0] sm:$0xf]
    %v6754 = vld [vmem:[#allocation5 + $0x18c4] sm:$0xff]
    %v6755 = vld [vmem:[#allocation5 + $0x18cc] sm:$0xff]
    %v6756 = vld [vmem:[#allocation5 + $0x18d4] sm:$0xf]
    %v6757 = vld [vmem:[#allocation5 + $0x18d8] sm:$0xff]
    %v6758 = vld [vmem:[#allocation5 + $0x18e0] sm:$0xff]
    %v6759 = vld [vmem:[#allocation5 + $0x18e8] sm:$0xf]
    %v6760 = vld [vmem:[#allocation5 + $0x18ec] sm:$0xff]
    %v6761 = vld [vmem:[#allocation5 + $0x18f4] sm:$0xff]
    %v6762 = vld [vmem:[#allocation5 + $0x18fc] sm:$0xf]
    %v6763 = vld [vmem:[#allocation5 + $0x1900] sm:$0xff]
    %v6764 = vld [vmem:[#allocation5 + $0x1908] sm:$0xff]
    %v6765 = vld [vmem:[#allocation5 + $0x1910] sm:$0xf]
    %v6766 = vld [vmem:[#allocation5 + $0x1914] sm:$0xff]
    %v6767 = vld [vmem:[#allocation5 + $0x191c] sm:$0xff]
    %v6768 = vld [vmem:[#allocation5 + $0x1924] sm:$0xf]
    %v6769 = vld [vmem:[#allocation5 + $0x1928] sm:$0xff]
    %v6770 = vld [vmem:[#allocation5 + $0x1930] sm:$0xff]
    %v6771 = vld [vmem:[#allocation5 + $0x1938] sm:$0xf]
    %v6772 = vld [vmem:[#allocation5 + $0x193c] sm:$0xff]
    %v6773 = vld [vmem:[#allocation5 + $0x1944] sm:$0xff]
    %v6774 = vld [vmem:[#allocation5 + $0x194c] sm:$0xf]
    %v6775 = vld [vmem:[#allocation5 + $0x1950] sm:$0xff]
    %v6776 = vld [vmem:[#allocation5 + $0x1958] sm:$0xff]
    %v6777 = vld [vmem:[#allocation5 + $0x1960] sm:$0xf]
    %v6778 = vld [vmem:[#allocation5 + $0x1964] sm:$0xff]
    %v6779 = vld [vmem:[#allocation5 + $0x196c] sm:$0xff]
    %v6780 = vld [vmem:[#allocation5 + $0x1974] sm:$0xf]
    %v6781 = vld [vmem:[#allocation5 + $0x1978] sm:$0xff]
    %v6782 = vld [vmem:[#allocation5 + $0x1980] sm:$0xff]
    %v6783 = vld [vmem:[#allocation5 + $0x1988] sm:$0xf]
    %v6784 = vld [vmem:[#allocation5 + $0x198c] sm:$0xff]
    %v6785 = vld [vmem:[#allocation5 + $0x1994] sm:$0xff]
    %v6786 = vld [vmem:[#allocation5 + $0x199c] sm:$0xf]
    %v6787 = vld [vmem:[#allocation5 + $0x19a0] sm:$0xff]
    %v6788 = vld [vmem:[#allocation5 + $0x19a8] sm:$0xff]
    %v6789 = vld [vmem:[#allocation5 + $0x19b0] sm:$0xf]
    %v6790 = vld [vmem:[#allocation5 + $0x19b4] sm:$0xff]
    %v6791 = vld [vmem:[#allocation5 + $0x19bc] sm:$0xff]
    %v6792 = vld [vmem:[#allocation5 + $0x19c4] sm:$0xf]
    %v6793 = vld [vmem:[#allocation5 + $0x19c8] sm:$0xff]
    %v6794 = vld [vmem:[#allocation5 + $0x19d0] sm:$0xff]
    %v6795 = vld [vmem:[#allocation5 + $0x19d8] sm:$0xf]
    %v6796 = vld [vmem:[#allocation5 + $0x19dc] sm:$0xff]
    %v6797 = vld [vmem:[#allocation5 + $0x19e4] sm:$0xff]
    %v6798 = vld [vmem:[#allocation5 + $0x19ec] sm:$0xf]
    %v6799 = vld [vmem:[#allocation5 + $0x19f0] sm:$0xff]
    %v6800 = vld [vmem:[#allocation5 + $0x19f8] sm:$0xff]
    %v6801 = vld [vmem:[#allocation5 + $0x1a00] sm:$0xf]
    %v6802 = vld [vmem:[#allocation5 + $0x1a04] sm:$0xff]
    %v6803 = vld [vmem:[#allocation5 + $0x1a0c] sm:$0xff]
    %v6804 = vld [vmem:[#allocation5 + $0x1a14] sm:$0xf]
    %v6805 = vld [vmem:[#allocation5 + $0x1a18] sm:$0xff]
    %v6806 = vld [vmem:[#allocation5 + $0x1a20] sm:$0xff]
    %v6807 = vld [vmem:[#allocation5 + $0x1a28] sm:$0xf]
    %v6808 = vld [vmem:[#allocation5 + $0x1a2c] sm:$0xff]
    %v6809 = vld [vmem:[#allocation5 + $0x1a34] sm:$0xff]
    %v6810 = vld [vmem:[#allocation5 + $0x1a3c] sm:$0xf]
    %v6811 = vld [vmem:[#allocation5 + $0x1a40] sm:$0xff]
    %v6812 = vld [vmem:[#allocation5 + $0x1a48] sm:$0xff]
    %v6813 = vld [vmem:[#allocation5 + $0x1a50] sm:$0xf]
    %v6814 = vld [vmem:[#allocation5 + $0x1a54] sm:$0xff]
    %v6815 = vld [vmem:[#allocation5 + $0x1a5c] sm:$0xff]
    %v6816 = vld [vmem:[#allocation5 + $0x1a64] sm:$0xf]
    %v6817 = vld [vmem:[#allocation5 + $0x1a68] sm:$0xff]
    %v6818 = vld [vmem:[#allocation5 + $0x1a70] sm:$0xff]
    %v6819 = vld [vmem:[#allocation5 + $0x1a78] sm:$0xf]
    %v6820 = vld [vmem:[#allocation5 + $0x1a7c] sm:$0xff]
    %v6821 = vld [vmem:[#allocation5 + $0x1a84] sm:$0xff]
    %v6822 = vld [vmem:[#allocation5 + $0x1a8c] sm:$0xf]
    %v6823 = vld [vmem:[#allocation5 + $0x1a90] sm:$0xff]
    %v6824 = vld [vmem:[#allocation5 + $0x1a98] sm:$0xff]
    %v6825 = vld [vmem:[#allocation5 + $0x1aa0] sm:$0xf]
    %v6826 = vld [vmem:[#allocation5 + $0x1aa4] sm:$0xff]
    %v6827 = vld [vmem:[#allocation5 + $0x1aac] sm:$0xff]
    %v6828 = vld [vmem:[#allocation5 + $0x1ab4] sm:$0xf]
    %v6829 = vld [vmem:[#allocation5 + $0x1ab8] sm:$0xff]
    %v6830 = vld [vmem:[#allocation5 + $0x1ac0] sm:$0xff]
    %v6831 = vld [vmem:[#allocation5 + $0x1ac8] sm:$0xf]
    %v6832 = vld [vmem:[#allocation5 + $0x1acc] sm:$0xff]
    %v6833 = vld [vmem:[#allocation5 + $0x1ad4] sm:$0xff]
    %v6834 = vld [vmem:[#allocation5 + $0x1adc] sm:$0xf]
    %v6835 = vld [vmem:[#allocation5 + $0x1ae0] sm:$0xff]
    %v6836 = vld [vmem:[#allocation5 + $0x1ae8] sm:$0xff]
    %v6837 = vld [vmem:[#allocation5 + $0x1af0] sm:$0xf]
    %v6838 = vld [vmem:[#allocation5 + $0x1af4] sm:$0xff]
    %v6839 = vld [vmem:[#allocation5 + $0x1afc] sm:$0xff]
    %v6840 = vld [vmem:[#allocation5 + $0x1b04] sm:$0xf]
    %v6841 = vld [vmem:[#allocation5 + $0x1b08] sm:$0xff]
    %v6842 = vld [vmem:[#allocation5 + $0x1b10] sm:$0xff]
    %v6843 = vld [vmem:[#allocation5 + $0x1b18] sm:$0xf]
    %v6844 = vld [vmem:[#allocation5 + $0x1b1c] sm:$0xff]
    %v6845 = vld [vmem:[#allocation5 + $0x1b24] sm:$0xff]
    %v6846 = vld [vmem:[#allocation5 + $0x1b2c] sm:$0xf]
    %v6847 = vld [vmem:[#allocation5 + $0x1b30] sm:$0xff]
    %v6848 = vld [vmem:[#allocation5 + $0x1b38] sm:$0xff]
    %v6849 = vld [vmem:[#allocation5 + $0x1b40] sm:$0xf]
    %v6850 = vld [vmem:[#allocation5 + $0x1b44] sm:$0xff]
    %v6851 = vld [vmem:[#allocation5 + $0x1b4c] sm:$0xff]
    %v6852 = vld [vmem:[#allocation5 + $0x1b54] sm:$0xf]
    %v6853 = vld [vmem:[#allocation5 + $0x1b58] sm:$0xff]
    %v6854 = vld [vmem:[#allocation5 + $0x1b60] sm:$0xff]
    %v6855 = vld [vmem:[#allocation5 + $0x1b68] sm:$0xf]
    %v6856 = vld [vmem:[#allocation5 + $0x1b6c] sm:$0xff]
    %v6857 = vld [vmem:[#allocation5 + $0x1b74] sm:$0xff]
    %v6858 = vld [vmem:[#allocation5 + $0x1b7c] sm:$0xf]
    %v6859 = vld [vmem:[#allocation5 + $0x1b80] sm:$0xff]
    %v6860 = vld [vmem:[#allocation5 + $0x1b88] sm:$0xff]
    %v6861 = vld [vmem:[#allocation5 + $0x1b90] sm:$0xf]
    %v6862 = vld [vmem:[#allocation5 + $0x1b94] sm:$0xff]
    %v6863 = vld [vmem:[#allocation5 + $0x1b9c] sm:$0xff]
    %v6864 = vld [vmem:[#allocation5 + $0x1ba4] sm:$0xf]
    %v6865 = vld [vmem:[#allocation5 + $0x1ba8] sm:$0xff]
    %v6866 = vld [vmem:[#allocation5 + $0x1bb0] sm:$0xff]
    %v6867 = vld [vmem:[#allocation5 + $0x1bb8] sm:$0xf]
    %v6868 = vld [vmem:[#allocation5 + $0x1bbc] sm:$0xff]
    %v6869 = vld [vmem:[#allocation5 + $0x1bc4] sm:$0xff]
    %v6870 = vld [vmem:[#allocation5 + $0x1bcc] sm:$0xf]
    %v6871 = vld [vmem:[#allocation5 + $0x1bd0] sm:$0xff]
    %v6872 = vld [vmem:[#allocation5 + $0x1bd8] sm:$0xff]
    %v6873 = vld [vmem:[#allocation5 + $0x1be0] sm:$0xf]
    %v6874 = vld [vmem:[#allocation5 + $0x1be4] sm:$0xff]
    %v6875 = vld [vmem:[#allocation5 + $0x1bec] sm:$0xff]
    %v6876 = vld [vmem:[#allocation5 + $0x1bf4] sm:$0xf]
    %v6877 = vld [vmem:[#allocation5 + $0x1bf8] sm:$0xff]
    %v6878 = vld [vmem:[#allocation5 + $0x1c00] sm:$0xff]
    %v6879 = vld [vmem:[#allocation5 + $0x1c08] sm:$0xf]
    %v6880 = vld [vmem:[#allocation5 + $0x1c0c] sm:$0xff]
    %v6881 = vld [vmem:[#allocation5 + $0x1c14] sm:$0xff]
    %v6882 = vld [vmem:[#allocation5 + $0x1c1c] sm:$0xf]
    %v6883 = vld [vmem:[#allocation5 + $0x1c20] sm:$0xff]
    %v6884 = vld [vmem:[#allocation5 + $0x1c28] sm:$0xff]
    %v6885 = vld [vmem:[#allocation5 + $0x1c30] sm:$0xf]
    %v6886 = vld [vmem:[#allocation5 + $0x1c34] sm:$0xff]
    %v6887 = vld [vmem:[#allocation5 + $0x1c3c] sm:$0xff]
    %v6888 = vld [vmem:[#allocation5 + $0x1c44] sm:$0xf]
    %v6889 = vld [vmem:[#allocation5 + $0x1c48] sm:$0xff]
    %v6890 = vld [vmem:[#allocation5 + $0x1c50] sm:$0xff]
    %v6891 = vld [vmem:[#allocation5 + $0x1c58] sm:$0xf]
    %v6892 = vld [vmem:[#allocation5 + $0x1c5c] sm:$0xff]
    %v6893 = vld [vmem:[#allocation5 + $0x1c64] sm:$0xff]
    %v6894 = vld [vmem:[#allocation5 + $0x1c6c] sm:$0xf]
    %v6895 = vld [vmem:[#allocation5 + $0x1c70] sm:$0xff]
    %v6896 = vld [vmem:[#allocation5 + $0x1c78] sm:$0xff]
    %v6897 = vld [vmem:[#allocation5 + $0x1c80] sm:$0xf]
    %v6898 = vld [vmem:[#allocation5 + $0x1c84] sm:$0xff]
    %v6899 = vld [vmem:[#allocation5 + $0x1c8c] sm:$0xff]
    %v6900 = vld [vmem:[#allocation5 + $0x1c94] sm:$0xf]
    %v6901 = vld [vmem:[#allocation5 + $0x1c98] sm:$0xff]
    %v6902 = vld [vmem:[#allocation5 + $0x1ca0] sm:$0xff]
    %v6903 = vld [vmem:[#allocation5 + $0x1ca8] sm:$0xf]
    %v6904 = vld [vmem:[#allocation5 + $0x1cac] sm:$0xff]
    %v6905 = vld [vmem:[#allocation5 + $0x1cb4] sm:$0xff]
    %v6906 = vld [vmem:[#allocation5 + $0x1cbc] sm:$0xf]
    %v6907 = vld [vmem:[#allocation10 + $0x1c] sm:$0x1f]
    %v6909 = vperm.slane %v6907, 0
    %v6910 = vperm.slane %v6907, 1
    %v6911 = vperm.slane %v6907, 2
    %v6912 = vperm.slane %v6907, 3
    %v6913 = vperm.slane %v6907, 4
    %v7159 = vunpack.c.l.b16 %v6667
    %v7160 = vunpack.c.h.b16 %v6667
    %v7161 = vunpack.c.l.b16 %v6668
    %v7162 = vunpack.c.h.b16 %v6668
    %v7163 = vunpack.c.l.b16 %v6669
    %v7164 = vunpack.c.l.b16 %v6670
    %v7165 = vunpack.c.h.b16 %v6670
    %v7166 = vunpack.c.l.b16 %v6671
    %v7167 = vunpack.c.h.b16 %v6671
    %v7168 = vunpack.c.l.b16 %v6672
    %v7169 = vunpack.c.l.b16 %v6673
    %v7170 = vunpack.c.h.b16 %v6673
    %v7171 = vunpack.c.l.b16 %v6674
    %v7172 = vunpack.c.h.b16 %v6674
    %v7173 = vunpack.c.l.b16 %v6675
    %v7174 = vunpack.c.l.b16 %v6676
    %v7175 = vunpack.c.h.b16 %v6676
    %v7176 = vunpack.c.l.b16 %v6677
    %v7177 = vunpack.c.h.b16 %v6677
    %v7178 = vunpack.c.l.b16 %v6678
    %v7179 = vunpack.c.l.b16 %v6679
    %v7180 = vunpack.c.h.b16 %v6679
    %v7181 = vunpack.c.l.b16 %v6680
    %v7182 = vunpack.c.h.b16 %v6680
    %v7183 = vunpack.c.l.b16 %v6681
    %v7184 = vunpack.c.l.b16 %v6682
    %v7185 = vunpack.c.h.b16 %v6682
    %v7186 = vunpack.c.l.b16 %v6683
    %v7187 = vunpack.c.h.b16 %v6683
    %v7188 = vunpack.c.l.b16 %v6684
    %v7189 = vunpack.c.l.b16 %v6685
    %v7190 = vunpack.c.h.b16 %v6685
    %v7191 = vunpack.c.l.b16 %v6686
    %v7192 = vunpack.c.h.b16 %v6686
    %v7193 = vunpack.c.l.b16 %v6687
    %v7194 = vunpack.c.l.b16 %v6688
    %v7195 = vunpack.c.h.b16 %v6688
    %v7196 = vunpack.c.l.b16 %v6689
    %v7197 = vunpack.c.h.b16 %v6689
    %v7198 = vunpack.c.l.b16 %v6690
    %v7199 = vunpack.c.l.b16 %v6691
    %v7200 = vunpack.c.h.b16 %v6691
    %v7201 = vunpack.c.l.b16 %v6692
    %v7202 = vunpack.c.h.b16 %v6692
    %v7203 = vunpack.c.l.b16 %v6693
    %v7204 = vunpack.c.l.b16 %v6694
    %v7205 = vunpack.c.h.b16 %v6694
    %v7206 = vunpack.c.l.b16 %v6695
    %v7207 = vunpack.c.h.b16 %v6695
    %v7208 = vunpack.c.l.b16 %v6696
    %v7209 = vunpack.c.l.b16 %v6697
    %v7210 = vunpack.c.h.b16 %v6697
    %v7211 = vunpack.c.l.b16 %v6698
    %v7212 = vunpack.c.h.b16 %v6698
    %v7213 = vunpack.c.l.b16 %v6699
    %v7214 = vunpack.c.l.b16 %v6700
    %v7215 = vunpack.c.h.b16 %v6700
    %v7216 = vunpack.c.l.b16 %v6701
    %v7217 = vunpack.c.h.b16 %v6701
    %v7218 = vunpack.c.l.b16 %v6702
    %v7219 = vunpack.c.l.b16 %v6703
    %v7220 = vunpack.c.h.b16 %v6703
    %v7221 = vunpack.c.l.b16 %v6704
    %v7222 = vunpack.c.h.b16 %v6704
    %v7223 = vunpack.c.l.b16 %v6705
    %v7224 = vunpack.c.l.b16 %v6706
    %v7225 = vunpack.c.h.b16 %v6706
    %v7226 = vunpack.c.l.b16 %v6707
    %v7227 = vunpack.c.h.b16 %v6707
    %v7228 = vunpack.c.l.b16 %v6708
    %v7229 = vunpack.c.l.b16 %v6709
    %v7230 = vunpack.c.h.b16 %v6709
    %v7231 = vunpack.c.l.b16 %v6710
    %v7232 = vunpack.c.h.b16 %v6710
    %v7233 = vunpack.c.l.b16 %v6711
    %v7234 = vunpack.c.l.b16 %v6712
    %v7235 = vunpack.c.h.b16 %v6712
    %v7236 = vunpack.c.l.b16 %v6713
    %v7237 = vunpack.c.h.b16 %v6713
    %v7238 = vunpack.c.l.b16 %v6714
    %v7239 = vunpack.c.l.b16 %v6715
    %v7240 = vunpack.c.h.b16 %v6715
    %v7241 = vunpack.c.l.b16 %v6716
    %v7242 = vunpack.c.h.b16 %v6716
    %v7243 = vunpack.c.l.b16 %v6717
    %v7244 = vunpack.c.l.b16 %v6718
    %v7245 = vunpack.c.h.b16 %v6718
    %v7246 = vunpack.c.l.b16 %v6719
    %v7247 = vunpack.c.h.b16 %v6719
    %v7248 = vunpack.c.l.b16 %v6720
    %v7249 = vunpack.c.l.b16 %v6721
    %v7250 = vunpack.c.h.b16 %v6721
    %v7251 = vunpack.c.l.b16 %v6722
    %v7252 = vunpack.c.h.b16 %v6722
    %v7253 = vunpack.c.l.b16 %v6723
    %v7254 = vunpack.c.l.b16 %v6724
    %v7255 = vunpack.c.h.b16 %v6724
    %v7256 = vunpack.c.l.b16 %v6725
    %v7257 = vunpack.c.h.b16 %v6725
    %v7258 = vunpack.c.l.b16 %v6726
    %v7259 = vunpack.c.l.b16 %v6727
    %v7260 = vunpack.c.h.b16 %v6727
    %v7261 = vunpack.c.l.b16 %v6728
    %v7262 = vunpack.c.h.b16 %v6728
    %v7263 = vunpack.c.l.b16 %v6729
    %v7264 = vunpack.c.l.b16 %v6730
    %v7265 = vunpack.c.h.b16 %v6730
    %v7266 = vunpack.c.l.b16 %v6731
    %v7267 = vunpack.c.h.b16 %v6731
    %v7268 = vunpack.c.l.b16 %v6732
    %v7269 = vunpack.c.l.b16 %v6733
    %v7270 = vunpack.c.h.b16 %v6733
    %v7271 = vunpack.c.l.b16 %v6734
    %v7272 = vunpack.c.h.b16 %v6734
    %v7273 = vunpack.c.l.b16 %v6735
    %v7274 = vunpack.c.l.b16 %v6736
    %v7275 = vunpack.c.h.b16 %v6736
    %v7276 = vunpack.c.l.b16 %v6737
    %v7277 = vunpack.c.h.b16 %v6737
    %v7278 = vunpack.c.l.b16 %v6738
    %v7279 = vunpack.c.l.b16 %v6739
    %v7280 = vunpack.c.h.b16 %v6739
    %v7281 = vunpack.c.l.b16 %v6740
    %v7282 = vunpack.c.h.b16 %v6740
    %v7283 = vunpack.c.l.b16 %v6741
    %v7284 = vunpack.c.l.b16 %v6742
    %v7285 = vunpack.c.h.b16 %v6742
    %v7286 = vunpack.c.l.b16 %v6743
    %v7287 = vunpack.c.h.b16 %v6743
    %v7288 = vunpack.c.l.b16 %v6744
    %v7289 = vunpack.c.l.b16 %v6745
    %v7290 = vunpack.c.h.b16 %v6745
    %v7291 = vunpack.c.l.b16 %v6746
    %v7292 = vunpack.c.h.b16 %v6746
    %v7293 = vunpack.c.l.b16 %v6747
    %v7294 = vunpack.c.l.b16 %v6748
    %v7295 = vunpack.c.h.b16 %v6748
    %v7296 = vunpack.c.l.b16 %v6749
    %v7297 = vunpack.c.h.b16 %v6749
    %v7298 = vunpack.c.l.b16 %v6750
    %v7299 = vunpack.c.l.b16 %v6751
    %v7300 = vunpack.c.h.b16 %v6751
    %v7301 = vunpack.c.l.b16 %v6752
    %v7302 = vunpack.c.h.b16 %v6752
    %v7303 = vunpack.c.l.b16 %v6753
    %v7304 = vunpack.c.l.b16 %v6754
    %v7305 = vunpack.c.h.b16 %v6754
    %v7306 = vunpack.c.l.b16 %v6755
    %v7307 = vunpack.c.h.b16 %v6755
    %v7308 = vunpack.c.l.b16 %v6756
    %v7309 = vunpack.c.l.b16 %v6757
    %v7310 = vunpack.c.h.b16 %v6757
    %v7311 = vunpack.c.l.b16 %v6758
    %v7312 = vunpack.c.h.b16 %v6758
    %v7313 = vunpack.c.l.b16 %v6759
    %v7314 = vunpack.c.l.b16 %v6760
    %v7315 = vunpack.c.h.b16 %v6760
    %v7316 = vunpack.c.l.b16 %v6761
    %v7317 = vunpack.c.h.b16 %v6761
    %v7318 = vunpack.c.l.b16 %v6762
    %v7319 = vunpack.c.l.b16 %v6763
    %v7320 = vunpack.c.h.b16 %v6763
    %v7321 = vunpack.c.l.b16 %v6764
    %v7322 = vunpack.c.h.b16 %v6764
    %v7323 = vunpack.c.l.b16 %v6765
    %v7324 = vunpack.c.l.b16 %v6766
    %v7325 = vunpack.c.h.b16 %v6766
    %v7326 = vunpack.c.l.b16 %v6767
    %v7327 = vunpack.c.h.b16 %v6767
    %v7328 = vunpack.c.l.b16 %v6768
    %v7329 = vunpack.c.l.b16 %v6769
    %v7330 = vunpack.c.h.b16 %v6769
    %v7331 = vunpack.c.l.b16 %v6770
    %v7332 = vunpack.c.h.b16 %v6770
    %v7333 = vunpack.c.l.b16 %v6771
    %v7334 = vunpack.c.l.b16 %v6772
    %v7335 = vunpack.c.h.b16 %v6772
    %v7336 = vunpack.c.l.b16 %v6773
    %v7337 = vunpack.c.h.b16 %v6773
    %v7338 = vunpack.c.l.b16 %v6774
    %v7339 = vunpack.c.l.b16 %v6775
    %v7340 = vunpack.c.h.b16 %v6775
    %v7341 = vunpack.c.l.b16 %v6776
    %v7342 = vunpack.c.h.b16 %v6776
    %v7343 = vunpack.c.l.b16 %v6777
    %v7344 = vunpack.c.l.b16 %v6778
    %v7345 = vunpack.c.h.b16 %v6778
    %v7346 = vunpack.c.l.b16 %v6779
    %v7347 = vunpack.c.h.b16 %v6779
    %v7348 = vunpack.c.l.b16 %v6780
    %v7349 = vunpack.c.l.b16 %v6781
    %v7350 = vunpack.c.h.b16 %v6781
    %v7351 = vunpack.c.l.b16 %v6782
    %v7352 = vunpack.c.h.b16 %v6782
    %v7353 = vunpack.c.l.b16 %v6783
    %v7354 = vunpack.c.l.b16 %v6784
    %v7355 = vunpack.c.h.b16 %v6784
    %v7356 = vunpack.c.l.b16 %v6785
    %v7357 = vunpack.c.h.b16 %v6785
    %v7358 = vunpack.c.l.b16 %v6786
    %v7359 = vunpack.c.l.b16 %v6787
    %v7360 = vunpack.c.h.b16 %v6787
    %v7361 = vunpack.c.l.b16 %v6788
    %v7362 = vunpack.c.h.b16 %v6788
    %v7363 = vunpack.c.l.b16 %v6789
    %v7364 = vunpack.c.l.b16 %v6790
    %v7365 = vunpack.c.h.b16 %v6790
    %v7366 = vunpack.c.l.b16 %v6791
    %v7367 = vunpack.c.h.b16 %v6791
    %v7368 = vunpack.c.l.b16 %v6792
    %v7369 = vunpack.c.l.b16 %v6793
    %v7370 = vunpack.c.h.b16 %v6793
    %v7371 = vunpack.c.l.b16 %v6794
    %v7372 = vunpack.c.h.b16 %v6794
    %v7373 = vunpack.c.l.b16 %v6795
    %v7374 = vunpack.c.l.b16 %v6796
    %v7375 = vunpack.c.h.b16 %v6796
    %v7376 = vunpack.c.l.b16 %v6797
    %v7377 = vunpack.c.h.b16 %v6797
    %v7378 = vunpack.c.l.b16 %v6798
    %v7379 = vunpack.c.l.b16 %v6799
    %v7380 = vunpack.c.h.b16 %v6799
    %v7381 = vunpack.c.l.b16 %v6800
    %v7382 = vunpack.c.h.b16 %v6800
    %v7383 = vunpack.c.l.b16 %v6801
    %v7384 = vunpack.c.l.b16 %v6802
    %v7385 = vunpack.c.h.b16 %v6802
    %v7386 = vunpack.c.l.b16 %v6803
    %v7387 = vunpack.c.h.b16 %v6803
    %v7388 = vunpack.c.l.b16 %v6804
    %v7389 = vunpack.c.l.b16 %v6805
    %v7390 = vunpack.c.h.b16 %v6805
    %v7391 = vunpack.c.l.b16 %v6806
    %v7392 = vunpack.c.h.b16 %v6806
    %v7393 = vunpack.c.l.b16 %v6807
    %v7394 = vunpack.c.l.b16 %v6808
    %v7395 = vunpack.c.h.b16 %v6808
    %v7396 = vunpack.c.l.b16 %v6809
    %v7397 = vunpack.c.h.b16 %v6809
    %v7398 = vunpack.c.l.b16 %v6810
    %v7399 = vunpack.c.l.b16 %v6811
    %v7400 = vunpack.c.h.b16 %v6811
    %v7401 = vunpack.c.l.b16 %v6812
    %v7402 = vunpack.c.h.b16 %v6812
    %v7403 = vunpack.c.l.b16 %v6813
    %v7404 = vunpack.c.l.b16 %v6814
    %v7405 = vunpack.c.h.b16 %v6814
    %v7406 = vunpack.c.l.b16 %v6815
    %v7407 = vunpack.c.h.b16 %v6815
    %v7408 = vunpack.c.l.b16 %v6816
    %v7409 = vunpack.c.l.b16 %v6817
    %v7410 = vunpack.c.h.b16 %v6817
    %v7411 = vunpack.c.l.b16 %v6818
    %v7412 = vunpack.c.h.b16 %v6818
    %v7413 = vunpack.c.l.b16 %v6819
    %v7414 = vunpack.c.l.b16 %v6820
    %v7415 = vunpack.c.h.b16 %v6820
    %v7416 = vunpack.c.l.b16 %v6821
    %v7417 = vunpack.c.h.b16 %v6821
    %v7418 = vunpack.c.l.b16 %v6822
    %v7419 = vunpack.c.l.b16 %v6823
    %v7420 = vunpack.c.h.b16 %v6823
    %v7421 = vunpack.c.l.b16 %v6824
    %v7422 = vunpack.c.h.b16 %v6824
    %v7423 = vunpack.c.l.b16 %v6825
    %v7424 = vunpack.c.l.b16 %v6826
    %v7425 = vunpack.c.h.b16 %v6826
    %v7426 = vunpack.c.l.b16 %v6827
    %v7427 = vunpack.c.h.b16 %v6827
    %v7428 = vunpack.c.l.b16 %v6828
    %v7429 = vunpack.c.l.b16 %v6829
    %v7430 = vunpack.c.h.b16 %v6829
    %v7431 = vunpack.c.l.b16 %v6830
    %v7432 = vunpack.c.h.b16 %v6830
    %v7433 = vunpack.c.l.b16 %v6831
    %v7434 = vunpack.c.l.b16 %v6832
    %v7435 = vunpack.c.h.b16 %v6832
    %v7436 = vunpack.c.l.b16 %v6833
    %v7437 = vunpack.c.h.b16 %v6833
    %v7438 = vunpack.c.l.b16 %v6834
    %v7439 = vunpack.c.l.b16 %v6835
    %v7440 = vunpack.c.h.b16 %v6835
    %v7441 = vunpack.c.l.b16 %v6836
    %v7442 = vunpack.c.h.b16 %v6836
    %v7443 = vunpack.c.l.b16 %v6837
    %v7444 = vunpack.c.l.b16 %v6838
    %v7445 = vunpack.c.h.b16 %v6838
    %v7446 = vunpack.c.l.b16 %v6839
    %v7447 = vunpack.c.h.b16 %v6839
    %v7448 = vunpack.c.l.b16 %v6840
    %v7449 = vunpack.c.l.b16 %v6841
    %v7450 = vunpack.c.h.b16 %v6841
    %v7451 = vunpack.c.l.b16 %v6842
    %v7452 = vunpack.c.h.b16 %v6842
    %v7453 = vunpack.c.l.b16 %v6843
    %v7454 = vunpack.c.l.b16 %v6844
    %v7455 = vunpack.c.h.b16 %v6844
    %v7456 = vunpack.c.l.b16 %v6845
    %v7457 = vunpack.c.h.b16 %v6845
    %v7458 = vunpack.c.l.b16 %v6846
    %v7459 = vunpack.c.l.b16 %v6847
    %v7460 = vunpack.c.h.b16 %v6847
    %v7461 = vunpack.c.l.b16 %v6848
    %v7462 = vunpack.c.h.b16 %v6848
    %v7463 = vunpack.c.l.b16 %v6849
    %v7464 = vunpack.c.l.b16 %v6850
    %v7465 = vunpack.c.h.b16 %v6850
    %v7466 = vunpack.c.l.b16 %v6851
    %v7467 = vunpack.c.h.b16 %v6851
    %v7468 = vunpack.c.l.b16 %v6852
    %v7469 = vunpack.c.l.b16 %v6853
    %v7470 = vunpack.c.h.b16 %v6853
    %v7471 = vunpack.c.l.b16 %v6854
    %v7472 = vunpack.c.h.b16 %v6854
    %v7473 = vunpack.c.l.b16 %v6855
    %v7474 = vunpack.c.l.b16 %v6856
    %v7475 = vunpack.c.h.b16 %v6856
    %v7476 = vunpack.c.l.b16 %v6857
    %v7477 = vunpack.c.h.b16 %v6857
    %v7478 = vunpack.c.l.b16 %v6858
    %v7479 = vunpack.c.l.b16 %v6859
    %v7480 = vunpack.c.h.b16 %v6859
    %v7481 = vunpack.c.l.b16 %v6860
    %v7482 = vunpack.c.h.b16 %v6860
    %v7483 = vunpack.c.l.b16 %v6861
    %v7484 = vunpack.c.l.b16 %v6862
    %v7485 = vunpack.c.h.b16 %v6862
    %v7486 = vunpack.c.l.b16 %v6863
    %v7487 = vunpack.c.h.b16 %v6863
    %v7488 = vunpack.c.l.b16 %v6864
    %v7489 = vunpack.c.l.b16 %v6865
    %v7490 = vunpack.c.h.b16 %v6865
    %v7491 = vunpack.c.l.b16 %v6866
    %v7492 = vunpack.c.h.b16 %v6866
    %v7493 = vunpack.c.l.b16 %v6867
    %v7494 = vunpack.c.l.b16 %v6868
    %v7495 = vunpack.c.h.b16 %v6868
    %v7496 = vunpack.c.l.b16 %v6869
    %v7497 = vunpack.c.h.b16 %v6869
    %v7498 = vunpack.c.l.b16 %v6870
    %v7499 = vunpack.c.l.b16 %v6871
    %v7500 = vunpack.c.h.b16 %v6871
    %v7501 = vunpack.c.l.b16 %v6872
    %v7502 = vunpack.c.h.b16 %v6872
    %v7503 = vunpack.c.l.b16 %v6873
    %v7504 = vunpack.c.l.b16 %v6874
    %v7505 = vunpack.c.h.b16 %v6874
    %v7506 = vunpack.c.l.b16 %v6875
    %v7507 = vunpack.c.h.b16 %v6875
    %v7508 = vunpack.c.l.b16 %v6876
    %v7509 = vunpack.c.l.b16 %v6877
    %v7510 = vunpack.c.h.b16 %v6877
    %v7511 = vunpack.c.l.b16 %v6878
    %v7512 = vunpack.c.h.b16 %v6878
    %v7513 = vunpack.c.l.b16 %v6879
    %v7514 = vunpack.c.l.b16 %v6880
    %v7515 = vunpack.c.h.b16 %v6880
    %v7516 = vunpack.c.l.b16 %v6881
    %v7517 = vunpack.c.h.b16 %v6881
    %v7518 = vunpack.c.l.b16 %v6882
    %v7519 = vunpack.c.l.b16 %v6883
    %v7520 = vunpack.c.h.b16 %v6883
    %v7521 = vunpack.c.l.b16 %v6884
    %v7522 = vunpack.c.h.b16 %v6884
    %v7523 = vunpack.c.l.b16 %v6885
    %v7524 = vunpack.c.l.b16 %v6886
    %v7525 = vunpack.c.h.b16 %v6886
    %v7526 = vunpack.c.l.b16 %v6887
    %v7527 = vunpack.c.h.b16 %v6887
    %v7528 = vunpack.c.l.b16 %v6888
    %v7529 = vunpack.c.l.b16 %v6889
    %v7530 = vunpack.c.h.b16 %v6889
    %v7531 = vunpack.c.l.b16 %v6890
    %v7532 = vunpack.c.h.b16 %v6890
    %v7533 = vunpack.c.l.b16 %v6891
    %v7534 = vunpack.c.l.b16 %v6892
    %v7535 = vunpack.c.h.b16 %v6892
    %v7536 = vunpack.c.l.b16 %v6893
    %v7537 = vunpack.c.h.b16 %v6893
    %v7538 = vunpack.c.l.b16 %v6894
    %v7539 = vunpack.c.l.b16 %v6895
    %v7540 = vunpack.c.h.b16 %v6895
    %v7541 = vunpack.c.l.b16 %v6896
    %v7542 = vunpack.c.h.b16 %v6896
    %v7543 = vunpack.c.l.b16 %v6897
    %v7544 = vunpack.c.l.b16 %v6898
    %v7545 = vunpack.c.h.b16 %v6898
    %v7546 = vunpack.c.l.b16 %v6899
    %v7547 = vunpack.c.h.b16 %v6899
    %v7548 = vunpack.c.l.b16 %v6900
    %v7549 = vunpack.c.l.b16 %v6901
    %v7550 = vunpack.c.h.b16 %v6901
    %v7551 = vunpack.c.l.b16 %v6902
    %v7552 = vunpack.c.h.b16 %v6902
    %v7553 = vunpack.c.l.b16 %v6903
    %v7554 = vunpack.c.l.b16 %v6904
    %v7555 = vunpack.c.h.b16 %v6904
    %v7556 = vunpack.c.l.b16 %v6905
    %v7557 = vunpack.c.h.b16 %v6905
    %v7558 = vunpack.c.l.b16 %v6906
    %v7559 = vpack.c.b16 %v7164, %v7159
    %v7560 = vpack.c.b16 %v7165, %v7160
    %v7561 = vpack.c.b16 %v7166, %v7161
    %v7562 = vpack.c.b16 %v7167, %v7162
    %v7563 = vpack.c.b16 %v7168, %v7163
    %v7564 = vpack.c.b16 %v7174, %v7169
    %v7565 = vpack.c.b16 %v7175, %v7170
    %v7566 = vpack.c.b16 %v7176, %v7171
    %v7567 = vpack.c.b16 %v7177, %v7172
    %v7568 = vpack.c.b16 %v7178, %v7173
    %v7569 = vpack.c.b16 %v7184, %v7179
    %v7570 = vpack.c.b16 %v7185, %v7180
    %v7571 = vpack.c.b16 %v7186, %v7181
    %v7572 = vpack.c.b16 %v7187, %v7182
    %v7573 = vpack.c.b16 %v7188, %v7183
    %v7574 = vpack.c.b16 %v7194, %v7189
    %v7575 = vpack.c.b16 %v7195, %v7190
    %v7576 = vpack.c.b16 %v7196, %v7191
    %v7577 = vpack.c.b16 %v7197, %v7192
    %v7578 = vpack.c.b16 %v7198, %v7193
    %v7579 = vpack.c.b16 %v7204, %v7199
    %v7580 = vpack.c.b16 %v7205, %v7200
    %v7581 = vpack.c.b16 %v7206, %v7201
    %v7582 = vpack.c.b16 %v7207, %v7202
    %v7583 = vpack.c.b16 %v7208, %v7203
    %v7584 = vpack.c.b16 %v7214, %v7209
    %v7585 = vpack.c.b16 %v7215, %v7210
    %v7586 = vpack.c.b16 %v7216, %v7211
    %v7587 = vpack.c.b16 %v7217, %v7212
    %v7588 = vpack.c.b16 %v7218, %v7213
    %v7589 = vpack.c.b16 %v7224, %v7219
    %v7590 = vpack.c.b16 %v7225, %v7220
    %v7591 = vpack.c.b16 %v7226, %v7221
    %v7592 = vpack.c.b16 %v7227, %v7222
    %v7593 = vpack.c.b16 %v7228, %v7223
    %v7594 = vpack.c.b16 %v7234, %v7229
    %v7595 = vpack.c.b16 %v7235, %v7230
    %v7596 = vpack.c.b16 %v7236, %v7231
    %v7597 = vpack.c.b16 %v7237, %v7232
    %v7598 = vpack.c.b16 %v7238, %v7233
    %v7599 = vpack.c.b16 %v7244, %v7239
    %v7600 = vpack.c.b16 %v7245, %v7240
    %v7601 = vpack.c.b16 %v7246, %v7241
    %v7602 = vpack.c.b16 %v7247, %v7242
    %v7603 = vpack.c.b16 %v7248, %v7243
    %v7604 = vpack.c.b16 %v7254, %v7249
    %v7605 = vpack.c.b16 %v7255, %v7250
    %v7606 = vpack.c.b16 %v7256, %v7251
    %v7607 = vpack.c.b16 %v7257, %v7252
    %v7608 = vpack.c.b16 %v7258, %v7253
    %v7609 = vpack.c.b16 %v7264, %v7259
    %v7610 = vpack.c.b16 %v7265, %v7260
    %v7611 = vpack.c.b16 %v7266, %v7261
    %v7612 = vpack.c.b16 %v7267, %v7262
    %v7613 = vpack.c.b16 %v7268, %v7263
    %v7614 = vpack.c.b16 %v7274, %v7269
    %v7615 = vpack.c.b16 %v7275, %v7270
    %v7616 = vpack.c.b16 %v7276, %v7271
    %v7617 = vpack.c.b16 %v7277, %v7272
    %v7618 = vpack.c.b16 %v7278, %v7273
    %v7619 = vpack.c.b16 %v7284, %v7279
    %v7620 = vpack.c.b16 %v7285, %v7280
    %v7621 = vpack.c.b16 %v7286, %v7281
    %v7622 = vpack.c.b16 %v7287, %v7282
    %v7623 = vpack.c.b16 %v7288, %v7283
    %v7624 = vpack.c.b16 %v7294, %v7289
    %v7625 = vpack.c.b16 %v7295, %v7290
    %v7626 = vpack.c.b16 %v7296, %v7291
    %v7627 = vpack.c.b16 %v7297, %v7292
    %v7628 = vpack.c.b16 %v7298, %v7293
    %v7629 = vpack.c.b16 %v7304, %v7299
    %v7630 = vpack.c.b16 %v7305, %v7300
    %v7631 = vpack.c.b16 %v7306, %v7301
    %v7632 = vpack.c.b16 %v7307, %v7302
    %v7633 = vpack.c.b16 %v7308, %v7303
    %v7634 = vpack.c.b16 %v7314, %v7309
    %v7635 = vpack.c.b16 %v7315, %v7310
    %v7636 = vpack.c.b16 %v7316, %v7311
    %v7637 = vpack.c.b16 %v7317, %v7312
    %v7638 = vpack.c.b16 %v7318, %v7313
    %v7639 = vpack.c.b16 %v7324, %v7319
    %v7640 = vpack.c.b16 %v7325, %v7320
    %v7641 = vpack.c.b16 %v7326, %v7321
    %v7642 = vpack.c.b16 %v7327, %v7322
    %v7643 = vpack.c.b16 %v7328, %v7323
    %v7644 = vpack.c.b16 %v7334, %v7329
    %v7645 = vpack.c.b16 %v7335, %v7330
    %v7646 = vpack.c.b16 %v7336, %v7331
    %v7647 = vpack.c.b16 %v7337, %v7332
    %v7648 = vpack.c.b16 %v7338, %v7333
    %v7649 = vpack.c.b16 %v7344, %v7339
    %v7650 = vpack.c.b16 %v7345, %v7340
    %v7651 = vpack.c.b16 %v7346, %v7341
    %v7652 = vpack.c.b16 %v7347, %v7342
    %v7653 = vpack.c.b16 %v7348, %v7343
    %v7654 = vpack.c.b16 %v7354, %v7349
    %v7655 = vpack.c.b16 %v7355, %v7350
    %v7656 = vpack.c.b16 %v7356, %v7351
    %v7657 = vpack.c.b16 %v7357, %v7352
    %v7658 = vpack.c.b16 %v7358, %v7353
    %v7659 = vpack.c.b16 %v7364, %v7359
    %v7660 = vpack.c.b16 %v7365, %v7360
    %v7661 = vpack.c.b16 %v7366, %v7361
    %v7662 = vpack.c.b16 %v7367, %v7362
    %v7663 = vpack.c.b16 %v7368, %v7363
    %v7664 = vpack.c.b16 %v7374, %v7369
    %v7665 = vpack.c.b16 %v7375, %v7370
    %v7666 = vpack.c.b16 %v7376, %v7371
    %v7667 = vpack.c.b16 %v7377, %v7372
    %v7668 = vpack.c.b16 %v7378, %v7373
    %v7669 = vpack.c.b16 %v7384, %v7379
    %v7670 = vpack.c.b16 %v7385, %v7380
    %v7671 = vpack.c.b16 %v7386, %v7381
    %v7672 = vpack.c.b16 %v7387, %v7382
    %v7673 = vpack.c.b16 %v7388, %v7383
    %v7674 = vpack.c.b16 %v7394, %v7389
    %v7675 = vpack.c.b16 %v7395, %v7390
    %v7676 = vpack.c.b16 %v7396, %v7391
    %v7677 = vpack.c.b16 %v7397, %v7392
    %v7678 = vpack.c.b16 %v7398, %v7393
    %v7679 = vpack.c.b16 %v7404, %v7399
    %v7680 = vpack.c.b16 %v7405, %v7400
    %v7681 = vpack.c.b16 %v7406, %v7401
    %v7682 = vpack.c.b16 %v7407, %v7402
    %v7683 = vpack.c.b16 %v7408, %v7403
    %v7684 = vpack.c.b16 %v7414, %v7409
    %v7685 = vpack.c.b16 %v7415, %v7410
    %v7686 = vpack.c.b16 %v7416, %v7411
    %v7687 = vpack.c.b16 %v7417, %v7412
    %v7688 = vpack.c.b16 %v7418, %v7413
    %v7689 = vpack.c.b16 %v7424, %v7419
    %v7690 = vpack.c.b16 %v7425, %v7420
    %v7691 = vpack.c.b16 %v7426, %v7421
    %v7692 = vpack.c.b16 %v7427, %v7422
    %v7693 = vpack.c.b16 %v7428, %v7423
    %v7694 = vpack.c.b16 %v7434, %v7429
    %v7695 = vpack.c.b16 %v7435, %v7430
    %v7696 = vpack.c.b16 %v7436, %v7431
    %v7697 = vpack.c.b16 %v7437, %v7432
    %v7698 = vpack.c.b16 %v7438, %v7433
    %v7699 = vpack.c.b16 %v7444, %v7439
    %v7700 = vpack.c.b16 %v7445, %v7440
    %v7701 = vpack.c.b16 %v7446, %v7441
    %v7702 = vpack.c.b16 %v7447, %v7442
    %v7703 = vpack.c.b16 %v7448, %v7443
    %v7704 = vpack.c.b16 %v7454, %v7449
    %v7705 = vpack.c.b16 %v7455, %v7450
    %v7706 = vpack.c.b16 %v7456, %v7451
    %v7707 = vpack.c.b16 %v7457, %v7452
    %v7708 = vpack.c.b16 %v7458, %v7453
    %v7709 = vpack.c.b16 %v7464, %v7459
    %v7710 = vpack.c.b16 %v7465, %v7460
    %v7711 = vpack.c.b16 %v7466, %v7461
    %v7712 = vpack.c.b16 %v7467, %v7462
    %v7713 = vpack.c.b16 %v7468, %v7463
    %v7714 = vpack.c.b16 %v7474, %v7469
    %v7715 = vpack.c.b16 %v7475, %v7470
    %v7716 = vpack.c.b16 %v7476, %v7471
    %v7717 = vpack.c.b16 %v7477, %v7472
    %v7718 = vpack.c.b16 %v7478, %v7473
    %v7719 = vpack.c.b16 %v7484, %v7479
    %v7720 = vpack.c.b16 %v7485, %v7480
    %v7721 = vpack.c.b16 %v7486, %v7481
    %v7722 = vpack.c.b16 %v7487, %v7482
    %v7723 = vpack.c.b16 %v7488, %v7483
    %v7724 = vpack.c.b16 %v7494, %v7489
    %v7725 = vpack.c.b16 %v7495, %v7490
    %v7726 = vpack.c.b16 %v7496, %v7491
    %v7727 = vpack.c.b16 %v7497, %v7492
    %v7728 = vpack.c.b16 %v7498, %v7493
    %v7729 = vpack.c.b16 %v7504, %v7499
    %v7730 = vpack.c.b16 %v7505, %v7500
    %v7731 = vpack.c.b16 %v7506, %v7501
    %v7732 = vpack.c.b16 %v7507, %v7502
    %v7733 = vpack.c.b16 %v7508, %v7503
    %v7734 = vpack.c.b16 %v7514, %v7509
    %v7735 = vpack.c.b16 %v7515, %v7510
    %v7736 = vpack.c.b16 %v7516, %v7511
    %v7737 = vpack.c.b16 %v7517, %v7512
    %v7738 = vpack.c.b16 %v7518, %v7513
    %v7739 = vpack.c.b16 %v7524, %v7519
    %v7740 = vpack.c.b16 %v7525, %v7520
    %v7741 = vpack.c.b16 %v7526, %v7521
    %v7742 = vpack.c.b16 %v7527, %v7522
    %v7743 = vpack.c.b16 %v7528, %v7523
    %v7744 = vpack.c.b16 %v7534, %v7529
    %v7745 = vpack.c.b16 %v7535, %v7530
    %v7746 = vpack.c.b16 %v7536, %v7531
    %v7747 = vpack.c.b16 %v7537, %v7532
    %v7748 = vpack.c.b16 %v7538, %v7533
    %v7749 = vpack.c.b16 %v7544, %v7539
    %v7750 = vpack.c.b16 %v7545, %v7540
    %v7751 = vpack.c.b16 %v7546, %v7541
    %v7752 = vpack.c.b16 %v7547, %v7542
    %v7753 = vpack.c.b16 %v7548, %v7543
    %v7754 = vpack.c.b16 %v7554, %v7549
    %v7755 = vpack.c.b16 %v7555, %v7550
    %v7756 = vpack.c.b16 %v7556, %v7551
    %v7757 = vpack.c.b16 %v7557, %v7552
    %v7758 = vpack.c.b16 %v7558, %v7553
    %7959 = vmatpush.bf16.msra.mxu0 %v7594
    %7960 = vmatpush.bf16.msra.mxu0 %v7589
    %7961 = vmatpush.bf16.msra.mxu0 %v7584
    %7962 = vmatpush.bf16.msra.mxu0 %v7579
    %7963 = vmatpush.bf16.msra.mxu0 %v7574
    %7964 = vmatpush.bf16.msra.mxu0 %v7569
    %7965 = vmatpush.bf16.msra.mxu0 %v7564
    %7966 = vmatpush.bf16.msra.mxu0 %v7559
    %7967 = vmatmul.bf16.gmra.mxu0 %v6662
    %v7968 = vpop.f32.mrf.mxu0
    %v7969 = vadd.f32 %v6909, %v7968
    %v7970 = vpop.f32.mrf.mxu0
    %v7971 = vadd.f32 %v6909, %v7970
    %7972 = vdwg.mxu0
    %7973 = vmatpush.bf16.msra.mxu0 %v7634
    %7974 = vmatpush.bf16.msra.mxu0 %v7629
    %7975 = vmatpush.bf16.msra.mxu0 %v7624
    %7976 = vmatpush.bf16.msra.mxu0 %v7619
    %7977 = vmatpush.bf16.msra.mxu0 %v7614
    %7978 = vmatpush.bf16.msra.mxu0 %v7609
    %7979 = vmatpush.bf16.msra.mxu0 %v7604
    %7980 = vmatpush.bf16.msra.mxu0 %v7599
    %7981 = vmatmul.bf16.gmra.mxu0 %v6663
    %v7982 = vpop.f32.mrf.mxu0
    %v7983 = vadd.f32 %v7969, %v7982
    %v7984 = vpop.f32.mrf.mxu0
    %v7985 = vadd.f32 %v7971, %v7984
    %7986 = vdwg.mxu0
    %7987 = vmatpush.bf16.msra.mxu0 %v7674
    %7988 = vmatpush.bf16.msra.mxu0 %v7669
    %7989 = vmatpush.bf16.msra.mxu0 %v7664
    %7990 = vmatpush.bf16.msra.mxu0 %v7659
    %7991 = vmatpush.bf16.msra.mxu0 %v7654
    %7992 = vmatpush.bf16.msra.mxu0 %v7649
    %7993 = vmatpush.bf16.msra.mxu0 %v7644
    %7994 = vmatpush.bf16.msra.mxu0 %v7639
    %7995 = vmatmul.bf16.gmra.mxu0 %v6664
    %v7996 = vpop.f32.mrf.mxu0
    %v7997 = vadd.f32 %v7983, %v7996
    %v7998 = vpop.f32.mrf.mxu0
    %v7999 = vadd.f32 %v7985, %v7998
    %8000 = vdwg.mxu0
    %8001 = vmatpush.bf16.msra.mxu0 %v7714
    %8002 = vmatpush.bf16.msra.mxu0 %v7709
    %8003 = vmatpush.bf16.msra.mxu0 %v7704
    %8004 = vmatpush.bf16.msra.mxu0 %v7699
    %8005 = vmatpush.bf16.msra.mxu0 %v7694
    %8006 = vmatpush.bf16.msra.mxu0 %v7689
    %8007 = vmatpush.bf16.msra.mxu0 %v7684
    %8008 = vmatpush.bf16.msra.mxu0 %v7679
    %8009 = vmatmul.bf16.gmra.mxu0 %v6665
    %v8010 = vpop.f32.mrf.mxu0
    %v8011 = vadd.f32 %v7997, %v8010
    %v8012 = vpop.f32.mrf.mxu0
    %v8013 = vadd.f32 %v7999, %v8012
    %8014 = vdwg.mxu0
    %8015 = vmatpush.bf16.msra.mxu0 %v7754
    %8016 = vmatpush.bf16.msra.mxu0 %v7749
    %8017 = vmatpush.bf16.msra.mxu0 %v7744
    %8018 = vmatpush.bf16.msra.mxu0 %v7739
    %8019 = vmatpush.bf16.msra.mxu0 %v7734
    %8020 = vmatpush.bf16.msra.mxu0 %v7729
    %8021 = vmatpush.bf16.msra.mxu0 %v7724
    %8022 = vmatpush.bf16.msra.mxu0 %v7719
    %8023 = vmatmul.bf16.gmra.mxu0 %v6666
    %v8024 = vpop.f32.mrf.mxu0
    %v8025 = vadd.f32 %v8011, %v8024
    %v8026 = vpop.f32.mrf.mxu0
    %v8027 = vadd.f32 %v8013, %v8026
    %8028 = vdwg.mxu0
    %8029 = vmatpush.bf16.msra.mxu0 %v7595
    %8030 = vmatpush.bf16.msra.mxu0 %v7590
    %8031 = vmatpush.bf16.msra.mxu0 %v7585
    %8032 = vmatpush.bf16.msra.mxu0 %v7580
    %8033 = vmatpush.bf16.msra.mxu0 %v7575
    %8034 = vmatpush.bf16.msra.mxu0 %v7570
    %8035 = vmatpush.bf16.msra.mxu0 %v7565
    %8036 = vmatpush.bf16.msra.mxu0 %v7560
    %8037 = vmatmul.bf16.gmra.mxu0 %v6662
    %v8038 = vpop.f32.mrf.mxu0
    %v8039 = vadd.f32 %v6910, %v8038
    %v8040 = vpop.f32.mrf.mxu0
    %v8041 = vadd.f32 %v6910, %v8040
    %8042 = vdwg.mxu0
    %8043 = vmatpush.bf16.msra.mxu0 %v7635
    %8044 = vmatpush.bf16.msra.mxu0 %v7630
    %8045 = vmatpush.bf16.msra.mxu0 %v7625
    %8046 = vmatpush.bf16.msra.mxu0 %v7620
    %8047 = vmatpush.bf16.msra.mxu0 %v7615
    %8048 = vmatpush.bf16.msra.mxu0 %v7610
    %8049 = vmatpush.bf16.msra.mxu0 %v7605
    %8050 = vmatpush.bf16.msra.mxu0 %v7600
    %8051 = vmatmul.bf16.gmra.mxu0 %v6663
    %v8052 = vpop.f32.mrf.mxu0
    %v8053 = vadd.f32 %v8039, %v8052
    %v8054 = vpop.f32.mrf.mxu0
    %v8055 = vadd.f32 %v8041, %v8054
    %8056 = vdwg.mxu0
    %8057 = vmatpush.bf16.msra.mxu0 %v7675
    %8058 = vmatpush.bf16.msra.mxu0 %v7670
    %8059 = vmatpush.bf16.msra.mxu0 %v7665
    %8060 = vmatpush.bf16.msra.mxu0 %v7660
    %8061 = vmatpush.bf16.msra.mxu0 %v7655
    %8062 = vmatpush.bf16.msra.mxu0 %v7650
    %8063 = vmatpush.bf16.msra.mxu0 %v7645
    %8064 = vmatpush.bf16.msra.mxu0 %v7640
    %8065 = vmatmul.bf16.gmra.mxu0 %v6664
    %v8066 = vpop.f32.mrf.mxu0
    %v8067 = vadd.f32 %v8053, %v8066
    %v8068 = vpop.f32.mrf.mxu0
    %v8069 = vadd.f32 %v8055, %v8068
    %8070 = vdwg.mxu0
    %8071 = vmatpush.bf16.msra.mxu0 %v7715
    %8072 = vmatpush.bf16.msra.mxu0 %v7710
    %8073 = vmatpush.bf16.msra.mxu0 %v7705
    %8074 = vmatpush.bf16.msra.mxu0 %v7700
    %8075 = vmatpush.bf16.msra.mxu0 %v7695
    %8076 = vmatpush.bf16.msra.mxu0 %v7690
    %8077 = vmatpush.bf16.msra.mxu0 %v7685
    %8078 = vmatpush.bf16.msra.mxu0 %v7680
    %8079 = vmatmul.bf16.gmra.mxu0 %v6665
    %v8080 = vpop.f32.mrf.mxu0
    %v8081 = vadd.f32 %v8067, %v8080
    %v8082 = vpop.f32.mrf.mxu0
    %v8083 = vadd.f32 %v8069, %v8082
    %8084 = vdwg.mxu0
    %8085 = vmatpush.bf16.msra.mxu0 %v7755
    %8086 = vmatpush.bf16.msra.mxu0 %v7750
    %8087 = vmatpush.bf16.msra.mxu0 %v7745
    %8088 = vmatpush.bf16.msra.mxu0 %v7740
    %8089 = vmatpush.bf16.msra.mxu0 %v7735
    %8090 = vmatpush.bf16.msra.mxu0 %v7730
    %8091 = vmatpush.bf16.msra.mxu0 %v7725
    %8092 = vmatpush.bf16.msra.mxu0 %v7720
    %8093 = vmatmul.bf16.gmra.mxu0 %v6666
    %v8094 = vpop.f32.mrf.mxu0
    %v8095 = vadd.f32 %v8081, %v8094
    %v8096 = vpop.f32.mrf.mxu0
    %v8097 = vadd.f32 %v8083, %v8096
    %8098 = vdwg.mxu0
    %8099 = vmatpush.bf16.msra.mxu0 %v7596
    %8100 = vmatpush.bf16.msra.mxu0 %v7591
    %8101 = vmatpush.bf16.msra.mxu0 %v7586
    %8102 = vmatpush.bf16.msra.mxu0 %v7581
    %8103 = vmatpush.bf16.msra.mxu0 %v7576
    %8104 = vmatpush.bf16.msra.mxu0 %v7571
    %8105 = vmatpush.bf16.msra.mxu0 %v7566
    %8106 = vmatpush.bf16.msra.mxu0 %v7561
    %8107 = vmatmul.bf16.gmra.mxu0 %v6662
    %v8108 = vpop.f32.mrf.mxu0
    %v8109 = vadd.f32 %v6911, %v8108
    %v8110 = vpop.f32.mrf.mxu0
    %v8111 = vadd.f32 %v6911, %v8110
    %8112 = vdwg.mxu0
    %8113 = vmatpush.bf16.msra.mxu0 %v7636
    %8114 = vmatpush.bf16.msra.mxu0 %v7631
    %8115 = vmatpush.bf16.msra.mxu0 %v7626
    %8116 = vmatpush.bf16.msra.mxu0 %v7621
    %8117 = vmatpush.bf16.msra.mxu0 %v7616
    %8118 = vmatpush.bf16.msra.mxu0 %v7611
    %8119 = vmatpush.bf16.msra.mxu0 %v7606
    %8120 = vmatpush.bf16.msra.mxu0 %v7601
    %8121 = vmatmul.bf16.gmra.mxu0 %v6663
    %v8122 = vpop.f32.mrf.mxu0
    %v8123 = vadd.f32 %v8109, %v8122
    %v8124 = vpop.f32.mrf.mxu0
    %v8125 = vadd.f32 %v8111, %v8124
    %8126 = vdwg.mxu0
    %8127 = vmatpush.bf16.msra.mxu0 %v7676
    %8128 = vmatpush.bf16.msra.mxu0 %v7671
    %8129 = vmatpush.bf16.msra.mxu0 %v7666
    %8130 = vmatpush.bf16.msra.mxu0 %v7661
    %8131 = vmatpush.bf16.msra.mxu0 %v7656
    %8132 = vmatpush.bf16.msra.mxu0 %v7651
    %8133 = vmatpush.bf16.msra.mxu0 %v7646
    %8134 = vmatpush.bf16.msra.mxu0 %v7641
    %8135 = vmatmul.bf16.gmra.mxu0 %v6664
    %v8136 = vpop.f32.mrf.mxu0
    %v8137 = vadd.f32 %v8123, %v8136
    %v8138 = vpop.f32.mrf.mxu0
    %v8139 = vadd.f32 %v8125, %v8138
    %8140 = vdwg.mxu0
    %8141 = vmatpush.bf16.msra.mxu0 %v7716
    %8142 = vmatpush.bf16.msra.mxu0 %v7711
    %8143 = vmatpush.bf16.msra.mxu0 %v7706
    %8144 = vmatpush.bf16.msra.mxu0 %v7701
    %8145 = vmatpush.bf16.msra.mxu0 %v7696
    %8146 = vmatpush.bf16.msra.mxu0 %v7691
    %8147 = vmatpush.bf16.msra.mxu0 %v7686
    %8148 = vmatpush.bf16.msra.mxu0 %v7681
    %8149 = vmatmul.bf16.gmra.mxu0 %v6665
    %v8150 = vpop.f32.mrf.mxu0
    %v8151 = vadd.f32 %v8137, %v8150
    %v8152 = vpop.f32.mrf.mxu0
    %v8153 = vadd.f32 %v8139, %v8152
    %8154 = vdwg.mxu0
    %8155 = vmatpush.bf16.msra.mxu0 %v7756
    %8156 = vmatpush.bf16.msra.mxu0 %v7751
    %8157 = vmatpush.bf16.msra.mxu0 %v7746
    %8158 = vmatpush.bf16.msra.mxu0 %v7741
    %8159 = vmatpush.bf16.msra.mxu0 %v7736
    %8160 = vmatpush.bf16.msra.mxu0 %v7731
    %8161 = vmatpush.bf16.msra.mxu0 %v7726
    %8162 = vmatpush.bf16.msra.mxu0 %v7721
    %8163 = vmatmul.bf16.gmra.mxu0 %v6666
    %v8164 = vpop.f32.mrf.mxu0
    %v8165 = vadd.f32 %v8151, %v8164
    %v8166 = vpop.f32.mrf.mxu0
    %v8167 = vadd.f32 %v8153, %v8166
    %8168 = vdwg.mxu0
    %8169 = vmatpush.bf16.msra.mxu0 %v7597
    %8170 = vmatpush.bf16.msra.mxu0 %v7592
    %8171 = vmatpush.bf16.msra.mxu0 %v7587
    %8172 = vmatpush.bf16.msra.mxu0 %v7582
    %8173 = vmatpush.bf16.msra.mxu0 %v7577
    %8174 = vmatpush.bf16.msra.mxu0 %v7572
    %8175 = vmatpush.bf16.msra.mxu0 %v7567
    %8176 = vmatpush.bf16.msra.mxu0 %v7562
    %8177 = vmatmul.bf16.gmra.mxu0 %v6662
    %v8178 = vpop.f32.mrf.mxu0
    %v8179 = vadd.f32 %v6912, %v8178
    %v8180 = vpop.f32.mrf.mxu0
    %v8181 = vadd.f32 %v6912, %v8180
    %8182 = vdwg.mxu0
    %8183 = vmatpush.bf16.msra.mxu0 %v7637
    %8184 = vmatpush.bf16.msra.mxu0 %v7632
    %8185 = vmatpush.bf16.msra.mxu0 %v7627
    %8186 = vmatpush.bf16.msra.mxu0 %v7622
    %8187 = vmatpush.bf16.msra.mxu0 %v7617
    %8188 = vmatpush.bf16.msra.mxu0 %v7612
    %8189 = vmatpush.bf16.msra.mxu0 %v7607
    %8190 = vmatpush.bf16.msra.mxu0 %v7602
    %8191 = vmatmul.bf16.gmra.mxu0 %v6663
    %v8192 = vpop.f32.mrf.mxu0
    %v8193 = vadd.f32 %v8179, %v8192
    %v8194 = vpop.f32.mrf.mxu0
    %v8195 = vadd.f32 %v8181, %v8194
    %8196 = vdwg.mxu0
    %8197 = vmatpush.bf16.msra.mxu0 %v7677
    %8198 = vmatpush.bf16.msra.mxu0 %v7672
    %8199 = vmatpush.bf16.msra.mxu0 %v7667
    %8200 = vmatpush.bf16.msra.mxu0 %v7662
    %8201 = vmatpush.bf16.msra.mxu0 %v7657
    %8202 = vmatpush.bf16.msra.mxu0 %v7652
    %8203 = vmatpush.bf16.msra.mxu0 %v7647
    %8204 = vmatpush.bf16.msra.mxu0 %v7642
    %8205 = vmatmul.bf16.gmra.mxu0 %v6664
    %v8206 = vpop.f32.mrf.mxu0
    %v8207 = vadd.f32 %v8193, %v8206
    %v8208 = vpop.f32.mrf.mxu0
    %v8209 = vadd.f32 %v8195, %v8208
    %8210 = vdwg.mxu0
    %8211 = vmatpush.bf16.msra.mxu0 %v7717
    %8212 = vmatpush.bf16.msra.mxu0 %v7712
    %8213 = vmatpush.bf16.msra.mxu0 %v7707
    %8214 = vmatpush.bf16.msra.mxu0 %v7702
    %8215 = vmatpush.bf16.msra.mxu0 %v7697
    %8216 = vmatpush.bf16.msra.mxu0 %v7692
    %8217 = vmatpush.bf16.msra.mxu0 %v7687
    %8218 = vmatpush.bf16.msra.mxu0 %v7682
    %8219 = vmatmul.bf16.gmra.mxu0 %v6665
    %v8220 = vpop.f32.mrf.mxu0
    %v8221 = vadd.f32 %v8207, %v8220
    %v8222 = vpop.f32.mrf.mxu0
    %v8223 = vadd.f32 %v8209, %v8222
    %8224 = vdwg.mxu0
    %8225 = vmatpush.bf16.msra.mxu0 %v7757
    %8226 = vmatpush.bf16.msra.mxu0 %v7752
    %8227 = vmatpush.bf16.msra.mxu0 %v7747
    %8228 = vmatpush.bf16.msra.mxu0 %v7742
    %8229 = vmatpush.bf16.msra.mxu0 %v7737
    %8230 = vmatpush.bf16.msra.mxu0 %v7732
    %8231 = vmatpush.bf16.msra.mxu0 %v7727
    %8232 = vmatpush.bf16.msra.mxu0 %v7722
    %8233 = vmatmul.bf16.gmra.mxu0 %v6666
    %v8234 = vpop.f32.mrf.mxu0
    %v8235 = vadd.f32 %v8221, %v8234
    %v8236 = vpop.f32.mrf.mxu0
    %v8237 = vadd.f32 %v8223, %v8236
    %8238 = vdwg.mxu0
    %8239 = vmatpush.bf16.msra.mxu0 %v7598
    %8240 = vmatpush.bf16.msra.mxu0 %v7593
    %8241 = vmatpush.bf16.msra.mxu0 %v7588
    %8242 = vmatpush.bf16.msra.mxu0 %v7583
    %8243 = vmatpush.bf16.msra.mxu0 %v7578
    %8244 = vmatpush.bf16.msra.mxu0 %v7573
    %8245 = vmatpush.bf16.msra.mxu0 %v7568
    %8246 = vmatpush.bf16.msra.mxu0 %v7563
    %8247 = vmatmul.bf16.gmra.mxu0 %v6662
    %v8248 = vpop.f32.mrf.mxu0
    %v8249 = vadd.f32 %v6913, %v8248
    %v8250 = vpop.f32.mrf.mxu0
    %v8251 = vadd.f32 %v6913, %v8250
    %8252 = vdwg.mxu0
    %8253 = vmatpush.bf16.msra.mxu0 %v7638
    %8254 = vmatpush.bf16.msra.mxu0 %v7633
    %8255 = vmatpush.bf16.msra.mxu0 %v7628
    %8256 = vmatpush.bf16.msra.mxu0 %v7623
    %8257 = vmatpush.bf16.msra.mxu0 %v7618
    %8258 = vmatpush.bf16.msra.mxu0 %v7613
    %8259 = vmatpush.bf16.msra.mxu0 %v7608
    %8260 = vmatpush.bf16.msra.mxu0 %v7603
    %8261 = vmatmul.bf16.gmra.mxu0 %v6663
    %v8262 = vpop.f32.mrf.mxu0
    %v8263 = vadd.f32 %v8249, %v8262
    %v8264 = vpop.f32.mrf.mxu0
    %v8265 = vadd.f32 %v8251, %v8264
    %8266 = vdwg.mxu0
    %8267 = vmatpush.bf16.msra.mxu0 %v7678
    %8268 = vmatpush.bf16.msra.mxu0 %v7673
    %8269 = vmatpush.bf16.msra.mxu0 %v7668
    %8270 = vmatpush.bf16.msra.mxu0 %v7663
    %8271 = vmatpush.bf16.msra.mxu0 %v7658
    %8272 = vmatpush.bf16.msra.mxu0 %v7653
    %8273 = vmatpush.bf16.msra.mxu0 %v7648
    %8274 = vmatpush.bf16.msra.mxu0 %v7643
    %8275 = vmatmul.bf16.gmra.mxu0 %v6664
    %v8276 = vpop.f32.mrf.mxu0
    %v8277 = vadd.f32 %v8263, %v8276
    %v8278 = vpop.f32.mrf.mxu0
    %v8279 = vadd.f32 %v8265, %v8278
    %8280 = vdwg.mxu0
    %8281 = vmatpush.bf16.msra.mxu0 %v7718
    %8282 = vmatpush.bf16.msra.mxu0 %v7713
    %8283 = vmatpush.bf16.msra.mxu0 %v7708
    %8284 = vmatpush.bf16.msra.mxu0 %v7703
    %8285 = vmatpush.bf16.msra.mxu0 %v7698
    %8286 = vmatpush.bf16.msra.mxu0 %v7693
    %8287 = vmatpush.bf16.msra.mxu0 %v7688
    %8288 = vmatpush.bf16.msra.mxu0 %v7683
    %8289 = vmatmul.bf16.gmra.mxu0 %v6665
    %v8290 = vpop.f32.mrf.mxu0
    %v8291 = vadd.f32 %v8277, %v8290
    %v8292 = vpop.f32.mrf.mxu0
    %v8293 = vadd.f32 %v8279, %v8292
    %8294 = vdwg.mxu0
    %8295 = vmatpush.bf16.msra.mxu0 %v7758
    %8296 = vmatpush.bf16.msra.mxu0 %v7753
    %8297 = vmatpush.bf16.msra.mxu0 %v7748
    %8298 = vmatpush.bf16.msra.mxu0 %v7743
    %8299 = vmatpush.bf16.msra.mxu0 %v7738
    %8300 = vmatpush.bf16.msra.mxu0 %v7733
    %8301 = vmatpush.bf16.msra.mxu0 %v7728
    %8302 = vmatpush.bf16.msra.mxu0 %v7723
    %8303 = vmatmul.bf16.gmra.mxu0 %v6666
    %v8304 = vpop.f32.mrf.mxu0
    %v8305 = vadd.f32 %v8291, %v8304
    %v8306 = vpop.f32.mrf.mxu0
    %v8307 = vadd.f32 %v8293, %v8306
    %8308 = vdwg.mxu0
    %v8309 = vmax.f32 %v8025, 0.0
    %v8310 = vmax.f32 %v8095, 0.0
    %v8311 = vmax.f32 %v8165, 0.0
    %v8312 = vmax.f32 %v8235, 0.0
    %v8313 = vmax.f32 %v8305, 0.0
    %v8314 = vmax.f32 %v8027, 0.0
    %v8315 = vmax.f32 %v8097, 0.0
    %v8316 = vmax.f32 %v8167, 0.0
    %v8317 = vmax.f32 %v8237, 0.0
    %v8318 = vmax.f32 %v8307, 0.0
    %v8319 = vpack.c.bf16 %v8314, %v8309
    %v8320 = vpack.c.bf16 %v8315, %v8310
    %v8321 = vpack.c.bf16 %v8316, %v8311
    %v8322 = vpack.c.bf16 %v8317, %v8312
    %v8323 = vpack.c.bf16 %v8318, %v8313
    %v8324 = vld [vmem:[#allocation8] sm:$0xff]
    %v8325 = vld [vmem:[#allocation8 + $0x8] sm:$0xff]
    %v8326 = vld [vmem:[#allocation8 + $0x10] sm:$0xff]
    %v8327 = vld [vmem:[#allocation8 + $0x18] sm:$0xff]
    %v8328 = vld [vmem:[#allocation8 + $0x20] sm:$0xff]
    %v8329 = vld [vmem:[#allocation8 + $0x28] sm:$0xff]
    %v8330 = vld [vmem:[#allocation8 + $0x30] sm:$0xff]
    %v8331 = vld [vmem:[#allocation8 + $0x38] sm:$0xff]
    %v8332 = vld [vmem:[#allocation8 + $0x40] sm:$0xff]
    %v8333 = vld [vmem:[#allocation8 + $0x48] sm:$0xff]
    %v8334 = vld [vmem:[#allocation8 + $0x50] sm:$0xff]
    %v8335 = vld [vmem:[#allocation8 + $0x58] sm:$0xff]
    %v8336 = vld [vmem:[#allocation8 + $0x60] sm:$0xff]
    %v8337 = vld [vmem:[#allocation8 + $0x68] sm:$0xff]
    %v8338 = vld [vmem:[#allocation8 + $0x70] sm:$0xff]
    %v8339 = vld [vmem:[#allocation8 + $0x78] sm:$0xff]
    %v8340 = vld [vmem:[#allocation8 + $0x80] sm:$0xff]
    %v8341 = vld [vmem:[#allocation8 + $0x88] sm:$0xff]
    %v8342 = vld [vmem:[#allocation8 + $0x90] sm:$0xff]
    %v8343 = vld [vmem:[#allocation8 + $0x98] sm:$0xff]
    %v8344 = vld [vmem:[#allocation8 + $0xa0] sm:$0xff]
    %v8345 = vld [vmem:[#allocation8 + $0xa8] sm:$0xff]
    %v8346 = vld [vmem:[#allocation8 + $0xb0] sm:$0xff]
    %v8347 = vld [vmem:[#allocation8 + $0xb8] sm:$0xff]
    %v8348 = vld [vmem:[#allocation8 + $0xc0] sm:$0xff]
    %v8349 = vld [vmem:[#allocation8 + $0xc8] sm:$0xff]
    %v8350 = vld [vmem:[#allocation8 + $0xd0] sm:$0xff]
    %v8351 = vld [vmem:[#allocation8 + $0xd8] sm:$0xff]
    %v8352 = vld [vmem:[#allocation8 + $0xe0] sm:$0xff]
    %v8353 = vld [vmem:[#allocation8 + $0xe8] sm:$0xff]
    %v8354 = vld [vmem:[#allocation8 + $0xf0] sm:$0xff]
    %v8355 = vld [vmem:[#allocation8 + $0xf8] sm:$0xff]
    %v8356 = vld [vmem:[#allocation8 + $0x100] sm:$0xff]
    %v8357 = vld [vmem:[#allocation8 + $0x108] sm:$0xff]
    %v8358 = vld [vmem:[#allocation8 + $0x110] sm:$0xff]
    %v8359 = vld [vmem:[#allocation8 + $0x118] sm:$0xff]
    %v8360 = vld [vmem:[#allocation8 + $0x120] sm:$0xff]
    %v8361 = vld [vmem:[#allocation8 + $0x128] sm:$0xff]
    %v8362 = vld [vmem:[#allocation8 + $0x130] sm:$0xff]
    %v8363 = vld [vmem:[#allocation8 + $0x138] sm:$0xff]
    %v8364 = vld [vmem:[#allocation8 + $0x140] sm:$0xff]
    %v8365 = vld [vmem:[#allocation8 + $0x148] sm:$0xff]
    %v8366 = vld [vmem:[#allocation8 + $0x150] sm:$0xff]
    %v8367 = vld [vmem:[#allocation8 + $0x158] sm:$0xff]
    %v8368 = vld [vmem:[#allocation8 + $0x160] sm:$0xff]
    %v8369 = vld [vmem:[#allocation8 + $0x168] sm:$0xff]
    %v8370 = vld [vmem:[#allocation8 + $0x170] sm:$0xff]
    %v8371 = vld [vmem:[#allocation8 + $0x178] sm:$0xff]
    %v8372 = vld [vmem:[#allocation8 + $0x180] sm:$0xff]
    %v8373 = vld [vmem:[#allocation8 + $0x188] sm:$0xff]
    %v8374 = vld [vmem:[#allocation8 + $0x190] sm:$0xff]
    %v8375 = vld [vmem:[#allocation8 + $0x198] sm:$0xff]
    %v8376 = vld [vmem:[#allocation8 + $0x1a0] sm:$0xff]
    %v8377 = vld [vmem:[#allocation8 + $0x1a8] sm:$0xff]
    %v8378 = vld [vmem:[#allocation8 + $0x1b0] sm:$0xff]
    %v8379 = vld [vmem:[#allocation8 + $0x1b8] sm:$0xff]
    %v8380 = vld [vmem:[#allocation8 + $0x1c0] sm:$0xff]
    %v8381 = vld [vmem:[#allocation8 + $0x1c8] sm:$0xff]
    %v8382 = vld [vmem:[#allocation8 + $0x1d0] sm:$0xff]
    %v8383 = vld [vmem:[#allocation8 + $0x1d8] sm:$0xff]
    %v8384 = vld [vmem:[#allocation8 + $0x1e0] sm:$0xff]
    %v8385 = vld [vmem:[#allocation8 + $0x1e8] sm:$0xff]
    %v8386 = vld [vmem:[#allocation8 + $0x1f0] sm:$0xff]
    %v8387 = vld [vmem:[#allocation8 + $0x1f8] sm:$0xff]
    %v8388 = vld [vmem:[#allocation8 + $0x200] sm:$0xff]
    %v8389 = vld [vmem:[#allocation8 + $0x208] sm:$0xff]
    %v8390 = vld [vmem:[#allocation8 + $0x210] sm:$0xff]
    %v8391 = vld [vmem:[#allocation8 + $0x218] sm:$0xff]
    %v8392 = vld [vmem:[#allocation8 + $0x220] sm:$0xff]
    %v8393 = vld [vmem:[#allocation8 + $0x228] sm:$0xff]
    %v8394 = vld [vmem:[#allocation8 + $0x230] sm:$0xff]
    %v8395 = vld [vmem:[#allocation8 + $0x238] sm:$0xff]
    %v8396 = vld [vmem:[#allocation8 + $0x240] sm:$0xff]
    %v8397 = vld [vmem:[#allocation8 + $0x248] sm:$0xff]
    %v8398 = vld [vmem:[#allocation8 + $0x250] sm:$0xff]
    %v8399 = vld [vmem:[#allocation8 + $0x258] sm:$0xff]
    %v8400 = vld [vmem:[#allocation8 + $0x260] sm:$0xff]
    %v8401 = vld [vmem:[#allocation8 + $0x268] sm:$0xff]
    %v8402 = vld [vmem:[#allocation8 + $0x270] sm:$0xff]
    %v8403 = vld [vmem:[#allocation8 + $0x278] sm:$0xff]
    %v8404 = vld [vmem:[#allocation10 + $0x21] sm:$0x3]
    %v8406 = vperm.slane %v8404, 0
    %v8407 = vperm.slane %v8404, 1
    %v8490 = vunpack.c.l.b16 %v8324
    %v8491 = vunpack.c.h.b16 %v8324
    %v8492 = vunpack.c.l.b16 %v8325
    %v8493 = vunpack.c.h.b16 %v8325
    %v8494 = vunpack.c.l.b16 %v8326
    %v8495 = vunpack.c.h.b16 %v8326
    %v8496 = vunpack.c.l.b16 %v8327
    %v8497 = vunpack.c.h.b16 %v8327
    %v8498 = vunpack.c.l.b16 %v8328
    %v8499 = vunpack.c.h.b16 %v8328
    %v8500 = vunpack.c.l.b16 %v8329
    %v8501 = vunpack.c.h.b16 %v8329
    %v8502 = vunpack.c.l.b16 %v8330
    %v8503 = vunpack.c.h.b16 %v8330
    %v8504 = vunpack.c.l.b16 %v8331
    %v8505 = vunpack.c.h.b16 %v8331
    %v8506 = vunpack.c.l.b16 %v8332
    %v8507 = vunpack.c.h.b16 %v8332
    %v8508 = vunpack.c.l.b16 %v8333
    %v8509 = vunpack.c.h.b16 %v8333
    %v8510 = vunpack.c.l.b16 %v8334
    %v8511 = vunpack.c.h.b16 %v8334
    %v8512 = vunpack.c.l.b16 %v8335
    %v8513 = vunpack.c.h.b16 %v8335
    %v8514 = vunpack.c.l.b16 %v8336
    %v8515 = vunpack.c.h.b16 %v8336
    %v8516 = vunpack.c.l.b16 %v8337
    %v8517 = vunpack.c.h.b16 %v8337
    %v8518 = vunpack.c.l.b16 %v8338
    %v8519 = vunpack.c.h.b16 %v8338
    %v8520 = vunpack.c.l.b16 %v8339
    %v8521 = vunpack.c.h.b16 %v8339
    %v8522 = vunpack.c.l.b16 %v8340
    %v8523 = vunpack.c.h.b16 %v8340
    %v8524 = vunpack.c.l.b16 %v8341
    %v8525 = vunpack.c.h.b16 %v8341
    %v8526 = vunpack.c.l.b16 %v8342
    %v8527 = vunpack.c.h.b16 %v8342
    %v8528 = vunpack.c.l.b16 %v8343
    %v8529 = vunpack.c.h.b16 %v8343
    %v8530 = vunpack.c.l.b16 %v8344
    %v8531 = vunpack.c.h.b16 %v8344
    %v8532 = vunpack.c.l.b16 %v8345
    %v8533 = vunpack.c.h.b16 %v8345
    %v8534 = vunpack.c.l.b16 %v8346
    %v8535 = vunpack.c.h.b16 %v8346
    %v8536 = vunpack.c.l.b16 %v8347
    %v8537 = vunpack.c.h.b16 %v8347
    %v8538 = vunpack.c.l.b16 %v8348
    %v8539 = vunpack.c.h.b16 %v8348
    %v8540 = vunpack.c.l.b16 %v8349
    %v8541 = vunpack.c.h.b16 %v8349
    %v8542 = vunpack.c.l.b16 %v8350
    %v8543 = vunpack.c.h.b16 %v8350
    %v8544 = vunpack.c.l.b16 %v8351
    %v8545 = vunpack.c.h.b16 %v8351
    %v8546 = vunpack.c.l.b16 %v8352
    %v8547 = vunpack.c.h.b16 %v8352
    %v8548 = vunpack.c.l.b16 %v8353
    %v8549 = vunpack.c.h.b16 %v8353
    %v8550 = vunpack.c.l.b16 %v8354
    %v8551 = vunpack.c.h.b16 %v8354
    %v8552 = vunpack.c.l.b16 %v8355
    %v8553 = vunpack.c.h.b16 %v8355
    %v8554 = vunpack.c.l.b16 %v8356
    %v8555 = vunpack.c.h.b16 %v8356
    %v8556 = vunpack.c.l.b16 %v8357
    %v8557 = vunpack.c.h.b16 %v8357
    %v8558 = vunpack.c.l.b16 %v8358
    %v8559 = vunpack.c.h.b16 %v8358
    %v8560 = vunpack.c.l.b16 %v8359
    %v8561 = vunpack.c.h.b16 %v8359
    %v8562 = vunpack.c.l.b16 %v8360
    %v8563 = vunpack.c.h.b16 %v8360
    %v8564 = vunpack.c.l.b16 %v8361
    %v8565 = vunpack.c.h.b16 %v8361
    %v8566 = vunpack.c.l.b16 %v8362
    %v8567 = vunpack.c.h.b16 %v8362
    %v8568 = vunpack.c.l.b16 %v8363
    %v8569 = vunpack.c.h.b16 %v8363
    %v8570 = vunpack.c.l.b16 %v8364
    %v8571 = vunpack.c.h.b16 %v8364
    %v8572 = vunpack.c.l.b16 %v8365
    %v8573 = vunpack.c.h.b16 %v8365
    %v8574 = vunpack.c.l.b16 %v8366
    %v8575 = vunpack.c.h.b16 %v8366
    %v8576 = vunpack.c.l.b16 %v8367
    %v8577 = vunpack.c.h.b16 %v8367
    %v8578 = vunpack.c.l.b16 %v8368
    %v8579 = vunpack.c.h.b16 %v8368
    %v8580 = vunpack.c.l.b16 %v8369
    %v8581 = vunpack.c.h.b16 %v8369
    %v8582 = vunpack.c.l.b16 %v8370
    %v8583 = vunpack.c.h.b16 %v8370
    %v8584 = vunpack.c.l.b16 %v8371
    %v8585 = vunpack.c.h.b16 %v8371
    %v8586 = vunpack.c.l.b16 %v8372
    %v8587 = vunpack.c.h.b16 %v8372
    %v8588 = vunpack.c.l.b16 %v8373
    %v8589 = vunpack.c.h.b16 %v8373
    %v8590 = vunpack.c.l.b16 %v8374
    %v8591 = vunpack.c.h.b16 %v8374
    %v8592 = vunpack.c.l.b16 %v8375
    %v8593 = vunpack.c.h.b16 %v8375
    %v8594 = vunpack.c.l.b16 %v8376
    %v8595 = vunpack.c.h.b16 %v8376
    %v8596 = vunpack.c.l.b16 %v8377
    %v8597 = vunpack.c.h.b16 %v8377
    %v8598 = vunpack.c.l.b16 %v8378
    %v8599 = vunpack.c.h.b16 %v8378
    %v8600 = vunpack.c.l.b16 %v8379
    %v8601 = vunpack.c.h.b16 %v8379
    %v8602 = vunpack.c.l.b16 %v8380
    %v8603 = vunpack.c.h.b16 %v8380
    %v8604 = vunpack.c.l.b16 %v8381
    %v8605 = vunpack.c.h.b16 %v8381
    %v8606 = vunpack.c.l.b16 %v8382
    %v8607 = vunpack.c.h.b16 %v8382
    %v8608 = vunpack.c.l.b16 %v8383
    %v8609 = vunpack.c.h.b16 %v8383
    %v8610 = vunpack.c.l.b16 %v8384
    %v8611 = vunpack.c.h.b16 %v8384
    %v8612 = vunpack.c.l.b16 %v8385
    %v8613 = vunpack.c.h.b16 %v8385
    %v8614 = vunpack.c.l.b16 %v8386
    %v8615 = vunpack.c.h.b16 %v8386
    %v8616 = vunpack.c.l.b16 %v8387
    %v8617 = vunpack.c.h.b16 %v8387
    %v8618 = vunpack.c.l.b16 %v8388
    %v8619 = vunpack.c.h.b16 %v8388
    %v8620 = vunpack.c.l.b16 %v8389
    %v8621 = vunpack.c.h.b16 %v8389
    %v8622 = vunpack.c.l.b16 %v8390
    %v8623 = vunpack.c.h.b16 %v8390
    %v8624 = vunpack.c.l.b16 %v8391
    %v8625 = vunpack.c.h.b16 %v8391
    %v8626 = vunpack.c.l.b16 %v8392
    %v8627 = vunpack.c.h.b16 %v8392
    %v8628 = vunpack.c.l.b16 %v8393
    %v8629 = vunpack.c.h.b16 %v8393
    %v8630 = vunpack.c.l.b16 %v8394
    %v8631 = vunpack.c.h.b16 %v8394
    %v8632 = vunpack.c.l.b16 %v8395
    %v8633 = vunpack.c.h.b16 %v8395
    %v8634 = vunpack.c.l.b16 %v8396
    %v8635 = vunpack.c.h.b16 %v8396
    %v8636 = vunpack.c.l.b16 %v8397
    %v8637 = vunpack.c.h.b16 %v8397
    %v8638 = vunpack.c.l.b16 %v8398
    %v8639 = vunpack.c.h.b16 %v8398
    %v8640 = vunpack.c.l.b16 %v8399
    %v8641 = vunpack.c.h.b16 %v8399
    %v8642 = vunpack.c.l.b16 %v8400
    %v8643 = vunpack.c.h.b16 %v8400
    %v8644 = vunpack.c.l.b16 %v8401
    %v8645 = vunpack.c.h.b16 %v8401
    %v8646 = vunpack.c.l.b16 %v8402
    %v8647 = vunpack.c.h.b16 %v8402
    %v8648 = vunpack.c.l.b16 %v8403
    %v8649 = vunpack.c.h.b16 %v8403
    %v8650 = vpack.c.b16 %v8492, %v8490
    %v8651 = vpack.c.b16 %v8493, %v8491
    %v8652 = vpack.c.b16 %v8496, %v8494
    %v8653 = vpack.c.b16 %v8497, %v8495
    %v8654 = vpack.c.b16 %v8500, %v8498
    %v8655 = vpack.c.b16 %v8501, %v8499
    %v8656 = vpack.c.b16 %v8504, %v8502
    %v8657 = vpack.c.b16 %v8505, %v8503
    %v8658 = vpack.c.b16 %v8508, %v8506
    %v8659 = vpack.c.b16 %v8509, %v8507
    %v8660 = vpack.c.b16 %v8512, %v8510
    %v8661 = vpack.c.b16 %v8513, %v8511
    %v8662 = vpack.c.b16 %v8516, %v8514
    %v8663 = vpack.c.b16 %v8517, %v8515
    %v8664 = vpack.c.b16 %v8520, %v8518
    %v8665 = vpack.c.b16 %v8521, %v8519
    %v8666 = vpack.c.b16 %v8524, %v8522
    %v8667 = vpack.c.b16 %v8525, %v8523
    %v8668 = vpack.c.b16 %v8528, %v8526
    %v8669 = vpack.c.b16 %v8529, %v8527
    %v8670 = vpack.c.b16 %v8532, %v8530
    %v8671 = vpack.c.b16 %v8533, %v8531
    %v8672 = vpack.c.b16 %v8536, %v8534
    %v8673 = vpack.c.b16 %v8537, %v8535
    %v8674 = vpack.c.b16 %v8540, %v8538
    %v8675 = vpack.c.b16 %v8541, %v8539
    %v8676 = vpack.c.b16 %v8544, %v8542
    %v8677 = vpack.c.b16 %v8545, %v8543
    %v8678 = vpack.c.b16 %v8548, %v8546
    %v8679 = vpack.c.b16 %v8549, %v8547
    %v8680 = vpack.c.b16 %v8552, %v8550
    %v8681 = vpack.c.b16 %v8553, %v8551
    %v8682 = vpack.c.b16 %v8556, %v8554
    %v8683 = vpack.c.b16 %v8557, %v8555
    %v8684 = vpack.c.b16 %v8560, %v8558
    %v8685 = vpack.c.b16 %v8561, %v8559
    %v8686 = vpack.c.b16 %v8564, %v8562
    %v8687 = vpack.c.b16 %v8565, %v8563
    %v8688 = vpack.c.b16 %v8568, %v8566
    %v8689 = vpack.c.b16 %v8569, %v8567
    %v8690 = vpack.c.b16 %v8572, %v8570
    %v8691 = vpack.c.b16 %v8573, %v8571
    %v8692 = vpack.c.b16 %v8576, %v8574
    %v8693 = vpack.c.b16 %v8577, %v8575
    %v8694 = vpack.c.b16 %v8580, %v8578
    %v8695 = vpack.c.b16 %v8581, %v8579
    %v8696 = vpack.c.b16 %v8584, %v8582
    %v8697 = vpack.c.b16 %v8585, %v8583
    %v8698 = vpack.c.b16 %v8588, %v8586
    %v8699 = vpack.c.b16 %v8589, %v8587
    %v8700 = vpack.c.b16 %v8592, %v8590
    %v8701 = vpack.c.b16 %v8593, %v8591
    %v8702 = vpack.c.b16 %v8596, %v8594
    %v8703 = vpack.c.b16 %v8597, %v8595
    %v8704 = vpack.c.b16 %v8600, %v8598
    %v8705 = vpack.c.b16 %v8601, %v8599
    %v8706 = vpack.c.b16 %v8604, %v8602
    %v8707 = vpack.c.b16 %v8605, %v8603
    %v8708 = vpack.c.b16 %v8608, %v8606
    %v8709 = vpack.c.b16 %v8609, %v8607
    %v8710 = vpack.c.b16 %v8612, %v8610
    %v8711 = vpack.c.b16 %v8613, %v8611
    %v8712 = vpack.c.b16 %v8616, %v8614
    %v8713 = vpack.c.b16 %v8617, %v8615
    %v8714 = vpack.c.b16 %v8620, %v8618
    %v8715 = vpack.c.b16 %v8621, %v8619
    %v8716 = vpack.c.b16 %v8624, %v8622
    %v8717 = vpack.c.b16 %v8625, %v8623
    %v8718 = vpack.c.b16 %v8628, %v8626
    %v8719 = vpack.c.b16 %v8629, %v8627
    %v8720 = vpack.c.b16 %v8632, %v8630
    %v8721 = vpack.c.b16 %v8633, %v8631
    %v8722 = vpack.c.b16 %v8636, %v8634
    %v8723 = vpack.c.b16 %v8637, %v8635
    %v8724 = vpack.c.b16 %v8640, %v8638
    %v8725 = vpack.c.b16 %v8641, %v8639
    %v8726 = vpack.c.b16 %v8644, %v8642
    %v8727 = vpack.c.b16 %v8645, %v8643
    %v8728 = vpack.c.b16 %v8648, %v8646
    %v8729 = vpack.c.b16 %v8649, %v8647
    %8810 = vmatpush.bf16.msra.mxu0 %v8664
    %8811 = vmatpush.bf16.msra.mxu0 %v8662
    %8812 = vmatpush.bf16.msra.mxu0 %v8660
    %8813 = vmatpush.bf16.msra.mxu0 %v8658
    %8814 = vmatpush.bf16.msra.mxu0 %v8656
    %8815 = vmatpush.bf16.msra.mxu0 %v8654
    %8816 = vmatpush.bf16.msra.mxu0 %v8652
    %8817 = vmatpush.bf16.msra.mxu0 %v8650
    %8818 = vmatmul.bf16.gmra.mxu0 %v8319
    %v8819 = vpop.f32.mrf.mxu0
    %v8820 = vadd.f32 %v8406, %v8819
    %v8821 = vpop.f32.mrf.mxu0
    %v8822 = vadd.f32 %v8406, %v8821
    %8823 = vdwg.mxu0
    %8824 = vmatpush.bf16.msra.mxu0 %v8680
    %8825 = vmatpush.bf16.msra.mxu0 %v8678
    %8826 = vmatpush.bf16.msra.mxu0 %v8676
    %8827 = vmatpush.bf16.msra.mxu0 %v8674
    %8828 = vmatpush.bf16.msra.mxu0 %v8672
    %8829 = vmatpush.bf16.msra.mxu0 %v8670
    %8830 = vmatpush.bf16.msra.mxu0 %v8668
    %8831 = vmatpush.bf16.msra.mxu0 %v8666
    %8832 = vmatmul.bf16.gmra.mxu0 %v8320
    %v8833 = vpop.f32.mrf.mxu0
    %v8834 = vadd.f32 %v8820, %v8833
    %v8835 = vpop.f32.mrf.mxu0
    %v8836 = vadd.f32 %v8822, %v8835
    %8837 = vdwg.mxu0
    %8838 = vmatpush.bf16.msra.mxu0 %v8696
    %8839 = vmatpush.bf16.msra.mxu0 %v8694
    %8840 = vmatpush.bf16.msra.mxu0 %v8692
    %8841 = vmatpush.bf16.msra.mxu0 %v8690
    %8842 = vmatpush.bf16.msra.mxu0 %v8688
    %8843 = vmatpush.bf16.msra.mxu0 %v8686
    %8844 = vmatpush.bf16.msra.mxu0 %v8684
    %8845 = vmatpush.bf16.msra.mxu0 %v8682
    %8846 = vmatmul.bf16.gmra.mxu0 %v8321
    %v8847 = vpop.f32.mrf.mxu0
    %v8848 = vadd.f32 %v8834, %v8847
    %v8849 = vpop.f32.mrf.mxu0
    %v8850 = vadd.f32 %v8836, %v8849
    %8851 = vdwg.mxu0
    %8852 = vmatpush.bf16.msra.mxu0 %v8712
    %8853 = vmatpush.bf16.msra.mxu0 %v8710
    %8854 = vmatpush.bf16.msra.mxu0 %v8708
    %8855 = vmatpush.bf16.msra.mxu0 %v8706
    %8856 = vmatpush.bf16.msra.mxu0 %v8704
    %8857 = vmatpush.bf16.msra.mxu0 %v8702
    %8858 = vmatpush.bf16.msra.mxu0 %v8700
    %8859 = vmatpush.bf16.msra.mxu0 %v8698
    %8860 = vmatmul.bf16.gmra.mxu0 %v8322
    %v8861 = vpop.f32.mrf.mxu0
    %v8862 = vadd.f32 %v8848, %v8861
    %v8863 = vpop.f32.mrf.mxu0
    %v8864 = vadd.f32 %v8850, %v8863
    %8865 = vdwg.mxu0
    %8866 = vmatpush.bf16.msra.mxu0 %v8728
    %8867 = vmatpush.bf16.msra.mxu0 %v8726
    %8868 = vmatpush.bf16.msra.mxu0 %v8724
    %8869 = vmatpush.bf16.msra.mxu0 %v8722
    %8870 = vmatpush.bf16.msra.mxu0 %v8720
    %8871 = vmatpush.bf16.msra.mxu0 %v8718
    %8872 = vmatpush.bf16.msra.mxu0 %v8716
    %8873 = vmatpush.bf16.msra.mxu0 %v8714
    %8874 = vmatmul.bf16.gmra.mxu0 %v8323
    %v8875 = vpop.f32.mrf.mxu0
    %v8876 = vadd.f32 %v8862, %v8875
    %v8877 = vpop.f32.mrf.mxu0
    %v8878 = vadd.f32 %v8864, %v8877
    %8879 = vdwg.mxu0
    %8880 = vmatpush.bf16.msra.mxu0 %v8665
    %8881 = vmatpush.bf16.msra.mxu0 %v8663
    %8882 = vmatpush.bf16.msra.mxu0 %v8661
    %8883 = vmatpush.bf16.msra.mxu0 %v8659
    %8884 = vmatpush.bf16.msra.mxu0 %v8657
    %8885 = vmatpush.bf16.msra.mxu0 %v8655
    %8886 = vmatpush.bf16.msra.mxu0 %v8653
    %8887 = vmatpush.bf16.msra.mxu0 %v8651
    %8888 = vmatmul.bf16.gmra.mxu0 %v8319
    %v8889 = vpop.f32.mrf.mxu0
    %v8890 = vadd.f32 %v8407, %v8889
    %v8891 = vpop.f32.mrf.mxu0
    %v8892 = vadd.f32 %v8407, %v8891
    %8893 = vdwg.mxu0
    %8894 = vmatpush.bf16.msra.mxu0 %v8681
    %8895 = vmatpush.bf16.msra.mxu0 %v8679
    %8896 = vmatpush.bf16.msra.mxu0 %v8677
    %8897 = vmatpush.bf16.msra.mxu0 %v8675
    %8898 = vmatpush.bf16.msra.mxu0 %v8673
    %8899 = vmatpush.bf16.msra.mxu0 %v8671
    %8900 = vmatpush.bf16.msra.mxu0 %v8669
    %8901 = vmatpush.bf16.msra.mxu0 %v8667
    %8902 = vmatmul.bf16.gmra.mxu0 %v8320
    %v8903 = vpop.f32.mrf.mxu0
    %v8904 = vadd.f32 %v8890, %v8903
    %v8905 = vpop.f32.mrf.mxu0
    %v8906 = vadd.f32 %v8892, %v8905
    %8907 = vdwg.mxu0
    %8908 = vmatpush.bf16.msra.mxu0 %v8697
    %8909 = vmatpush.bf16.msra.mxu0 %v8695
    %8910 = vmatpush.bf16.msra.mxu0 %v8693
    %8911 = vmatpush.bf16.msra.mxu0 %v8691
    %8912 = vmatpush.bf16.msra.mxu0 %v8689
    %8913 = vmatpush.bf16.msra.mxu0 %v8687
    %8914 = vmatpush.bf16.msra.mxu0 %v8685
    %8915 = vmatpush.bf16.msra.mxu0 %v8683
    %8916 = vmatmul.bf16.gmra.mxu0 %v8321
    %v8917 = vpop.f32.mrf.mxu0
    %v8918 = vadd.f32 %v8904, %v8917
    %v8919 = vpop.f32.mrf.mxu0
    %v8920 = vadd.f32 %v8906, %v8919
    %8921 = vdwg.mxu0
    %8922 = vmatpush.bf16.msra.mxu0 %v8713
    %8923 = vmatpush.bf16.msra.mxu0 %v8711
    %8924 = vmatpush.bf16.msra.mxu0 %v8709
    %8925 = vmatpush.bf16.msra.mxu0 %v8707
    %8926 = vmatpush.bf16.msra.mxu0 %v8705
    %8927 = vmatpush.bf16.msra.mxu0 %v8703
    %8928 = vmatpush.bf16.msra.mxu0 %v8701
    %8929 = vmatpush.bf16.msra.mxu0 %v8699
    %8930 = vmatmul.bf16.gmra.mxu0 %v8322
    %v8931 = vpop.f32.mrf.mxu0
    %v8932 = vadd.f32 %v8918, %v8931
    %v8933 = vpop.f32.mrf.mxu0
    %v8934 = vadd.f32 %v8920, %v8933
    %8935 = vdwg.mxu0
    %8936 = vmatpush.bf16.msra.mxu0 %v8729
    %8937 = vmatpush.bf16.msra.mxu0 %v8727
    %8938 = vmatpush.bf16.msra.mxu0 %v8725
    %8939 = vmatpush.bf16.msra.mxu0 %v8723
    %8940 = vmatpush.bf16.msra.mxu0 %v8721
    %8941 = vmatpush.bf16.msra.mxu0 %v8719
    %8942 = vmatpush.bf16.msra.mxu0 %v8717
    %8943 = vmatpush.bf16.msra.mxu0 %v8715
    %8944 = vmatmul.bf16.gmra.mxu0 %v8323
    %v8945 = vpop.f32.mrf.mxu0
    %v8946 = vadd.f32 %v8932, %v8945
    %v8947 = vpop.f32.mrf.mxu0
    %v8948 = vadd.f32 %v8934, %v8947
    %8949 = vdwg.mxu0
    %8950 = vst [vmem:[#allocation11] sm:$0xff] %v8876
    %8951 = vst [vmem:[#allocation11 + $0x8] sm:$0xff] %v8946
    %8952 = vst [vmem:[#allocation11 + $0x10] sm:$0xff] %v8878
    %8953 = vst [vmem:[#allocation11 + $0x18] sm:$0xff] %v8948
    // Predicated region
    $region42: #{tpu_custom_call.1} parent=1 // pred_check
      _
    $region43: #{tpu_custom_call.1} parent=1 // pred_check_branch
      %8955 = sbr.rel (0) target = $region45
    $region44: #{tpu_custom_call.1} parent=1 // pred_region
      %8957 = vsyncadd [#allocation4], 0
      %s8958 = sshll.u32 [#allocation11], 4
      %s8959 = int_to_ptr.vmem [resolvable:$true] %s8958
      %s8960 = sshll.u32 %s5, 4
      %s8961 = int_to_ptr.hbm [resolvable:$true] %s8960
      %8966 = dma.vmem_to_hbm [thread:$0]  %s8959, 512, %s8961, [#allocation4], 256, 256, 16
    $region45: #{tpu_custom_call.1} parent=1 // pred_fallthru
      _
    // Predicated region
    $region46: #{tpu_custom_call.1} parent=1 // pred_check
      _
    $region47: #{tpu_custom_call.1} parent=1 // pred_check_branch
      %8968 = sbr.rel (0) target = $region49
    $region48: #{tpu_custom_call.1} parent=1 // pred_region
      %8970 = dma.done [#allocation4], 512
    $region49: #{tpu_custom_call.1} parent=1 // pred_fallthru
      _
    %8971 = vsyncpa [#allocation3], 1
    %8972 = vsyncpa [#allocation6], 1
    %8973 = vsyncpa [#allocation9], 1
    %8974 = vsyncpa [#allocation4], 1

</llo_original>
